<compile_context>
chip_gen: v7x
topology: tpu7x:2x2x1
jax: 0.10.0
libtpu: 0.0.40
codegen_flags: <defaults>
</compile_context>

<pallas_src>
import jax
import jax.numpy as jnp
from jax import lax
from jax.experimental import pallas as pl
from jax.experimental.pallas import tpu as pltpu


def _round_up(x, m):
    return ((x + m - 1) // m) * m


def _make_kernel(K, H, Wxp, Wop, Ho, Cin, Cmid):
    KC_in = K * Cin
    KC_mid = K * Cmid

    def kernel(x_ref, w1a_ref, w1b_ref, w2_ref, o_ref, b_ref):
        # Grid is (N, n_co); the Cout-tile axis `co` MUST stay the innermost,
        # "arbitrary" axis: b_ref (the stage-2 im2col LHS) is produced at co==0
        # and reused by the remaining Cout tiles of the same image.
        co = pl.program_id(1)

        # ---- once per image: stage-1 convs + stage-2 im2col LHS (registers only,
        #      single store into the persistent scratch) -------------------------
        @pl.when(co == 0)
        def _build_lhs():
            x = x_ref[...]                                         # (H, Wxp, Cin) bf16

            # path 1 first conv, (K,1) over H: one matmul, contraction K*Cin
            a1 = jnp.concatenate([x[k:k + Ho] for k in range(K)], axis=-1)
            y1 = jnp.dot(a1.reshape(Ho * Wxp, KC_in), w1a_ref[...],
                         preferred_element_type=jnp.float32)
            y1 = y1.reshape(Ho, Wxp, Cmid).astype(jnp.bfloat16)    # (Ho, Wxp, Cmid)

            # path 2 first conv, (1,K) over W: one matmul, contraction K*Cin
            a2 = jnp.concatenate([x[:, k:k + Wop, :] for k in range(K)], axis=-1)
            y2 = jnp.dot(a2.reshape(H * Wop, KC_in), w1b_ref[...],
                         preferred_element_type=jnp.float32)
            y2 = y2.reshape(H, Wop, Cmid).astype(jnp.bfloat16)     # (H, Wop, Cmid)

            # stage-2 im2col LHS: the K taps of both paths folded into the
            # contraction dimension.  Stored once (lane offsets are multiples
            # of K*Cmid, itself a multiple of 128 for these shapes).
            b1 = jnp.concatenate([y1[:, k:k + Wop, :] for k in range(K)], axis=-1)
            b_ref[:, :KC_mid] = b1.reshape(Ho * Wop, KC_mid)
            b2 = jnp.concatenate([y2[k:k + Ho] for k in range(K)], axis=-1)
            b_ref[:, KC_mid:] = b2.reshape(Ho * Wop, KC_mid)

        # ---- per (image, Cout tile): a single full-depth MXU matmul, written
        #      to the output block exactly once ---------------------------------
        o_ref[...] = jnp.dot(b_ref[...], w2_ref[...],
                             preferred_element_type=jnp.float32).astype(o_ref.dtype)

    return kernel


def large_separable_conv2d_nhwc(x_nhwc, params, *, kernel_size=15, tco=None,
                                vmem_limit_bytes=32 * 1024 * 1024):
    """Fused forward pass (channels-last). x_nhwc: (N, H, W, Cin) float32.
    params: PyTorch-layout conv weights (see make_params). Returns (N, Ho, Wo, Cout)."""
    N, H, W, Cin = x_nhwc.shape
    K = kernel_size
    assert H >= K and W >= K, "spatial dims must be >= kernel_size (padding=0)"
    Ho, Wo = H - K + 1, W - K + 1

    W11, W12, W21, W22 = params["W11"], params["W12"], params["W21"], params["W22"]
    Cmid = W11.shape[0]
    Cout = W12.shape[0]

    # --- per-tap weight layouts from PyTorch (O, I, kH, kW) ---
    w11 = jnp.transpose(W11[:, :, :, 0], (2, 1, 0))   # (K, Cin, Cmid)  taps over H
    w21 = jnp.transpose(W21[:, :, 0, :], (2, 1, 0))   # (K, Cin, Cmid)  taps over W
    w12 = jnp.transpose(W12[:, :, 0, :], (2, 1, 0))   # (K, Cmid, Cout) taps over W
    w22 = jnp.transpose(W22[:, :, :, 0], (2, 1, 0))   # (K, Cmid, Cout) taps over H

    # --- Cout tiling: by default keep all of Cout resident (setting 'S') ---
    if tco is None:
        tco = _round_up(Cout, 128)          # no Cout grid axis (n_co == 1)
    assert tco % 128 == 0, "tco must be a multiple of 128 (lane-dense stores)"
    Cout_p = _round_up(Cout, tco)
    n_co = Cout_p // tco

    # --- host prepack: stage-1 (K*Cin, Cmid); stage-2 (2*K*Cmid, Cout_p), bf16 ---
    w1a = w11.reshape(K * Cin, Cmid).astype(jnp.bfloat16)
    w1b = w21.reshape(K * Cin, Cmid).astype(jnp.bfloat16)
    w2 = jnp.concatenate([w12.reshape(K * Cmid, Cout),
                          w22.reshape(K * Cmid, Cout)], axis=0)
    w2 = jnp.pad(w2, ((0, 0), (0, Cout_p - Cout))).astype(jnp.bfloat16)

    # --- pad W so every in-kernel slice/reshape stays inside the padded extents ---
    Wop = _round_up(Wo, 8)                  # padded output width (sublane multiple)
    Wxp = _round_up(Wop + K - 1, 8)         # padded input width (>= W)
    x_b = x_nhwc.astype(jnp.bfloat16)
    if Wxp != W:
        x_b = jnp.pad(x_b, ((0, 0), (0, 0), (0, Wxp - W), (0, 0)))

    kernel = _make_kernel(K, H, Wxp, Wop, Ho, Cin, Cmid)

    # TODO(synk): N is the only 'parallel' axis; for N==1 on v7x megacore one core
    # idles (splitting output rows across cores would need stage-1 duplication).
    grid = (N, n_co)
    out_flat = pl.pallas_call(
        kernel,
        out_shape=jax.ShapeDtypeStruct((N, Ho * Wop, Cout_p), jnp.float32),
        grid=grid,
        in_specs=[
            pl.BlockSpec((None, H, Wxp, Cin), lambda n, co: (n, 0, 0, 0)),
            pl.BlockSpec((K * Cin, Cmid), lambda n, co: (0, 0)),
            pl.BlockSpec((K * Cin, Cmid), lambda n, co: (0, 0)),
            pl.BlockSpec((2 * K * Cmid, tco), lambda n, co: (0, co)),
        ],
        out_specs=pl.BlockSpec((None, Ho * Wop, tco), lambda n, co: (n, 0, co)),
        scratch_shapes=[
            # stage-2 im2col LHS, persistent across the Cout-tile axis
            pltpu.VMEM((Ho * Wop, 2 * K * Cmid), jnp.bfloat16),
        ],
        compiler_params=pltpu.CompilerParams(
            dimension_semantics=("parallel", "arbitrary"),
            vmem_limit_bytes=vmem_limit_bytes),
    )(x_b, w1a, w1b, w2)

    out = out_flat.reshape(N, Ho, Wop, Cout_p)[:, :, :Wo, :Cout]
    return out


def large_separable_conv2d_forward(x_nchw, params, *, kernel_size=15, tco=None):
    """NCHW wrapper matching the PyTorch module's layout (bias=False, bn=False)."""
    # TODO(synk): bias=True / bn=True module variants would fold a per-channel
    # scale/bias after each stage; not implemented (module defaults are False).
    x_nhwc = jnp.transpose(x_nchw, (0, 2, 3, 1))
    out_nhwc = large_separable_conv2d_nhwc(x_nhwc, params, kernel_size=kernel_size,
                                           tco=tco)
    return jnp.transpose(out_nhwc, (0, 3, 1, 2))


def large_separable_conv2d_ref(x_nchw, params):
    """Pure-XLA f32 reference mirroring the PyTorch forward (bias=False, bn=False)."""
    dn = ("NCHW", "OIHW", "NCHW")

    def conv(lhs, rhs):
        return lax.conv_general_dilated(lhs, rhs, (1, 1), "VALID",
                                        dimension_numbers=dn)

    x1 = conv(conv(x_nchw, params["W11"]), params["W12"])
    x2 = conv(conv(x_nchw, params["W21"]), params["W22"])
    return x1 + x2


def make_params(key, c_in, *, kernel_size=15, setting="S"):
    """Weights in PyTorch Conv2d (O, I, kH, kW) layout, matching the module."""
    c_mid = 64 if setting == "S" else 256
    c_out = 10 * 7 * 7                      # dim_out hard-coded by the module
    k = jax.random.split(key, 4)
    std = 0.05
    return dict(
        W11=std * jax.random.normal(k[0], (c_mid, c_in, kernel_size, 1), jnp.float32),
        W12=std * jax.random.normal(k[1], (c_out, c_mid, 1, kernel_size), jnp.float32),
        W21=std * jax.random.normal(k[2], (c_mid, c_in, 1, kernel_size), jnp.float32),
        W22=std * jax.random.normal(k[3], (c_out, c_mid, kernel_size, 1), jnp.float32),
    )


if __name__ == "__main__":
    key = jax.random.PRNGKey(0)
    kx, kp = jax.random.split(key)

    # LargeSeparableConv2d(c_in=16, kernel_size=15, bias=False, bn=False, setting='S')
    N, Cin, H, W = 2, 16, 20, 20
    kernel_size, setting = 15, "S"

    x = jax.random.normal(kx, (N, Cin, H, W), jnp.float32)
    params = make_params(kp, Cin, kernel_size=kernel_size, setting=setting)

    out = large_separable_conv2d_forward(x, params, kernel_size=kernel_size)
    out = jax.block_until_ready(out)

    ref = large_separable_conv2d_ref(x, params)
    assert out.shape == ref.shape, (out.shape, ref.shape)
    # Kernel uses bf16 MXU operands with f32 accumulation; tolerance is set to a
    # bf16-appropriate bound vs. the f32 reference (contractions of 240 / 1920).
    max_err = float(jnp.max(jnp.abs(out - ref)))
    assert jnp.allclose(out, ref, rtol=2e-2, atol=6e-2), f"max abs err {max_err}"

    print("KERNEL_OK")
</pallas_src>

<mosaic_0001>
module attributes {stable_mosaic.version = 11 : i64} {
  func.func @kernel(%arg0: i32, %arg1: i32, %arg2: memref<1x20x24x16xbf16, #tpu.memory_space<vmem>>, %arg3: memref<240x64xbf16, #tpu.memory_space<vmem>>, %arg4: memref<240x64xbf16, #tpu.memory_space<vmem>>, %arg5: memref<1920x512xbf16, #tpu.memory_space<vmem>>, %arg6: memref<1x48x512xf32, #tpu.memory_space<vmem>>, %arg7: memref<48x1920xbf16, #tpu.memory_space<vmem>>) attributes {dimension_semantics = [#tpu.dimension_semantics<parallel>, #tpu.dimension_semantics<arbitrary>], iteration_bounds = array<i64: 2, 1>, scalar_prefetch = 0 : i64, scratch_operands = 1 : i64, tpu.core_type = #tpu.core_type<tc>, window_params = [{transform_indices = @transform_0, window_bounds = array<i64: 1, 20, 24, 16>}, {pipeline_mode = #tpu.pipeline_mode<synchronous>, transform_indices = @transform_1, window_bounds = array<i64: 240, 64>}, {pipeline_mode = #tpu.pipeline_mode<synchronous>, transform_indices = @transform_2, window_bounds = array<i64: 240, 64>}, {transform_indices = @transform_3, window_bounds = array<i64: 1920, 512>}, {transform_indices = @transform_4, window_bounds = array<i64: 1, 48, 512>}]} {
    %c0_i32 = arith.constant 0 : i32
    %0 = arith.cmpi eq, %arg1, %c0_i32 : i32
    %1 = arith.extui %0 : i1 to i32
    %c0_i32_0 = arith.constant 0 : i32
    %2 = arith.cmpi ne, %1, %c0_i32_0 : i32
    scf.if %2 {
      %c0_7 = arith.constant 0 : index
      %c0_8 = arith.constant 0 : index
      %c0_9 = arith.constant 0 : index
      %c0_10 = arith.constant 0 : index
      %9 = vector.load %arg2[%c0_7, %c0_8, %c0_9, %c0_10] : memref<1x20x24x16xbf16, #tpu.memory_space<vmem>>, vector<1x20x24x16xbf16>
      %10 = vector.shape_cast %9 : vector<1x20x24x16xbf16> to vector<20x24x16xbf16>
      %11 = vector.extract_strided_slice %10 {offsets = [0, 0, 0], sizes = [6, 24, 16], strides = [1, 1, 1]} : vector<20x24x16xbf16> to vector<6x24x16xbf16>
      %12 = vector.extract_strided_slice %10 {offsets = [1, 0, 0], sizes = [6, 24, 16], strides = [1, 1, 1]} : vector<20x24x16xbf16> to vector<6x24x16xbf16>
      %13 = vector.extract_strided_slice %10 {offsets = [2, 0, 0], sizes = [6, 24, 16], strides = [1, 1, 1]} : vector<20x24x16xbf16> to vector<6x24x16xbf16>
      %14 = vector.extract_strided_slice %10 {offsets = [3, 0, 0], sizes = [6, 24, 16], strides = [1, 1, 1]} : vector<20x24x16xbf16> to vector<6x24x16xbf16>
      %15 = vector.extract_strided_slice %10 {offsets = [4, 0, 0], sizes = [6, 24, 16], strides = [1, 1, 1]} : vector<20x24x16xbf16> to vector<6x24x16xbf16>
      %16 = vector.extract_strided_slice %10 {offsets = [5, 0, 0], sizes = [6, 24, 16], strides = [1, 1, 1]} : vector<20x24x16xbf16> to vector<6x24x16xbf16>
      %17 = vector.extract_strided_slice %10 {offsets = [6, 0, 0], sizes = [6, 24, 16], strides = [1, 1, 1]} : vector<20x24x16xbf16> to vector<6x24x16xbf16>
      %18 = vector.extract_strided_slice %10 {offsets = [7, 0, 0], sizes = [6, 24, 16], strides = [1, 1, 1]} : vector<20x24x16xbf16> to vector<6x24x16xbf16>
      %19 = vector.extract_strided_slice %10 {offsets = [8, 0, 0], sizes = [6, 24, 16], strides = [1, 1, 1]} : vector<20x24x16xbf16> to vector<6x24x16xbf16>
      %20 = vector.extract_strided_slice %10 {offsets = [9, 0, 0], sizes = [6, 24, 16], strides = [1, 1, 1]} : vector<20x24x16xbf16> to vector<6x24x16xbf16>
      %21 = vector.extract_strided_slice %10 {offsets = [10, 0, 0], sizes = [6, 24, 16], strides = [1, 1, 1]} : vector<20x24x16xbf16> to vector<6x24x16xbf16>
      %22 = vector.extract_strided_slice %10 {offsets = [11, 0, 0], sizes = [6, 24, 16], strides = [1, 1, 1]} : vector<20x24x16xbf16> to vector<6x24x16xbf16>
      %23 = vector.extract_strided_slice %10 {offsets = [12, 0, 0], sizes = [6, 24, 16], strides = [1, 1, 1]} : vector<20x24x16xbf16> to vector<6x24x16xbf16>
      %24 = vector.extract_strided_slice %10 {offsets = [13, 0, 0], sizes = [6, 24, 16], strides = [1, 1, 1]} : vector<20x24x16xbf16> to vector<6x24x16xbf16>
      %25 = vector.extract_strided_slice %10 {offsets = [14, 0, 0], sizes = [6, 24, 16], strides = [1, 1, 1]} : vector<20x24x16xbf16> to vector<6x24x16xbf16>
      %26 = tpu.concatenate %11, %12, %13, %14, %15, %16, %17, %18, %19, %20, %21, %22, %23, %24, %25 in 2 : vector<6x24x16xbf16>, vector<6x24x16xbf16>, vector<6x24x16xbf16>, vector<6x24x16xbf16>, vector<6x24x16xbf16>, vector<6x24x16xbf16>, vector<6x24x16xbf16>, vector<6x24x16xbf16>, vector<6x24x16xbf16>, vector<6x24x16xbf16>, vector<6x24x16xbf16>, vector<6x24x16xbf16>, vector<6x24x16xbf16>, vector<6x24x16xbf16>, vector<6x24x16xbf16> -> vector<6x24x240xbf16>
      %27 = vector.shape_cast %26 : vector<6x24x240xbf16> to vector<144x240xbf16>
      %c0_11 = arith.constant 0 : index
      %c0_12 = arith.constant 0 : index
      %28 = vector.load %arg3[%c0_11, %c0_12] : memref<240x64xbf16, #tpu.memory_space<vmem>>, vector<240x64xbf16>
      %cst_13 = arith.constant dense<0.000000e+00> : vector<144x64xf32>
      %29 = tpu.matmul %27, %28, %cst_13 {dimension_numbers = #tpu.dot_dimension_numbers<[1], [0], [0], [1], [0, 0, 1, 1], [], []>} : vector<144x240xbf16>, vector<240x64xbf16>, vector<144x64xf32> -> vector<144x64xf32>
      %30 = vector.shape_cast %29 : vector<144x64xf32> to vector<6x24x64xf32>
      %31 = arith.truncf %30 : vector<6x24x64xf32> to vector<6x24x64xbf16>
      %32 = vector.extract_strided_slice %10 {offsets = [0, 0, 0], sizes = [20, 8, 16], strides = [1, 1, 1]} : vector<20x24x16xbf16> to vector<20x8x16xbf16>
      %33 = vector.extract_strided_slice %10 {offsets = [0, 1, 0], sizes = [20, 8, 16], strides = [1, 1, 1]} : vector<20x24x16xbf16> to vector<20x8x16xbf16>
      %34 = vector.extract_strided_slice %10 {offsets = [0, 2, 0], sizes = [20, 8, 16], strides = [1, 1, 1]} : vector<20x24x16xbf16> to vector<20x8x16xbf16>
      %35 = vector.extract_strided_slice %10 {offsets = [0, 3, 0], sizes = [20, 8, 16], strides = [1, 1, 1]} : vector<20x24x16xbf16> to vector<20x8x16xbf16>
      %36 = vector.extract_strided_slice %10 {offsets = [0, 4, 0], sizes = [20, 8, 16], strides = [1, 1, 1]} : vector<20x24x16xbf16> to vector<20x8x16xbf16>
      %37 = vector.extract_strided_slice %10 {offsets = [0, 5, 0], sizes = [20, 8, 16], strides = [1, 1, 1]} : vector<20x24x16xbf16> to vector<20x8x16xbf16>
      %38 = vector.extract_strided_slice %10 {offsets = [0, 6, 0], sizes = [20, 8, 16], strides = [1, 1, 1]} : vector<20x24x16xbf16> to vector<20x8x16xbf16>
      %39 = vector.extract_strided_slice %10 {offsets = [0, 7, 0], sizes = [20, 8, 16], strides = [1, 1, 1]} : vector<20x24x16xbf16> to vector<20x8x16xbf16>
      %40 = vector.extract_strided_slice %10 {offsets = [0, 8, 0], sizes = [20, 8, 16], strides = [1, 1, 1]} : vector<20x24x16xbf16> to vector<20x8x16xbf16>
      %41 = vector.extract_strided_slice %10 {offsets = [0, 9, 0], sizes = [20, 8, 16], strides = [1, 1, 1]} : vector<20x24x16xbf16> to vector<20x8x16xbf16>
      %42 = vector.extract_strided_slice %10 {offsets = [0, 10, 0], sizes = [20, 8, 16], strides = [1, 1, 1]} : vector<20x24x16xbf16> to vector<20x8x16xbf16>
      %43 = vector.extract_strided_slice %10 {offsets = [0, 11, 0], sizes = [20, 8, 16], strides = [1, 1, 1]} : vector<20x24x16xbf16> to vector<20x8x16xbf16>
      %44 = vector.extract_strided_slice %10 {offsets = [0, 12, 0], sizes = [20, 8, 16], strides = [1, 1, 1]} : vector<20x24x16xbf16> to vector<20x8x16xbf16>
      %45 = vector.extract_strided_slice %10 {offsets = [0, 13, 0], sizes = [20, 8, 16], strides = [1, 1, 1]} : vector<20x24x16xbf16> to vector<20x8x16xbf16>
      %46 = vector.extract_strided_slice %10 {offsets = [0, 14, 0], sizes = [20, 8, 16], strides = [1, 1, 1]} : vector<20x24x16xbf16> to vector<20x8x16xbf16>
      %47 = tpu.concatenate %32, %33, %34, %35, %36, %37, %38, %39, %40, %41, %42, %43, %44, %45, %46 in 2 : vector<20x8x16xbf16>, vector<20x8x16xbf16>, vector<20x8x16xbf16>, vector<20x8x16xbf16>, vector<20x8x16xbf16>, vector<20x8x16xbf16>, vector<20x8x16xbf16>, vector<20x8x16xbf16>, vector<20x8x16xbf16>, vector<20x8x16xbf16>, vector<20x8x16xbf16>, vector<20x8x16xbf16>, vector<20x8x16xbf16>, vector<20x8x16xbf16>, vector<20x8x16xbf16> -> vector<20x8x240xbf16>
      %48 = vector.shape_cast %47 : vector<20x8x240xbf16> to vector<160x240xbf16>
      %c0_14 = arith.constant 0 : index
      %c0_15 = arith.constant 0 : index
      %49 = vector.load %arg4[%c0_14, %c0_15] : memref<240x64xbf16, #tpu.memory_space<vmem>>, vector<240x64xbf16>
      %cst_16 = arith.constant dense<0.000000e+00> : vector<160x64xf32>
      %50 = tpu.matmul %48, %49, %cst_16 {dimension_numbers = #tpu.dot_dimension_numbers<[1], [0], [0], [1], [0, 0, 1, 1], [], []>} : vector<160x240xbf16>, vector<240x64xbf16>, vector<160x64xf32> -> vector<160x64xf32>
      %51 = vector.shape_cast %50 : vector<160x64xf32> to vector<20x8x64xf32>
      %52 = arith.truncf %51 : vector<20x8x64xf32> to vector<20x8x64xbf16>
      %53 = vector.extract_strided_slice %31 {offsets = [0, 0, 0], sizes = [6, 8, 64], strides = [1, 1, 1]} : vector<6x24x64xbf16> to vector<6x8x64xbf16>
      %54 = vector.extract_strided_slice %31 {offsets = [0, 1, 0], sizes = [6, 8, 64], strides = [1, 1, 1]} : vector<6x24x64xbf16> to vector<6x8x64xbf16>
      %55 = vector.extract_strided_slice %31 {offsets = [0, 2, 0], sizes = [6, 8, 64], strides = [1, 1, 1]} : vector<6x24x64xbf16> to vector<6x8x64xbf16>
      %56 = vector.extract_strided_slice %31 {offsets = [0, 3, 0], sizes = [6, 8, 64], strides = [1, 1, 1]} : vector<6x24x64xbf16> to vector<6x8x64xbf16>
      %57 = vector.extract_strided_slice %31 {offsets = [0, 4, 0], sizes = [6, 8, 64], strides = [1, 1, 1]} : vector<6x24x64xbf16> to vector<6x8x64xbf16>
      %58 = vector.extract_strided_slice %31 {offsets = [0, 5, 0], sizes = [6, 8, 64], strides = [1, 1, 1]} : vector<6x24x64xbf16> to vector<6x8x64xbf16>
      %59 = vector.extract_strided_slice %31 {offsets = [0, 6, 0], sizes = [6, 8, 64], strides = [1, 1, 1]} : vector<6x24x64xbf16> to vector<6x8x64xbf16>
      %60 = vector.extract_strided_slice %31 {offsets = [0, 7, 0], sizes = [6, 8, 64], strides = [1, 1, 1]} : vector<6x24x64xbf16> to vector<6x8x64xbf16>
      %61 = vector.extract_strided_slice %31 {offsets = [0, 8, 0], sizes = [6, 8, 64], strides = [1, 1, 1]} : vector<6x24x64xbf16> to vector<6x8x64xbf16>
      %62 = vector.extract_strided_slice %31 {offsets = [0, 9, 0], sizes = [6, 8, 64], strides = [1, 1, 1]} : vector<6x24x64xbf16> to vector<6x8x64xbf16>
      %63 = vector.extract_strided_slice %31 {offsets = [0, 10, 0], sizes = [6, 8, 64], strides = [1, 1, 1]} : vector<6x24x64xbf16> to vector<6x8x64xbf16>
      %64 = vector.extract_strided_slice %31 {offsets = [0, 11, 0], sizes = [6, 8, 64], strides = [1, 1, 1]} : vector<6x24x64xbf16> to vector<6x8x64xbf16>
      %65 = vector.extract_strided_slice %31 {offsets = [0, 12, 0], sizes = [6, 8, 64], strides = [1, 1, 1]} : vector<6x24x64xbf16> to vector<6x8x64xbf16>
      %66 = vector.extract_strided_slice %31 {offsets = [0, 13, 0], sizes = [6, 8, 64], strides = [1, 1, 1]} : vector<6x24x64xbf16> to vector<6x8x64xbf16>
      %67 = vector.extract_strided_slice %31 {offsets = [0, 14, 0], sizes = [6, 8, 64], strides = [1, 1, 1]} : vector<6x24x64xbf16> to vector<6x8x64xbf16>
      %68 = tpu.concatenate %53, %54, %55, %56, %57, %58, %59, %60, %61, %62, %63, %64, %65, %66, %67 in 2 : vector<6x8x64xbf16>, vector<6x8x64xbf16>, vector<6x8x64xbf16>, vector<6x8x64xbf16>, vector<6x8x64xbf16>, vector<6x8x64xbf16>, vector<6x8x64xbf16>, vector<6x8x64xbf16>, vector<6x8x64xbf16>, vector<6x8x64xbf16>, vector<6x8x64xbf16>, vector<6x8x64xbf16>, vector<6x8x64xbf16>, vector<6x8x64xbf16>, vector<6x8x64xbf16> -> vector<6x8x960xbf16>
      %69 = vector.shape_cast %68 : vector<6x8x960xbf16> to vector<48x960xbf16>
      %c0_17 = arith.constant 0 : index
      %c0_18 = arith.constant 0 : index
      %70 = vector.load %arg7[%c0_17, %c0_18] : memref<48x1920xbf16, #tpu.memory_space<vmem>>, vector<48x960xbf16>
      tpu.vector_store %arg7[%c0_17, %c0_18], %69 {strides = array<i32>} : memref<48x1920xbf16, #tpu.memory_space<vmem>>, vector<48x960xbf16>,
      %71 = vector.extract_strided_slice %52 {offsets = [0, 0, 0], sizes = [6, 8, 64], strides = [1, 1, 1]} : vector<20x8x64xbf16> to vector<6x8x64xbf16>
      %72 = vector.extract_strided_slice %52 {offsets = [1, 0, 0], sizes = [6, 8, 64], strides = [1, 1, 1]} : vector<20x8x64xbf16> to vector<6x8x64xbf16>
      %73 = vector.extract_strided_slice %52 {offsets = [2, 0, 0], sizes = [6, 8, 64], strides = [1, 1, 1]} : vector<20x8x64xbf16> to vector<6x8x64xbf16>
      %74 = vector.extract_strided_slice %52 {offsets = [3, 0, 0], sizes = [6, 8, 64], strides = [1, 1, 1]} : vector<20x8x64xbf16> to vector<6x8x64xbf16>
      %75 = vector.extract_strided_slice %52 {offsets = [4, 0, 0], sizes = [6, 8, 64], strides = [1, 1, 1]} : vector<20x8x64xbf16> to vector<6x8x64xbf16>
      %76 = vector.extract_strided_slice %52 {offsets = [5, 0, 0], sizes = [6, 8, 64], strides = [1, 1, 1]} : vector<20x8x64xbf16> to vector<6x8x64xbf16>
      %77 = vector.extract_strided_slice %52 {offsets = [6, 0, 0], sizes = [6, 8, 64], strides = [1, 1, 1]} : vector<20x8x64xbf16> to vector<6x8x64xbf16>
      %78 = vector.extract_strided_slice %52 {offsets = [7, 0, 0], sizes = [6, 8, 64], strides = [1, 1, 1]} : vector<20x8x64xbf16> to vector<6x8x64xbf16>
      %79 = vector.extract_strided_slice %52 {offsets = [8, 0, 0], sizes = [6, 8, 64], strides = [1, 1, 1]} : vector<20x8x64xbf16> to vector<6x8x64xbf16>
      %80 = vector.extract_strided_slice %52 {offsets = [9, 0, 0], sizes = [6, 8, 64], strides = [1, 1, 1]} : vector<20x8x64xbf16> to vector<6x8x64xbf16>
      %81 = vector.extract_strided_slice %52 {offsets = [10, 0, 0], sizes = [6, 8, 64], strides = [1, 1, 1]} : vector<20x8x64xbf16> to vector<6x8x64xbf16>
      %82 = vector.extract_strided_slice %52 {offsets = [11, 0, 0], sizes = [6, 8, 64], strides = [1, 1, 1]} : vector<20x8x64xbf16> to vector<6x8x64xbf16>
      %83 = vector.extract_strided_slice %52 {offsets = [12, 0, 0], sizes = [6, 8, 64], strides = [1, 1, 1]} : vector<20x8x64xbf16> to vector<6x8x64xbf16>
      %84 = vector.extract_strided_slice %52 {offsets = [13, 0, 0], sizes = [6, 8, 64], strides = [1, 1, 1]} : vector<20x8x64xbf16> to vector<6x8x64xbf16>
      %85 = vector.extract_strided_slice %52 {offsets = [14, 0, 0], sizes = [6, 8, 64], strides = [1, 1, 1]} : vector<20x8x64xbf16> to vector<6x8x64xbf16>
      %86 = tpu.concatenate %71, %72, %73, %74, %75, %76, %77, %78, %79, %80, %81, %82, %83, %84, %85 in 2 : vector<6x8x64xbf16>, vector<6x8x64xbf16>, vector<6x8x64xbf16>, vector<6x8x64xbf16>, vector<6x8x64xbf16>, vector<6x8x64xbf16>, vector<6x8x64xbf16>, vector<6x8x64xbf16>, vector<6x8x64xbf16>, vector<6x8x64xbf16>, vector<6x8x64xbf16>, vector<6x8x64xbf16>, vector<6x8x64xbf16>, vector<6x8x64xbf16>, vector<6x8x64xbf16> -> vector<6x8x960xbf16>
      %87 = vector.shape_cast %86 : vector<6x8x960xbf16> to vector<48x960xbf16>
      %c0_19 = arith.constant 0 : index
      %c960 = arith.constant 960 : index
      %88 = vector.load %arg7[%c0_19, %c960] : memref<48x1920xbf16, #tpu.memory_space<vmem>>, vector<48x960xbf16>
      tpu.vector_store %arg7[%c0_19, %c960], %87 {strides = array<i32>} : memref<48x1920xbf16, #tpu.memory_space<vmem>>, vector<48x960xbf16>,
    } else {
    }
    %c0 = arith.constant 0 : index
    %c0_1 = arith.constant 0 : index
    %3 = vector.load %arg7[%c0, %c0_1] : memref<48x1920xbf16, #tpu.memory_space<vmem>>, vector<48x1920xbf16>
    %c0_2 = arith.constant 0 : index
    %c0_3 = arith.constant 0 : index
    %4 = vector.load %arg5[%c0_2, %c0_3] : memref<1920x512xbf16, #tpu.memory_space<vmem>>, vector<1920x512xbf16>
    %cst = arith.constant dense<0.000000e+00> : vector<48x512xf32>
    %5 = tpu.matmul %3, %4, %cst {dimension_numbers = #tpu.dot_dimension_numbers<[1], [0], [0], [1], [0, 0, 1, 1], [], []>} : vector<48x1920xbf16>, vector<1920x512xbf16>, vector<48x512xf32> -> vector<48x512xf32>
    %c0_4 = arith.constant 0 : index
    %c0_5 = arith.constant 0 : index
    %c0_6 = arith.constant 0 : index
    %6 = vector.load %arg6[%c0_4, %c0_5, %c0_6] : memref<1x48x512xf32, #tpu.memory_space<vmem>>, vector<1x48x512xf32>
    %7 = vector.shape_cast %6 : vector<1x48x512xf32> to vector<48x512xf32>
    %8 = vector.shape_cast %5 : vector<48x512xf32> to vector<1x48x512xf32>
    tpu.vector_store %arg6[%c0_4, %c0_5, %c0_6], %8 {strides = array<i32>} : memref<1x48x512xf32, #tpu.memory_space<vmem>>, vector<1x48x512xf32>,
    return
  }
  func.func @transform_0(%arg0: i32, %arg1: i32) -> (i32, i32, i32, i32) {
    %c0_i32 = arith.constant 0 : i32
    %c0_i32_0 = arith.constant 0 : i32
    %c0_i32_1 = arith.constant 0 : i32
    %c0_i32_2 = arith.constant 0 : i32
    return %arg0, %c0_i32, %c0_i32_0, %c0_i32_1 : i32, i32, i32, i32
  }
  func.func @transform_1(%arg0: i32, %arg1: i32) -> (i32, i32) {
    %c0_i32 = arith.constant 0 : i32
    %c0_i32_0 = arith.constant 0 : i32
    %c0_i32_1 = arith.constant 0 : i32
    return %c0_i32, %c0_i32_0 : i32, i32
  }
  func.func @transform_2(%arg0: i32, %arg1: i32) -> (i32, i32) {
    %c0_i32 = arith.constant 0 : i32
    %c0_i32_0 = arith.constant 0 : i32
    %c0_i32_1 = arith.constant 0 : i32
    return %c0_i32, %c0_i32_0 : i32, i32
  }
  func.func @transform_3(%arg0: i32, %arg1: i32) -> (i32, i32) {
    %c0_i32 = arith.constant 0 : i32
    %c0_i32_0 = arith.constant 0 : i32
    return %c0_i32, %arg1 : i32, i32
  }
  func.func @transform_4(%arg0: i32, %arg1: i32) -> (i32, i32, i32) {
    %c0_i32 = arith.constant 0 : i32
    %c0_i32_0 = arith.constant 0 : i32
    return %arg0, %c0_i32, %arg1 : i32, i32, i32
  }
}

</mosaic_0001>

<llo_original>
// kernel: tpu_custom_call.1
$region0: #{tpu_custom_call.1}
  #allocation0 [shape = 'u32[]', space=smem, size = 0x4, offset = 0x4, fixed_abs, tag = 'smem constant byte address 0x4 - core index']
  #allocation1 [shape = 'u32[144,128]{1,0:T(1,128)}', space=vmem, size = 0x12000, scoped, tag = 'internal scratch']
  #allocation2 [shape = 'bf16[48,1920]{1,0:T(16,128)(2,1)}', space=vmem, size = 0x2d000, scoped, tag = 'scratch operand']
  %s0 = inlined_call_operand.vmem [shape: bf16[2,20,24,16], index: 0, kind: input, shape index: {}]
  %s1 = inlined_call_operand.vmem [shape: bf16[240,64], index: 1, kind: input, shape index: {}]
  %s2 = inlined_call_operand.vmem [shape: bf16[240,64], index: 2, kind: input, shape index: {}]
  %s3 = inlined_call_operand.hbm [shape: bf16[1920,512], index: 3, kind: input, shape index: {}]
  %s4 = inlined_call_operand.hbm [shape: f32[2,48,512], index: 4, kind: output, shape index: {}]
  %s5 = sld [smem:[#allocation0]]
  $region57: #{tpu_custom_call.1} parent=0
    _
  %s7 = ssub.s32 1, %s5
  %s8 = scalar_select 0, %s7, %s5
  $region1: #{tpu_custom_call.1} parent=0
    #allocation3 [shape = 'u8[1966080]{0}', space=vmem, size = 0x1e0000, scoped, tag = 'input window, operand 3, single buffered']
    #allocation4 [shape = 's32[2]{0}', space=sflag, size = 0x8, scoped, tag = 'scoped memory for tpu_custom_call.1']
    #allocation5 [shape = 's32[2]{0}', space=sflag, size = 0x8, scoped, tag = 'scoped memory for tpu_custom_call.1']
    #allocation6 [shape = 'u8[196608]{0}', space=vmem, size = 0x30000, scoped, tag = 'output window, operand 0']
    %9 = vsyncpa [#allocation4], 0
    %10 = vsyncpa [#allocation5], 0
    %s11 = scalar_lea.sflag [#allocation5], 1
    %12 = vsyncpa %s11, 0
    loop: start=0, step=1, limit=4
    $region2: #{tpu_custom_call.1} parent=1 // loop_pre_header
      _
    $region3: #{tpu_custom_call.1} parent=1 // loop_header
      %s14 = sphi 0, %s18
      %p15 = scmp.ge.s32.totalorder %s14, 4
      %s21 = sphi 0, %s33
      %s22 = sphi 0, %s29
      %s23 = sphi 0, %s21
      %s24 = sphi 0, %s22
      %s25 = sphi 0, %s23
      %s26 = sphi 0, %s24
      %s36 = sphi 0, %s38
      %s39 = sphi 0, %s36
      %s40 = sphi 0, %s39
      %s56 = sphi 0, %s40
      %s60 = sphi 0, %s60
      %s62 = sphi 0, %s60
      %s63 = sphi 0, %s62
      %s77 = sphi 0, %s63
      %s81 = sphi 0, %s81
      %s83 = sphi 0, %s81
      %s84 = sphi 0, %s83
      %s98 = sphi 0, %s84
      %s104 = sphi 0, %s106
      %s107 = sphi 0, %s104
      %s108 = sphi 0, %s107
      %s124 = sphi 0, %s108
      %s132 = sphi 0, %s134
      %s135 = sphi 0, %s132
      %s136 = sphi 0, %s135
      %s152 = sphi 0, %s136
    $region4: #{tpu_custom_call.1} parent=1 // loop_header_branch
      %17 = sbr.rel (%p15) target = $region8
    $region5: #{tpu_custom_call.1} parent=1 // loop_body
      %s19 = ssub.s32 %s14, 1
      %s20 = ssub.s32 %s14, 2
      %s27 = sadd.s32 1, %s22
      %p28 = scmp.ge.s32.totalorder %s27, 1
      %s29 = scalar_select %p28, 0, %s27
      %s30 = sadd.s32 1, %s21
      %s31 = scalar_select %p28, %s30, %s21
      %p32 = scmp.ge.s32.totalorder %s31, 2
      %s33 = scalar_select %p32, 0, %s31
      %s34 = ssub.s32 %s21, %s33
      %p35 = scmp.eq.s32.totalorder %s34, 0
      %s37 = sadd.s32 %s36, 1
      %s38 = scalar_select %p35, %s36, %s37
      %p41 = pneg %p35
      %p42 = scmp.eq.s32.totalorder %s14, 1
      %p43 = por %p41, %p42
      %p44 = scmp.ne.s32.totalorder %s36, %s39
      %p45 = scmp.eq.s32.totalorder %s14, 0
      %p46 = por %p44, %p45
      %p47 = scmp.ne.s32.totalorder %s36, %s39
      %p48 = scmp.eq.s32.totalorder %s19, 1
      %p49 = por %p47, %p48
      %p50 = scmp.ne.s32.totalorder %s39, %s40
      %p51 = scmp.eq.s32.totalorder %s19, 0
      %p52 = por %p50, %p51
      %p53 = scmp.ne.s32.totalorder %s39, %s40
      %p54 = scmp.eq.s32.totalorder %s20, 1
      %p55 = por %p53, %p54
      %p57 = scmp.ne.s32.totalorder %s40, %s56
      %p58 = scmp.eq.s32.totalorder %s20, 0
      %p59 = por %p57, %p58
      %s61 = sadd.s32 %s60, 1
      %p64 = scmp.eq.s32.totalorder %s14, 1
      %p65 = scmp.ne.s32.totalorder %s60, %s62
      %p66 = scmp.eq.s32.totalorder %s14, 0
      %p67 = por %p65, %p66
      %p68 = scmp.ne.s32.totalorder %s60, %s62
      %p69 = scmp.eq.s32.totalorder %s19, 1
      %p70 = por %p68, %p69
      %p71 = scmp.ne.s32.totalorder %s62, %s63
      %p72 = scmp.eq.s32.totalorder %s19, 0
      %p73 = por %p71, %p72
      %p74 = scmp.ne.s32.totalorder %s62, %s63
      %p75 = scmp.eq.s32.totalorder %s20, 1
      %p76 = por %p74, %p75
      %p78 = scmp.ne.s32.totalorder %s63, %s77
      %p79 = scmp.eq.s32.totalorder %s20, 0
      %p80 = por %p78, %p79
      %s82 = sadd.s32 %s81, 1
      %p85 = scmp.eq.s32.totalorder %s14, 1
      %p86 = scmp.ne.s32.totalorder %s81, %s83
      %p87 = scmp.eq.s32.totalorder %s14, 0
      %p88 = por %p86, %p87
      %p89 = scmp.ne.s32.totalorder %s81, %s83
      %p90 = scmp.eq.s32.totalorder %s19, 1
      %p91 = por %p89, %p90
      %p92 = scmp.ne.s32.totalorder %s83, %s84
      %p93 = scmp.eq.s32.totalorder %s19, 0
      %p94 = por %p92, %p93
      %p95 = scmp.ne.s32.totalorder %s83, %s84
      %p96 = scmp.eq.s32.totalorder %s20, 1
      %p97 = por %p95, %p96
      %p99 = scmp.ne.s32.totalorder %s84, %s98
      %p100 = scmp.eq.s32.totalorder %s20, 0
      %p101 = por %p99, %p100
      %s102 = ssub.s32 %s22, %s29
      %p103 = scmp.eq.s32.totalorder %s102, 0
      %s105 = sadd.s32 %s104, 1
      %s106 = scalar_select %p103, %s104, %s105
      %p109 = pneg %p103
      %p110 = scmp.eq.s32.totalorder %s14, 1
      %p111 = por %p109, %p110
      %p112 = scmp.ne.s32.totalorder %s104, %s107
      %p113 = scmp.eq.s32.totalorder %s14, 0
      %p114 = por %p112, %p113
      %p115 = scmp.ne.s32.totalorder %s104, %s107
      %p116 = scmp.eq.s32.totalorder %s19, 1
      %p117 = por %p115, %p116
      %p118 = scmp.ne.s32.totalorder %s107, %s108
      %p119 = scmp.eq.s32.totalorder %s19, 0
      %p120 = por %p118, %p119
      %p121 = scmp.ne.s32.totalorder %s107, %s108
      %p122 = scmp.eq.s32.totalorder %s20, 1
      %p123 = por %p121, %p122
      %p125 = scmp.ne.s32.totalorder %s108, %s124
      %p126 = scmp.eq.s32.totalorder %s20, 0
      %p127 = por %p125, %p126
      %s128 = ssub.s32 %s21, %s33
      %s129 = ssub.s32 %s22, %s29
      %s130 = sor.u32 %s128, %s129
      %p131 = scmp.eq.s32.totalorder %s130, 0
      %s133 = sadd.s32 %s132, 1
      %s134 = scalar_select %p131, %s132, %s133
      %p137 = pneg %p131
      %p138 = scmp.eq.s32.totalorder %s14, 1
      %p139 = por %p137, %p138
      %p140 = scmp.ne.s32.totalorder %s132, %s135
      %p141 = scmp.eq.s32.totalorder %s14, 0
      %p142 = por %p140, %p141
      %p143 = scmp.ne.s32.totalorder %s132, %s135
      %p144 = scmp.eq.s32.totalorder %s19, 1
      %p145 = por %p143, %p144
      %p146 = scmp.ne.s32.totalorder %s135, %s136
      %p147 = scmp.eq.s32.totalorder %s19, 0
      %p148 = por %p146, %p147
      %p149 = scmp.ne.s32.totalorder %s135, %s136
      %p150 = scmp.eq.s32.totalorder %s20, 1
      %p151 = por %p149, %p150
      %p153 = scmp.ne.s32.totalorder %s136, %s152
      %p154 = scmp.eq.s32.totalorder %s20, 0
      %p155 = por %p153, %p154
      %p156 = scmp.le.s32.totalorder 1, %s14
      %p157 = scmp.lt.s32.totalorder %s14, 3
      %p158 = pnand %p156, %p157
      %p159 = pneg %p158
      // Predicated region
      $region9: #{tpu_custom_call.1} parent=5 // pred_check
        _
      $region10: #{tpu_custom_call.1} parent=5 // pred_check_branch
        %161 = sbr.rel (%p158) target = $region12
      $region11: #{tpu_custom_call.1} parent=5 // pred_region
        %s162 = ssub.s32 %s14, 1
        // Predicated region
        $region13: #{tpu_custom_call.1} parent=11 // pred_check
          %p163 = pneg %p73
        $region14: #{tpu_custom_call.1} parent=11 // pred_check_branch
          %165 = sbr.rel (%p163) target = $region16
        $region15: #{tpu_custom_call.1} parent=11 // pred_region
          _
        $region16: #{tpu_custom_call.1} parent=11 // pred_fallthru
          _
        // Predicated region
        $region17: #{tpu_custom_call.1} parent=11 // pred_check
          %p166 = pneg %p94
        $region18: #{tpu_custom_call.1} parent=11 // pred_check_branch
          %168 = sbr.rel (%p166) target = $region20
        $region19: #{tpu_custom_call.1} parent=11 // pred_region
          _
        $region20: #{tpu_custom_call.1} parent=11 // pred_fallthru
          _
        // Predicated region
        $region21: #{tpu_custom_call.1} parent=11 // pred_check
          %p169 = pneg %p120
        $region22: #{tpu_custom_call.1} parent=11 // pred_check_branch
          %171 = sbr.rel (%p169) target = $region24
        $region23: #{tpu_custom_call.1} parent=11 // pred_region
          %s172 = smul.u32 4, %s24
          %s174 = ssub.s32 61440, 61440
          %175 = vsyncadd [#allocation4], %s174
          %s176 = smul.addr %s172, 64
          %s177 = scalar_lea.hbm %s3, %s176
          %s178 = sshll.u32 [#allocation3], 4
          %s179 = int_to_ptr.vmem [resolvable:$true] %s178
          %184 = dma.hbm_to_vmem [thread:$0]  %s177, 61440, %s179, [#allocation4], 256, 256, 16
        $region24: #{tpu_custom_call.1} parent=11 // pred_fallthru
          _
      $region12: #{tpu_custom_call.1} parent=5 // pred_fallthru
        _
      %p185 = scmp.lt.s32.totalorder %s14, 2
      // Predicated region
      $region25: #{tpu_custom_call.1} parent=5 // pred_check
        %p186 = pneg %p185
      $region26: #{tpu_custom_call.1} parent=5 // pred_check_branch
        %188 = sbr.rel (%p186) target = $region28
      $region27: #{tpu_custom_call.1} parent=5 // pred_region
        // Predicated region
        $region29: #{tpu_custom_call.1} parent=27 // pred_check
          %p189 = pneg %p46
        $region30: #{tpu_custom_call.1} parent=27 // pred_check_branch
          %191 = sbr.rel (%p189) target = $region32
        $region31: #{tpu_custom_call.1} parent=27 // pred_region
          %p192 = scmp.lt.s32.totalorder %s21, 1
          %s193 = scalar_select %p192, %s21, 1
          %s194 = smul.addr %s193, 60
          %s195 = smul.addr %s194, 4
          %s196 = scalar_lea.vmem %s0, %s195
        $region32: #{tpu_custom_call.1} parent=27 // pred_fallthru
          _
      $region28: #{tpu_custom_call.1} parent=5 // pred_fallthru
        _
      %p197 = scmp.le.s32.totalorder 1, %s14
      %p198 = scmp.lt.s32.totalorder %s14, 3
      %p199 = pnand %p197, %p198
      %p200 = pneg %p199
      // Predicated region
      $region33: #{tpu_custom_call.1} parent=5 // pred_check
        _
      $region34: #{tpu_custom_call.1} parent=5 // pred_check_branch
        %202 = sbr.rel (%p199) target = $region36
      $region35: #{tpu_custom_call.1} parent=5 // pred_region
        %s203 = ssub.s32 %s14, 1
        // Predicated region
        $region37: #{tpu_custom_call.1} parent=35 // pred_check
          %p204 = pneg %p120
        $region38: #{tpu_custom_call.1} parent=35 // pred_check_branch
          %206 = sbr.rel (%p204) target = $region40
        $region39: #{tpu_custom_call.1} parent=35 // pred_region
          %207 = dma.done [#allocation4], 61440
        $region40: #{tpu_custom_call.1} parent=35 // pred_fallthru
          _
        %p208 = scmp.lt.s32.totalorder %s23, 1
        %s209 = scalar_select %p208, %s23, 1
        %s210 = smul.addr %s209, 60
        %s211 = smul.addr %s210, 4
        %s212 = scalar_lea.vmem %s0, %s211
        %p213 = pneg %p52
        %p214 = pneg %p49
        %p215 = pneg %p73
        %p216 = pneg %p70
        %p217 = pneg %p94
        %p218 = pneg %p91
        %p219 = pneg %p120
        %p220 = pneg %p117
        %p221 = pneg %p148
        %p222 = pneg %p145
        %s223 = sand.u32 %s135, 1
        %s224 = scalar_lea.sflag [#allocation5], %s223
        %s225 = sand.u32 %s135, 1
        %s226 = smul.addr %s225, 192
        %s227 = scalar_lea.vmem [#allocation6], %s226
        %p228 = scmp.lt.s32.totalorder %s23, 1
        %s229 = scalar_select %p228, %s23, 1
        %s230 = smul.addr %s229, 60
        %s231 = smul.addr %s230, 4
        %s232 = scalar_lea.vmem %s0, %s231
        %s233 = smul.u32 4, %s24
        %s234 = smul.u32 4, %s24
        %p236 = scmp.eq.s32.totalorder %s24, 0
        // Predicated region
        $region41: #{tpu_custom_call.1} parent=35 // pred_check
          %p237 = pneg %p236
        $region42: #{tpu_custom_call.1} parent=35 // pred_check_branch
          %239 = sbr.rel (%p237) target = $region44
        $region43: #{tpu_custom_call.1} parent=35 // pred_region
          %v240 = vld [vmem:[%s232] sm:$0xf]
          %v241 = vld [vmem:[%s232 + $0x4] sm:$0xf]
          %v242 = vld [vmem:[%s232 + $0x8] sm:$0xf]
          %v243 = vld [vmem:[%s232 + $0xc] sm:$0xf]
          %v244 = vld [vmem:[%s232 + $0x10] sm:$0xf]
          %v245 = vld [vmem:[%s232 + $0x14] sm:$0xf]
          %v246 = vld [vmem:[%s232 + $0x18] sm:$0xf]
          %v247 = vld [vmem:[%s232 + $0x1c] sm:$0xf]
          %v248 = vld [vmem:[%s232 + $0x20] sm:$0xf]
          %v249 = vld [vmem:[%s232 + $0x24] sm:$0xf]
          %v250 = vld [vmem:[%s232 + $0x28] sm:$0xf]
          %v251 = vld [vmem:[%s232 + $0x2c] sm:$0xf]
          %v252 = vld [vmem:[%s232 + $0x30] sm:$0xf]
          %v253 = vld [vmem:[%s232 + $0x34] sm:$0xf]
          %v254 = vld [vmem:[%s232 + $0x38] sm:$0xf]
          %v255 = vld [vmem:[%s232 + $0x3c] sm:$0xf]
          %v256 = vld [vmem:[%s232 + $0x40] sm:$0xf]
          %v257 = vld [vmem:[%s232 + $0x44] sm:$0xf]
          %v258 = vld [vmem:[%s232 + $0x48] sm:$0xf]
          %v259 = vld [vmem:[%s232 + $0x4c] sm:$0xf]
          %v260 = vld [vmem:[%s232 + $0x50] sm:$0xf]
          %v261 = vld [vmem:[%s232 + $0x54] sm:$0xf]
          %v262 = vld [vmem:[%s232 + $0x58] sm:$0xf]
          %v263 = vld [vmem:[%s232 + $0x5c] sm:$0xf]
          %v264 = vld [vmem:[%s232 + $0x60] sm:$0xf]
          %v265 = vld [vmem:[%s232 + $0x64] sm:$0xf]
          %v266 = vld [vmem:[%s232 + $0x68] sm:$0xf]
          %v267 = vld [vmem:[%s232 + $0x6c] sm:$0xf]
          %v268 = vld [vmem:[%s232 + $0x70] sm:$0xf]
          %v269 = vld [vmem:[%s232 + $0x74] sm:$0xf]
          %v270 = vld [vmem:[%s232 + $0x78] sm:$0xf]
          %v271 = vld [vmem:[%s232 + $0x7c] sm:$0xf]
          %v272 = vld [vmem:[%s232 + $0x80] sm:$0xf]
          %v273 = vld [vmem:[%s232 + $0x84] sm:$0xf]
          %v274 = vld [vmem:[%s232 + $0x88] sm:$0xf]
          %v275 = vld [vmem:[%s232 + $0x8c] sm:$0xf]
          %v276 = vld [vmem:[%s232 + $0x90] sm:$0xf]
          %v277 = vld [vmem:[%s232 + $0x94] sm:$0xf]
          %v278 = vld [vmem:[%s232 + $0x98] sm:$0xf]
          %v279 = vld [vmem:[%s232 + $0x9c] sm:$0xf]
          %v280 = vld [vmem:[%s232 + $0xa0] sm:$0xf]
          %v281 = vld [vmem:[%s232 + $0xa4] sm:$0xf]
          %v282 = vld [vmem:[%s232 + $0xa8] sm:$0xf]
          %v283 = vld [vmem:[%s232 + $0xac] sm:$0xf]
          %v284 = vld [vmem:[%s232 + $0xb0] sm:$0xf]
          %v285 = vld [vmem:[%s232 + $0xb4] sm:$0xf]
          %v286 = vld [vmem:[%s232 + $0xb8] sm:$0xf]
          %v287 = vld [vmem:[%s232 + $0xbc] sm:$0xf]
          %v288 = vld [vmem:[%s232 + $0xc0] sm:$0xf]
          %v289 = vld [vmem:[%s232 + $0xc4] sm:$0xf]
          %v290 = vld [vmem:[%s232 + $0xc8] sm:$0xf]
          %v291 = vld [vmem:[%s232 + $0xcc] sm:$0xf]
          %v292 = vld [vmem:[%s232 + $0xd0] sm:$0xf]
          %v293 = vld [vmem:[%s232 + $0xd4] sm:$0xf]
          %v294 = vld [vmem:[%s232 + $0xd8] sm:$0xf]
          %v295 = vld [vmem:[%s232 + $0xdc] sm:$0xf]
          %v296 = vld [vmem:[%s232 + $0xe0] sm:$0xf]
          %v297 = vld [vmem:[%s232 + $0xe4] sm:$0xf]
          %v298 = vld [vmem:[%s232 + $0xe8] sm:$0xf]
          %v299 = vld [vmem:[%s232 + $0xec] sm:$0xf]
          %v318 = vunpack.c.l.b16 %v240
          %v319 = vunpack.c.l.b16 %v241
          %v320 = vunpack.c.l.b16 %v242
          %v321 = vunpack.c.l.b16 %v243
          %v322 = vunpack.c.l.b16 %v244
          %v323 = vunpack.c.l.b16 %v245
          %v324 = vunpack.c.l.b16 %v246
          %v325 = vunpack.c.l.b16 %v247
          %v326 = vunpack.c.l.b16 %v248
          %v327 = vunpack.c.l.b16 %v249
          %v328 = vunpack.c.l.b16 %v250
          %v329 = vunpack.c.l.b16 %v251
          %v330 = vunpack.c.l.b16 %v252
          %v331 = vunpack.c.l.b16 %v253
          %v332 = vunpack.c.l.b16 %v254
          %v333 = vunpack.c.l.b16 %v255
          %v334 = vunpack.c.l.b16 %v256
          %v335 = vunpack.c.l.b16 %v257
          %v336 = vpack.c.b16 %v319, %v318
          %v337 = vpack.c.b16 %v320, %v320
          %v338 = vpack.c.b16 %v322, %v321
          %v339 = vpack.c.b16 %v323, %v323
          %v340 = vpack.c.b16 %v325, %v324
          %v341 = vpack.c.b16 %v326, %v326
          %v342 = vpack.c.b16 %v328, %v327
          %v343 = vpack.c.b16 %v329, %v329
          %v344 = vpack.c.b16 %v331, %v330
          %v345 = vpack.c.b16 %v332, %v332
          %v346 = vpack.c.b16 %v334, %v333
          %v347 = vpack.c.b16 %v335, %v335
          %v351 = vunpack.c.l.b16 %v258
          %v352 = vunpack.c.l.b16 %v259
          %v353 = vunpack.c.l.b16 %v260
          %v354 = vpack.c.b16 %v352, %v351
          %v355 = vpack.c.b16 %v353, %v353
          %356 = vrot.lane.b32.xlu0 %v338, 16
          %v357 = vpop.permute.xlu0 %356
          %358 = vrot.lane.b32.xlu0 %v339, 16
          %v359 = vpop.permute.xlu0 %358
          %360 = vrot.lane.b32.xlu0 %v340, 16
          %v361 = vpop.permute.xlu0 %360
          %362 = vrot.lane.b32.xlu0 %v341, 16
          %v363 = vpop.permute.xlu0 %362
          %364 = vrot.lane.b32.xlu0 %v342, 16
          %v365 = vpop.permute.xlu0 %364
          %366 = vrot.lane.b32.xlu0 %v343, 16
          %v367 = vpop.permute.xlu0 %366
          %368 = vrot.lane.b32.xlu0 %v344, 16
          %v369 = vpop.permute.xlu0 %368
          %370 = vrot.lane.b32.xlu0 %v345, 16
          %v371 = vpop.permute.xlu0 %370
          %372 = vrot.lane.b32.xlu0 %v346, 16
          %v373 = vpop.permute.xlu0 %372
          %374 = vrot.lane.b32.xlu0 %v347, 16
          %v375 = vpop.permute.xlu0 %374
          %376 = vrot.lane.b32.xlu0 %v354, 16
          %v377 = vpop.permute.xlu0 %376
          %378 = vrot.lane.b32.xlu0 %v355, 16
          %v379 = vpop.permute.xlu0 %378
          %v383 = vunpack.c.l.b16 %v261
          %v384 = vunpack.c.l.b16 %v262
          %v385 = vunpack.c.l.b16 %v263
          %v386 = vpack.c.b16 %v384, %v383
          %v387 = vpack.c.b16 %v385, %v385
          %388 = vrot.lane.b32.xlu0 %v340, 32
          %v389 = vpop.permute.xlu0 %388
          %390 = vrot.lane.b32.xlu0 %v341, 32
          %v391 = vpop.permute.xlu0 %390
          %392 = vrot.lane.b32.xlu0 %v342, 32
          %v393 = vpop.permute.xlu0 %392
          %394 = vrot.lane.b32.xlu0 %v343, 32
          %v395 = vpop.permute.xlu0 %394
          %396 = vrot.lane.b32.xlu0 %v344, 32
          %v397 = vpop.permute.xlu0 %396
          %398 = vrot.lane.b32.xlu0 %v345, 32
          %v399 = vpop.permute.xlu0 %398
          %400 = vrot.lane.b32.xlu0 %v346, 32
          %v401 = vpop.permute.xlu0 %400
          %402 = vrot.lane.b32.xlu0 %v347, 32
          %v403 = vpop.permute.xlu0 %402
          %404 = vrot.lane.b32.xlu0 %v354, 32
          %v405 = vpop.permute.xlu0 %404
          %406 = vrot.lane.b32.xlu0 %v355, 32
          %v407 = vpop.permute.xlu0 %406
          %408 = vrot.lane.b32.xlu0 %v386, 32
          %v409 = vpop.permute.xlu0 %408
          %410 = vrot.lane.b32.xlu0 %v387, 32
          %v411 = vpop.permute.xlu0 %410
          %v415 = vunpack.c.l.b16 %v264
          %v416 = vunpack.c.l.b16 %v265
          %v417 = vunpack.c.l.b16 %v266
          %v418 = vpack.c.b16 %v416, %v415
          %v419 = vpack.c.b16 %v417, %v417
          %420 = vrot.lane.b32.xlu0 %v342, 48
          %v421 = vpop.permute.xlu0 %420
          %422 = vrot.lane.b32.xlu0 %v343, 48
          %v423 = vpop.permute.xlu0 %422
          %424 = vrot.lane.b32.xlu0 %v344, 48
          %v425 = vpop.permute.xlu0 %424
          %426 = vrot.lane.b32.xlu0 %v345, 48
          %v427 = vpop.permute.xlu0 %426
          %428 = vrot.lane.b32.xlu0 %v346, 48
          %v429 = vpop.permute.xlu0 %428
          %430 = vrot.lane.b32.xlu0 %v347, 48
          %v431 = vpop.permute.xlu0 %430
          %432 = vrot.lane.b32.xlu0 %v354, 48
          %v433 = vpop.permute.xlu0 %432
          %434 = vrot.lane.b32.xlu0 %v355, 48
          %v435 = vpop.permute.xlu0 %434
          %436 = vrot.lane.b32.xlu0 %v386, 48
          %v437 = vpop.permute.xlu0 %436
          %438 = vrot.lane.b32.xlu0 %v387, 48
          %v439 = vpop.permute.xlu0 %438
          %440 = vrot.lane.b32.xlu0 %v418, 48
          %v441 = vpop.permute.xlu0 %440
          %442 = vrot.lane.b32.xlu0 %v419, 48
          %v443 = vpop.permute.xlu0 %442
          %v447 = vunpack.c.l.b16 %v267
          %v448 = vunpack.c.l.b16 %v268
          %v449 = vunpack.c.l.b16 %v269
          %v450 = vpack.c.b16 %v448, %v447
          %v451 = vpack.c.b16 %v449, %v449
          %452 = vrot.lane.b32.xlu0 %v344, 64
          %v453 = vpop.permute.xlu0 %452
          %454 = vrot.lane.b32.xlu0 %v345, 64
          %v455 = vpop.permute.xlu0 %454
          %456 = vrot.lane.b32.xlu0 %v346, 64
          %v457 = vpop.permute.xlu0 %456
          %458 = vrot.lane.b32.xlu0 %v347, 64
          %v459 = vpop.permute.xlu0 %458
          %460 = vrot.lane.b32.xlu0 %v354, 64
          %v461 = vpop.permute.xlu0 %460
          %462 = vrot.lane.b32.xlu0 %v355, 64
          %v463 = vpop.permute.xlu0 %462
          %464 = vrot.lane.b32.xlu0 %v386, 64
          %v465 = vpop.permute.xlu0 %464
          %466 = vrot.lane.b32.xlu0 %v387, 64
          %v467 = vpop.permute.xlu0 %466
          %468 = vrot.lane.b32.xlu0 %v418, 64
          %v469 = vpop.permute.xlu0 %468
          %470 = vrot.lane.b32.xlu0 %v419, 64
          %v471 = vpop.permute.xlu0 %470
          %472 = vrot.lane.b32.xlu0 %v450, 64
          %v473 = vpop.permute.xlu0 %472
          %474 = vrot.lane.b32.xlu0 %v451, 64
          %v475 = vpop.permute.xlu0 %474
          %v479 = vunpack.c.l.b16 %v270
          %v480 = vunpack.c.l.b16 %v271
          %v481 = vunpack.c.l.b16 %v272
          %v482 = vpack.c.b16 %v480, %v479
          %v483 = vpack.c.b16 %v481, %v481
          %484 = vrot.lane.b32.xlu0 %v346, 80
          %v485 = vpop.permute.xlu0 %484
          %486 = vrot.lane.b32.xlu0 %v347, 80
          %v487 = vpop.permute.xlu0 %486
          %488 = vrot.lane.b32.xlu0 %v354, 80
          %v489 = vpop.permute.xlu0 %488
          %490 = vrot.lane.b32.xlu0 %v355, 80
          %v491 = vpop.permute.xlu0 %490
          %492 = vrot.lane.b32.xlu0 %v386, 80
          %v493 = vpop.permute.xlu0 %492
          %494 = vrot.lane.b32.xlu0 %v387, 80
          %v495 = vpop.permute.xlu0 %494
          %496 = vrot.lane.b32.xlu0 %v418, 80
          %v497 = vpop.permute.xlu0 %496
          %498 = vrot.lane.b32.xlu0 %v419, 80
          %v499 = vpop.permute.xlu0 %498
          %500 = vrot.lane.b32.xlu0 %v450, 80
          %v501 = vpop.permute.xlu0 %500
          %502 = vrot.lane.b32.xlu0 %v451, 80
          %v503 = vpop.permute.xlu0 %502
          %504 = vrot.lane.b32.xlu0 %v482, 80
          %v505 = vpop.permute.xlu0 %504
          %506 = vrot.lane.b32.xlu0 %v483, 80
          %v507 = vpop.permute.xlu0 %506
          %v511 = vunpack.c.l.b16 %v273
          %v512 = vunpack.c.l.b16 %v274
          %v513 = vunpack.c.l.b16 %v275
          %v514 = vpack.c.b16 %v512, %v511
          %v515 = vpack.c.b16 %v513, %v513
          %516 = vrot.lane.b32.xlu0 %v354, 96
          %v517 = vpop.permute.xlu0 %516
          %518 = vrot.lane.b32.xlu0 %v355, 96
          %v519 = vpop.permute.xlu0 %518
          %520 = vrot.lane.b32.xlu0 %v386, 96
          %v521 = vpop.permute.xlu0 %520
          %522 = vrot.lane.b32.xlu0 %v387, 96
          %v523 = vpop.permute.xlu0 %522
          %524 = vrot.lane.b32.xlu0 %v418, 96
          %v525 = vpop.permute.xlu0 %524
          %526 = vrot.lane.b32.xlu0 %v419, 96
          %v527 = vpop.permute.xlu0 %526
          %528 = vrot.lane.b32.xlu0 %v450, 96
          %v529 = vpop.permute.xlu0 %528
          %530 = vrot.lane.b32.xlu0 %v451, 96
          %v531 = vpop.permute.xlu0 %530
          %532 = vrot.lane.b32.xlu0 %v482, 96
          %v533 = vpop.permute.xlu0 %532
          %534 = vrot.lane.b32.xlu0 %v483, 96
          %v535 = vpop.permute.xlu0 %534
          %536 = vrot.lane.b32.xlu0 %v514, 96
          %v537 = vpop.permute.xlu0 %536
          %538 = vrot.lane.b32.xlu0 %v515, 96
          %v539 = vpop.permute.xlu0 %538
          %v543 = vunpack.c.l.b16 %v276
          %v544 = vunpack.c.l.b16 %v277
          %v545 = vunpack.c.l.b16 %v278
          %v546 = vpack.c.b16 %v544, %v543
          %v547 = vpack.c.b16 %v545, %v545
          %548 = vrot.lane.b32.xlu0 %v386, 112
          %v549 = vpop.permute.xlu0 %548
          %550 = vrot.lane.b32.xlu0 %v387, 112
          %v551 = vpop.permute.xlu0 %550
          %552 = vrot.lane.b32.xlu0 %v418, 112
          %v553 = vpop.permute.xlu0 %552
          %554 = vrot.lane.b32.xlu0 %v419, 112
          %v555 = vpop.permute.xlu0 %554
          %556 = vrot.lane.b32.xlu0 %v450, 112
          %v557 = vpop.permute.xlu0 %556
          %558 = vrot.lane.b32.xlu0 %v451, 112
          %v559 = vpop.permute.xlu0 %558
          %560 = vrot.lane.b32.xlu0 %v482, 112
          %v561 = vpop.permute.xlu0 %560
          %562 = vrot.lane.b32.xlu0 %v483, 112
          %v563 = vpop.permute.xlu0 %562
          %564 = vrot.lane.b32.xlu0 %v514, 112
          %v565 = vpop.permute.xlu0 %564
          %566 = vrot.lane.b32.xlu0 %v515, 112
          %v567 = vpop.permute.xlu0 %566
          %568 = vrot.lane.b32.xlu0 %v546, 112
          %v569 = vpop.permute.xlu0 %568
          %570 = vrot.lane.b32.xlu0 %v547, 112
          %v571 = vpop.permute.xlu0 %570
          %v575 = vunpack.c.l.b16 %v279
          %v576 = vunpack.c.l.b16 %v280
          %v577 = vunpack.c.l.b16 %v281
          %v578 = vpack.c.b16 %v576, %v575
          %v579 = vpack.c.b16 %v577, %v577
          %v583 = vunpack.c.l.b16 %v282
          %v584 = vunpack.c.l.b16 %v283
          %v585 = vunpack.c.l.b16 %v284
          %v586 = vpack.c.b16 %v584, %v583
          %v587 = vpack.c.b16 %v585, %v585
          %588 = vrot.lane.b32.xlu0 %v450, 16
          %v589 = vpop.permute.xlu0 %588
          %590 = vrot.lane.b32.xlu0 %v451, 16
          %v591 = vpop.permute.xlu0 %590
          %592 = vrot.lane.b32.xlu0 %v482, 16
          %v593 = vpop.permute.xlu0 %592
          %594 = vrot.lane.b32.xlu0 %v483, 16
          %v595 = vpop.permute.xlu0 %594
          %596 = vrot.lane.b32.xlu0 %v514, 16
          %v597 = vpop.permute.xlu0 %596
          %598 = vrot.lane.b32.xlu0 %v515, 16
          %v599 = vpop.permute.xlu0 %598
          %600 = vrot.lane.b32.xlu0 %v546, 16
          %v601 = vpop.permute.xlu0 %600
          %602 = vrot.lane.b32.xlu0 %v547, 16
          %v603 = vpop.permute.xlu0 %602
          %604 = vrot.lane.b32.xlu0 %v578, 16
          %v605 = vpop.permute.xlu0 %604
          %606 = vrot.lane.b32.xlu0 %v579, 16
          %v607 = vpop.permute.xlu0 %606
          %608 = vrot.lane.b32.xlu0 %v586, 16
          %v609 = vpop.permute.xlu0 %608
          %610 = vrot.lane.b32.xlu0 %v587, 16
          %v611 = vpop.permute.xlu0 %610
          %v615 = vunpack.c.l.b16 %v285
          %v616 = vunpack.c.l.b16 %v286
          %v617 = vunpack.c.l.b16 %v287
          %v618 = vpack.c.b16 %v616, %v615
          %v619 = vpack.c.b16 %v617, %v617
          %620 = vrot.lane.b32.xlu0 %v482, 32
          %v621 = vpop.permute.xlu0 %620
          %622 = vrot.lane.b32.xlu0 %v483, 32
          %v623 = vpop.permute.xlu0 %622
          %624 = vrot.lane.b32.xlu0 %v514, 32
          %v625 = vpop.permute.xlu0 %624
          %626 = vrot.lane.b32.xlu0 %v515, 32
          %v627 = vpop.permute.xlu0 %626
          %628 = vrot.lane.b32.xlu0 %v546, 32
          %v629 = vpop.permute.xlu0 %628
          %630 = vrot.lane.b32.xlu0 %v547, 32
          %v631 = vpop.permute.xlu0 %630
          %632 = vrot.lane.b32.xlu0 %v578, 32
          %v633 = vpop.permute.xlu0 %632
          %634 = vrot.lane.b32.xlu0 %v579, 32
          %v635 = vpop.permute.xlu0 %634
          %636 = vrot.lane.b32.xlu0 %v586, 32
          %v637 = vpop.permute.xlu0 %636
          %638 = vrot.lane.b32.xlu0 %v587, 32
          %v639 = vpop.permute.xlu0 %638
          %640 = vrot.lane.b32.xlu0 %v618, 32
          %v641 = vpop.permute.xlu0 %640
          %642 = vrot.lane.b32.xlu0 %v619, 32
          %v643 = vpop.permute.xlu0 %642
          %v647 = vunpack.c.l.b16 %v288
          %v648 = vunpack.c.l.b16 %v289
          %v649 = vunpack.c.l.b16 %v290
          %v650 = vpack.c.b16 %v648, %v647
          %v651 = vpack.c.b16 %v649, %v649
          %652 = vrot.lane.b32.xlu0 %v514, 48
          %v653 = vpop.permute.xlu0 %652
          %654 = vrot.lane.b32.xlu0 %v515, 48
          %v655 = vpop.permute.xlu0 %654
          %656 = vrot.lane.b32.xlu0 %v546, 48
          %v657 = vpop.permute.xlu0 %656
          %658 = vrot.lane.b32.xlu0 %v547, 48
          %v659 = vpop.permute.xlu0 %658
          %660 = vrot.lane.b32.xlu0 %v578, 48
          %v661 = vpop.permute.xlu0 %660
          %662 = vrot.lane.b32.xlu0 %v579, 48
          %v663 = vpop.permute.xlu0 %662
          %664 = vrot.lane.b32.xlu0 %v586, 48
          %v665 = vpop.permute.xlu0 %664
          %666 = vrot.lane.b32.xlu0 %v587, 48
          %v667 = vpop.permute.xlu0 %666
          %668 = vrot.lane.b32.xlu0 %v618, 48
          %v669 = vpop.permute.xlu0 %668
          %670 = vrot.lane.b32.xlu0 %v619, 48
          %v671 = vpop.permute.xlu0 %670
          %672 = vrot.lane.b32.xlu0 %v650, 48
          %v673 = vpop.permute.xlu0 %672
          %674 = vrot.lane.b32.xlu0 %v651, 48
          %v675 = vpop.permute.xlu0 %674
          %v679 = vunpack.c.l.b16 %v291
          %v680 = vunpack.c.l.b16 %v292
          %v681 = vunpack.c.l.b16 %v293
          %v682 = vpack.c.b16 %v680, %v679
          %v683 = vpack.c.b16 %v681, %v681
          %684 = vrot.lane.b32.xlu0 %v546, 64
          %v685 = vpop.permute.xlu0 %684
          %686 = vrot.lane.b32.xlu0 %v547, 64
          %v687 = vpop.permute.xlu0 %686
          %688 = vrot.lane.b32.xlu0 %v578, 64
          %v689 = vpop.permute.xlu0 %688
          %690 = vrot.lane.b32.xlu0 %v579, 64
          %v691 = vpop.permute.xlu0 %690
          %692 = vrot.lane.b32.xlu0 %v586, 64
          %v693 = vpop.permute.xlu0 %692
          %694 = vrot.lane.b32.xlu0 %v587, 64
          %v695 = vpop.permute.xlu0 %694
          %696 = vrot.lane.b32.xlu0 %v618, 64
          %v697 = vpop.permute.xlu0 %696
          %698 = vrot.lane.b32.xlu0 %v619, 64
          %v699 = vpop.permute.xlu0 %698
          %700 = vrot.lane.b32.xlu0 %v650, 64
          %v701 = vpop.permute.xlu0 %700
          %702 = vrot.lane.b32.xlu0 %v651, 64
          %v703 = vpop.permute.xlu0 %702
          %704 = vrot.lane.b32.xlu0 %v682, 64
          %v705 = vpop.permute.xlu0 %704
          %706 = vrot.lane.b32.xlu0 %v683, 64
          %v707 = vpop.permute.xlu0 %706
          %v711 = vunpack.c.l.b16 %v294
          %v712 = vunpack.c.l.b16 %v295
          %v713 = vunpack.c.l.b16 %v296
          %v714 = vpack.c.b16 %v712, %v711
          %v715 = vpack.c.b16 %v713, %v713
          %716 = vrot.lane.b32.xlu0 %v578, 80
          %v717 = vpop.permute.xlu0 %716
          %718 = vrot.lane.b32.xlu0 %v579, 80
          %v719 = vpop.permute.xlu0 %718
          %720 = vrot.lane.b32.xlu0 %v586, 80
          %v721 = vpop.permute.xlu0 %720
          %722 = vrot.lane.b32.xlu0 %v587, 80
          %v723 = vpop.permute.xlu0 %722
          %724 = vrot.lane.b32.xlu0 %v618, 80
          %v725 = vpop.permute.xlu0 %724
          %726 = vrot.lane.b32.xlu0 %v619, 80
          %v727 = vpop.permute.xlu0 %726
          %728 = vrot.lane.b32.xlu0 %v650, 80
          %v729 = vpop.permute.xlu0 %728
          %730 = vrot.lane.b32.xlu0 %v651, 80
          %v731 = vpop.permute.xlu0 %730
          %732 = vrot.lane.b32.xlu0 %v682, 80
          %v733 = vpop.permute.xlu0 %732
          %734 = vrot.lane.b32.xlu0 %v683, 80
          %v735 = vpop.permute.xlu0 %734
          %736 = vrot.lane.b32.xlu0 %v714, 80
          %v737 = vpop.permute.xlu0 %736
          %738 = vrot.lane.b32.xlu0 %v715, 80
          %v739 = vpop.permute.xlu0 %738
          %v743 = vunpack.c.l.b16 %v297
          %v744 = vunpack.c.l.b16 %v298
          %v745 = vunpack.c.l.b16 %v299
          %v746 = vpack.c.b16 %v744, %v743
          %v747 = vpack.c.b16 %v745, %v745
          %748 = vrot.lane.b32.xlu0 %v586, 96
          %v749 = vpop.permute.xlu0 %748
          %750 = vrot.lane.b32.xlu0 %v587, 96
          %v751 = vpop.permute.xlu0 %750
          %752 = vrot.lane.b32.xlu0 %v618, 96
          %v753 = vpop.permute.xlu0 %752
          %754 = vrot.lane.b32.xlu0 %v619, 96
          %v755 = vpop.permute.xlu0 %754
          %756 = vrot.lane.b32.xlu0 %v650, 96
          %v757 = vpop.permute.xlu0 %756
          %758 = vrot.lane.b32.xlu0 %v651, 96
          %v759 = vpop.permute.xlu0 %758
          %760 = vrot.lane.b32.xlu0 %v682, 96
          %v761 = vpop.permute.xlu0 %760
          %762 = vrot.lane.b32.xlu0 %v683, 96
          %v763 = vpop.permute.xlu0 %762
          %764 = vrot.lane.b32.xlu0 %v714, 96
          %v765 = vpop.permute.xlu0 %764
          %766 = vrot.lane.b32.xlu0 %v715, 96
          %v767 = vpop.permute.xlu0 %766
          %768 = vrot.lane.b32.xlu0 %v746, 96
          %v769 = vpop.permute.xlu0 %768
          %770 = vrot.lane.b32.xlu0 %v747, 96
          %v771 = vpop.permute.xlu0 %770
          %vm772 = vcmask 130048
          %v775 = vsel %vm772, %v336, %v357
          %v778 = vsel %vm772, %v337, %v359
          %v781 = vsel %vm772, %v338, %v361
          %v784 = vsel %vm772, %v339, %v363
          %v787 = vsel %vm772, %v340, %v365
          %v790 = vsel %vm772, %v341, %v367
          %v793 = vsel %vm772, %v342, %v369
          %v796 = vsel %vm772, %v343, %v371
          %v799 = vsel %vm772, %v344, %v373
          %v802 = vsel %vm772, %v345, %v375
          %v805 = vsel %vm772, %v346, %v377
          %v808 = vsel %vm772, %v347, %v379
          %vm809 = vcmask 261120
          %v811 = vsel %vm809, %v775, %v389
          %v813 = vsel %vm809, %v778, %v391
          %v815 = vsel %vm809, %v781, %v393
          %v817 = vsel %vm809, %v784, %v395
          %v819 = vsel %vm809, %v787, %v397
          %v821 = vsel %vm809, %v790, %v399
          %v823 = vsel %vm809, %v793, %v401
          %v825 = vsel %vm809, %v796, %v403
          %v827 = vsel %vm809, %v799, %v405
          %v829 = vsel %vm809, %v802, %v407
          %v831 = vsel %vm809, %v805, %v409
          %v833 = vsel %vm809, %v808, %v411
          %vm834 = vcmask 392192
          %v836 = vsel %vm834, %v811, %v421
          %v838 = vsel %vm834, %v813, %v423
          %v840 = vsel %vm834, %v815, %v425
          %v842 = vsel %vm834, %v817, %v427
          %v844 = vsel %vm834, %v819, %v429
          %v846 = vsel %vm834, %v821, %v431
          %v848 = vsel %vm834, %v823, %v433
          %v850 = vsel %vm834, %v825, %v435
          %v852 = vsel %vm834, %v827, %v437
          %v854 = vsel %vm834, %v829, %v439
          %v856 = vsel %vm834, %v831, %v441
          %v858 = vsel %vm834, %v833, %v443
          %vm859 = vcmask 523264
          %v861 = vsel %vm859, %v836, %v453
          %v863 = vsel %vm859, %v838, %v455
          %v865 = vsel %vm859, %v840, %v457
          %v867 = vsel %vm859, %v842, %v459
          %v869 = vsel %vm859, %v844, %v461
          %v871 = vsel %vm859, %v846, %v463
          %v873 = vsel %vm859, %v848, %v465
          %v875 = vsel %vm859, %v850, %v467
          %v877 = vsel %vm859, %v852, %v469
          %v879 = vsel %vm859, %v854, %v471
          %v881 = vsel %vm859, %v856, %v473
          %v883 = vsel %vm859, %v858, %v475
          %vm884 = vcmask 654336
          %v886 = vsel %vm884, %v861, %v485
          %v888 = vsel %vm884, %v863, %v487
          %v890 = vsel %vm884, %v865, %v489
          %v892 = vsel %vm884, %v867, %v491
          %v894 = vsel %vm884, %v869, %v493
          %v896 = vsel %vm884, %v871, %v495
          %v898 = vsel %vm884, %v873, %v497
          %v900 = vsel %vm884, %v875, %v499
          %v902 = vsel %vm884, %v877, %v501
          %v904 = vsel %vm884, %v879, %v503
          %v906 = vsel %vm884, %v881, %v505
          %v908 = vsel %vm884, %v883, %v507
          %vm909 = vcmask 785408
          %v911 = vsel %vm909, %v886, %v517
          %v913 = vsel %vm909, %v888, %v519
          %v915 = vsel %vm909, %v890, %v521
          %v917 = vsel %vm909, %v892, %v523
          %v919 = vsel %vm909, %v894, %v525
          %v921 = vsel %vm909, %v896, %v527
          %v923 = vsel %vm909, %v898, %v529
          %v925 = vsel %vm909, %v900, %v531
          %v927 = vsel %vm909, %v902, %v533
          %v929 = vsel %vm909, %v904, %v535
          %v931 = vsel %vm909, %v906, %v537
          %v933 = vsel %vm909, %v908, %v539
          %vm934 = vcmask 916480
          %v936 = vsel %vm934, %v911, %v549
          %v938 = vsel %vm934, %v913, %v551
          %v940 = vsel %vm934, %v915, %v553
          %v942 = vsel %vm934, %v917, %v555
          %v944 = vsel %vm934, %v919, %v557
          %v946 = vsel %vm934, %v921, %v559
          %v948 = vsel %vm934, %v923, %v561
          %v950 = vsel %vm934, %v925, %v563
          %v952 = vsel %vm934, %v927, %v565
          %v954 = vsel %vm934, %v929, %v567
          %v956 = vsel %vm934, %v931, %v569
          %v958 = vsel %vm934, %v933, %v571
          %v961 = vsel %vm772, %v418, %v589
          %v964 = vsel %vm772, %v419, %v591
          %v967 = vsel %vm772, %v450, %v593
          %v970 = vsel %vm772, %v451, %v595
          %v973 = vsel %vm772, %v482, %v597
          %v976 = vsel %vm772, %v483, %v599
          %v979 = vsel %vm772, %v514, %v601
          %v982 = vsel %vm772, %v515, %v603
          %v985 = vsel %vm772, %v546, %v605
          %v988 = vsel %vm772, %v547, %v607
          %v991 = vsel %vm772, %v578, %v609
          %v994 = vsel %vm772, %v579, %v611
          %v996 = vsel %vm809, %v961, %v621
          %v998 = vsel %vm809, %v964, %v623
          %v1000 = vsel %vm809, %v967, %v625
          %v1002 = vsel %vm809, %v970, %v627
          %v1004 = vsel %vm809, %v973, %v629
          %v1006 = vsel %vm809, %v976, %v631
          %v1008 = vsel %vm809, %v979, %v633
          %v1010 = vsel %vm809, %v982, %v635
          %v1012 = vsel %vm809, %v985, %v637
          %v1014 = vsel %vm809, %v988, %v639
          %v1016 = vsel %vm809, %v991, %v641
          %v1018 = vsel %vm809, %v994, %v643
          %v1020 = vsel %vm834, %v996, %v653
          %v1022 = vsel %vm834, %v998, %v655
          %v1024 = vsel %vm834, %v1000, %v657
          %v1026 = vsel %vm834, %v1002, %v659
          %v1028 = vsel %vm834, %v1004, %v661
          %v1030 = vsel %vm834, %v1006, %v663
          %v1032 = vsel %vm834, %v1008, %v665
          %v1034 = vsel %vm834, %v1010, %v667
          %v1036 = vsel %vm834, %v1012, %v669
          %v1038 = vsel %vm834, %v1014, %v671
          %v1040 = vsel %vm834, %v1016, %v673
          %v1042 = vsel %vm834, %v1018, %v675
          %v1044 = vsel %vm859, %v1020, %v685
          %v1046 = vsel %vm859, %v1022, %v687
          %v1048 = vsel %vm859, %v1024, %v689
          %v1050 = vsel %vm859, %v1026, %v691
          %v1052 = vsel %vm859, %v1028, %v693
          %v1054 = vsel %vm859, %v1030, %v695
          %v1056 = vsel %vm859, %v1032, %v697
          %v1058 = vsel %vm859, %v1034, %v699
          %v1060 = vsel %vm859, %v1036, %v701
          %v1062 = vsel %vm859, %v1038, %v703
          %v1064 = vsel %vm859, %v1040, %v705
          %v1066 = vsel %vm859, %v1042, %v707
          %v1068 = vsel %vm884, %v1044, %v717
          %v1070 = vsel %vm884, %v1046, %v719
          %v1072 = vsel %vm884, %v1048, %v721
          %v1074 = vsel %vm884, %v1050, %v723
          %v1076 = vsel %vm884, %v1052, %v725
          %v1078 = vsel %vm884, %v1054, %v727
          %v1080 = vsel %vm884, %v1056, %v729
          %v1082 = vsel %vm884, %v1058, %v731
          %v1084 = vsel %vm884, %v1060, %v733
          %v1086 = vsel %vm884, %v1062, %v735
          %v1088 = vsel %vm884, %v1064, %v737
          %v1090 = vsel %vm884, %v1066, %v739
          %v1092 = vsel %vm909, %v1068, %v749
          %v1094 = vsel %vm909, %v1070, %v751
          %v1096 = vsel %vm909, %v1072, %v753
          %v1098 = vsel %vm909, %v1074, %v755
          %v1100 = vsel %vm909, %v1076, %v757
          %v1102 = vsel %vm909, %v1078, %v759
          %v1104 = vsel %vm909, %v1080, %v761
          %v1106 = vsel %vm909, %v1082, %v763
          %v1108 = vsel %vm909, %v1084, %v765
          %v1110 = vsel %vm909, %v1086, %v767
          %v1112 = vsel %vm909, %v1088, %v769
          %v1114 = vsel %vm909, %v1090, %v771
          %v1139 = vunpack.c.l.b16 %v936
          %v1140 = vunpack.c.l.b16 %v1092
          %v1141 = vunpack.c.h.b16 %v936
          %v1142 = vunpack.c.h.b16 %v1092
          %v1143 = vunpack.c.l.b16 %v938
          %v1144 = vunpack.c.l.b16 %v1094
          %v1145 = vunpack.c.l.b16 %v940
          %v1146 = vunpack.c.l.b16 %v1096
          %v1147 = vunpack.c.h.b16 %v940
          %v1148 = vunpack.c.h.b16 %v1096
          %v1149 = vunpack.c.l.b16 %v942
          %v1150 = vunpack.c.l.b16 %v1098
          %v1151 = vunpack.c.l.b16 %v944
          %v1152 = vunpack.c.l.b16 %v1100
          %v1153 = vunpack.c.h.b16 %v944
          %v1154 = vunpack.c.h.b16 %v1100
          %v1155 = vunpack.c.l.b16 %v946
          %v1156 = vunpack.c.l.b16 %v1102
          %v1157 = vunpack.c.l.b16 %v948
          %v1158 = vunpack.c.l.b16 %v1104
          %v1159 = vunpack.c.h.b16 %v948
          %v1160 = vunpack.c.h.b16 %v1104
          %v1161 = vunpack.c.l.b16 %v950
          %v1162 = vunpack.c.l.b16 %v1106
          %v1163 = vunpack.c.l.b16 %v952
          %v1164 = vunpack.c.l.b16 %v1108
          %v1165 = vunpack.c.h.b16 %v952
          %v1166 = vunpack.c.h.b16 %v1108
          %v1167 = vunpack.c.l.b16 %v954
          %v1168 = vunpack.c.l.b16 %v1110
          %v1169 = vunpack.c.l.b16 %v956
          %v1170 = vunpack.c.l.b16 %v1112
          %v1171 = vunpack.c.h.b16 %v956
          %v1172 = vunpack.c.h.b16 %v1112
          %v1173 = vunpack.c.l.b16 %v958
          %v1174 = vunpack.c.l.b16 %v1114
          %v1175 = vld [vmem:[%s1] sm:$0xf]
          %v1176 = vld [vmem:[%s1 + $0x4] sm:$0xf]
          %v1177 = vld [vmem:[%s1 + $0x8] sm:$0xf]
          %v1178 = vld [vmem:[%s1 + $0xc] sm:$0xf]
          %v1179 = vld [vmem:[%s1 + $0x10] sm:$0xf]
          %v1180 = vld [vmem:[%s1 + $0x14] sm:$0xf]
          %v1181 = vld [vmem:[%s1 + $0x18] sm:$0xf]
          %v1182 = vld [vmem:[%s1 + $0x1c] sm:$0xf]
          %v1183 = vld [vmem:[%s1 + $0x20] sm:$0xf]
          %v1184 = vld [vmem:[%s1 + $0x24] sm:$0xf]
          %v1185 = vld [vmem:[%s1 + $0x28] sm:$0xf]
          %v1186 = vld [vmem:[%s1 + $0x2c] sm:$0xf]
          %v1187 = vld [vmem:[%s1 + $0x30] sm:$0xf]
          %v1188 = vld [vmem:[%s1 + $0x34] sm:$0xf]
          %v1189 = vld [vmem:[%s1 + $0x38] sm:$0xf]
          %v1190 = vld [vmem:[%s1 + $0x3c] sm:$0xf]
          %v1191 = vld [vmem:[%s1 + $0x40] sm:$0xf]
          %v1192 = vld [vmem:[%s1 + $0x44] sm:$0xf]
          %v1193 = vld [vmem:[%s1 + $0x48] sm:$0xf]
          %v1194 = vld [vmem:[%s1 + $0x4c] sm:$0xf]
          %v1195 = vld [vmem:[%s1 + $0x50] sm:$0xf]
          %v1196 = vld [vmem:[%s1 + $0x54] sm:$0xf]
          %v1197 = vld [vmem:[%s1 + $0x58] sm:$0xf]
          %v1198 = vld [vmem:[%s1 + $0x5c] sm:$0xf]
          %v1199 = vld [vmem:[%s1 + $0x60] sm:$0xf]
          %v1200 = vld [vmem:[%s1 + $0x64] sm:$0xf]
          %v1201 = vld [vmem:[%s1 + $0x68] sm:$0xf]
          %v1202 = vld [vmem:[%s1 + $0x6c] sm:$0xf]
          %v1203 = vld [vmem:[%s1 + $0x70] sm:$0xf]
          %v1204 = vld [vmem:[%s1 + $0x74] sm:$0xf]
          %v1205 = vpack.c.b16 %v1141, %v1139
          %v1206 = vpack.c.b16 %v1142, %v1140
          %v1207 = vpack.c.b16 %v1145, %v1143
          %v1208 = vpack.c.b16 %v1146, %v1144
          %v1209 = vpack.c.b16 %v1149, %v1147
          %v1210 = vpack.c.b16 %v1150, %v1148
          %v1211 = vpack.c.b16 %v1153, %v1151
          %v1212 = vpack.c.b16 %v1154, %v1152
          %v1213 = vpack.c.b16 %v1157, %v1155
          %v1214 = vpack.c.b16 %v1158, %v1156
          %v1215 = vpack.c.b16 %v1161, %v1159
          %v1216 = vpack.c.b16 %v1162, %v1160
          %v1217 = vpack.c.b16 %v1165, %v1163
          %v1218 = vpack.c.b16 %v1166, %v1164
          %v1219 = vpack.c.b16 %v1169, %v1167
          %v1220 = vpack.c.b16 %v1170, %v1168
          %v1221 = vpack.c.b16 %v1173, %v1171
          %v1222 = vpack.c.b16 %v1174, %v1172
          %v1262 = vunpack.c.l.b16 %v1175
          %v1263 = vunpack.c.l.b16 %v1176
          %v1264 = vunpack.c.l.b16 %v1177
          %v1265 = vunpack.c.l.b16 %v1178
          %v1266 = vunpack.c.l.b16 %v1179
          %v1267 = vunpack.c.l.b16 %v1180
          %v1268 = vunpack.c.l.b16 %v1181
          %v1269 = vunpack.c.l.b16 %v1182
          %v1270 = vunpack.c.l.b16 %v1183
          %v1271 = vunpack.c.l.b16 %v1184
          %v1272 = vunpack.c.l.b16 %v1185
          %v1273 = vunpack.c.l.b16 %v1186
          %v1274 = vunpack.c.l.b16 %v1187
          %v1275 = vunpack.c.l.b16 %v1188
          %v1276 = vunpack.c.l.b16 %v1189
          %v1277 = vunpack.c.l.b16 %v1190
          %v1278 = vunpack.c.l.b16 %v1191
          %v1279 = vunpack.c.l.b16 %v1192
          %v1280 = vunpack.c.l.b16 %v1193
          %v1281 = vunpack.c.l.b16 %v1194
          %v1282 = vunpack.c.l.b16 %v1195
          %v1283 = vunpack.c.l.b16 %v1196
          %v1284 = vunpack.c.l.b16 %v1197
          %v1285 = vunpack.c.l.b16 %v1198
          %v1286 = vunpack.c.l.b16 %v1199
          %v1287 = vunpack.c.l.b16 %v1200
          %v1288 = vunpack.c.l.b16 %v1201
          %v1289 = vunpack.c.l.b16 %v1202
          %v1290 = vunpack.c.l.b16 %v1203
          %v1291 = vunpack.c.l.b16 %v1204
          %v1292 = vpack.c.b16 %v1263, %v1262
          %v1293 = vpack.c.b16 %v1265, %v1264
          %v1294 = vpack.c.b16 %v1267, %v1266
          %v1295 = vpack.c.b16 %v1269, %v1268
          %v1296 = vpack.c.b16 %v1271, %v1270
          %v1297 = vpack.c.b16 %v1273, %v1272
          %v1298 = vpack.c.b16 %v1275, %v1274
          %v1299 = vpack.c.b16 %v1277, %v1276
          %v1300 = vpack.c.b16 %v1279, %v1278
          %v1301 = vpack.c.b16 %v1281, %v1280
          %v1302 = vpack.c.b16 %v1283, %v1282
          %v1303 = vpack.c.b16 %v1285, %v1284
          %v1304 = vpack.c.b16 %v1287, %v1286
          %v1305 = vpack.c.b16 %v1289, %v1288
          %v1306 = vpack.c.b16 %v1291, %v1290
          %v1323 = vsel %vm934, %v1206, 0
          %v1326 = vsel %vm934, %v1208, 0
          %v1329 = vsel %vm934, %v1210, 0
          %v1332 = vsel %vm934, %v1212, 0
          %v1335 = vsel %vm934, %v1214, 0
          %v1338 = vsel %vm934, %v1216, 0
          %v1341 = vsel %vm934, %v1218, 0
          %v1344 = vsel %vm934, %v1220, 0
          %v1347 = vsel %vm934, %v1222, 0
          %1349 = vmatprep.subr.bf16.mxu0 0
          %1350 = vmatpush1.bf16.msra.mxu0 %v1292
          %1351 = vmatprep.subr.bf16.mxu0 0
          %1352 = vmatpush1.bf16.msra.mxu0 %v1293
          %1353 = vmatprep.subr.bf16.mxu0 0
          %1354 = vmatpush1.bf16.msra.mxu0 %v1294
          %1355 = vmatprep.subr.bf16.mxu0 0
          %1356 = vmatpush1.bf16.msra.mxu0 %v1295
          %1357 = vmatprep.subr.bf16.mxu0 0
          %1358 = vmatpush1.bf16.msra.mxu0 %v1296
          %1359 = vmatprep.subr.bf16.mxu0 0
          %1360 = vmatpush1.bf16.msra.mxu0 %v1297
          %1361 = vmatprep.subr.bf16.mxu0 0
          %1362 = vmatpush1.bf16.msra.mxu0 %v1298
          %1363 = vmatprep.subr.bf16.mxu0 0
          %1364 = vmatpush1.bf16.msra.mxu0 %v1299
          %1365 = vmatprep.subr.bf16.mxu0 0
          %1366 = vmatpush1.bf16.msra.mxu0 %v1300
          %1367 = vmatprep.subr.bf16.mxu0 0
          %1368 = vmatpush1.bf16.msra.mxu0 %v1301
          %1369 = vmatprep.subr.bf16.mxu0 0
          %1370 = vmatpush1.bf16.msra.mxu0 %v1302
          %1371 = vmatprep.subr.bf16.mxu0 0
          %1372 = vmatpush1.bf16.msra.mxu0 %v1303
          %1373 = vmatprep.subr.bf16.mxu0 0
          %1374 = vmatpush1.bf16.msra.mxu0 %v1304
          %1375 = vmatprep.subr.bf16.mxu0 0
          %1376 = vmatpush1.bf16.msra.mxu0 %v1305
          %1377 = vmatprep.subr.bf16.mxu0 0
          %1378 = vmatpush1.bf16.msra.mxu0 %v1306
          %1379 = vmatprep.subr.bf16.mxu0 0
          %1380 = vmatpush1.bf16.msra.mxu0 0
          %1381 = vmatprep.mubr.bf16.mxu0 %v1323
          %1382 = vmatmul.mubr.bf16.gmra.mrb[0].mxu0 %v1205
          %v1383 = vpop.f32.mrb[0].mxu0
          %v1384 = vadd.f32 0.0, %v1383
          %v1385 = vpop.f32.mrb[0].mxu0
          %v1386 = vpop.f32.mrb[0].mxu0
          %v1387 = vadd.f32 0.0, %v1386
          %v1388 = vpop.f32.mrb[0].mxu0
          %1389 = vmatprep.mubr.bf16.mxu0 %v1326
          %1390 = vmatmul.mubr.bf16.gmra.mrb[0].mxu0 %v1207
          %v1391 = vpop.f32.mrb[0].mxu0
          %v1392 = vadd.f32 0.0, %v1391
          %v1393 = vpop.f32.mrb[0].mxu0
          %v1394 = vpop.f32.mrb[0].mxu0
          %v1395 = vadd.f32 0.0, %v1394
          %v1396 = vpop.f32.mrb[0].mxu0
          %1397 = vmatprep.mubr.bf16.mxu0 %v1329
          %1398 = vmatmul.mubr.bf16.gmra.mrb[0].mxu0 %v1209
          %v1399 = vpop.f32.mrb[0].mxu0
          %v1400 = vadd.f32 0.0, %v1399
          %v1401 = vpop.f32.mrb[0].mxu0
          %v1402 = vpop.f32.mrb[0].mxu0
          %v1403 = vadd.f32 0.0, %v1402
          %v1404 = vpop.f32.mrb[0].mxu0
          %1405 = vmatprep.mubr.bf16.mxu0 %v1332
          %1406 = vmatmul.mubr.bf16.gmra.mrb[0].mxu0 %v1211
          %v1407 = vpop.f32.mrb[0].mxu0
          %v1408 = vadd.f32 0.0, %v1407
          %v1409 = vpop.f32.mrb[0].mxu0
          %v1410 = vpop.f32.mrb[0].mxu0
          %v1411 = vadd.f32 0.0, %v1410
          %v1412 = vpop.f32.mrb[0].mxu0
          %1413 = vmatprep.mubr.bf16.mxu0 %v1335
          %1414 = vmatmul.mubr.bf16.gmra.mrb[0].mxu0 %v1213
          %v1415 = vpop.f32.mrb[0].mxu0
          %v1416 = vadd.f32 0.0, %v1415
          %v1417 = vpop.f32.mrb[0].mxu0
          %v1418 = vpop.f32.mrb[0].mxu0
          %v1419 = vadd.f32 0.0, %v1418
          %v1420 = vpop.f32.mrb[0].mxu0
          %1421 = vmatprep.mubr.bf16.mxu0 %v1338
          %1422 = vmatmul.mubr.bf16.gmra.mrb[0].mxu0 %v1215
          %v1423 = vpop.f32.mrb[0].mxu0
          %v1424 = vadd.f32 0.0, %v1423
          %v1425 = vpop.f32.mrb[0].mxu0
          %v1426 = vpop.f32.mrb[0].mxu0
          %v1427 = vadd.f32 0.0, %v1426
          %v1428 = vpop.f32.mrb[0].mxu0
          %1429 = vmatprep.mubr.bf16.mxu0 %v1341
          %1430 = vmatmul.mubr.bf16.gmra.mrb[0].mxu0 %v1217
          %v1431 = vpop.f32.mrb[0].mxu0
          %v1432 = vadd.f32 0.0, %v1431
          %v1433 = vpop.f32.mrb[0].mxu0
          %v1434 = vpop.f32.mrb[0].mxu0
          %v1435 = vadd.f32 0.0, %v1434
          %v1436 = vpop.f32.mrb[0].mxu0
          %1437 = vmatprep.mubr.bf16.mxu0 %v1344
          %1438 = vmatmul.mubr.bf16.gmra.mrb[0].mxu0 %v1219
          %v1439 = vpop.f32.mrb[0].mxu0
          %v1440 = vadd.f32 0.0, %v1439
          %v1441 = vpop.f32.mrb[0].mxu0
          %v1442 = vpop.f32.mrb[0].mxu0
          %v1443 = vadd.f32 0.0, %v1442
          %v1444 = vpop.f32.mrb[0].mxu0
          %1445 = vmatprep.mubr.bf16.mxu0 %v1347
          %1446 = vmatmul.mubr.bf16.gmra.mrb[0].mxu0 %v1221
          %v1447 = vpop.f32.mrb[0].mxu0
          %v1448 = vadd.f32 0.0, %v1447
          %v1449 = vpop.f32.mrb[0].mxu0
          %v1450 = vpop.f32.mrb[0].mxu0
          %v1451 = vadd.f32 0.0, %v1450
          %v1452 = vpop.f32.mrb[0].mxu0
          %1453 = vdwg.mxu0
          %v1454 = vpack.c.bf16 %v1387, %v1384
          %v1455 = vpack.c.bf16 %v1392, %v1392
          %v1456 = vpack.c.bf16 %v1400, %v1395
          %v1457 = vpack.c.bf16 %v1403, %v1403
          %v1458 = vpack.c.bf16 %v1411, %v1408
          %v1459 = vpack.c.bf16 %v1416, %v1416
          %v1460 = vpack.c.bf16 %v1424, %v1419
          %v1461 = vpack.c.bf16 %v1427, %v1427
          %v1462 = vpack.c.bf16 %v1435, %v1432
          %v1463 = vpack.c.bf16 %v1440, %v1440
          %v1464 = vpack.c.bf16 %v1448, %v1443
          %v1465 = vpack.c.bf16 %v1451, %v1451
          %v1466 = vshrl.u32 %v336, 16
          %v1468 = vshll.u32 %v336, 16
          %v1470 = vrot.slane %v1468, 1
          %v1471 = vor.u32 %v1466, %v1470
          %v1472 = vshrl.u32 %v338, 16
          %v1474 = vshll.u32 %v338, 16
          %v1476 = vrot.slane %v1474, 1
          %v1477 = vor.u32 %v1472, %v1476
          %v1478 = vshrl.u32 %v340, 16
          %v1480 = vshll.u32 %v340, 16
          %v1482 = vrot.slane %v1480, 1
          %v1483 = vor.u32 %v1478, %v1482
          %v1484 = vshrl.u32 %v342, 16
          %v1486 = vshll.u32 %v342, 16
          %v1488 = vrot.slane %v1486, 1
          %v1489 = vor.u32 %v1484, %v1488
          %v1490 = vshrl.u32 %v344, 16
          %v1492 = vshll.u32 %v344, 16
          %v1494 = vrot.slane %v1492, 1
          %v1495 = vor.u32 %v1490, %v1494
          %v1496 = vshrl.u32 %v346, 16
          %v1498 = vshll.u32 %v346, 16
          %v1500 = vrot.slane %v1498, 1
          %v1501 = vor.u32 %v1496, %v1500
          %v1503 = vshrl.u32 %v354, 16
          %v1505 = vshll.u32 %v354, 16
          %v1507 = vrot.slane %v1505, 1
          %v1508 = vor.u32 %v1503, %v1507
          %v1510 = vshrl.u32 %v386, 16
          %v1512 = vshll.u32 %v386, 16
          %v1514 = vrot.slane %v1512, 1
          %v1515 = vor.u32 %v1510, %v1514
          %v1516 = vshrl.u32 %v418, 16
          %v1518 = vshll.u32 %v418, 16
          %v1520 = vrot.slane %v1518, 1
          %v1521 = vor.u32 %v1516, %v1520
          %v1522 = vshrl.u32 %v450, 16
          %v1524 = vshll.u32 %v450, 16
          %v1526 = vrot.slane %v1524, 1
          %v1527 = vor.u32 %v1522, %v1526
          %v1528 = vshrl.u32 %v482, 16
          %v1530 = vshll.u32 %v482, 16
          %v1532 = vrot.slane %v1530, 1
          %v1533 = vor.u32 %v1528, %v1532
          %v1534 = vshrl.u32 %v514, 16
          %v1536 = vshll.u32 %v514, 16
          %v1538 = vrot.slane %v1536, 1
          %v1539 = vor.u32 %v1534, %v1538
          %v1540 = vshrl.u32 %v546, 16
          %v1542 = vshll.u32 %v546, 16
          %v1544 = vrot.slane %v1542, 1
          %v1545 = vor.u32 %v1540, %v1544
          %v1546 = vshrl.u32 %v578, 16
          %v1548 = vshll.u32 %v578, 16
          %v1550 = vrot.slane %v1548, 1
          %v1551 = vor.u32 %v1546, %v1550
          %v1553 = vshrl.u32 %v586, 16
          %v1555 = vshll.u32 %v586, 16
          %v1557 = vrot.slane %v1555, 1
          %v1558 = vor.u32 %v1553, %v1557
          %v1560 = vshrl.u32 %v618, 16
          %v1562 = vshll.u32 %v618, 16
          %v1564 = vrot.slane %v1562, 1
          %v1565 = vor.u32 %v1560, %v1564
          %v1567 = vshrl.u32 %v650, 16
          %v1569 = vshll.u32 %v650, 16
          %v1571 = vrot.slane %v1569, 1
          %v1572 = vor.u32 %v1567, %v1571
          %v1574 = vshrl.u32 %v682, 16
          %v1576 = vshll.u32 %v682, 16
          %v1578 = vrot.slane %v1576, 1
          %v1579 = vor.u32 %v1574, %v1578
          %v1581 = vshrl.u32 %v714, 16
          %v1583 = vshll.u32 %v714, 16
          %v1585 = vrot.slane %v1583, 1
          %v1586 = vor.u32 %v1581, %v1585
          %v1588 = vshrl.u32 %v746, 16
          %v1590 = vshll.u32 %v746, 16
          %v1592 = vrot.slane %v1590, 1
          %v1593 = vor.u32 %v1588, %v1592
          %1594 = vrot.lane.b32.xlu0 %v1471, 16
          %v1595 = vpop.permute.xlu0 %1594
          %1596 = vrot.lane.b32.xlu0 %v1477, 16
          %v1597 = vpop.permute.xlu0 %1596
          %1598 = vrot.lane.b32.xlu0 %v1483, 16
          %v1599 = vpop.permute.xlu0 %1598
          %1600 = vrot.lane.b32.xlu0 %v1489, 16
          %v1601 = vpop.permute.xlu0 %1600
          %1602 = vrot.lane.b32.xlu0 %v1495, 16
          %v1603 = vpop.permute.xlu0 %1602
          %1604 = vrot.lane.b32.xlu0 %v1501, 16
          %v1605 = vpop.permute.xlu0 %1604
          %1606 = vrot.lane.b32.xlu0 %v1508, 16
          %v1607 = vpop.permute.xlu0 %1606
          %1608 = vrot.lane.b32.xlu0 %v1515, 16
          %v1609 = vpop.permute.xlu0 %1608
          %1610 = vrot.lane.b32.xlu0 %v1521, 16
          %v1611 = vpop.permute.xlu0 %1610
          %1612 = vrot.lane.b32.xlu0 %v1527, 16
          %v1613 = vpop.permute.xlu0 %1612
          %1614 = vrot.lane.b32.xlu0 %v1533, 16
          %v1615 = vpop.permute.xlu0 %1614
          %1616 = vrot.lane.b32.xlu0 %v1539, 16
          %v1617 = vpop.permute.xlu0 %1616
          %1618 = vrot.lane.b32.xlu0 %v1545, 16
          %v1619 = vpop.permute.xlu0 %1618
          %1620 = vrot.lane.b32.xlu0 %v1551, 16
          %v1621 = vpop.permute.xlu0 %1620
          %1622 = vrot.lane.b32.xlu0 %v1558, 16
          %v1623 = vpop.permute.xlu0 %1622
          %1624 = vrot.lane.b32.xlu0 %v1565, 16
          %v1625 = vpop.permute.xlu0 %1624
          %1626 = vrot.lane.b32.xlu0 %v1572, 16
          %v1627 = vpop.permute.xlu0 %1626
          %1628 = vrot.lane.b32.xlu0 %v1579, 16
          %v1629 = vpop.permute.xlu0 %1628
          %1630 = vrot.lane.b32.xlu0 %v1586, 16
          %v1631 = vpop.permute.xlu0 %1630
          %1632 = vrot.lane.b32.xlu0 %v1593, 16
          %v1633 = vpop.permute.xlu0 %1632
          %v1634 = vrot.slane %v336, 1
          %v1635 = vrot.slane %v338, 1
          %v1636 = vrot.slane %v340, 1
          %v1637 = vrot.slane %v342, 1
          %v1638 = vrot.slane %v344, 1
          %v1639 = vrot.slane %v346, 1
          %v1640 = vrot.slane %v354, 1
          %v1641 = vrot.slane %v386, 1
          %v1642 = vrot.slane %v418, 1
          %v1643 = vrot.slane %v450, 1
          %v1644 = vrot.slane %v482, 1
          %v1645 = vrot.slane %v514, 1
          %v1646 = vrot.slane %v546, 1
          %v1647 = vrot.slane %v578, 1
          %v1648 = vrot.slane %v586, 1
          %v1649 = vrot.slane %v618, 1
          %v1650 = vrot.slane %v650, 1
          %v1651 = vrot.slane %v682, 1
          %v1652 = vrot.slane %v714, 1
          %v1653 = vrot.slane %v746, 1
          %1654 = vrot.lane.b32.xlu0 %v1634, 32
          %v1655 = vpop.permute.xlu0 %1654
          %1656 = vrot.lane.b32.xlu0 %v1635, 32
          %v1657 = vpop.permute.xlu0 %1656
          %1658 = vrot.lane.b32.xlu0 %v1636, 32
          %v1659 = vpop.permute.xlu0 %1658
          %1660 = vrot.lane.b32.xlu0 %v1637, 32
          %v1661 = vpop.permute.xlu0 %1660
          %1662 = vrot.lane.b32.xlu0 %v1638, 32
          %v1663 = vpop.permute.xlu0 %1662
          %1664 = vrot.lane.b32.xlu0 %v1639, 32
          %v1665 = vpop.permute.xlu0 %1664
          %1666 = vrot.lane.b32.xlu0 %v1640, 32
          %v1667 = vpop.permute.xlu0 %1666
          %1668 = vrot.lane.b32.xlu0 %v1641, 32
          %v1669 = vpop.permute.xlu0 %1668
          %1670 = vrot.lane.b32.xlu0 %v1642, 32
          %v1671 = vpop.permute.xlu0 %1670
          %1672 = vrot.lane.b32.xlu0 %v1643, 32
          %v1673 = vpop.permute.xlu0 %1672
          %1674 = vrot.lane.b32.xlu0 %v1644, 32
          %v1675 = vpop.permute.xlu0 %1674
          %1676 = vrot.lane.b32.xlu0 %v1645, 32
          %v1677 = vpop.permute.xlu0 %1676
          %1678 = vrot.lane.b32.xlu0 %v1646, 32
          %v1679 = vpop.permute.xlu0 %1678
          %1680 = vrot.lane.b32.xlu0 %v1647, 32
          %v1681 = vpop.permute.xlu0 %1680
          %1682 = vrot.lane.b32.xlu0 %v1648, 32
          %v1683 = vpop.permute.xlu0 %1682
          %1684 = vrot.lane.b32.xlu0 %v1649, 32
          %v1685 = vpop.permute.xlu0 %1684
          %1686 = vrot.lane.b32.xlu0 %v1650, 32
          %v1687 = vpop.permute.xlu0 %1686
          %1688 = vrot.lane.b32.xlu0 %v1651, 32
          %v1689 = vpop.permute.xlu0 %1688
          %1690 = vrot.lane.b32.xlu0 %v1652, 32
          %v1691 = vpop.permute.xlu0 %1690
          %1692 = vrot.lane.b32.xlu0 %v1653, 32
          %v1693 = vpop.permute.xlu0 %1692
          %v1694 = vrot.slane %v1466, 1
          %v1695 = vrot.slane %v1468, 2
          %v1696 = vor.u32 %v1694, %v1695
          %v1697 = vrot.slane %v1472, 1
          %v1698 = vrot.slane %v1474, 2
          %v1699 = vor.u32 %v1697, %v1698
          %v1700 = vrot.slane %v1478, 1
          %v1701 = vrot.slane %v1480, 2
          %v1702 = vor.u32 %v1700, %v1701
          %v1703 = vrot.slane %v1484, 1
          %v1704 = vrot.slane %v1486, 2
          %v1705 = vor.u32 %v1703, %v1704
          %v1706 = vrot.slane %v1490, 1
          %v1707 = vrot.slane %v1492, 2
          %v1708 = vor.u32 %v1706, %v1707
          %v1709 = vrot.slane %v1496, 1
          %v1710 = vrot.slane %v1498, 2
          %v1711 = vor.u32 %v1709, %v1710
          %v1712 = vrot.slane %v1503, 1
          %v1713 = vrot.slane %v1505, 2
          %v1714 = vor.u32 %v1712, %v1713
          %v1715 = vrot.slane %v1510, 1
          %v1716 = vrot.slane %v1512, 2
          %v1717 = vor.u32 %v1715, %v1716
          %v1718 = vrot.slane %v1516, 1
          %v1719 = vrot.slane %v1518, 2
          %v1720 = vor.u32 %v1718, %v1719
          %v1721 = vrot.slane %v1522, 1
          %v1722 = vrot.slane %v1524, 2
          %v1723 = vor.u32 %v1721, %v1722
          %v1724 = vrot.slane %v1528, 1
          %v1725 = vrot.slane %v1530, 2
          %v1726 = vor.u32 %v1724, %v1725
          %v1727 = vrot.slane %v1534, 1
          %v1728 = vrot.slane %v1536, 2
          %v1729 = vor.u32 %v1727, %v1728
          %v1730 = vrot.slane %v1540, 1
          %v1731 = vrot.slane %v1542, 2
          %v1732 = vor.u32 %v1730, %v1731
          %v1733 = vrot.slane %v1546, 1
          %v1734 = vrot.slane %v1548, 2
          %v1735 = vor.u32 %v1733, %v1734
          %v1736 = vrot.slane %v1553, 1
          %v1737 = vrot.slane %v1555, 2
          %v1738 = vor.u32 %v1736, %v1737
          %v1739 = vrot.slane %v1560, 1
          %v1740 = vrot.slane %v1562, 2
          %v1741 = vor.u32 %v1739, %v1740
          %v1742 = vrot.slane %v1567, 1
          %v1743 = vrot.slane %v1569, 2
          %v1744 = vor.u32 %v1742, %v1743
          %v1745 = vrot.slane %v1574, 1
          %v1746 = vrot.slane %v1576, 2
          %v1747 = vor.u32 %v1745, %v1746
          %v1748 = vrot.slane %v1581, 1
          %v1749 = vrot.slane %v1583, 2
          %v1750 = vor.u32 %v1748, %v1749
          %v1751 = vrot.slane %v1588, 1
          %v1752 = vrot.slane %v1590, 2
          %v1753 = vor.u32 %v1751, %v1752
          %1754 = vrot.lane.b32.xlu0 %v1696, 48
          %v1755 = vpop.permute.xlu0 %1754
          %1756 = vrot.lane.b32.xlu0 %v1699, 48
          %v1757 = vpop.permute.xlu0 %1756
          %1758 = vrot.lane.b32.xlu0 %v1702, 48
          %v1759 = vpop.permute.xlu0 %1758
          %1760 = vrot.lane.b32.xlu0 %v1705, 48
          %v1761 = vpop.permute.xlu0 %1760
          %1762 = vrot.lane.b32.xlu0 %v1708, 48
          %v1763 = vpop.permute.xlu0 %1762
          %1764 = vrot.lane.b32.xlu0 %v1711, 48
          %v1765 = vpop.permute.xlu0 %1764
          %1766 = vrot.lane.b32.xlu0 %v1714, 48
          %v1767 = vpop.permute.xlu0 %1766
          %1768 = vrot.lane.b32.xlu0 %v1717, 48
          %v1769 = vpop.permute.xlu0 %1768
          %1770 = vrot.lane.b32.xlu0 %v1720, 48
          %v1771 = vpop.permute.xlu0 %1770
          %1772 = vrot.lane.b32.xlu0 %v1723, 48
          %v1773 = vpop.permute.xlu0 %1772
          %1774 = vrot.lane.b32.xlu0 %v1726, 48
          %v1775 = vpop.permute.xlu0 %1774
          %1776 = vrot.lane.b32.xlu0 %v1729, 48
          %v1777 = vpop.permute.xlu0 %1776
          %1778 = vrot.lane.b32.xlu0 %v1732, 48
          %v1779 = vpop.permute.xlu0 %1778
          %1780 = vrot.lane.b32.xlu0 %v1735, 48
          %v1781 = vpop.permute.xlu0 %1780
          %1782 = vrot.lane.b32.xlu0 %v1738, 48
          %v1783 = vpop.permute.xlu0 %1782
          %1784 = vrot.lane.b32.xlu0 %v1741, 48
          %v1785 = vpop.permute.xlu0 %1784
          %1786 = vrot.lane.b32.xlu0 %v1744, 48
          %v1787 = vpop.permute.xlu0 %1786
          %1788 = vrot.lane.b32.xlu0 %v1747, 48
          %v1789 = vpop.permute.xlu0 %1788
          %1790 = vrot.lane.b32.xlu0 %v1750, 48
          %v1791 = vpop.permute.xlu0 %1790
          %1792 = vrot.lane.b32.xlu0 %v1753, 48
          %v1793 = vpop.permute.xlu0 %1792
          %v1794 = vrot.slane %v336, 2
          %v1795 = vrot.slane %v338, 2
          %v1796 = vrot.slane %v340, 2
          %v1797 = vrot.slane %v342, 2
          %v1798 = vrot.slane %v344, 2
          %v1799 = vrot.slane %v346, 2
          %v1800 = vrot.slane %v354, 2
          %v1801 = vrot.slane %v386, 2
          %v1802 = vrot.slane %v418, 2
          %v1803 = vrot.slane %v450, 2
          %v1804 = vrot.slane %v482, 2
          %v1805 = vrot.slane %v514, 2
          %v1806 = vrot.slane %v546, 2
          %v1807 = vrot.slane %v578, 2
          %v1808 = vrot.slane %v586, 2
          %v1809 = vrot.slane %v618, 2
          %v1810 = vrot.slane %v650, 2
          %v1811 = vrot.slane %v682, 2
          %v1812 = vrot.slane %v714, 2
          %v1813 = vrot.slane %v746, 2
          %1814 = vrot.lane.b32.xlu0 %v1794, 64
          %v1815 = vpop.permute.xlu0 %1814
          %1816 = vrot.lane.b32.xlu0 %v1795, 64
          %v1817 = vpop.permute.xlu0 %1816
          %1818 = vrot.lane.b32.xlu0 %v1796, 64
          %v1819 = vpop.permute.xlu0 %1818
          %1820 = vrot.lane.b32.xlu0 %v1797, 64
          %v1821 = vpop.permute.xlu0 %1820
          %1822 = vrot.lane.b32.xlu0 %v1798, 64
          %v1823 = vpop.permute.xlu0 %1822
          %1824 = vrot.lane.b32.xlu0 %v1799, 64
          %v1825 = vpop.permute.xlu0 %1824
          %1826 = vrot.lane.b32.xlu0 %v1800, 64
          %v1827 = vpop.permute.xlu0 %1826
          %1828 = vrot.lane.b32.xlu0 %v1801, 64
          %v1829 = vpop.permute.xlu0 %1828
          %1830 = vrot.lane.b32.xlu0 %v1802, 64
          %v1831 = vpop.permute.xlu0 %1830
          %1832 = vrot.lane.b32.xlu0 %v1803, 64
          %v1833 = vpop.permute.xlu0 %1832
          %1834 = vrot.lane.b32.xlu0 %v1804, 64
          %v1835 = vpop.permute.xlu0 %1834
          %1836 = vrot.lane.b32.xlu0 %v1805, 64
          %v1837 = vpop.permute.xlu0 %1836
          %1838 = vrot.lane.b32.xlu0 %v1806, 64
          %v1839 = vpop.permute.xlu0 %1838
          %1840 = vrot.lane.b32.xlu0 %v1807, 64
          %v1841 = vpop.permute.xlu0 %1840
          %1842 = vrot.lane.b32.xlu0 %v1808, 64
          %v1843 = vpop.permute.xlu0 %1842
          %1844 = vrot.lane.b32.xlu0 %v1809, 64
          %v1845 = vpop.permute.xlu0 %1844
          %1846 = vrot.lane.b32.xlu0 %v1810, 64
          %v1847 = vpop.permute.xlu0 %1846
          %1848 = vrot.lane.b32.xlu0 %v1811, 64
          %v1849 = vpop.permute.xlu0 %1848
          %1850 = vrot.lane.b32.xlu0 %v1812, 64
          %v1851 = vpop.permute.xlu0 %1850
          %1852 = vrot.lane.b32.xlu0 %v1813, 64
          %v1853 = vpop.permute.xlu0 %1852
          %v1854 = vrot.slane %v1466, 2
          %v1855 = vrot.slane %v1468, 3
          %v1856 = vor.u32 %v1854, %v1855
          %v1857 = vrot.slane %v1472, 2
          %v1858 = vrot.slane %v1474, 3
          %v1859 = vor.u32 %v1857, %v1858
          %v1860 = vrot.slane %v1478, 2
          %v1861 = vrot.slane %v1480, 3
          %v1862 = vor.u32 %v1860, %v1861
          %v1863 = vrot.slane %v1484, 2
          %v1864 = vrot.slane %v1486, 3
          %v1865 = vor.u32 %v1863, %v1864
          %v1866 = vrot.slane %v1490, 2
          %v1867 = vrot.slane %v1492, 3
          %v1868 = vor.u32 %v1866, %v1867
          %v1869 = vrot.slane %v1496, 2
          %v1870 = vrot.slane %v1498, 3
          %v1871 = vor.u32 %v1869, %v1870
          %v1872 = vrot.slane %v1503, 2
          %v1873 = vrot.slane %v1505, 3
          %v1874 = vor.u32 %v1872, %v1873
          %v1875 = vrot.slane %v1510, 2
          %v1876 = vrot.slane %v1512, 3
          %v1877 = vor.u32 %v1875, %v1876
          %v1878 = vrot.slane %v1516, 2
          %v1879 = vrot.slane %v1518, 3
          %v1880 = vor.u32 %v1878, %v1879
          %v1881 = vrot.slane %v1522, 2
          %v1882 = vrot.slane %v1524, 3
          %v1883 = vor.u32 %v1881, %v1882
          %v1884 = vrot.slane %v1528, 2
          %v1885 = vrot.slane %v1530, 3
          %v1886 = vor.u32 %v1884, %v1885
          %v1887 = vrot.slane %v1534, 2
          %v1888 = vrot.slane %v1536, 3
          %v1889 = vor.u32 %v1887, %v1888
          %v1890 = vrot.slane %v1540, 2
          %v1891 = vrot.slane %v1542, 3
          %v1892 = vor.u32 %v1890, %v1891
          %v1893 = vrot.slane %v1546, 2
          %v1894 = vrot.slane %v1548, 3
          %v1895 = vor.u32 %v1893, %v1894
          %v1896 = vrot.slane %v1553, 2
          %v1897 = vrot.slane %v1555, 3
          %v1898 = vor.u32 %v1896, %v1897
          %v1899 = vrot.slane %v1560, 2
          %v1900 = vrot.slane %v1562, 3
          %v1901 = vor.u32 %v1899, %v1900
          %v1902 = vrot.slane %v1567, 2
          %v1903 = vrot.slane %v1569, 3
          %v1904 = vor.u32 %v1902, %v1903
          %v1905 = vrot.slane %v1574, 2
          %v1906 = vrot.slane %v1576, 3
          %v1907 = vor.u32 %v1905, %v1906
          %v1908 = vrot.slane %v1581, 2
          %v1909 = vrot.slane %v1583, 3
          %v1910 = vor.u32 %v1908, %v1909
          %v1911 = vrot.slane %v1588, 2
          %v1912 = vrot.slane %v1590, 3
          %v1913 = vor.u32 %v1911, %v1912
          %1914 = vrot.lane.b32.xlu0 %v1856, 80
          %v1915 = vpop.permute.xlu0 %1914
          %1916 = vrot.lane.b32.xlu0 %v1859, 80
          %v1917 = vpop.permute.xlu0 %1916
          %1918 = vrot.lane.b32.xlu0 %v1862, 80
          %v1919 = vpop.permute.xlu0 %1918
          %1920 = vrot.lane.b32.xlu0 %v1865, 80
          %v1921 = vpop.permute.xlu0 %1920
          %1922 = vrot.lane.b32.xlu0 %v1868, 80
          %v1923 = vpop.permute.xlu0 %1922
          %1924 = vrot.lane.b32.xlu0 %v1871, 80
          %v1925 = vpop.permute.xlu0 %1924
          %1926 = vrot.lane.b32.xlu0 %v1874, 80
          %v1927 = vpop.permute.xlu0 %1926
          %1928 = vrot.lane.b32.xlu0 %v1877, 80
          %v1929 = vpop.permute.xlu0 %1928
          %1930 = vrot.lane.b32.xlu0 %v1880, 80
          %v1931 = vpop.permute.xlu0 %1930
          %1932 = vrot.lane.b32.xlu0 %v1883, 80
          %v1933 = vpop.permute.xlu0 %1932
          %1934 = vrot.lane.b32.xlu0 %v1886, 80
          %v1935 = vpop.permute.xlu0 %1934
          %1936 = vrot.lane.b32.xlu0 %v1889, 80
          %v1937 = vpop.permute.xlu0 %1936
          %1938 = vrot.lane.b32.xlu0 %v1892, 80
          %v1939 = vpop.permute.xlu0 %1938
          %1940 = vrot.lane.b32.xlu0 %v1895, 80
          %v1941 = vpop.permute.xlu0 %1940
          %1942 = vrot.lane.b32.xlu0 %v1898, 80
          %v1943 = vpop.permute.xlu0 %1942
          %1944 = vrot.lane.b32.xlu0 %v1901, 80
          %v1945 = vpop.permute.xlu0 %1944
          %1946 = vrot.lane.b32.xlu0 %v1904, 80
          %v1947 = vpop.permute.xlu0 %1946
          %1948 = vrot.lane.b32.xlu0 %v1907, 80
          %v1949 = vpop.permute.xlu0 %1948
          %1950 = vrot.lane.b32.xlu0 %v1910, 80
          %v1951 = vpop.permute.xlu0 %1950
          %1952 = vrot.lane.b32.xlu0 %v1913, 80
          %v1953 = vpop.permute.xlu0 %1952
          %v1954 = vrot.slane %v336, 3
          %v1955 = vrot.slane %v338, 3
          %v1956 = vrot.slane %v340, 3
          %v1957 = vrot.slane %v342, 3
          %v1958 = vrot.slane %v344, 3
          %v1959 = vrot.slane %v346, 3
          %v1960 = vrot.slane %v354, 3
          %v1961 = vrot.slane %v386, 3
          %v1962 = vrot.slane %v418, 3
          %v1963 = vrot.slane %v450, 3
          %v1964 = vrot.slane %v482, 3
          %v1965 = vrot.slane %v514, 3
          %v1966 = vrot.slane %v546, 3
          %v1967 = vrot.slane %v578, 3
          %v1968 = vrot.slane %v586, 3
          %v1969 = vrot.slane %v618, 3
          %v1970 = vrot.slane %v650, 3
          %v1971 = vrot.slane %v682, 3
          %v1972 = vrot.slane %v714, 3
          %v1973 = vrot.slane %v746, 3
          %1974 = vrot.lane.b32.xlu0 %v1954, 96
          %v1975 = vpop.permute.xlu0 %1974
          %1976 = vrot.lane.b32.xlu0 %v1955, 96
          %v1977 = vpop.permute.xlu0 %1976
          %1978 = vrot.lane.b32.xlu0 %v1956, 96
          %v1979 = vpop.permute.xlu0 %1978
          %1980 = vrot.lane.b32.xlu0 %v1957, 96
          %v1981 = vpop.permute.xlu0 %1980
          %1982 = vrot.lane.b32.xlu0 %v1958, 96
          %v1983 = vpop.permute.xlu0 %1982
          %1984 = vrot.lane.b32.xlu0 %v1959, 96
          %v1985 = vpop.permute.xlu0 %1984
          %1986 = vrot.lane.b32.xlu0 %v1960, 96
          %v1987 = vpop.permute.xlu0 %1986
          %1988 = vrot.lane.b32.xlu0 %v1961, 96
          %v1989 = vpop.permute.xlu0 %1988
          %1990 = vrot.lane.b32.xlu0 %v1962, 96
          %v1991 = vpop.permute.xlu0 %1990
          %1992 = vrot.lane.b32.xlu0 %v1963, 96
          %v1993 = vpop.permute.xlu0 %1992
          %1994 = vrot.lane.b32.xlu0 %v1964, 96
          %v1995 = vpop.permute.xlu0 %1994
          %1996 = vrot.lane.b32.xlu0 %v1965, 96
          %v1997 = vpop.permute.xlu0 %1996
          %1998 = vrot.lane.b32.xlu0 %v1966, 96
          %v1999 = vpop.permute.xlu0 %1998
          %2000 = vrot.lane.b32.xlu0 %v1967, 96
          %v2001 = vpop.permute.xlu0 %2000
          %2002 = vrot.lane.b32.xlu0 %v1968, 96
          %v2003 = vpop.permute.xlu0 %2002
          %2004 = vrot.lane.b32.xlu0 %v1969, 96
          %v2005 = vpop.permute.xlu0 %2004
          %2006 = vrot.lane.b32.xlu0 %v1970, 96
          %v2007 = vpop.permute.xlu0 %2006
          %2008 = vrot.lane.b32.xlu0 %v1971, 96
          %v2009 = vpop.permute.xlu0 %2008
          %2010 = vrot.lane.b32.xlu0 %v1972, 96
          %v2011 = vpop.permute.xlu0 %2010
          %2012 = vrot.lane.b32.xlu0 %v1973, 96
          %v2013 = vpop.permute.xlu0 %2012
          %v2014 = vrot.slane %v1466, 3
          %v2015 = vrot.slane %v1468, 4
          %v2016 = vor.u32 %v2014, %v2015
          %v2017 = vrot.slane %v1472, 3
          %v2018 = vrot.slane %v1474, 4
          %v2019 = vor.u32 %v2017, %v2018
          %v2020 = vrot.slane %v1478, 3
          %v2021 = vrot.slane %v1480, 4
          %v2022 = vor.u32 %v2020, %v2021
          %v2023 = vrot.slane %v1484, 3
          %v2024 = vrot.slane %v1486, 4
          %v2025 = vor.u32 %v2023, %v2024
          %v2026 = vrot.slane %v1490, 3
          %v2027 = vrot.slane %v1492, 4
          %v2028 = vor.u32 %v2026, %v2027
          %v2029 = vrot.slane %v1496, 3
          %v2030 = vrot.slane %v1498, 4
          %v2031 = vor.u32 %v2029, %v2030
          %v2032 = vrot.slane %v1503, 3
          %v2033 = vrot.slane %v1505, 4
          %v2034 = vor.u32 %v2032, %v2033
          %v2035 = vrot.slane %v1510, 3
          %v2036 = vrot.slane %v1512, 4
          %v2037 = vor.u32 %v2035, %v2036
          %v2038 = vrot.slane %v1516, 3
          %v2039 = vrot.slane %v1518, 4
          %v2040 = vor.u32 %v2038, %v2039
          %v2041 = vrot.slane %v1522, 3
          %v2042 = vrot.slane %v1524, 4
          %v2043 = vor.u32 %v2041, %v2042
          %v2044 = vrot.slane %v1528, 3
          %v2045 = vrot.slane %v1530, 4
          %v2046 = vor.u32 %v2044, %v2045
          %v2047 = vrot.slane %v1534, 3
          %v2048 = vrot.slane %v1536, 4
          %v2049 = vor.u32 %v2047, %v2048
          %v2050 = vrot.slane %v1540, 3
          %v2051 = vrot.slane %v1542, 4
          %v2052 = vor.u32 %v2050, %v2051
          %v2053 = vrot.slane %v1546, 3
          %v2054 = vrot.slane %v1548, 4
          %v2055 = vor.u32 %v2053, %v2054
          %v2056 = vrot.slane %v1553, 3
          %v2057 = vrot.slane %v1555, 4
          %v2058 = vor.u32 %v2056, %v2057
          %v2059 = vrot.slane %v1560, 3
          %v2060 = vrot.slane %v1562, 4
          %v2061 = vor.u32 %v2059, %v2060
          %v2062 = vrot.slane %v1567, 3
          %v2063 = vrot.slane %v1569, 4
          %v2064 = vor.u32 %v2062, %v2063
          %v2065 = vrot.slane %v1574, 3
          %v2066 = vrot.slane %v1576, 4
          %v2067 = vor.u32 %v2065, %v2066
          %v2068 = vrot.slane %v1581, 3
          %v2069 = vrot.slane %v1583, 4
          %v2070 = vor.u32 %v2068, %v2069
          %v2071 = vrot.slane %v1588, 3
          %v2072 = vrot.slane %v1590, 4
          %v2073 = vor.u32 %v2071, %v2072
          %2074 = vrot.lane.b32.xlu0 %v2016, 112
          %v2075 = vpop.permute.xlu0 %2074
          %2076 = vrot.lane.b32.xlu0 %v2019, 112
          %v2077 = vpop.permute.xlu0 %2076
          %2078 = vrot.lane.b32.xlu0 %v2022, 112
          %v2079 = vpop.permute.xlu0 %2078
          %2080 = vrot.lane.b32.xlu0 %v2025, 112
          %v2081 = vpop.permute.xlu0 %2080
          %2082 = vrot.lane.b32.xlu0 %v2028, 112
          %v2083 = vpop.permute.xlu0 %2082
          %2084 = vrot.lane.b32.xlu0 %v2031, 112
          %v2085 = vpop.permute.xlu0 %2084
          %2086 = vrot.lane.b32.xlu0 %v2034, 112
          %v2087 = vpop.permute.xlu0 %2086
          %2088 = vrot.lane.b32.xlu0 %v2037, 112
          %v2089 = vpop.permute.xlu0 %2088
          %2090 = vrot.lane.b32.xlu0 %v2040, 112
          %v2091 = vpop.permute.xlu0 %2090
          %2092 = vrot.lane.b32.xlu0 %v2043, 112
          %v2093 = vpop.permute.xlu0 %2092
          %2094 = vrot.lane.b32.xlu0 %v2046, 112
          %v2095 = vpop.permute.xlu0 %2094
          %2096 = vrot.lane.b32.xlu0 %v2049, 112
          %v2097 = vpop.permute.xlu0 %2096
          %2098 = vrot.lane.b32.xlu0 %v2052, 112
          %v2099 = vpop.permute.xlu0 %2098
          %2100 = vrot.lane.b32.xlu0 %v2055, 112
          %v2101 = vpop.permute.xlu0 %2100
          %2102 = vrot.lane.b32.xlu0 %v2058, 112
          %v2103 = vpop.permute.xlu0 %2102
          %2104 = vrot.lane.b32.xlu0 %v2061, 112
          %v2105 = vpop.permute.xlu0 %2104
          %2106 = vrot.lane.b32.xlu0 %v2064, 112
          %v2107 = vpop.permute.xlu0 %2106
          %2108 = vrot.lane.b32.xlu0 %v2067, 112
          %v2109 = vpop.permute.xlu0 %2108
          %2110 = vrot.lane.b32.xlu0 %v2070, 112
          %v2111 = vpop.permute.xlu0 %2110
          %2112 = vrot.lane.b32.xlu0 %v2073, 112
          %v2113 = vpop.permute.xlu0 %2112
          %v2114 = vpack.c.b16 %v320, %v319
          %v2115 = vpack.c.b16 %v323, %v322
          %v2116 = vpack.c.b16 %v326, %v325
          %v2117 = vpack.c.b16 %v329, %v328
          %v2118 = vpack.c.b16 %v332, %v331
          %v2119 = vpack.c.b16 %v335, %v334
          %v2120 = vpack.c.b16 %v353, %v352
          %v2121 = vpack.c.b16 %v385, %v384
          %v2122 = vpack.c.b16 %v417, %v416
          %v2123 = vpack.c.b16 %v449, %v448
          %v2124 = vpack.c.b16 %v481, %v480
          %v2125 = vpack.c.b16 %v513, %v512
          %v2126 = vpack.c.b16 %v545, %v544
          %v2127 = vpack.c.b16 %v577, %v576
          %v2128 = vpack.c.b16 %v585, %v584
          %v2129 = vpack.c.b16 %v617, %v616
          %v2130 = vpack.c.b16 %v649, %v648
          %v2131 = vpack.c.b16 %v681, %v680
          %v2132 = vpack.c.b16 %v713, %v712
          %v2133 = vpack.c.b16 %v745, %v744
          %v2135 = vshrl.u32 %v2114, 16
          %v2137 = vshll.u32 %v2114, 16
          %v2139 = vrot.slane %v2137, 1
          %v2140 = vor.u32 %v2135, %v2139
          %v2142 = vshrl.u32 %v2115, 16
          %v2144 = vshll.u32 %v2115, 16
          %v2146 = vrot.slane %v2144, 1
          %v2147 = vor.u32 %v2142, %v2146
          %v2149 = vshrl.u32 %v2116, 16
          %v2151 = vshll.u32 %v2116, 16
          %v2153 = vrot.slane %v2151, 1
          %v2154 = vor.u32 %v2149, %v2153
          %v2156 = vshrl.u32 %v2117, 16
          %v2158 = vshll.u32 %v2117, 16
          %v2160 = vrot.slane %v2158, 1
          %v2161 = vor.u32 %v2156, %v2160
          %v2163 = vshrl.u32 %v2118, 16
          %v2165 = vshll.u32 %v2118, 16
          %v2167 = vrot.slane %v2165, 1
          %v2168 = vor.u32 %v2163, %v2167
          %v2170 = vshrl.u32 %v2119, 16
          %v2172 = vshll.u32 %v2119, 16
          %v2174 = vrot.slane %v2172, 1
          %v2175 = vor.u32 %v2170, %v2174
          %v2177 = vshrl.u32 %v2120, 16
          %v2179 = vshll.u32 %v2120, 16
          %v2181 = vrot.slane %v2179, 1
          %v2182 = vor.u32 %v2177, %v2181
          %v2184 = vshrl.u32 %v2121, 16
          %v2186 = vshll.u32 %v2121, 16
          %v2188 = vrot.slane %v2186, 1
          %v2189 = vor.u32 %v2184, %v2188
          %v2191 = vshrl.u32 %v2122, 16
          %v2193 = vshll.u32 %v2122, 16
          %v2195 = vrot.slane %v2193, 1
          %v2196 = vor.u32 %v2191, %v2195
          %v2198 = vshrl.u32 %v2123, 16
          %v2200 = vshll.u32 %v2123, 16
          %v2202 = vrot.slane %v2200, 1
          %v2203 = vor.u32 %v2198, %v2202
          %v2205 = vshrl.u32 %v2124, 16
          %v2207 = vshll.u32 %v2124, 16
          %v2209 = vrot.slane %v2207, 1
          %v2210 = vor.u32 %v2205, %v2209
          %v2212 = vshrl.u32 %v2125, 16
          %v2214 = vshll.u32 %v2125, 16
          %v2216 = vrot.slane %v2214, 1
          %v2217 = vor.u32 %v2212, %v2216
          %v2219 = vshrl.u32 %v2126, 16
          %v2221 = vshll.u32 %v2126, 16
          %v2223 = vrot.slane %v2221, 1
          %v2224 = vor.u32 %v2219, %v2223
          %v2226 = vshrl.u32 %v2127, 16
          %v2228 = vshll.u32 %v2127, 16
          %v2230 = vrot.slane %v2228, 1
          %v2231 = vor.u32 %v2226, %v2230
          %v2233 = vshrl.u32 %v2128, 16
          %v2235 = vshll.u32 %v2128, 16
          %v2237 = vrot.slane %v2235, 1
          %v2238 = vor.u32 %v2233, %v2237
          %v2240 = vshrl.u32 %v2129, 16
          %v2242 = vshll.u32 %v2129, 16
          %v2244 = vrot.slane %v2242, 1
          %v2245 = vor.u32 %v2240, %v2244
          %v2247 = vshrl.u32 %v2130, 16
          %v2249 = vshll.u32 %v2130, 16
          %v2251 = vrot.slane %v2249, 1
          %v2252 = vor.u32 %v2247, %v2251
          %v2254 = vshrl.u32 %v2131, 16
          %v2256 = vshll.u32 %v2131, 16
          %v2258 = vrot.slane %v2256, 1
          %v2259 = vor.u32 %v2254, %v2258
          %v2261 = vshrl.u32 %v2132, 16
          %v2263 = vshll.u32 %v2132, 16
          %v2265 = vrot.slane %v2263, 1
          %v2266 = vor.u32 %v2261, %v2265
          %v2268 = vshrl.u32 %v2133, 16
          %v2270 = vshll.u32 %v2133, 16
          %v2272 = vrot.slane %v2270, 1
          %v2273 = vor.u32 %v2268, %v2272
          %2274 = vrot.lane.b32.xlu0 %v2140, 16
          %v2275 = vpop.permute.xlu0 %2274
          %2276 = vrot.lane.b32.xlu0 %v2147, 16
          %v2277 = vpop.permute.xlu0 %2276
          %2278 = vrot.lane.b32.xlu0 %v2154, 16
          %v2279 = vpop.permute.xlu0 %2278
          %2280 = vrot.lane.b32.xlu0 %v2161, 16
          %v2281 = vpop.permute.xlu0 %2280
          %2282 = vrot.lane.b32.xlu0 %v2168, 16
          %v2283 = vpop.permute.xlu0 %2282
          %2284 = vrot.lane.b32.xlu0 %v2175, 16
          %v2285 = vpop.permute.xlu0 %2284
          %2286 = vrot.lane.b32.xlu0 %v2182, 16
          %v2287 = vpop.permute.xlu0 %2286
          %2288 = vrot.lane.b32.xlu0 %v2189, 16
          %v2289 = vpop.permute.xlu0 %2288
          %2290 = vrot.lane.b32.xlu0 %v2196, 16
          %v2291 = vpop.permute.xlu0 %2290
          %2292 = vrot.lane.b32.xlu0 %v2203, 16
          %v2293 = vpop.permute.xlu0 %2292
          %2294 = vrot.lane.b32.xlu0 %v2210, 16
          %v2295 = vpop.permute.xlu0 %2294
          %2296 = vrot.lane.b32.xlu0 %v2217, 16
          %v2297 = vpop.permute.xlu0 %2296
          %2298 = vrot.lane.b32.xlu0 %v2224, 16
          %v2299 = vpop.permute.xlu0 %2298
          %2300 = vrot.lane.b32.xlu0 %v2231, 16
          %v2301 = vpop.permute.xlu0 %2300
          %2302 = vrot.lane.b32.xlu0 %v2238, 16
          %v2303 = vpop.permute.xlu0 %2302
          %2304 = vrot.lane.b32.xlu0 %v2245, 16
          %v2305 = vpop.permute.xlu0 %2304
          %2306 = vrot.lane.b32.xlu0 %v2252, 16
          %v2307 = vpop.permute.xlu0 %2306
          %2308 = vrot.lane.b32.xlu0 %v2259, 16
          %v2309 = vpop.permute.xlu0 %2308
          %2310 = vrot.lane.b32.xlu0 %v2266, 16
          %v2311 = vpop.permute.xlu0 %2310
          %2312 = vrot.lane.b32.xlu0 %v2273, 16
          %v2313 = vpop.permute.xlu0 %2312
          %v2314 = vrot.slane %v2114, 1
          %v2315 = vrot.slane %v2115, 1
          %v2316 = vrot.slane %v2116, 1
          %v2317 = vrot.slane %v2117, 1
          %v2318 = vrot.slane %v2118, 1
          %v2319 = vrot.slane %v2119, 1
          %v2320 = vrot.slane %v2120, 1
          %v2321 = vrot.slane %v2121, 1
          %v2322 = vrot.slane %v2122, 1
          %v2323 = vrot.slane %v2123, 1
          %v2324 = vrot.slane %v2124, 1
          %v2325 = vrot.slane %v2125, 1
          %v2326 = vrot.slane %v2126, 1
          %v2327 = vrot.slane %v2127, 1
          %v2328 = vrot.slane %v2128, 1
          %v2329 = vrot.slane %v2129, 1
          %v2330 = vrot.slane %v2130, 1
          %v2331 = vrot.slane %v2131, 1
          %v2332 = vrot.slane %v2132, 1
          %v2333 = vrot.slane %v2133, 1
          %2334 = vrot.lane.b32.xlu0 %v2314, 32
          %v2335 = vpop.permute.xlu0 %2334
          %2336 = vrot.lane.b32.xlu0 %v2315, 32
          %v2337 = vpop.permute.xlu0 %2336
          %2338 = vrot.lane.b32.xlu0 %v2316, 32
          %v2339 = vpop.permute.xlu0 %2338
          %2340 = vrot.lane.b32.xlu0 %v2317, 32
          %v2341 = vpop.permute.xlu0 %2340
          %2342 = vrot.lane.b32.xlu0 %v2318, 32
          %v2343 = vpop.permute.xlu0 %2342
          %2344 = vrot.lane.b32.xlu0 %v2319, 32
          %v2345 = vpop.permute.xlu0 %2344
          %2346 = vrot.lane.b32.xlu0 %v2320, 32
          %v2347 = vpop.permute.xlu0 %2346
          %2348 = vrot.lane.b32.xlu0 %v2321, 32
          %v2349 = vpop.permute.xlu0 %2348
          %2350 = vrot.lane.b32.xlu0 %v2322, 32
          %v2351 = vpop.permute.xlu0 %2350
          %2352 = vrot.lane.b32.xlu0 %v2323, 32
          %v2353 = vpop.permute.xlu0 %2352
          %2354 = vrot.lane.b32.xlu0 %v2324, 32
          %v2355 = vpop.permute.xlu0 %2354
          %2356 = vrot.lane.b32.xlu0 %v2325, 32
          %v2357 = vpop.permute.xlu0 %2356
          %2358 = vrot.lane.b32.xlu0 %v2326, 32
          %v2359 = vpop.permute.xlu0 %2358
          %2360 = vrot.lane.b32.xlu0 %v2327, 32
          %v2361 = vpop.permute.xlu0 %2360
          %2362 = vrot.lane.b32.xlu0 %v2328, 32
          %v2363 = vpop.permute.xlu0 %2362
          %2364 = vrot.lane.b32.xlu0 %v2329, 32
          %v2365 = vpop.permute.xlu0 %2364
          %2366 = vrot.lane.b32.xlu0 %v2330, 32
          %v2367 = vpop.permute.xlu0 %2366
          %2368 = vrot.lane.b32.xlu0 %v2331, 32
          %v2369 = vpop.permute.xlu0 %2368
          %2370 = vrot.lane.b32.xlu0 %v2332, 32
          %v2371 = vpop.permute.xlu0 %2370
          %2372 = vrot.lane.b32.xlu0 %v2333, 32
          %v2373 = vpop.permute.xlu0 %2372
          %v2374 = vrot.slane %v2135, 1
          %v2375 = vrot.slane %v2137, 2
          %v2376 = vor.u32 %v2374, %v2375
          %v2377 = vrot.slane %v2142, 1
          %v2378 = vrot.slane %v2144, 2
          %v2379 = vor.u32 %v2377, %v2378
          %v2380 = vrot.slane %v2149, 1
          %v2381 = vrot.slane %v2151, 2
          %v2382 = vor.u32 %v2380, %v2381
          %v2383 = vrot.slane %v2156, 1
          %v2384 = vrot.slane %v2158, 2
          %v2385 = vor.u32 %v2383, %v2384
          %v2386 = vrot.slane %v2163, 1
          %v2387 = vrot.slane %v2165, 2
          %v2388 = vor.u32 %v2386, %v2387
          %v2389 = vrot.slane %v2170, 1
          %v2390 = vrot.slane %v2172, 2
          %v2391 = vor.u32 %v2389, %v2390
          %v2392 = vrot.slane %v2177, 1
          %v2393 = vrot.slane %v2179, 2
          %v2394 = vor.u32 %v2392, %v2393
          %v2395 = vrot.slane %v2184, 1
          %v2396 = vrot.slane %v2186, 2
          %v2397 = vor.u32 %v2395, %v2396
          %v2398 = vrot.slane %v2191, 1
          %v2399 = vrot.slane %v2193, 2
          %v2400 = vor.u32 %v2398, %v2399
          %v2401 = vrot.slane %v2198, 1
          %v2402 = vrot.slane %v2200, 2
          %v2403 = vor.u32 %v2401, %v2402
          %v2404 = vrot.slane %v2205, 1
          %v2405 = vrot.slane %v2207, 2
          %v2406 = vor.u32 %v2404, %v2405
          %v2407 = vrot.slane %v2212, 1
          %v2408 = vrot.slane %v2214, 2
          %v2409 = vor.u32 %v2407, %v2408
          %v2410 = vrot.slane %v2219, 1
          %v2411 = vrot.slane %v2221, 2
          %v2412 = vor.u32 %v2410, %v2411
          %v2413 = vrot.slane %v2226, 1
          %v2414 = vrot.slane %v2228, 2
          %v2415 = vor.u32 %v2413, %v2414
          %v2416 = vrot.slane %v2233, 1
          %v2417 = vrot.slane %v2235, 2
          %v2418 = vor.u32 %v2416, %v2417
          %v2419 = vrot.slane %v2240, 1
          %v2420 = vrot.slane %v2242, 2
          %v2421 = vor.u32 %v2419, %v2420
          %v2422 = vrot.slane %v2247, 1
          %v2423 = vrot.slane %v2249, 2
          %v2424 = vor.u32 %v2422, %v2423
          %v2425 = vrot.slane %v2254, 1
          %v2426 = vrot.slane %v2256, 2
          %v2427 = vor.u32 %v2425, %v2426
          %v2428 = vrot.slane %v2261, 1
          %v2429 = vrot.slane %v2263, 2
          %v2430 = vor.u32 %v2428, %v2429
          %v2431 = vrot.slane %v2268, 1
          %v2432 = vrot.slane %v2270, 2
          %v2433 = vor.u32 %v2431, %v2432
          %2434 = vrot.lane.b32.xlu0 %v2376, 48
          %v2435 = vpop.permute.xlu0 %2434
          %2436 = vrot.lane.b32.xlu0 %v2379, 48
          %v2437 = vpop.permute.xlu0 %2436
          %2438 = vrot.lane.b32.xlu0 %v2382, 48
          %v2439 = vpop.permute.xlu0 %2438
          %2440 = vrot.lane.b32.xlu0 %v2385, 48
          %v2441 = vpop.permute.xlu0 %2440
          %2442 = vrot.lane.b32.xlu0 %v2388, 48
          %v2443 = vpop.permute.xlu0 %2442
          %2444 = vrot.lane.b32.xlu0 %v2391, 48
          %v2445 = vpop.permute.xlu0 %2444
          %2446 = vrot.lane.b32.xlu0 %v2394, 48
          %v2447 = vpop.permute.xlu0 %2446
          %2448 = vrot.lane.b32.xlu0 %v2397, 48
          %v2449 = vpop.permute.xlu0 %2448
          %2450 = vrot.lane.b32.xlu0 %v2400, 48
          %v2451 = vpop.permute.xlu0 %2450
          %2452 = vrot.lane.b32.xlu0 %v2403, 48
          %v2453 = vpop.permute.xlu0 %2452
          %2454 = vrot.lane.b32.xlu0 %v2406, 48
          %v2455 = vpop.permute.xlu0 %2454
          %2456 = vrot.lane.b32.xlu0 %v2409, 48
          %v2457 = vpop.permute.xlu0 %2456
          %2458 = vrot.lane.b32.xlu0 %v2412, 48
          %v2459 = vpop.permute.xlu0 %2458
          %2460 = vrot.lane.b32.xlu0 %v2415, 48
          %v2461 = vpop.permute.xlu0 %2460
          %2462 = vrot.lane.b32.xlu0 %v2418, 48
          %v2463 = vpop.permute.xlu0 %2462
          %2464 = vrot.lane.b32.xlu0 %v2421, 48
          %v2465 = vpop.permute.xlu0 %2464
          %2466 = vrot.lane.b32.xlu0 %v2424, 48
          %v2467 = vpop.permute.xlu0 %2466
          %2468 = vrot.lane.b32.xlu0 %v2427, 48
          %v2469 = vpop.permute.xlu0 %2468
          %2470 = vrot.lane.b32.xlu0 %v2430, 48
          %v2471 = vpop.permute.xlu0 %2470
          %2472 = vrot.lane.b32.xlu0 %v2433, 48
          %v2473 = vpop.permute.xlu0 %2472
          %v2474 = vrot.slane %v2114, 2
          %v2475 = vrot.slane %v2115, 2
          %v2476 = vrot.slane %v2116, 2
          %v2477 = vrot.slane %v2117, 2
          %v2478 = vrot.slane %v2118, 2
          %v2479 = vrot.slane %v2119, 2
          %v2480 = vrot.slane %v2120, 2
          %v2481 = vrot.slane %v2121, 2
          %v2482 = vrot.slane %v2122, 2
          %v2483 = vrot.slane %v2123, 2
          %v2484 = vrot.slane %v2124, 2
          %v2485 = vrot.slane %v2125, 2
          %v2486 = vrot.slane %v2126, 2
          %v2487 = vrot.slane %v2127, 2
          %v2488 = vrot.slane %v2128, 2
          %v2489 = vrot.slane %v2129, 2
          %v2490 = vrot.slane %v2130, 2
          %v2491 = vrot.slane %v2131, 2
          %v2492 = vrot.slane %v2132, 2
          %v2493 = vrot.slane %v2133, 2
          %2494 = vrot.lane.b32.xlu0 %v2474, 64
          %v2495 = vpop.permute.xlu0 %2494
          %2496 = vrot.lane.b32.xlu0 %v2475, 64
          %v2497 = vpop.permute.xlu0 %2496
          %2498 = vrot.lane.b32.xlu0 %v2476, 64
          %v2499 = vpop.permute.xlu0 %2498
          %2500 = vrot.lane.b32.xlu0 %v2477, 64
          %v2501 = vpop.permute.xlu0 %2500
          %2502 = vrot.lane.b32.xlu0 %v2478, 64
          %v2503 = vpop.permute.xlu0 %2502
          %2504 = vrot.lane.b32.xlu0 %v2479, 64
          %v2505 = vpop.permute.xlu0 %2504
          %2506 = vrot.lane.b32.xlu0 %v2480, 64
          %v2507 = vpop.permute.xlu0 %2506
          %2508 = vrot.lane.b32.xlu0 %v2481, 64
          %v2509 = vpop.permute.xlu0 %2508
          %2510 = vrot.lane.b32.xlu0 %v2482, 64
          %v2511 = vpop.permute.xlu0 %2510
          %2512 = vrot.lane.b32.xlu0 %v2483, 64
          %v2513 = vpop.permute.xlu0 %2512
          %2514 = vrot.lane.b32.xlu0 %v2484, 64
          %v2515 = vpop.permute.xlu0 %2514
          %2516 = vrot.lane.b32.xlu0 %v2485, 64
          %v2517 = vpop.permute.xlu0 %2516
          %2518 = vrot.lane.b32.xlu0 %v2486, 64
          %v2519 = vpop.permute.xlu0 %2518
          %2520 = vrot.lane.b32.xlu0 %v2487, 64
          %v2521 = vpop.permute.xlu0 %2520
          %2522 = vrot.lane.b32.xlu0 %v2488, 64
          %v2523 = vpop.permute.xlu0 %2522
          %2524 = vrot.lane.b32.xlu0 %v2489, 64
          %v2525 = vpop.permute.xlu0 %2524
          %2526 = vrot.lane.b32.xlu0 %v2490, 64
          %v2527 = vpop.permute.xlu0 %2526
          %2528 = vrot.lane.b32.xlu0 %v2491, 64
          %v2529 = vpop.permute.xlu0 %2528
          %2530 = vrot.lane.b32.xlu0 %v2492, 64
          %v2531 = vpop.permute.xlu0 %2530
          %2532 = vrot.lane.b32.xlu0 %v2493, 64
          %v2533 = vpop.permute.xlu0 %2532
          %v2534 = vrot.slane %v2135, 2
          %v2535 = vrot.slane %v2137, 3
          %v2536 = vor.u32 %v2534, %v2535
          %v2537 = vrot.slane %v2142, 2
          %v2538 = vrot.slane %v2144, 3
          %v2539 = vor.u32 %v2537, %v2538
          %v2540 = vrot.slane %v2149, 2
          %v2541 = vrot.slane %v2151, 3
          %v2542 = vor.u32 %v2540, %v2541
          %v2543 = vrot.slane %v2156, 2
          %v2544 = vrot.slane %v2158, 3
          %v2545 = vor.u32 %v2543, %v2544
          %v2546 = vrot.slane %v2163, 2
          %v2547 = vrot.slane %v2165, 3
          %v2548 = vor.u32 %v2546, %v2547
          %v2549 = vrot.slane %v2170, 2
          %v2550 = vrot.slane %v2172, 3
          %v2551 = vor.u32 %v2549, %v2550
          %v2552 = vrot.slane %v2177, 2
          %v2553 = vrot.slane %v2179, 3
          %v2554 = vor.u32 %v2552, %v2553
          %v2555 = vrot.slane %v2184, 2
          %v2556 = vrot.slane %v2186, 3
          %v2557 = vor.u32 %v2555, %v2556
          %v2558 = vrot.slane %v2191, 2
          %v2559 = vrot.slane %v2193, 3
          %v2560 = vor.u32 %v2558, %v2559
          %v2561 = vrot.slane %v2198, 2
          %v2562 = vrot.slane %v2200, 3
          %v2563 = vor.u32 %v2561, %v2562
          %v2564 = vrot.slane %v2205, 2
          %v2565 = vrot.slane %v2207, 3
          %v2566 = vor.u32 %v2564, %v2565
          %v2567 = vrot.slane %v2212, 2
          %v2568 = vrot.slane %v2214, 3
          %v2569 = vor.u32 %v2567, %v2568
          %v2570 = vrot.slane %v2219, 2
          %v2571 = vrot.slane %v2221, 3
          %v2572 = vor.u32 %v2570, %v2571
          %v2573 = vrot.slane %v2226, 2
          %v2574 = vrot.slane %v2228, 3
          %v2575 = vor.u32 %v2573, %v2574
          %v2576 = vrot.slane %v2233, 2
          %v2577 = vrot.slane %v2235, 3
          %v2578 = vor.u32 %v2576, %v2577
          %v2579 = vrot.slane %v2240, 2
          %v2580 = vrot.slane %v2242, 3
          %v2581 = vor.u32 %v2579, %v2580
          %v2582 = vrot.slane %v2247, 2
          %v2583 = vrot.slane %v2249, 3
          %v2584 = vor.u32 %v2582, %v2583
          %v2585 = vrot.slane %v2254, 2
          %v2586 = vrot.slane %v2256, 3
          %v2587 = vor.u32 %v2585, %v2586
          %v2588 = vrot.slane %v2261, 2
          %v2589 = vrot.slane %v2263, 3
          %v2590 = vor.u32 %v2588, %v2589
          %v2591 = vrot.slane %v2268, 2
          %v2592 = vrot.slane %v2270, 3
          %v2593 = vor.u32 %v2591, %v2592
          %2594 = vrot.lane.b32.xlu0 %v2536, 80
          %v2595 = vpop.permute.xlu0 %2594
          %2596 = vrot.lane.b32.xlu0 %v2539, 80
          %v2597 = vpop.permute.xlu0 %2596
          %2598 = vrot.lane.b32.xlu0 %v2542, 80
          %v2599 = vpop.permute.xlu0 %2598
          %2600 = vrot.lane.b32.xlu0 %v2545, 80
          %v2601 = vpop.permute.xlu0 %2600
          %2602 = vrot.lane.b32.xlu0 %v2548, 80
          %v2603 = vpop.permute.xlu0 %2602
          %2604 = vrot.lane.b32.xlu0 %v2551, 80
          %v2605 = vpop.permute.xlu0 %2604
          %2606 = vrot.lane.b32.xlu0 %v2554, 80
          %v2607 = vpop.permute.xlu0 %2606
          %2608 = vrot.lane.b32.xlu0 %v2557, 80
          %v2609 = vpop.permute.xlu0 %2608
          %2610 = vrot.lane.b32.xlu0 %v2560, 80
          %v2611 = vpop.permute.xlu0 %2610
          %2612 = vrot.lane.b32.xlu0 %v2563, 80
          %v2613 = vpop.permute.xlu0 %2612
          %2614 = vrot.lane.b32.xlu0 %v2566, 80
          %v2615 = vpop.permute.xlu0 %2614
          %2616 = vrot.lane.b32.xlu0 %v2569, 80
          %v2617 = vpop.permute.xlu0 %2616
          %2618 = vrot.lane.b32.xlu0 %v2572, 80
          %v2619 = vpop.permute.xlu0 %2618
          %2620 = vrot.lane.b32.xlu0 %v2575, 80
          %v2621 = vpop.permute.xlu0 %2620
          %2622 = vrot.lane.b32.xlu0 %v2578, 80
          %v2623 = vpop.permute.xlu0 %2622
          %2624 = vrot.lane.b32.xlu0 %v2581, 80
          %v2625 = vpop.permute.xlu0 %2624
          %2626 = vrot.lane.b32.xlu0 %v2584, 80
          %v2627 = vpop.permute.xlu0 %2626
          %2628 = vrot.lane.b32.xlu0 %v2587, 80
          %v2629 = vpop.permute.xlu0 %2628
          %2630 = vrot.lane.b32.xlu0 %v2590, 80
          %v2631 = vpop.permute.xlu0 %2630
          %2632 = vrot.lane.b32.xlu0 %v2593, 80
          %v2633 = vpop.permute.xlu0 %2632
          %v2634 = vrot.slane %v2114, 3
          %v2635 = vrot.slane %v2115, 3
          %v2636 = vrot.slane %v2116, 3
          %v2637 = vrot.slane %v2117, 3
          %v2638 = vrot.slane %v2118, 3
          %v2639 = vrot.slane %v2119, 3
          %v2640 = vrot.slane %v2120, 3
          %v2641 = vrot.slane %v2121, 3
          %v2642 = vrot.slane %v2122, 3
          %v2643 = vrot.slane %v2123, 3
          %v2644 = vrot.slane %v2124, 3
          %v2645 = vrot.slane %v2125, 3
          %v2646 = vrot.slane %v2126, 3
          %v2647 = vrot.slane %v2127, 3
          %v2648 = vrot.slane %v2128, 3
          %v2649 = vrot.slane %v2129, 3
          %v2650 = vrot.slane %v2130, 3
          %v2651 = vrot.slane %v2131, 3
          %v2652 = vrot.slane %v2132, 3
          %v2653 = vrot.slane %v2133, 3
          %2654 = vrot.lane.b32.xlu0 %v2634, 96
          %v2655 = vpop.permute.xlu0 %2654
          %2656 = vrot.lane.b32.xlu0 %v2635, 96
          %v2657 = vpop.permute.xlu0 %2656
          %2658 = vrot.lane.b32.xlu0 %v2636, 96
          %v2659 = vpop.permute.xlu0 %2658
          %2660 = vrot.lane.b32.xlu0 %v2637, 96
          %v2661 = vpop.permute.xlu0 %2660
          %2662 = vrot.lane.b32.xlu0 %v2638, 96
          %v2663 = vpop.permute.xlu0 %2662
          %2664 = vrot.lane.b32.xlu0 %v2639, 96
          %v2665 = vpop.permute.xlu0 %2664
          %2666 = vrot.lane.b32.xlu0 %v2640, 96
          %v2667 = vpop.permute.xlu0 %2666
          %2668 = vrot.lane.b32.xlu0 %v2641, 96
          %v2669 = vpop.permute.xlu0 %2668
          %2670 = vrot.lane.b32.xlu0 %v2642, 96
          %v2671 = vpop.permute.xlu0 %2670
          %2672 = vrot.lane.b32.xlu0 %v2643, 96
          %v2673 = vpop.permute.xlu0 %2672
          %2674 = vrot.lane.b32.xlu0 %v2644, 96
          %v2675 = vpop.permute.xlu0 %2674
          %2676 = vrot.lane.b32.xlu0 %v2645, 96
          %v2677 = vpop.permute.xlu0 %2676
          %2678 = vrot.lane.b32.xlu0 %v2646, 96
          %v2679 = vpop.permute.xlu0 %2678
          %2680 = vrot.lane.b32.xlu0 %v2647, 96
          %v2681 = vpop.permute.xlu0 %2680
          %2682 = vrot.lane.b32.xlu0 %v2648, 96
          %v2683 = vpop.permute.xlu0 %2682
          %2684 = vrot.lane.b32.xlu0 %v2649, 96
          %v2685 = vpop.permute.xlu0 %2684
          %2686 = vrot.lane.b32.xlu0 %v2650, 96
          %v2687 = vpop.permute.xlu0 %2686
          %2688 = vrot.lane.b32.xlu0 %v2651, 96
          %v2689 = vpop.permute.xlu0 %2688
          %2690 = vrot.lane.b32.xlu0 %v2652, 96
          %v2691 = vpop.permute.xlu0 %2690
          %2692 = vrot.lane.b32.xlu0 %v2653, 96
          %v2693 = vpop.permute.xlu0 %2692
          %v2696 = vsel %vm772, %v240, %v1595
          %v2699 = vsel %vm772, %v243, %v1597
          %v2702 = vsel %vm772, %v246, %v1599
          %v2705 = vsel %vm772, %v249, %v1601
          %v2708 = vsel %vm772, %v252, %v1603
          %v2711 = vsel %vm772, %v255, %v1605
          %v2714 = vsel %vm772, %v258, %v1607
          %v2717 = vsel %vm772, %v261, %v1609
          %v2720 = vsel %vm772, %v264, %v1611
          %v2723 = vsel %vm772, %v267, %v1613
          %v2726 = vsel %vm772, %v270, %v1615
          %v2729 = vsel %vm772, %v273, %v1617
          %v2732 = vsel %vm772, %v276, %v1619
          %v2735 = vsel %vm772, %v279, %v1621
          %v2738 = vsel %vm772, %v282, %v1623
          %v2741 = vsel %vm772, %v285, %v1625
          %v2744 = vsel %vm772, %v288, %v1627
          %v2747 = vsel %vm772, %v291, %v1629
          %v2750 = vsel %vm772, %v294, %v1631
          %v2753 = vsel %vm772, %v297, %v1633
          %v2755 = vsel %vm809, %v2696, %v1655
          %v2757 = vsel %vm809, %v2699, %v1657
          %v2759 = vsel %vm809, %v2702, %v1659
          %v2761 = vsel %vm809, %v2705, %v1661
          %v2763 = vsel %vm809, %v2708, %v1663
          %v2765 = vsel %vm809, %v2711, %v1665
          %v2767 = vsel %vm809, %v2714, %v1667
          %v2769 = vsel %vm809, %v2717, %v1669
          %v2771 = vsel %vm809, %v2720, %v1671
          %v2773 = vsel %vm809, %v2723, %v1673
          %v2775 = vsel %vm809, %v2726, %v1675
          %v2777 = vsel %vm809, %v2729, %v1677
          %v2779 = vsel %vm809, %v2732, %v1679
          %v2781 = vsel %vm809, %v2735, %v1681
          %v2783 = vsel %vm809, %v2738, %v1683
          %v2785 = vsel %vm809, %v2741, %v1685
          %v2787 = vsel %vm809, %v2744, %v1687
          %v2789 = vsel %vm809, %v2747, %v1689
          %v2791 = vsel %vm809, %v2750, %v1691
          %v2793 = vsel %vm809, %v2753, %v1693
          %v2795 = vsel %vm834, %v2755, %v1755
          %v2797 = vsel %vm834, %v2757, %v1757
          %v2799 = vsel %vm834, %v2759, %v1759
          %v2801 = vsel %vm834, %v2761, %v1761
          %v2803 = vsel %vm834, %v2763, %v1763
          %v2805 = vsel %vm834, %v2765, %v1765
          %v2807 = vsel %vm834, %v2767, %v1767
          %v2809 = vsel %vm834, %v2769, %v1769
          %v2811 = vsel %vm834, %v2771, %v1771
          %v2813 = vsel %vm834, %v2773, %v1773
          %v2815 = vsel %vm834, %v2775, %v1775
          %v2817 = vsel %vm834, %v2777, %v1777
          %v2819 = vsel %vm834, %v2779, %v1779
          %v2821 = vsel %vm834, %v2781, %v1781
          %v2823 = vsel %vm834, %v2783, %v1783
          %v2825 = vsel %vm834, %v2785, %v1785
          %v2827 = vsel %vm834, %v2787, %v1787
          %v2829 = vsel %vm834, %v2789, %v1789
          %v2831 = vsel %vm834, %v2791, %v1791
          %v2833 = vsel %vm834, %v2793, %v1793
          %v2835 = vsel %vm859, %v2795, %v1815
          %v2837 = vsel %vm859, %v2797, %v1817
          %v2839 = vsel %vm859, %v2799, %v1819
          %v2841 = vsel %vm859, %v2801, %v1821
          %v2843 = vsel %vm859, %v2803, %v1823
          %v2845 = vsel %vm859, %v2805, %v1825
          %v2847 = vsel %vm859, %v2807, %v1827
          %v2849 = vsel %vm859, %v2809, %v1829
          %v2851 = vsel %vm859, %v2811, %v1831
          %v2853 = vsel %vm859, %v2813, %v1833
          %v2855 = vsel %vm859, %v2815, %v1835
          %v2857 = vsel %vm859, %v2817, %v1837
          %v2859 = vsel %vm859, %v2819, %v1839
          %v2861 = vsel %vm859, %v2821, %v1841
          %v2863 = vsel %vm859, %v2823, %v1843
          %v2865 = vsel %vm859, %v2825, %v1845
          %v2867 = vsel %vm859, %v2827, %v1847
          %v2869 = vsel %vm859, %v2829, %v1849
          %v2871 = vsel %vm859, %v2831, %v1851
          %v2873 = vsel %vm859, %v2833, %v1853
          %v2875 = vsel %vm884, %v2835, %v1915
          %v2877 = vsel %vm884, %v2837, %v1917
          %v2879 = vsel %vm884, %v2839, %v1919
          %v2881 = vsel %vm884, %v2841, %v1921
          %v2883 = vsel %vm884, %v2843, %v1923
          %v2885 = vsel %vm884, %v2845, %v1925
          %v2887 = vsel %vm884, %v2847, %v1927
          %v2889 = vsel %vm884, %v2849, %v1929
          %v2891 = vsel %vm884, %v2851, %v1931
          %v2893 = vsel %vm884, %v2853, %v1933
          %v2895 = vsel %vm884, %v2855, %v1935
          %v2897 = vsel %vm884, %v2857, %v1937
          %v2899 = vsel %vm884, %v2859, %v1939
          %v2901 = vsel %vm884, %v2861, %v1941
          %v2903 = vsel %vm884, %v2863, %v1943
          %v2905 = vsel %vm884, %v2865, %v1945
          %v2907 = vsel %vm884, %v2867, %v1947
          %v2909 = vsel %vm884, %v2869, %v1949
          %v2911 = vsel %vm884, %v2871, %v1951
          %v2913 = vsel %vm884, %v2873, %v1953
          %v2915 = vsel %vm909, %v2875, %v1975
          %v2917 = vsel %vm909, %v2877, %v1977
          %v2919 = vsel %vm909, %v2879, %v1979
          %v2921 = vsel %vm909, %v2881, %v1981
          %v2923 = vsel %vm909, %v2883, %v1983
          %v2925 = vsel %vm909, %v2885, %v1985
          %v2927 = vsel %vm909, %v2887, %v1987
          %v2929 = vsel %vm909, %v2889, %v1989
          %v2931 = vsel %vm909, %v2891, %v1991
          %v2933 = vsel %vm909, %v2893, %v1993
          %v2935 = vsel %vm909, %v2895, %v1995
          %v2937 = vsel %vm909, %v2897, %v1997
          %v2939 = vsel %vm909, %v2899, %v1999
          %v2941 = vsel %vm909, %v2901, %v2001
          %v2943 = vsel %vm909, %v2903, %v2003
          %v2945 = vsel %vm909, %v2905, %v2005
          %v2947 = vsel %vm909, %v2907, %v2007
          %v2949 = vsel %vm909, %v2909, %v2009
          %v2951 = vsel %vm909, %v2911, %v2011
          %v2953 = vsel %vm909, %v2913, %v2013
          %v2955 = vsel %vm934, %v2915, %v2075
          %v2957 = vsel %vm934, %v2917, %v2077
          %v2959 = vsel %vm934, %v2919, %v2079
          %v2961 = vsel %vm934, %v2921, %v2081
          %v2963 = vsel %vm934, %v2923, %v2083
          %v2965 = vsel %vm934, %v2925, %v2085
          %v2967 = vsel %vm934, %v2927, %v2087
          %v2969 = vsel %vm934, %v2929, %v2089
          %v2971 = vsel %vm934, %v2931, %v2091
          %v2973 = vsel %vm934, %v2933, %v2093
          %v2975 = vsel %vm934, %v2935, %v2095
          %v2977 = vsel %vm934, %v2937, %v2097
          %v2979 = vsel %vm934, %v2939, %v2099
          %v2981 = vsel %vm934, %v2941, %v2101
          %v2983 = vsel %vm934, %v2943, %v2103
          %v2985 = vsel %vm934, %v2945, %v2105
          %v2987 = vsel %vm934, %v2947, %v2107
          %v2989 = vsel %vm934, %v2949, %v2109
          %v2991 = vsel %vm934, %v2951, %v2111
          %v2993 = vsel %vm934, %v2953, %v2113
          %v2996 = vsel %vm772, %v241, %v2275
          %v2999 = vsel %vm772, %v244, %v2277
          %v3002 = vsel %vm772, %v247, %v2279
          %v3005 = vsel %vm772, %v250, %v2281
          %v3008 = vsel %vm772, %v253, %v2283
          %v3011 = vsel %vm772, %v256, %v2285
          %v3014 = vsel %vm772, %v259, %v2287
          %v3017 = vsel %vm772, %v262, %v2289
          %v3020 = vsel %vm772, %v265, %v2291
          %v3023 = vsel %vm772, %v268, %v2293
          %v3026 = vsel %vm772, %v271, %v2295
          %v3029 = vsel %vm772, %v274, %v2297
          %v3032 = vsel %vm772, %v277, %v2299
          %v3035 = vsel %vm772, %v280, %v2301
          %v3038 = vsel %vm772, %v283, %v2303
          %v3041 = vsel %vm772, %v286, %v2305
          %v3044 = vsel %vm772, %v289, %v2307
          %v3047 = vsel %vm772, %v292, %v2309
          %v3050 = vsel %vm772, %v295, %v2311
          %v3053 = vsel %vm772, %v298, %v2313
          %v3055 = vsel %vm809, %v2996, %v2335
          %v3057 = vsel %vm809, %v2999, %v2337
          %v3059 = vsel %vm809, %v3002, %v2339
          %v3061 = vsel %vm809, %v3005, %v2341
          %v3063 = vsel %vm809, %v3008, %v2343
          %v3065 = vsel %vm809, %v3011, %v2345
          %v3067 = vsel %vm809, %v3014, %v2347
          %v3069 = vsel %vm809, %v3017, %v2349
          %v3071 = vsel %vm809, %v3020, %v2351
          %v3073 = vsel %vm809, %v3023, %v2353
          %v3075 = vsel %vm809, %v3026, %v2355
          %v3077 = vsel %vm809, %v3029, %v2357
          %v3079 = vsel %vm809, %v3032, %v2359
          %v3081 = vsel %vm809, %v3035, %v2361
          %v3083 = vsel %vm809, %v3038, %v2363
          %v3085 = vsel %vm809, %v3041, %v2365
          %v3087 = vsel %vm809, %v3044, %v2367
          %v3089 = vsel %vm809, %v3047, %v2369
          %v3091 = vsel %vm809, %v3050, %v2371
          %v3093 = vsel %vm809, %v3053, %v2373
          %v3095 = vsel %vm834, %v3055, %v2435
          %v3097 = vsel %vm834, %v3057, %v2437
          %v3099 = vsel %vm834, %v3059, %v2439
          %v3101 = vsel %vm834, %v3061, %v2441
          %v3103 = vsel %vm834, %v3063, %v2443
          %v3105 = vsel %vm834, %v3065, %v2445
          %v3107 = vsel %vm834, %v3067, %v2447
          %v3109 = vsel %vm834, %v3069, %v2449
          %v3111 = vsel %vm834, %v3071, %v2451
          %v3113 = vsel %vm834, %v3073, %v2453
          %v3115 = vsel %vm834, %v3075, %v2455
          %v3117 = vsel %vm834, %v3077, %v2457
          %v3119 = vsel %vm834, %v3079, %v2459
          %v3121 = vsel %vm834, %v3081, %v2461
          %v3123 = vsel %vm834, %v3083, %v2463
          %v3125 = vsel %vm834, %v3085, %v2465
          %v3127 = vsel %vm834, %v3087, %v2467
          %v3129 = vsel %vm834, %v3089, %v2469
          %v3131 = vsel %vm834, %v3091, %v2471
          %v3133 = vsel %vm834, %v3093, %v2473
          %v3135 = vsel %vm859, %v3095, %v2495
          %v3137 = vsel %vm859, %v3097, %v2497
          %v3139 = vsel %vm859, %v3099, %v2499
          %v3141 = vsel %vm859, %v3101, %v2501
          %v3143 = vsel %vm859, %v3103, %v2503
          %v3145 = vsel %vm859, %v3105, %v2505
          %v3147 = vsel %vm859, %v3107, %v2507
          %v3149 = vsel %vm859, %v3109, %v2509
          %v3151 = vsel %vm859, %v3111, %v2511
          %v3153 = vsel %vm859, %v3113, %v2513
          %v3155 = vsel %vm859, %v3115, %v2515
          %v3157 = vsel %vm859, %v3117, %v2517
          %v3159 = vsel %vm859, %v3119, %v2519
          %v3161 = vsel %vm859, %v3121, %v2521
          %v3163 = vsel %vm859, %v3123, %v2523
          %v3165 = vsel %vm859, %v3125, %v2525
          %v3167 = vsel %vm859, %v3127, %v2527
          %v3169 = vsel %vm859, %v3129, %v2529
          %v3171 = vsel %vm859, %v3131, %v2531
          %v3173 = vsel %vm859, %v3133, %v2533
          %v3175 = vsel %vm884, %v3135, %v2595
          %v3177 = vsel %vm884, %v3137, %v2597
          %v3179 = vsel %vm884, %v3139, %v2599
          %v3181 = vsel %vm884, %v3141, %v2601
          %v3183 = vsel %vm884, %v3143, %v2603
          %v3185 = vsel %vm884, %v3145, %v2605
          %v3187 = vsel %vm884, %v3147, %v2607
          %v3189 = vsel %vm884, %v3149, %v2609
          %v3191 = vsel %vm884, %v3151, %v2611
          %v3193 = vsel %vm884, %v3153, %v2613
          %v3195 = vsel %vm884, %v3155, %v2615
          %v3197 = vsel %vm884, %v3157, %v2617
          %v3199 = vsel %vm884, %v3159, %v2619
          %v3201 = vsel %vm884, %v3161, %v2621
          %v3203 = vsel %vm884, %v3163, %v2623
          %v3205 = vsel %vm884, %v3165, %v2625
          %v3207 = vsel %vm884, %v3167, %v2627
          %v3209 = vsel %vm884, %v3169, %v2629
          %v3211 = vsel %vm884, %v3171, %v2631
          %v3213 = vsel %vm884, %v3173, %v2633
          %v3215 = vsel %vm909, %v3175, %v2655
          %v3217 = vsel %vm909, %v3177, %v2657
          %v3219 = vsel %vm909, %v3179, %v2659
          %v3221 = vsel %vm909, %v3181, %v2661
          %v3223 = vsel %vm909, %v3183, %v2663
          %v3225 = vsel %vm909, %v3185, %v2665
          %v3227 = vsel %vm909, %v3187, %v2667
          %v3229 = vsel %vm909, %v3189, %v2669
          %v3231 = vsel %vm909, %v3191, %v2671
          %v3233 = vsel %vm909, %v3193, %v2673
          %v3235 = vsel %vm909, %v3195, %v2675
          %v3237 = vsel %vm909, %v3197, %v2677
          %v3239 = vsel %vm909, %v3199, %v2679
          %v3241 = vsel %vm909, %v3201, %v2681
          %v3243 = vsel %vm909, %v3203, %v2683
          %v3245 = vsel %vm909, %v3205, %v2685
          %v3247 = vsel %vm909, %v3207, %v2687
          %v3249 = vsel %vm909, %v3209, %v2689
          %v3251 = vsel %vm909, %v3211, %v2691
          %v3253 = vsel %vm909, %v3213, %v2693
          %v3294 = vunpack.c.l.b16 %v2955
          %v3295 = vunpack.c.l.b16 %v3215
          %v3296 = vunpack.c.l.b16 %v2957
          %v3297 = vunpack.c.l.b16 %v3217
          %v3298 = vunpack.c.l.b16 %v2959
          %v3299 = vunpack.c.l.b16 %v3219
          %v3300 = vunpack.c.l.b16 %v2961
          %v3301 = vunpack.c.l.b16 %v3221
          %v3302 = vunpack.c.l.b16 %v2963
          %v3303 = vunpack.c.l.b16 %v3223
          %v3304 = vunpack.c.l.b16 %v2965
          %v3305 = vunpack.c.l.b16 %v3225
          %v3306 = vunpack.c.l.b16 %v2967
          %v3307 = vunpack.c.l.b16 %v3227
          %v3308 = vunpack.c.l.b16 %v2969
          %v3309 = vunpack.c.l.b16 %v3229
          %v3310 = vunpack.c.l.b16 %v2971
          %v3311 = vunpack.c.l.b16 %v3231
          %v3312 = vunpack.c.l.b16 %v2973
          %v3313 = vunpack.c.l.b16 %v3233
          %v3314 = vunpack.c.l.b16 %v2975
          %v3315 = vunpack.c.l.b16 %v3235
          %v3316 = vunpack.c.l.b16 %v2977
          %v3317 = vunpack.c.l.b16 %v3237
          %v3318 = vunpack.c.l.b16 %v2979
          %v3319 = vunpack.c.l.b16 %v3239
          %v3320 = vunpack.c.l.b16 %v2981
          %v3321 = vunpack.c.l.b16 %v3241
          %v3322 = vunpack.c.l.b16 %v2983
          %v3323 = vunpack.c.l.b16 %v3243
          %v3324 = vunpack.c.l.b16 %v2985
          %v3325 = vunpack.c.l.b16 %v3245
          %v3326 = vunpack.c.l.b16 %v2987
          %v3327 = vunpack.c.l.b16 %v3247
          %v3328 = vunpack.c.l.b16 %v2989
          %v3329 = vunpack.c.l.b16 %v3249
          %v3330 = vunpack.c.l.b16 %v2991
          %v3331 = vunpack.c.l.b16 %v3251
          %v3332 = vunpack.c.l.b16 %v2993
          %v3333 = vunpack.c.l.b16 %v3253
          %v3334 = vld [vmem:[%s2] sm:$0xf]
          %v3335 = vld [vmem:[%s2 + $0x4] sm:$0xf]
          %v3336 = vld [vmem:[%s2 + $0x8] sm:$0xf]
          %v3337 = vld [vmem:[%s2 + $0xc] sm:$0xf]
          %v3338 = vld [vmem:[%s2 + $0x10] sm:$0xf]
          %v3339 = vld [vmem:[%s2 + $0x14] sm:$0xf]
          %v3340 = vld [vmem:[%s2 + $0x18] sm:$0xf]
          %v3341 = vld [vmem:[%s2 + $0x1c] sm:$0xf]
          %v3342 = vld [vmem:[%s2 + $0x20] sm:$0xf]
          %v3343 = vld [vmem:[%s2 + $0x24] sm:$0xf]
          %v3344 = vld [vmem:[%s2 + $0x28] sm:$0xf]
          %v3345 = vld [vmem:[%s2 + $0x2c] sm:$0xf]
          %v3346 = vld [vmem:[%s2 + $0x30] sm:$0xf]
          %v3347 = vld [vmem:[%s2 + $0x34] sm:$0xf]
          %v3348 = vld [vmem:[%s2 + $0x38] sm:$0xf]
          %v3349 = vld [vmem:[%s2 + $0x3c] sm:$0xf]
          %v3350 = vld [vmem:[%s2 + $0x40] sm:$0xf]
          %v3351 = vld [vmem:[%s2 + $0x44] sm:$0xf]
          %v3352 = vld [vmem:[%s2 + $0x48] sm:$0xf]
          %v3353 = vld [vmem:[%s2 + $0x4c] sm:$0xf]
          %v3354 = vld [vmem:[%s2 + $0x50] sm:$0xf]
          %v3355 = vld [vmem:[%s2 + $0x54] sm:$0xf]
          %v3356 = vld [vmem:[%s2 + $0x58] sm:$0xf]
          %v3357 = vld [vmem:[%s2 + $0x5c] sm:$0xf]
          %v3358 = vld [vmem:[%s2 + $0x60] sm:$0xf]
          %v3359 = vld [vmem:[%s2 + $0x64] sm:$0xf]
          %v3360 = vld [vmem:[%s2 + $0x68] sm:$0xf]
          %v3361 = vld [vmem:[%s2 + $0x6c] sm:$0xf]
          %v3362 = vld [vmem:[%s2 + $0x70] sm:$0xf]
          %v3363 = vld [vmem:[%s2 + $0x74] sm:$0xf]
          %v3364 = vpack.c.b16 %v3296, %v3294
          %v3365 = vpack.c.b16 %v3297, %v3295
          %v3366 = vpack.c.b16 %v3300, %v3298
          %v3367 = vpack.c.b16 %v3301, %v3299
          %v3368 = vpack.c.b16 %v3304, %v3302
          %v3369 = vpack.c.b16 %v3305, %v3303
          %v3370 = vpack.c.b16 %v3308, %v3306
          %v3371 = vpack.c.b16 %v3309, %v3307
          %v3372 = vpack.c.b16 %v3312, %v3310
          %v3373 = vpack.c.b16 %v3313, %v3311
          %v3374 = vpack.c.b16 %v3316, %v3314
          %v3375 = vpack.c.b16 %v3317, %v3315
          %v3376 = vpack.c.b16 %v3320, %v3318
          %v3377 = vpack.c.b16 %v3321, %v3319
          %v3378 = vpack.c.b16 %v3324, %v3322
          %v3379 = vpack.c.b16 %v3325, %v3323
          %v3380 = vpack.c.b16 %v3328, %v3326
          %v3381 = vpack.c.b16 %v3329, %v3327
          %v3382 = vpack.c.b16 %v3332, %v3330
          %v3383 = vpack.c.b16 %v3333, %v3331
          %v3424 = vunpack.c.l.b16 %v3334
          %v3425 = vunpack.c.l.b16 %v3335
          %v3426 = vunpack.c.l.b16 %v3336
          %v3427 = vunpack.c.l.b16 %v3337
          %v3428 = vunpack.c.l.b16 %v3338
          %v3429 = vunpack.c.l.b16 %v3339
          %v3430 = vunpack.c.l.b16 %v3340
          %v3431 = vunpack.c.l.b16 %v3341
          %v3432 = vunpack.c.l.b16 %v3342
          %v3433 = vunpack.c.l.b16 %v3343
          %v3434 = vunpack.c.l.b16 %v3344
          %v3435 = vunpack.c.l.b16 %v3345
          %v3436 = vunpack.c.l.b16 %v3346
          %v3437 = vunpack.c.l.b16 %v3347
          %v3438 = vunpack.c.l.b16 %v3348
          %v3439 = vunpack.c.l.b16 %v3349
          %v3440 = vunpack.c.l.b16 %v3350
          %v3441 = vunpack.c.l.b16 %v3351
          %v3442 = vunpack.c.l.b16 %v3352
          %v3443 = vunpack.c.l.b16 %v3353
          %v3444 = vunpack.c.l.b16 %v3354
          %v3445 = vunpack.c.l.b16 %v3355
          %v3446 = vunpack.c.l.b16 %v3356
          %v3447 = vunpack.c.l.b16 %v3357
          %v3448 = vunpack.c.l.b16 %v3358
          %v3449 = vunpack.c.l.b16 %v3359
          %v3450 = vunpack.c.l.b16 %v3360
          %v3451 = vunpack.c.l.b16 %v3361
          %v3452 = vunpack.c.l.b16 %v3362
          %v3453 = vunpack.c.l.b16 %v3363
          %v3454 = vpack.c.b16 %v3425, %v3424
          %v3455 = vpack.c.b16 %v3427, %v3426
          %v3456 = vpack.c.b16 %v3429, %v3428
          %v3457 = vpack.c.b16 %v3431, %v3430
          %v3458 = vpack.c.b16 %v3433, %v3432
          %v3459 = vpack.c.b16 %v3435, %v3434
          %v3460 = vpack.c.b16 %v3437, %v3436
          %v3461 = vpack.c.b16 %v3439, %v3438
          %v3462 = vpack.c.b16 %v3441, %v3440
          %v3463 = vpack.c.b16 %v3443, %v3442
          %v3464 = vpack.c.b16 %v3445, %v3444
          %v3465 = vpack.c.b16 %v3447, %v3446
          %v3466 = vpack.c.b16 %v3449, %v3448
          %v3467 = vpack.c.b16 %v3451, %v3450
          %v3468 = vpack.c.b16 %v3453, %v3452
          %v3485 = vsel %vm934, %v3365, 0
          %v3488 = vsel %vm934, %v3367, 0
          %v3491 = vsel %vm934, %v3369, 0
          %v3494 = vsel %vm934, %v3371, 0
          %v3497 = vsel %vm934, %v3373, 0
          %v3500 = vsel %vm934, %v3375, 0
          %v3503 = vsel %vm934, %v3377, 0
          %v3506 = vsel %vm934, %v3379, 0
          %v3509 = vsel %vm934, %v3381, 0
          %v3512 = vsel %vm934, %v3383, 0
          %3514 = vmatprep.subr.bf16.mxu0 0
          %3515 = vmatpush1.bf16.msra.mxu0 %v3454
          %3516 = vmatprep.subr.bf16.mxu0 0
          %3517 = vmatpush1.bf16.msra.mxu0 %v3455
          %3518 = vmatprep.subr.bf16.mxu0 0
          %3519 = vmatpush1.bf16.msra.mxu0 %v3456
          %3520 = vmatprep.subr.bf16.mxu0 0
          %3521 = vmatpush1.bf16.msra.mxu0 %v3457
          %3522 = vmatprep.subr.bf16.mxu0 0
          %3523 = vmatpush1.bf16.msra.mxu0 %v3458
          %3524 = vmatprep.subr.bf16.mxu0 0
          %3525 = vmatpush1.bf16.msra.mxu0 %v3459
          %3526 = vmatprep.subr.bf16.mxu0 0
          %3527 = vmatpush1.bf16.msra.mxu0 %v3460
          %3528 = vmatprep.subr.bf16.mxu0 0
          %3529 = vmatpush1.bf16.msra.mxu0 %v3461
          %3530 = vmatprep.subr.bf16.mxu0 0
          %3531 = vmatpush1.bf16.msra.mxu0 %v3462
          %3532 = vmatprep.subr.bf16.mxu0 0
          %3533 = vmatpush1.bf16.msra.mxu0 %v3463
          %3534 = vmatprep.subr.bf16.mxu0 0
          %3535 = vmatpush1.bf16.msra.mxu0 %v3464
          %3536 = vmatprep.subr.bf16.mxu0 0
          %3537 = vmatpush1.bf16.msra.mxu0 %v3465
          %3538 = vmatprep.subr.bf16.mxu0 0
          %3539 = vmatpush1.bf16.msra.mxu0 %v3466
          %3540 = vmatprep.subr.bf16.mxu0 0
          %3541 = vmatpush1.bf16.msra.mxu0 %v3467
          %3542 = vmatprep.subr.bf16.mxu0 0
          %3543 = vmatpush1.bf16.msra.mxu0 %v3468
          %3544 = vmatprep.subr.bf16.mxu0 0
          %3545 = vmatpush1.bf16.msra.mxu0 0
          %3546 = vmatprep.mubr.bf16.mxu0 %v3485
          %3547 = vmatmul.mubr.bf16.gmra.mrb[0].mxu0 %v3364
          %v3548 = vpop.f32.mrb[0].mxu0
          %v3549 = vadd.f32 0.0, %v3548
          %v3550 = vpop.f32.mrb[0].mxu0
          %v3551 = vpop.f32.mrb[0].mxu0
          %v3552 = vadd.f32 0.0, %v3551
          %v3553 = vpop.f32.mrb[0].mxu0
          %3554 = vmatprep.mubr.bf16.mxu0 %v3488
          %3555 = vmatmul.mubr.bf16.gmra.mrb[0].mxu0 %v3366
          %v3556 = vpop.f32.mrb[0].mxu0
          %v3557 = vadd.f32 0.0, %v3556
          %v3558 = vpop.f32.mrb[0].mxu0
          %v3559 = vpop.f32.mrb[0].mxu0
          %v3560 = vadd.f32 0.0, %v3559
          %v3561 = vpop.f32.mrb[0].mxu0
          %3562 = vmatprep.mubr.bf16.mxu0 %v3491
          %3563 = vmatmul.mubr.bf16.gmra.mrb[0].mxu0 %v3368
          %v3564 = vpop.f32.mrb[0].mxu0
          %v3565 = vadd.f32 0.0, %v3564
          %v3566 = vpop.f32.mrb[0].mxu0
          %v3567 = vpop.f32.mrb[0].mxu0
          %v3568 = vadd.f32 0.0, %v3567
          %v3569 = vpop.f32.mrb[0].mxu0
          %3570 = vmatprep.mubr.bf16.mxu0 %v3494
          %3571 = vmatmul.mubr.bf16.gmra.mrb[0].mxu0 %v3370
          %v3572 = vpop.f32.mrb[0].mxu0
          %v3573 = vadd.f32 0.0, %v3572
          %v3574 = vpop.f32.mrb[0].mxu0
          %v3575 = vpop.f32.mrb[0].mxu0
          %v3576 = vadd.f32 0.0, %v3575
          %v3577 = vpop.f32.mrb[0].mxu0
          %3578 = vmatprep.mubr.bf16.mxu0 %v3497
          %3579 = vmatmul.mubr.bf16.gmra.mrb[0].mxu0 %v3372
          %v3580 = vpop.f32.mrb[0].mxu0
          %v3581 = vadd.f32 0.0, %v3580
          %v3582 = vpop.f32.mrb[0].mxu0
          %v3583 = vpop.f32.mrb[0].mxu0
          %v3584 = vadd.f32 0.0, %v3583
          %v3585 = vpop.f32.mrb[0].mxu0
          %3586 = vmatprep.mubr.bf16.mxu0 %v3500
          %3587 = vmatmul.mubr.bf16.gmra.mrb[0].mxu0 %v3374
          %v3588 = vpop.f32.mrb[0].mxu0
          %v3589 = vadd.f32 0.0, %v3588
          %v3590 = vpop.f32.mrb[0].mxu0
          %v3591 = vpop.f32.mrb[0].mxu0
          %v3592 = vadd.f32 0.0, %v3591
          %v3593 = vpop.f32.mrb[0].mxu0
          %3594 = vmatprep.mubr.bf16.mxu0 %v3503
          %3595 = vmatmul.mubr.bf16.gmra.mrb[0].mxu0 %v3376
          %v3596 = vpop.f32.mrb[0].mxu0
          %v3597 = vadd.f32 0.0, %v3596
          %v3598 = vpop.f32.mrb[0].mxu0
          %v3599 = vpop.f32.mrb[0].mxu0
          %v3600 = vadd.f32 0.0, %v3599
          %v3601 = vpop.f32.mrb[0].mxu0
          %3602 = vmatprep.mubr.bf16.mxu0 %v3506
          %3603 = vmatmul.mubr.bf16.gmra.mrb[0].mxu0 %v3378
          %v3604 = vpop.f32.mrb[0].mxu0
          %v3605 = vadd.f32 0.0, %v3604
          %v3606 = vpop.f32.mrb[0].mxu0
          %v3607 = vpop.f32.mrb[0].mxu0
          %v3608 = vadd.f32 0.0, %v3607
          %v3609 = vpop.f32.mrb[0].mxu0
          %3610 = vmatprep.mubr.bf16.mxu0 %v3509
          %3611 = vmatmul.mubr.bf16.gmra.mrb[0].mxu0 %v3380
          %v3612 = vpop.f32.mrb[0].mxu0
          %v3613 = vadd.f32 0.0, %v3612
          %v3614 = vpop.f32.mrb[0].mxu0
          %v3615 = vpop.f32.mrb[0].mxu0
          %v3616 = vadd.f32 0.0, %v3615
          %v3617 = vpop.f32.mrb[0].mxu0
          %3618 = vmatprep.mubr.bf16.mxu0 %v3512
          %3619 = vmatmul.mubr.bf16.gmra.mrb[0].mxu0 %v3382
          %v3620 = vpop.f32.mrb[0].mxu0
          %v3621 = vadd.f32 0.0, %v3620
          %v3622 = vpop.f32.mrb[0].mxu0
          %v3623 = vpop.f32.mrb[0].mxu0
          %v3624 = vadd.f32 0.0, %v3623
          %v3625 = vpop.f32.mrb[0].mxu0
          %3626 = vdwg.mxu0
          %v3627 = vpack.c.bf16 %v3549, %v3549
          %v3628 = vpack.c.bf16 %v3552, %v3552
          %v3629 = vpack.c.bf16 %v3557, %v3557
          %v3630 = vpack.c.bf16 %v3560, %v3560
          %v3631 = vpack.c.bf16 %v3565, %v3565
          %v3632 = vpack.c.bf16 %v3568, %v3568
          %v3633 = vpack.c.bf16 %v3573, %v3573
          %v3634 = vpack.c.bf16 %v3576, %v3576
          %v3635 = vpack.c.bf16 %v3581, %v3581
          %v3636 = vpack.c.bf16 %v3584, %v3584
          %v3637 = vpack.c.bf16 %v3589, %v3589
          %v3638 = vpack.c.bf16 %v3592, %v3592
          %v3639 = vpack.c.bf16 %v3597, %v3597
          %v3640 = vpack.c.bf16 %v3600, %v3600
          %v3641 = vpack.c.bf16 %v3605, %v3605
          %v3642 = vpack.c.bf16 %v3608, %v3608
          %v3643 = vpack.c.bf16 %v3613, %v3613
          %v3644 = vpack.c.bf16 %v3616, %v3616
          %v3645 = vpack.c.bf16 %v3621, %v3621
          %v3646 = vpack.c.bf16 %v3624, %v3624
          %v3648 = vshrl.u32 %v1454, 16
          %v3650 = vshll.u32 %v1454, 16
          %v3652 = vrot.slane %v3650, 1
          %v3653 = vor.u32 %v3648, %v3652
          %v3655 = vshrl.u32 %v1456, 16
          %v3657 = vshll.u32 %v1456, 16
          %v3659 = vrot.slane %v3657, 1
          %v3660 = vor.u32 %v3655, %v3659
          %v3662 = vshrl.u32 %v1458, 16
          %v3664 = vshll.u32 %v1458, 16
          %v3666 = vrot.slane %v3664, 1
          %v3667 = vor.u32 %v3662, %v3666
          %v3669 = vshrl.u32 %v1460, 16
          %v3671 = vshll.u32 %v1460, 16
          %v3673 = vrot.slane %v3671, 1
          %v3674 = vor.u32 %v3669, %v3673
          %v3676 = vshrl.u32 %v1462, 16
          %v3678 = vshll.u32 %v1462, 16
          %v3680 = vrot.slane %v3678, 1
          %v3681 = vor.u32 %v3676, %v3680
          %v3683 = vshrl.u32 %v1464, 16
          %v3685 = vshll.u32 %v1464, 16
          %v3687 = vrot.slane %v3685, 1
          %v3688 = vor.u32 %v3683, %v3687
          %3689 = vrot.lane.b32.xlu0 %v3653, 64
          %v3690 = vpop.permute.xlu0 %3689
          %3691 = vrot.lane.b32.xlu0 %v3660, 64
          %v3692 = vpop.permute.xlu0 %3691
          %3693 = vrot.lane.b32.xlu0 %v3667, 64
          %v3694 = vpop.permute.xlu0 %3693
          %3695 = vrot.lane.b32.xlu0 %v3674, 64
          %v3696 = vpop.permute.xlu0 %3695
          %3697 = vrot.lane.b32.xlu0 %v3681, 64
          %v3698 = vpop.permute.xlu0 %3697
          %3699 = vrot.lane.b32.xlu0 %v3688, 64
          %v3700 = vpop.permute.xlu0 %3699
          %v3707 = vrot.slane %v1454, 1
          %v3708 = vrot.slane %v1456, 1
          %v3709 = vrot.slane %v1458, 1
          %v3710 = vrot.slane %v1460, 1
          %v3711 = vrot.slane %v1462, 1
          %v3712 = vrot.slane %v1464, 1
          %v3713 = vrot.slane %v3648, 1
          %v3714 = vrot.slane %v3650, 2
          %v3715 = vor.u32 %v3713, %v3714
          %v3716 = vrot.slane %v3655, 1
          %v3717 = vrot.slane %v3657, 2
          %v3718 = vor.u32 %v3716, %v3717
          %v3719 = vrot.slane %v3662, 1
          %v3720 = vrot.slane %v3664, 2
          %v3721 = vor.u32 %v3719, %v3720
          %v3722 = vrot.slane %v3669, 1
          %v3723 = vrot.slane %v3671, 2
          %v3724 = vor.u32 %v3722, %v3723
          %v3725 = vrot.slane %v3676, 1
          %v3726 = vrot.slane %v3678, 2
          %v3727 = vor.u32 %v3725, %v3726
          %v3728 = vrot.slane %v3683, 1
          %v3729 = vrot.slane %v3685, 2
          %v3730 = vor.u32 %v3728, %v3729
          %3731 = vrot.lane.b32.xlu0 %v3715, 64
          %v3732 = vpop.permute.xlu0 %3731
          %3733 = vrot.lane.b32.xlu0 %v3718, 64
          %v3734 = vpop.permute.xlu0 %3733
          %3735 = vrot.lane.b32.xlu0 %v3721, 64
          %v3736 = vpop.permute.xlu0 %3735
          %3737 = vrot.lane.b32.xlu0 %v3724, 64
          %v3738 = vpop.permute.xlu0 %3737
          %3739 = vrot.lane.b32.xlu0 %v3727, 64
          %v3740 = vpop.permute.xlu0 %3739
          %3741 = vrot.lane.b32.xlu0 %v3730, 64
          %v3742 = vpop.permute.xlu0 %3741
          %v3743 = vrot.slane %v1454, 2
          %v3744 = vrot.slane %v1456, 2
          %v3745 = vrot.slane %v1458, 2
          %v3746 = vrot.slane %v1460, 2
          %v3747 = vrot.slane %v1462, 2
          %v3748 = vrot.slane %v1464, 2
          %v3749 = vrot.slane %v3648, 2
          %v3750 = vrot.slane %v3650, 3
          %v3751 = vor.u32 %v3749, %v3750
          %v3752 = vrot.slane %v3655, 2
          %v3753 = vrot.slane %v3657, 3
          %v3754 = vor.u32 %v3752, %v3753
          %v3755 = vrot.slane %v3662, 2
          %v3756 = vrot.slane %v3664, 3
          %v3757 = vor.u32 %v3755, %v3756
          %v3758 = vrot.slane %v3669, 2
          %v3759 = vrot.slane %v3671, 3
          %v3760 = vor.u32 %v3758, %v3759
          %v3761 = vrot.slane %v3676, 2
          %v3762 = vrot.slane %v3678, 3
          %v3763 = vor.u32 %v3761, %v3762
          %v3764 = vrot.slane %v3683, 2
          %v3765 = vrot.slane %v3685, 3
          %v3766 = vor.u32 %v3764, %v3765
          %3767 = vrot.lane.b32.xlu0 %v3751, 64
          %v3768 = vpop.permute.xlu0 %3767
          %3769 = vrot.lane.b32.xlu0 %v3754, 64
          %v3770 = vpop.permute.xlu0 %3769
          %3771 = vrot.lane.b32.xlu0 %v3757, 64
          %v3772 = vpop.permute.xlu0 %3771
          %3773 = vrot.lane.b32.xlu0 %v3760, 64
          %v3774 = vpop.permute.xlu0 %3773
          %3775 = vrot.lane.b32.xlu0 %v3763, 64
          %v3776 = vpop.permute.xlu0 %3775
          %3777 = vrot.lane.b32.xlu0 %v3766, 64
          %v3778 = vpop.permute.xlu0 %3777
          %v3779 = vrot.slane %v1454, 3
          %v3780 = vrot.slane %v1456, 3
          %v3781 = vrot.slane %v1458, 3
          %v3782 = vrot.slane %v1460, 3
          %v3783 = vrot.slane %v1462, 3
          %v3784 = vrot.slane %v1464, 3
          %v3785 = vrot.slane %v3648, 3
          %v3786 = vrot.slane %v3650, 4
          %v3787 = vor.u32 %v3785, %v3786
          %v3788 = vrot.slane %v3655, 3
          %v3789 = vrot.slane %v3657, 4
          %v3790 = vor.u32 %v3788, %v3789
          %v3791 = vrot.slane %v3662, 3
          %v3792 = vrot.slane %v3664, 4
          %v3793 = vor.u32 %v3791, %v3792
          %v3794 = vrot.slane %v3669, 3
          %v3795 = vrot.slane %v3671, 4
          %v3796 = vor.u32 %v3794, %v3795
          %v3797 = vrot.slane %v3676, 3
          %v3798 = vrot.slane %v3678, 4
          %v3799 = vor.u32 %v3797, %v3798
          %v3800 = vrot.slane %v3683, 3
          %v3801 = vrot.slane %v3685, 4
          %v3802 = vor.u32 %v3800, %v3801
          %3803 = vrot.lane.b32.xlu0 %v3787, 64
          %v3804 = vpop.permute.xlu0 %3803
          %3805 = vrot.lane.b32.xlu0 %v3790, 64
          %v3806 = vpop.permute.xlu0 %3805
          %3807 = vrot.lane.b32.xlu0 %v3793, 64
          %v3808 = vpop.permute.xlu0 %3807
          %3809 = vrot.lane.b32.xlu0 %v3796, 64
          %v3810 = vpop.permute.xlu0 %3809
          %3811 = vrot.lane.b32.xlu0 %v3799, 64
          %v3812 = vpop.permute.xlu0 %3811
          %3813 = vrot.lane.b32.xlu0 %v3802, 64
          %v3814 = vpop.permute.xlu0 %3813
          %v3815 = vrot.slane %v1454, 4
          %v3816 = vrot.slane %v1456, 4
          %v3817 = vrot.slane %v1458, 4
          %v3818 = vrot.slane %v1460, 4
          %v3819 = vrot.slane %v1462, 4
          %v3820 = vrot.slane %v1464, 4
          %vm3821 = vsmask.f32 3328
          %v3822 = vrot.slane %v3648, 4
          %v3823 = vrot.slane %v3650, 5
          %v3824 = vor.u32 %v3822, %v3823
          %v3826 = vshll.u32 %v1455, 16
          %v3828 = vrot.slane %v3826, 5
          %v3829 = vsel %vm3821, %v3824, %v3828
          %v3830 = vrot.slane %v3655, 4
          %v3831 = vrot.slane %v3657, 5
          %v3832 = vor.u32 %v3830, %v3831
          %v3834 = vshll.u32 %v1457, 16
          %v3836 = vrot.slane %v3834, 5
          %v3837 = vsel %vm3821, %v3832, %v3836
          %v3838 = vrot.slane %v3662, 4
          %v3839 = vrot.slane %v3664, 5
          %v3840 = vor.u32 %v3838, %v3839
          %v3842 = vshll.u32 %v1459, 16
          %v3844 = vrot.slane %v3842, 5
          %v3845 = vsel %vm3821, %v3840, %v3844
          %v3846 = vrot.slane %v3669, 4
          %v3847 = vrot.slane %v3671, 5
          %v3848 = vor.u32 %v3846, %v3847
          %v3850 = vshll.u32 %v1461, 16
          %v3852 = vrot.slane %v3850, 5
          %v3853 = vsel %vm3821, %v3848, %v3852
          %v3854 = vrot.slane %v3676, 4
          %v3855 = vrot.slane %v3678, 5
          %v3856 = vor.u32 %v3854, %v3855
          %v3858 = vshll.u32 %v1463, 16
          %v3860 = vrot.slane %v3858, 5
          %v3861 = vsel %vm3821, %v3856, %v3860
          %v3862 = vrot.slane %v3683, 4
          %v3863 = vrot.slane %v3685, 5
          %v3864 = vor.u32 %v3862, %v3863
          %v3866 = vshll.u32 %v1465, 16
          %v3868 = vrot.slane %v3866, 5
          %v3869 = vsel %vm3821, %v3864, %v3868
          %3870 = vrot.lane.b32.xlu0 %v3829, 64
          %v3871 = vpop.permute.xlu0 %3870
          %3872 = vrot.lane.b32.xlu0 %v3837, 64
          %v3873 = vpop.permute.xlu0 %3872
          %3874 = vrot.lane.b32.xlu0 %v3845, 64
          %v3875 = vpop.permute.xlu0 %3874
          %3876 = vrot.lane.b32.xlu0 %v3853, 64
          %v3877 = vpop.permute.xlu0 %3876
          %3878 = vrot.lane.b32.xlu0 %v3861, 64
          %v3879 = vpop.permute.xlu0 %3878
          %3880 = vrot.lane.b32.xlu0 %v3869, 64
          %v3881 = vpop.permute.xlu0 %3880
          %vm3888 = vcmask 1042432
          %v3889 = vrot.slane %v1454, 5
          %v3890 = vrot.slane %v1455, 5
          %v3891 = vsel %vm3888, %v3889, %v3890
          %v3892 = vrot.slane %v1456, 5
          %v3893 = vrot.slane %v1457, 5
          %v3894 = vsel %vm3888, %v3892, %v3893
          %v3895 = vrot.slane %v1458, 5
          %v3896 = vrot.slane %v1459, 5
          %v3897 = vsel %vm3888, %v3895, %v3896
          %v3898 = vrot.slane %v1460, 5
          %v3899 = vrot.slane %v1461, 5
          %v3900 = vsel %vm3888, %v3898, %v3899
          %v3901 = vrot.slane %v1462, 5
          %v3902 = vrot.slane %v1463, 5
          %v3903 = vsel %vm3888, %v3901, %v3902
          %v3904 = vrot.slane %v1464, 5
          %v3905 = vrot.slane %v1465, 5
          %v3906 = vsel %vm3888, %v3904, %v3905
          %vm3907 = vsmask.f32 2304
          %v3908 = vrot.slane %v3648, 5
          %v3909 = vrot.slane %v3650, 6
          %v3910 = vor.u32 %v3908, %v3909
          %v3911 = vshrl.u32 %v1455, 16
          %v3913 = vrot.slane %v3911, 5
          %v3914 = vrot.slane %v3826, 6
          %v3915 = vor.u32 %v3913, %v3914
          %v3916 = vsel %vm3907, %v3910, %v3915
          %v3917 = vrot.slane %v3655, 5
          %v3918 = vrot.slane %v3657, 6
          %v3919 = vor.u32 %v3917, %v3918
          %v3920 = vshrl.u32 %v1457, 16
          %v3922 = vrot.slane %v3920, 5
          %v3923 = vrot.slane %v3834, 6
          %v3924 = vor.u32 %v3922, %v3923
          %v3925 = vsel %vm3907, %v3919, %v3924
          %v3926 = vrot.slane %v3662, 5
          %v3927 = vrot.slane %v3664, 6
          %v3928 = vor.u32 %v3926, %v3927
          %v3929 = vshrl.u32 %v1459, 16
          %v3931 = vrot.slane %v3929, 5
          %v3932 = vrot.slane %v3842, 6
          %v3933 = vor.u32 %v3931, %v3932
          %v3934 = vsel %vm3907, %v3928, %v3933
          %v3935 = vrot.slane %v3669, 5
          %v3936 = vrot.slane %v3671, 6
          %v3937 = vor.u32 %v3935, %v3936
          %v3938 = vshrl.u32 %v1461, 16
          %v3940 = vrot.slane %v3938, 5
          %v3941 = vrot.slane %v3850, 6
          %v3942 = vor.u32 %v3940, %v3941
          %v3943 = vsel %vm3907, %v3937, %v3942
          %v3944 = vrot.slane %v3676, 5
          %v3945 = vrot.slane %v3678, 6
          %v3946 = vor.u32 %v3944, %v3945
          %v3947 = vshrl.u32 %v1463, 16
          %v3949 = vrot.slane %v3947, 5
          %v3950 = vrot.slane %v3858, 6
          %v3951 = vor.u32 %v3949, %v3950
          %v3952 = vsel %vm3907, %v3946, %v3951
          %v3953 = vrot.slane %v3683, 5
          %v3954 = vrot.slane %v3685, 6
          %v3955 = vor.u32 %v3953, %v3954
          %v3956 = vshrl.u32 %v1465, 16
          %v3958 = vrot.slane %v3956, 5
          %v3959 = vrot.slane %v3866, 6
          %v3960 = vor.u32 %v3958, %v3959
          %v3961 = vsel %vm3907, %v3955, %v3960
          %3962 = vrot.lane.b32.xlu0 %v3916, 64
          %v3963 = vpop.permute.xlu0 %3962
          %3964 = vrot.lane.b32.xlu0 %v3925, 64
          %v3965 = vpop.permute.xlu0 %3964
          %3966 = vrot.lane.b32.xlu0 %v3934, 64
          %v3967 = vpop.permute.xlu0 %3966
          %3968 = vrot.lane.b32.xlu0 %v3943, 64
          %v3969 = vpop.permute.xlu0 %3968
          %3970 = vrot.lane.b32.xlu0 %v3952, 64
          %v3971 = vpop.permute.xlu0 %3970
          %3972 = vrot.lane.b32.xlu0 %v3961, 64
          %v3973 = vpop.permute.xlu0 %3972
          %vm3974 = vcmask 1041408
          %v3975 = vrot.slane %v1454, 6
          %v3976 = vrot.slane %v1455, 6
          %v3977 = vsel %vm3974, %v3975, %v3976
          %v3978 = vrot.slane %v1456, 6
          %v3979 = vrot.slane %v1457, 6
          %v3980 = vsel %vm3974, %v3978, %v3979
          %v3981 = vrot.slane %v1458, 6
          %v3982 = vrot.slane %v1459, 6
          %v3983 = vsel %vm3974, %v3981, %v3982
          %v3984 = vrot.slane %v1460, 6
          %v3985 = vrot.slane %v1461, 6
          %v3986 = vsel %vm3974, %v3984, %v3985
          %v3987 = vrot.slane %v1462, 6
          %v3988 = vrot.slane %v1463, 6
          %v3989 = vsel %vm3974, %v3987, %v3988
          %v3990 = vrot.slane %v1464, 6
          %v3991 = vrot.slane %v1465, 6
          %v3992 = vsel %vm3974, %v3990, %v3991
          %vm3993 = vsmask.f32 1280
          %v3994 = vrot.slane %v3648, 6
          %v3995 = vrot.slane %v3650, 7
          %v3996 = vor.u32 %v3994, %v3995
          %v3997 = vrot.slane %v3911, 6
          %v3998 = vrot.slane %v3826, 7
          %v3999 = vor.u32 %v3997, %v3998
          %v4000 = vsel %vm3993, %v3996, %v3999
          %v4001 = vrot.slane %v3655, 6
          %v4002 = vrot.slane %v3657, 7
          %v4003 = vor.u32 %v4001, %v4002
          %v4004 = vrot.slane %v3920, 6
          %v4005 = vrot.slane %v3834, 7
          %v4006 = vor.u32 %v4004, %v4005
          %v4007 = vsel %vm3993, %v4003, %v4006
          %v4008 = vrot.slane %v3662, 6
          %v4009 = vrot.slane %v3664, 7
          %v4010 = vor.u32 %v4008, %v4009
          %v4011 = vrot.slane %v3929, 6
          %v4012 = vrot.slane %v3842, 7
          %v4013 = vor.u32 %v4011, %v4012
          %v4014 = vsel %vm3993, %v4010, %v4013
          %v4015 = vrot.slane %v3669, 6
          %v4016 = vrot.slane %v3671, 7
          %v4017 = vor.u32 %v4015, %v4016
          %v4018 = vrot.slane %v3938, 6
          %v4019 = vrot.slane %v3850, 7
          %v4020 = vor.u32 %v4018, %v4019
          %v4021 = vsel %vm3993, %v4017, %v4020
          %v4022 = vrot.slane %v3676, 6
          %v4023 = vrot.slane %v3678, 7
          %v4024 = vor.u32 %v4022, %v4023
          %v4025 = vrot.slane %v3947, 6
          %v4026 = vrot.slane %v3858, 7
          %v4027 = vor.u32 %v4025, %v4026
          %v4028 = vsel %vm3993, %v4024, %v4027
          %v4029 = vrot.slane %v3683, 6
          %v4030 = vrot.slane %v3685, 7
          %v4031 = vor.u32 %v4029, %v4030
          %v4032 = vrot.slane %v3956, 6
          %v4033 = vrot.slane %v3866, 7
          %v4034 = vor.u32 %v4032, %v4033
          %v4035 = vsel %vm3993, %v4031, %v4034
          %4036 = vrot.lane.b32.xlu0 %v4000, 64
          %v4037 = vpop.permute.xlu0 %4036
          %4038 = vrot.lane.b32.xlu0 %v4007, 64
          %v4039 = vpop.permute.xlu0 %4038
          %4040 = vrot.lane.b32.xlu0 %v4014, 64
          %v4041 = vpop.permute.xlu0 %4040
          %4042 = vrot.lane.b32.xlu0 %v4021, 64
          %v4043 = vpop.permute.xlu0 %4042
          %4044 = vrot.lane.b32.xlu0 %v4028, 64
          %v4045 = vpop.permute.xlu0 %4044
          %4046 = vrot.lane.b32.xlu0 %v4035, 64
          %v4047 = vpop.permute.xlu0 %4046
          %vm4048 = vcmask 1040384
          %v4049 = vrot.slane %v1454, 7
          %v4050 = vrot.slane %v1455, 7
          %v4051 = vsel %vm4048, %v4049, %v4050
          %v4052 = vrot.slane %v1456, 7
          %v4053 = vrot.slane %v1457, 7
          %v4054 = vsel %vm4048, %v4052, %v4053
          %v4055 = vrot.slane %v1458, 7
          %v4056 = vrot.slane %v1459, 7
          %v4057 = vsel %vm4048, %v4055, %v4056
          %v4058 = vrot.slane %v1460, 7
          %v4059 = vrot.slane %v1461, 7
          %v4060 = vsel %vm4048, %v4058, %v4059
          %v4061 = vrot.slane %v1462, 7
          %v4062 = vrot.slane %v1463, 7
          %v4063 = vsel %vm4048, %v4061, %v4062
          %v4064 = vrot.slane %v1464, 7
          %v4065 = vrot.slane %v1465, 7
          %v4066 = vsel %vm4048, %v4064, %v4065
          %v4068 = vsel %vm859, %v1454, %v3690
          %v4070 = vsel %vm859, %v1456, %v3692
          %v4072 = vsel %vm859, %v1458, %v3694
          %v4074 = vsel %vm859, %v1460, %v3696
          %v4076 = vsel %vm859, %v1462, %v3698
          %v4078 = vsel %vm859, %v1464, %v3700
          %v4081 = vsel %vm859, %v3707, %v3732
          %v4084 = vsel %vm859, %v3708, %v3734
          %v4087 = vsel %vm859, %v3709, %v3736
          %v4090 = vsel %vm859, %v3710, %v3738
          %v4093 = vsel %vm859, %v3711, %v3740
          %v4096 = vsel %vm859, %v3712, %v3742
          %v4099 = vsel %vm859, %v3743, %v3768
          %v4102 = vsel %vm859, %v3744, %v3770
          %v4105 = vsel %vm859, %v3745, %v3772
          %v4108 = vsel %vm859, %v3746, %v3774
          %v4111 = vsel %vm859, %v3747, %v3776
          %v4114 = vsel %vm859, %v3748, %v3778
          %v4117 = vsel %vm859, %v3779, %v3804
          %v4120 = vsel %vm859, %v3780, %v3806
          %v4123 = vsel %vm859, %v3781, %v3808
          %v4126 = vsel %vm859, %v3782, %v3810
          %v4129 = vsel %vm859, %v3783, %v3812
          %v4132 = vsel %vm859, %v3784, %v3814
          %v4135 = vsel %vm859, %v3815, %v3871
          %v4138 = vsel %vm859, %v3816, %v3873
          %v4141 = vsel %vm859, %v3817, %v3875
          %v4144 = vsel %vm859, %v3818, %v3877
          %v4147 = vsel %vm859, %v3819, %v3879
          %v4150 = vsel %vm859, %v3820, %v3881
          %v4153 = vsel %vm859, %v3891, %v3963
          %v4156 = vsel %vm859, %v3894, %v3965
          %v4159 = vsel %vm859, %v3897, %v3967
          %v4162 = vsel %vm859, %v3900, %v3969
          %v4165 = vsel %vm859, %v3903, %v3971
          %v4168 = vsel %vm859, %v3906, %v3973
          %v4171 = vsel %vm859, %v3977, %v4037
          %v4174 = vsel %vm859, %v3980, %v4039
          %v4177 = vsel %vm859, %v3983, %v4041
          %v4180 = vsel %vm859, %v3986, %v4043
          %v4183 = vsel %vm859, %v3989, %v4045
          %v4186 = vsel %vm859, %v3992, %v4047
          %v4229 = vunpack.c.l.b16 %v4068
          %v4230 = vunpack.c.l.b16 %v4081
          %v4231 = vunpack.c.l.b16 %v4099
          %v4232 = vunpack.c.l.b16 %v4117
          %v4233 = vunpack.c.l.b16 %v4135
          %v4234 = vunpack.c.l.b16 %v4153
          %v4235 = vunpack.c.l.b16 %v4171
          %v4236 = vunpack.c.l.b16 %v4051
          %v4237 = vunpack.c.l.b16 %v4070
          %v4238 = vunpack.c.l.b16 %v4084
          %v4239 = vunpack.c.l.b16 %v4102
          %v4240 = vunpack.c.l.b16 %v4120
          %v4241 = vunpack.c.l.b16 %v4138
          %v4242 = vunpack.c.l.b16 %v4156
          %v4243 = vunpack.c.l.b16 %v4174
          %v4244 = vunpack.c.l.b16 %v4054
          %v4245 = vunpack.c.l.b16 %v4072
          %v4246 = vunpack.c.l.b16 %v4087
          %v4247 = vunpack.c.l.b16 %v4105
          %v4248 = vunpack.c.l.b16 %v4123
          %v4249 = vunpack.c.l.b16 %v4141
          %v4250 = vunpack.c.l.b16 %v4159
          %v4251 = vunpack.c.l.b16 %v4177
          %v4252 = vunpack.c.l.b16 %v4057
          %v4253 = vunpack.c.l.b16 %v4074
          %v4254 = vunpack.c.l.b16 %v4090
          %v4255 = vunpack.c.l.b16 %v4108
          %v4256 = vunpack.c.l.b16 %v4126
          %v4257 = vunpack.c.l.b16 %v4144
          %v4258 = vunpack.c.l.b16 %v4162
          %v4259 = vunpack.c.l.b16 %v4180
          %v4260 = vunpack.c.l.b16 %v4060
          %v4261 = vunpack.c.l.b16 %v4076
          %v4262 = vunpack.c.l.b16 %v4093
          %v4263 = vunpack.c.l.b16 %v4111
          %v4264 = vunpack.c.l.b16 %v4129
          %v4265 = vunpack.c.l.b16 %v4147
          %v4266 = vunpack.c.l.b16 %v4165
          %v4267 = vunpack.c.l.b16 %v4183
          %v4268 = vunpack.c.l.b16 %v4063
          %v4269 = vunpack.c.l.b16 %v4078
          %v4270 = vunpack.c.l.b16 %v4096
          %v4271 = vunpack.c.l.b16 %v4114
          %v4272 = vunpack.c.l.b16 %v4132
          %v4273 = vunpack.c.l.b16 %v4150
          %v4274 = vunpack.c.l.b16 %v4168
          %v4275 = vunpack.c.l.b16 %v4186
          %v4276 = vunpack.c.l.b16 %v4066
          %v4277 = vpack.c.b16 %v4237, %v4229
          %v4278 = vpack.c.b16 %v4238, %v4230
          %v4279 = vpack.c.b16 %v4239, %v4231
          %v4280 = vpack.c.b16 %v4240, %v4232
          %v4281 = vpack.c.b16 %v4241, %v4233
          %v4282 = vpack.c.b16 %v4242, %v4234
          %v4283 = vpack.c.b16 %v4243, %v4235
          %v4284 = vpack.c.b16 %v4244, %v4236
          %v4285 = vpack.c.b16 %v4253, %v4245
          %v4286 = vpack.c.b16 %v4254, %v4246
          %v4287 = vpack.c.b16 %v4255, %v4247
          %v4288 = vpack.c.b16 %v4256, %v4248
          %v4289 = vpack.c.b16 %v4257, %v4249
          %v4290 = vpack.c.b16 %v4258, %v4250
          %v4291 = vpack.c.b16 %v4259, %v4251
          %v4292 = vpack.c.b16 %v4260, %v4252
          %v4293 = vpack.c.b16 %v4269, %v4261
          %v4294 = vpack.c.b16 %v4270, %v4262
          %v4295 = vpack.c.b16 %v4271, %v4263
          %v4296 = vpack.c.b16 %v4272, %v4264
          %v4297 = vpack.c.b16 %v4273, %v4265
          %v4298 = vpack.c.b16 %v4274, %v4266
          %v4299 = vpack.c.b16 %v4275, %v4267
          %v4300 = vpack.c.b16 %v4276, %v4268
          %4325 = vst [vmem:[#allocation2] sm:$0xff] %v4277
          %4326 = vst [vmem:[#allocation2 + $0x8] sm:$0xff] %v4278
          %4327 = vst [vmem:[#allocation2 + $0x10] sm:$0xff] %v4279
          %4328 = vst [vmem:[#allocation2 + $0x18] sm:$0xff] %v4280
          %4329 = vst [vmem:[#allocation2 + $0x20] sm:$0xff] %v4281
          %4330 = vst [vmem:[#allocation2 + $0x28] sm:$0xff] %v4282
          %4331 = vst [vmem:[#allocation2 + $0x30] sm:$0xff] %v4283
          %4332 = vst.msk [vmem:[#allocation2 + $0x38] sm:$0xff] %vm859, %v4284
          %4333 = vst [vmem:[#allocation2 + $0x78] sm:$0xff] %v4285
          %4334 = vst [vmem:[#allocation2 + $0x80] sm:$0xff] %v4286
          %4335 = vst [vmem:[#allocation2 + $0x88] sm:$0xff] %v4287
          %4336 = vst [vmem:[#allocation2 + $0x90] sm:$0xff] %v4288
          %4337 = vst [vmem:[#allocation2 + $0x98] sm:$0xff] %v4289
          %4338 = vst [vmem:[#allocation2 + $0xa0] sm:$0xff] %v4290
          %4339 = vst [vmem:[#allocation2 + $0xa8] sm:$0xff] %v4291
          %4340 = vst.msk [vmem:[#allocation2 + $0xb0] sm:$0xff] %vm859, %v4292
          %4341 = vst [vmem:[#allocation2 + $0xf0] sm:$0xff] %v4293
          %4342 = vst [vmem:[#allocation2 + $0xf8] sm:$0xff] %v4294
          %4343 = vst [vmem:[#allocation2 + $0x100] sm:$0xff] %v4295
          %4344 = vst [vmem:[#allocation2 + $0x108] sm:$0xff] %v4296
          %4345 = vst [vmem:[#allocation2 + $0x110] sm:$0xff] %v4297
          %4346 = vst [vmem:[#allocation2 + $0x118] sm:$0xff] %v4298
          %4347 = vst [vmem:[#allocation2 + $0x120] sm:$0xff] %v4299
          %4348 = vst.msk [vmem:[#allocation2 + $0x128] sm:$0xff] %vm859, %v4300
          %4355 = vrot.lane.b32.xlu0 %v3628, 64
          %v4356 = vpop.permute.xlu0 %4355
          %4357 = vrot.lane.b32.xlu0 %v3629, 64
          %v4358 = vpop.permute.xlu0 %4357
          %4359 = vrot.lane.b32.xlu0 %v3630, 64
          %v4360 = vpop.permute.xlu0 %4359
          %4361 = vrot.lane.b32.xlu0 %v3631, 64
          %v4362 = vpop.permute.xlu0 %4361
          %4363 = vrot.lane.b32.xlu0 %v3632, 64
          %v4364 = vpop.permute.xlu0 %4363
          %4365 = vrot.lane.b32.xlu0 %v3633, 64
          %v4366 = vpop.permute.xlu0 %4365
          %4369 = vrot.lane.b32.xlu0 %v3634, 64
          %v4370 = vpop.permute.xlu0 %4369
          %4371 = vrot.lane.b32.xlu0 %v3635, 64
          %v4372 = vpop.permute.xlu0 %4371
          %4375 = vrot.lane.b32.xlu0 %v3636, 64
          %v4376 = vpop.permute.xlu0 %4375
          %4377 = vrot.lane.b32.xlu0 %v3637, 64
          %v4378 = vpop.permute.xlu0 %4377
          %4381 = vrot.lane.b32.xlu0 %v3638, 64
          %v4382 = vpop.permute.xlu0 %4381
          %4383 = vrot.lane.b32.xlu0 %v3639, 64
          %v4384 = vpop.permute.xlu0 %4383
          %4387 = vrot.lane.b32.xlu0 %v3640, 64
          %v4388 = vpop.permute.xlu0 %4387
          %4389 = vrot.lane.b32.xlu0 %v3641, 64
          %v4390 = vpop.permute.xlu0 %4389
          %4393 = vrot.lane.b32.xlu0 %v3642, 64
          %v4394 = vpop.permute.xlu0 %4393
          %4395 = vrot.lane.b32.xlu0 %v3643, 64
          %v4396 = vpop.permute.xlu0 %4395
          %4399 = vrot.lane.b32.xlu0 %v3644, 64
          %v4400 = vpop.permute.xlu0 %4399
          %4401 = vrot.lane.b32.xlu0 %v3645, 64
          %v4402 = vpop.permute.xlu0 %4401
          %v4405 = vsel %vm859, %v3627, %v4356
          %v4408 = vsel %vm859, %v3628, %v4358
          %v4411 = vsel %vm859, %v3629, %v4360
          %v4414 = vsel %vm859, %v3630, %v4362
          %v4417 = vsel %vm859, %v3631, %v4364
          %v4420 = vsel %vm859, %v3632, %v4366
          %v4423 = vsel %vm859, %v3633, %v4370
          %v4426 = vsel %vm859, %v3634, %v4372
          %v4429 = vsel %vm859, %v3635, %v4376
          %v4432 = vsel %vm859, %v3636, %v4378
          %v4435 = vsel %vm859, %v3637, %v4382
          %v4438 = vsel %vm859, %v3638, %v4384
          %v4441 = vsel %vm859, %v3639, %v4388
          %v4444 = vsel %vm859, %v3640, %v4390
          %v4447 = vsel %vm859, %v3641, %v4394
          %v4450 = vsel %vm859, %v3642, %v4396
          %v4453 = vsel %vm859, %v3643, %v4400
          %v4456 = vsel %vm859, %v3644, %v4402
          %v4476 = vunpack.c.l.b16 %v4405
          %v4477 = vunpack.c.l.b16 %v4411
          %v4478 = vunpack.c.l.b16 %v4417
          %v4479 = vunpack.c.l.b16 %v4423
          %v4480 = vunpack.c.l.b16 %v4429
          %v4481 = vunpack.c.l.b16 %v4435
          %v4482 = vunpack.c.l.b16 %v4441
          %v4483 = vunpack.c.l.b16 %v3641
          %v4484 = vunpack.c.l.b16 %v4408
          %v4485 = vunpack.c.l.b16 %v4414
          %v4486 = vunpack.c.l.b16 %v4420
          %v4487 = vunpack.c.l.b16 %v4426
          %v4488 = vunpack.c.l.b16 %v4432
          %v4489 = vunpack.c.l.b16 %v4438
          %v4490 = vunpack.c.l.b16 %v4444
          %v4491 = vunpack.c.l.b16 %v3642
          %v4492 = vunpack.c.l.b16 %v4447
          %v4493 = vunpack.c.l.b16 %v3643
          %v4494 = vunpack.c.l.b16 %v4450
          %v4495 = vunpack.c.l.b16 %v3644
          %v4496 = vunpack.c.l.b16 %v4453
          %v4497 = vunpack.c.l.b16 %v3645
          %v4498 = vunpack.c.l.b16 %v4456
          %v4499 = vunpack.c.l.b16 %v3646
          %v4500 = vpack.c.b16 %v4484, %v4476
          %v4501 = vpack.c.b16 %v4485, %v4477
          %v4502 = vpack.c.b16 %v4486, %v4478
          %v4503 = vpack.c.b16 %v4487, %v4479
          %v4504 = vpack.c.b16 %v4488, %v4480
          %v4505 = vpack.c.b16 %v4489, %v4481
          %v4506 = vpack.c.b16 %v4490, %v4482
          %v4507 = vpack.c.b16 %v4491, %v4483
          %v4508 = vpack.c.b16 %v4494, %v4492
          %v4509 = vpack.c.b16 %v4495, %v4493
          %v4510 = vpack.c.b16 %v4498, %v4496
          %v4511 = vpack.c.b16 %v4499, %v4497
          %4512 = vrot.lane.b32.xlu0 %v4500, 64
          %v4513 = vpop.permute.xlu0 %4512
          %4514 = vrot.lane.b32.xlu0 %v4501, 64
          %v4515 = vpop.permute.xlu0 %4514
          %4516 = vrot.lane.b32.xlu0 %v4502, 64
          %v4517 = vpop.permute.xlu0 %4516
          %4518 = vrot.lane.b32.xlu0 %v4503, 64
          %v4519 = vpop.permute.xlu0 %4518
          %4520 = vrot.lane.b32.xlu0 %v4504, 64
          %v4521 = vpop.permute.xlu0 %4520
          %4522 = vrot.lane.b32.xlu0 %v4505, 64
          %v4523 = vpop.permute.xlu0 %4522
          %4524 = vrot.lane.b32.xlu0 %v4506, 64
          %v4525 = vpop.permute.xlu0 %4524
          %4526 = vrot.lane.b32.xlu0 %v4507, 64
          %v4527 = vpop.permute.xlu0 %4526
          %4528 = vrot.lane.b32.xlu0 %v4508, 64
          %v4529 = vpop.permute.xlu0 %4528
          %4530 = vrot.lane.b32.xlu0 %v4509, 64
          %v4531 = vpop.permute.xlu0 %4530
          %4532 = vrot.lane.b32.xlu0 %v4510, 64
          %v4533 = vpop.permute.xlu0 %4532
          %4534 = vrot.lane.b32.xlu0 %v4511, 64
          %v4535 = vpop.permute.xlu0 %4534
          %vm4536 = vcmask 523264
          %v4537 = vsel %vm4536, %v4513, %v4515
          %v4538 = vsel %vm4536, %v4515, %v4517
          %v4539 = vsel %vm4536, %v4517, %v4519
          %v4540 = vsel %vm4536, %v4519, %v4521
          %v4541 = vsel %vm4536, %v4521, %v4523
          %v4542 = vsel %vm4536, %v4523, %v4525
          %v4543 = vsel %vm4536, %v4525, %v4527
          %v4544 = vsel %vm4536, %v4525, %v4529
          %v4545 = vsel %vm4536, %v4529, %v4531
          %v4546 = vsel %vm4536, %v4529, %v4533
          %v4547 = vsel %vm4536, %v4533, %v4535
          %vm4562 = vcmask 1048064
          %4563 = vst.msk [vmem:[#allocation2 + $0x38] sm:$0xff] %vm4562, %v4513
          %4564 = vst [vmem:[#allocation2 + $0x40] sm:$0xff] %v4537
          %4565 = vst [vmem:[#allocation2 + $0x48] sm:$0xff] %v4538
          %4566 = vst [vmem:[#allocation2 + $0x50] sm:$0xff] %v4539
          %4567 = vst [vmem:[#allocation2 + $0x58] sm:$0xff] %v4540
          %4568 = vst [vmem:[#allocation2 + $0x60] sm:$0xff] %v4541
          %4569 = vst [vmem:[#allocation2 + $0x68] sm:$0xff] %v4542
          %4570 = vst [vmem:[#allocation2 + $0x70] sm:$0xff] %v4543
          %4571 = vst.msk [vmem:[#allocation2 + $0xb0] sm:$0xff] %vm4562, %v4515
          %4572 = vst [vmem:[#allocation2 + $0xb8] sm:$0xff] %v4538
          %4573 = vst [vmem:[#allocation2 + $0xc0] sm:$0xff] %v4539
          %4574 = vst [vmem:[#allocation2 + $0xc8] sm:$0xff] %v4540
          %4575 = vst [vmem:[#allocation2 + $0xd0] sm:$0xff] %v4541
          %4576 = vst [vmem:[#allocation2 + $0xd8] sm:$0xff] %v4542
          %4577 = vst [vmem:[#allocation2 + $0xe0] sm:$0xff] %v4544
          %4578 = vst [vmem:[#allocation2 + $0xe8] sm:$0xff] %v4545
          %4579 = vst.msk [vmem:[#allocation2 + $0x128] sm:$0xff] %vm4562, %v4517
          %4580 = vst [vmem:[#allocation2 + $0x130] sm:$0xff] %v4539
          %4581 = vst [vmem:[#allocation2 + $0x138] sm:$0xff] %v4540
          %4582 = vst [vmem:[#allocation2 + $0x140] sm:$0xff] %v4541
          %4583 = vst [vmem:[#allocation2 + $0x148] sm:$0xff] %v4542
          %4584 = vst [vmem:[#allocation2 + $0x150] sm:$0xff] %v4544
          %4585 = vst [vmem:[#allocation2 + $0x158] sm:$0xff] %v4546
          %4586 = vst [vmem:[#allocation2 + $0x160] sm:$0xff] %v4547
        $region44: #{tpu_custom_call.1} parent=35 // pred_fallthru
          _
        %v4587 = vld [vmem:[#allocation2] sm:$0xff]
        %v4588 = vld [vmem:[#allocation2 + $0x8] sm:$0xff]
        %v4589 = vld [vmem:[#allocation2 + $0x10] sm:$0xff]
        %v4590 = vld [vmem:[#allocation2 + $0x18] sm:$0xff]
        %v4591 = vld [vmem:[#allocation2 + $0x20] sm:$0xff]
        %v4592 = vld [vmem:[#allocation2 + $0x28] sm:$0xff]
        %v4593 = vld [vmem:[#allocation2 + $0x30] sm:$0xff]
        %v4594 = vld [vmem:[#allocation2 + $0x38] sm:$0xff]
        %v4595 = vld [vmem:[#allocation2 + $0x40] sm:$0xff]
        %v4596 = vld [vmem:[#allocation2 + $0x48] sm:$0xff]
        %v4597 = vld [vmem:[#allocation2 + $0x50] sm:$0xff]
        %v4598 = vld [vmem:[#allocation2 + $0x58] sm:$0xff]
        %v4599 = vld [vmem:[#allocation2 + $0x60] sm:$0xff]
        %v4600 = vld [vmem:[#allocation2 + $0x68] sm:$0xff]
        %v4601 = vld [vmem:[#allocation2 + $0x70] sm:$0xff]
        %v4602 = vld [vmem:[#allocation2 + $0x78] sm:$0xff]
        %v4603 = vld [vmem:[#allocation2 + $0x80] sm:$0xff]
        %v4604 = vld [vmem:[#allocation2 + $0x88] sm:$0xff]
        %v4605 = vld [vmem:[#allocation2 + $0x90] sm:$0xff]
        %v4606 = vld [vmem:[#allocation2 + $0x98] sm:$0xff]
        %v4607 = vld [vmem:[#allocation2 + $0xa0] sm:$0xff]
        %v4608 = vld [vmem:[#allocation2 + $0xa8] sm:$0xff]
        %v4609 = vld [vmem:[#allocation2 + $0xb0] sm:$0xff]
        %v4610 = vld [vmem:[#allocation2 + $0xb8] sm:$0xff]
        %v4611 = vld [vmem:[#allocation2 + $0xc0] sm:$0xff]
        %v4612 = vld [vmem:[#allocation2 + $0xc8] sm:$0xff]
        %v4613 = vld [vmem:[#allocation2 + $0xd0] sm:$0xff]
        %v4614 = vld [vmem:[#allocation2 + $0xd8] sm:$0xff]
        %v4615 = vld [vmem:[#allocation2 + $0xe0] sm:$0xff]
        %v4616 = vld [vmem:[#allocation2 + $0xe8] sm:$0xff]
        %v4617 = vld [vmem:[#allocation2 + $0xf0] sm:$0xff]
        %v4618 = vld [vmem:[#allocation2 + $0xf8] sm:$0xff]
        %v4619 = vld [vmem:[#allocation2 + $0x100] sm:$0xff]
        %v4620 = vld [vmem:[#allocation2 + $0x108] sm:$0xff]
        %v4621 = vld [vmem:[#allocation2 + $0x110] sm:$0xff]
        %v4622 = vld [vmem:[#allocation2 + $0x118] sm:$0xff]
        %v4623 = vld [vmem:[#allocation2 + $0x120] sm:$0xff]
        %v4624 = vld [vmem:[#allocation2 + $0x128] sm:$0xff]
        %v4625 = vld [vmem:[#allocation2 + $0x130] sm:$0xff]
        %v4626 = vld [vmem:[#allocation2 + $0x138] sm:$0xff]
        %v4627 = vld [vmem:[#allocation2 + $0x140] sm:$0xff]
        %v4628 = vld [vmem:[#allocation2 + $0x148] sm:$0xff]
        %v4629 = vld [vmem:[#allocation2 + $0x150] sm:$0xff]
        %v4630 = vld [vmem:[#allocation2 + $0x158] sm:$0xff]
        %v4631 = vld [vmem:[#allocation2 + $0x160] sm:$0xff]
        %v4632 = vld [vmem:[#allocation3] sm:$0xff]
        %v4633 = vld [vmem:[#allocation3 + $0x8] sm:$0xff]
        %v4634 = vld [vmem:[#allocation3 + $0x10] sm:$0xff]
        %v4635 = vld [vmem:[#allocation3 + $0x18] sm:$0xff]
        %v4636 = vld [vmem:[#allocation3 + $0x20] sm:$0xff]
        %v4637 = vld [vmem:[#allocation3 + $0x28] sm:$0xff]
        %v4638 = vld [vmem:[#allocation3 + $0x30] sm:$0xff]
        %v4639 = vld [vmem:[#allocation3 + $0x38] sm:$0xff]
        %v4640 = vld [vmem:[#allocation3 + $0x40] sm:$0xff]
        %v4641 = vld [vmem:[#allocation3 + $0x48] sm:$0xff]
        %v4642 = vld [vmem:[#allocation3 + $0x50] sm:$0xff]
        %v4643 = vld [vmem:[#allocation3 + $0x58] sm:$0xff]
        %v4644 = vld [vmem:[#allocation3 + $0x60] sm:$0xff]
        %v4645 = vld [vmem:[#allocation3 + $0x68] sm:$0xff]
        %v4646 = vld [vmem:[#allocation3 + $0x70] sm:$0xff]
        %v4647 = vld [vmem:[#allocation3 + $0x78] sm:$0xff]
        %v4648 = vld [vmem:[#allocation3 + $0x80] sm:$0xff]
        %v4649 = vld [vmem:[#allocation3 + $0x88] sm:$0xff]
        %v4650 = vld [vmem:[#allocation3 + $0x90] sm:$0xff]
        %v4651 = vld [vmem:[#allocation3 + $0x98] sm:$0xff]
        %v4652 = vld [vmem:[#allocation3 + $0xa0] sm:$0xff]
        %v4653 = vld [vmem:[#allocation3 + $0xa8] sm:$0xff]
        %v4654 = vld [vmem:[#allocation3 + $0xb0] sm:$0xff]
        %v4655 = vld [vmem:[#allocation3 + $0xb8] sm:$0xff]
        %v4656 = vld [vmem:[#allocation3 + $0xc0] sm:$0xff]
        %v4657 = vld [vmem:[#allocation3 + $0xc8] sm:$0xff]
        %v4658 = vld [vmem:[#allocation3 + $0xd0] sm:$0xff]
        %v4659 = vld [vmem:[#allocation3 + $0xd8] sm:$0xff]
        %v4660 = vld [vmem:[#allocation3 + $0xe0] sm:$0xff]
        %v4661 = vld [vmem:[#allocation3 + $0xe8] sm:$0xff]
        %v4662 = vld [vmem:[#allocation3 + $0xf0] sm:$0xff]
        %v4663 = vld [vmem:[#allocation3 + $0xf8] sm:$0xff]
        %v4664 = vld [vmem:[#allocation3 + $0x100] sm:$0xff]
        %v4665 = vld [vmem:[#allocation3 + $0x108] sm:$0xff]
        %v4666 = vld [vmem:[#allocation3 + $0x110] sm:$0xff]
        %v4667 = vld [vmem:[#allocation3 + $0x118] sm:$0xff]
        %v4668 = vld [vmem:[#allocation3 + $0x120] sm:$0xff]
        %v4669 = vld [vmem:[#allocation3 + $0x128] sm:$0xff]
        %v4670 = vld [vmem:[#allocation3 + $0x130] sm:$0xff]
        %v4671 = vld [vmem:[#allocation3 + $0x138] sm:$0xff]
        %v4672 = vld [vmem:[#allocation3 + $0x140] sm:$0xff]
        %v4673 = vld [vmem:[#allocation3 + $0x148] sm:$0xff]
        %v4674 = vld [vmem:[#allocation3 + $0x150] sm:$0xff]
        %v4675 = vld [vmem:[#allocation3 + $0x158] sm:$0xff]
        %v4676 = vld [vmem:[#allocation3 + $0x160] sm:$0xff]
        %v4677 = vld [vmem:[#allocation3 + $0x168] sm:$0xff]
        %v4678 = vld [vmem:[#allocation3 + $0x170] sm:$0xff]
        %v4679 = vld [vmem:[#allocation3 + $0x178] sm:$0xff]
        %v4680 = vld [vmem:[#allocation3 + $0x180] sm:$0xff]
        %v4681 = vld [vmem:[#allocation3 + $0x188] sm:$0xff]
        %v4682 = vld [vmem:[#allocation3 + $0x190] sm:$0xff]
        %v4683 = vld [vmem:[#allocation3 + $0x198] sm:$0xff]
        %v4684 = vld [vmem:[#allocation3 + $0x1a0] sm:$0xff]
        %v4685 = vld [vmem:[#allocation3 + $0x1a8] sm:$0xff]
        %v4686 = vld [vmem:[#allocation3 + $0x1b0] sm:$0xff]
        %v4687 = vld [vmem:[#allocation3 + $0x1b8] sm:$0xff]
        %v4688 = vld [vmem:[#allocation3 + $0x1c0] sm:$0xff]
        %v4689 = vld [vmem:[#allocation3 + $0x1c8] sm:$0xff]
        %v4690 = vld [vmem:[#allocation3 + $0x1d0] sm:$0xff]
        %v4691 = vld [vmem:[#allocation3 + $0x1d8] sm:$0xff]
        %v4692 = vld [vmem:[#allocation3 + $0x1e0] sm:$0xff]
        %v4693 = vld [vmem:[#allocation3 + $0x1e8] sm:$0xff]
        %v4694 = vld [vmem:[#allocation3 + $0x1f0] sm:$0xff]
        %v4695 = vld [vmem:[#allocation3 + $0x1f8] sm:$0xff]
        %v4696 = vld [vmem:[#allocation3 + $0x200] sm:$0xff]
        %v4697 = vld [vmem:[#allocation3 + $0x208] sm:$0xff]
        %v4698 = vld [vmem:[#allocation3 + $0x210] sm:$0xff]
        %v4699 = vld [vmem:[#allocation3 + $0x218] sm:$0xff]
        %v4700 = vld [vmem:[#allocation3 + $0x220] sm:$0xff]
        %v4701 = vld [vmem:[#allocation3 + $0x228] sm:$0xff]
        %v4702 = vld [vmem:[#allocation3 + $0x230] sm:$0xff]
        %v4703 = vld [vmem:[#allocation3 + $0x238] sm:$0xff]
        %v4704 = vld [vmem:[#allocation3 + $0x240] sm:$0xff]
        %v4705 = vld [vmem:[#allocation3 + $0x248] sm:$0xff]
        %v4706 = vld [vmem:[#allocation3 + $0x250] sm:$0xff]
        %v4707 = vld [vmem:[#allocation3 + $0x258] sm:$0xff]
        %v4708 = vld [vmem:[#allocation3 + $0x260] sm:$0xff]
        %v4709 = vld [vmem:[#allocation3 + $0x268] sm:$0xff]
        %v4710 = vld [vmem:[#allocation3 + $0x270] sm:$0xff]
        %v4711 = vld [vmem:[#allocation3 + $0x278] sm:$0xff]
        %v4712 = vld [vmem:[#allocation3 + $0x280] sm:$0xff]
        %v4713 = vld [vmem:[#allocation3 + $0x288] sm:$0xff]
        %v4714 = vld [vmem:[#allocation3 + $0x290] sm:$0xff]
        %v4715 = vld [vmem:[#allocation3 + $0x298] sm:$0xff]
        %v4716 = vld [vmem:[#allocation3 + $0x2a0] sm:$0xff]
        %v4717 = vld [vmem:[#allocation3 + $0x2a8] sm:$0xff]
        %v4718 = vld [vmem:[#allocation3 + $0x2b0] sm:$0xff]
        %v4719 = vld [vmem:[#allocation3 + $0x2b8] sm:$0xff]
        %v4720 = vld [vmem:[#allocation3 + $0x2c0] sm:$0xff]
        %v4721 = vld [vmem:[#allocation3 + $0x2c8] sm:$0xff]
        %v4722 = vld [vmem:[#allocation3 + $0x2d0] sm:$0xff]
        %v4723 = vld [vmem:[#allocation3 + $0x2d8] sm:$0xff]
        %v4724 = vld [vmem:[#allocation3 + $0x2e0] sm:$0xff]
        %v4725 = vld [vmem:[#allocation3 + $0x2e8] sm:$0xff]
        %v4726 = vld [vmem:[#allocation3 + $0x2f0] sm:$0xff]
        %v4727 = vld [vmem:[#allocation3 + $0x2f8] sm:$0xff]
        %v4728 = vld [vmem:[#allocation3 + $0x300] sm:$0xff]
        %v4729 = vld [vmem:[#allocation3 + $0x308] sm:$0xff]
        %v4730 = vld [vmem:[#allocation3 + $0x310] sm:$0xff]
        %v4731 = vld [vmem:[#allocation3 + $0x318] sm:$0xff]
        %v4732 = vld [vmem:[#allocation3 + $0x320] sm:$0xff]
        %v4733 = vld [vmem:[#allocation3 + $0x328] sm:$0xff]
        %v4734 = vld [vmem:[#allocation3 + $0x330] sm:$0xff]
        %v4735 = vld [vmem:[#allocation3 + $0x338] sm:$0xff]
        %v4736 = vld [vmem:[#allocation3 + $0x340] sm:$0xff]
        %v4737 = vld [vmem:[#allocation3 + $0x348] sm:$0xff]
        %v4738 = vld [vmem:[#allocation3 + $0x350] sm:$0xff]
        %v4739 = vld [vmem:[#allocation3 + $0x358] sm:$0xff]
        %v4740 = vld [vmem:[#allocation3 + $0x360] sm:$0xff]
        %v4741 = vld [vmem:[#allocation3 + $0x368] sm:$0xff]
        %v4742 = vld [vmem:[#allocation3 + $0x370] sm:$0xff]
        %v4743 = vld [vmem:[#allocation3 + $0x378] sm:$0xff]
        %v4744 = vld [vmem:[#allocation3 + $0x380] sm:$0xff]
        %v4745 = vld [vmem:[#allocation3 + $0x388] sm:$0xff]
        %v4746 = vld [vmem:[#allocation3 + $0x390] sm:$0xff]
        %v4747 = vld [vmem:[#allocation3 + $0x398] sm:$0xff]
        %v4748 = vld [vmem:[#allocation3 + $0x3a0] sm:$0xff]
        %v4749 = vld [vmem:[#allocation3 + $0x3a8] sm:$0xff]
        %v4750 = vld [vmem:[#allocation3 + $0x3b0] sm:$0xff]
        %v4751 = vld [vmem:[#allocation3 + $0x3b8] sm:$0xff]
        %v4752 = vld [vmem:[#allocation3 + $0x3c0] sm:$0xff]
        %v4753 = vld [vmem:[#allocation3 + $0x3c8] sm:$0xff]
        %v4754 = vld [vmem:[#allocation3 + $0x3d0] sm:$0xff]
        %v4755 = vld [vmem:[#allocation3 + $0x3d8] sm:$0xff]
        %v4756 = vld [vmem:[#allocation3 + $0x3e0] sm:$0xff]
        %v4757 = vld [vmem:[#allocation3 + $0x3e8] sm:$0xff]
        %v4758 = vld [vmem:[#allocation3 + $0x3f0] sm:$0xff]
        %v4759 = vld [vmem:[#allocation3 + $0x3f8] sm:$0xff]
        %v4760 = vld [vmem:[#allocation3 + $0x400] sm:$0xff]
        %v4761 = vld [vmem:[#allocation3 + $0x408] sm:$0xff]
        %v4762 = vld [vmem:[#allocation3 + $0x410] sm:$0xff]
        %v4763 = vld [vmem:[#allocation3 + $0x418] sm:$0xff]
        %v4764 = vld [vmem:[#allocation3 + $0x420] sm:$0xff]
        %v4765 = vld [vmem:[#allocation3 + $0x428] sm:$0xff]
        %v4766 = vld [vmem:[#allocation3 + $0x430] sm:$0xff]
        %v4767 = vld [vmem:[#allocation3 + $0x438] sm:$0xff]
        %v4768 = vld [vmem:[#allocation3 + $0x440] sm:$0xff]
        %v4769 = vld [vmem:[#allocation3 + $0x448] sm:$0xff]
        %v4770 = vld [vmem:[#allocation3 + $0x450] sm:$0xff]
        %v4771 = vld [vmem:[#allocation3 + $0x458] sm:$0xff]
        %v4772 = vld [vmem:[#allocation3 + $0x460] sm:$0xff]
        %v4773 = vld [vmem:[#allocation3 + $0x468] sm:$0xff]
        %v4774 = vld [vmem:[#allocation3 + $0x470] sm:$0xff]
        %v4775 = vld [vmem:[#allocation3 + $0x478] sm:$0xff]
        %v4776 = vld [vmem:[#allocation3 + $0x480] sm:$0xff]
        %v4777 = vld [vmem:[#allocation3 + $0x488] sm:$0xff]
        %v4778 = vld [vmem:[#allocation3 + $0x490] sm:$0xff]
        %v4779 = vld [vmem:[#allocation3 + $0x498] sm:$0xff]
        %v4780 = vld [vmem:[#allocation3 + $0x4a0] sm:$0xff]
        %v4781 = vld [vmem:[#allocation3 + $0x4a8] sm:$0xff]
        %v4782 = vld [vmem:[#allocation3 + $0x4b0] sm:$0xff]
        %v4783 = vld [vmem:[#allocation3 + $0x4b8] sm:$0xff]
        %v4784 = vld [vmem:[#allocation3 + $0x4c0] sm:$0xff]
        %v4785 = vld [vmem:[#allocation3 + $0x4c8] sm:$0xff]
        %v4786 = vld [vmem:[#allocation3 + $0x4d0] sm:$0xff]
        %v4787 = vld [vmem:[#allocation3 + $0x4d8] sm:$0xff]
        %v4788 = vld [vmem:[#allocation3 + $0x4e0] sm:$0xff]
        %v4789 = vld [vmem:[#allocation3 + $0x4e8] sm:$0xff]
        %v4790 = vld [vmem:[#allocation3 + $0x4f0] sm:$0xff]
        %v4791 = vld [vmem:[#allocation3 + $0x4f8] sm:$0xff]
        %v4792 = vld [vmem:[#allocation3 + $0x500] sm:$0xff]
        %v4793 = vld [vmem:[#allocation3 + $0x508] sm:$0xff]
        %v4794 = vld [vmem:[#allocation3 + $0x510] sm:$0xff]
        %v4795 = vld [vmem:[#allocation3 + $0x518] sm:$0xff]
        %v4796 = vld [vmem:[#allocation3 + $0x520] sm:$0xff]
        %v4797 = vld [vmem:[#allocation3 + $0x528] sm:$0xff]
        %v4798 = vld [vmem:[#allocation3 + $0x530] sm:$0xff]
        %v4799 = vld [vmem:[#allocation3 + $0x538] sm:$0xff]
        %v4800 = vld [vmem:[#allocation3 + $0x540] sm:$0xff]
        %v4801 = vld [vmem:[#allocation3 + $0x548] sm:$0xff]
        %v4802 = vld [vmem:[#allocation3 + $0x550] sm:$0xff]
        %v4803 = vld [vmem:[#allocation3 + $0x558] sm:$0xff]
        %v4804 = vld [vmem:[#allocation3 + $0x560] sm:$0xff]
        %v4805 = vld [vmem:[#allocation3 + $0x568] sm:$0xff]
        %v4806 = vld [vmem:[#allocation3 + $0x570] sm:$0xff]
        %v4807 = vld [vmem:[#allocation3 + $0x578] sm:$0xff]
        %v4808 = vld [vmem:[#allocation3 + $0x580] sm:$0xff]
        %v4809 = vld [vmem:[#allocation3 + $0x588] sm:$0xff]
        %v4810 = vld [vmem:[#allocation3 + $0x590] sm:$0xff]
        %v4811 = vld [vmem:[#allocation3 + $0x598] sm:$0xff]
        %v4812 = vld [vmem:[#allocation3 + $0x5a0] sm:$0xff]
        %v4813 = vld [vmem:[#allocation3 + $0x5a8] sm:$0xff]
        %v4814 = vld [vmem:[#allocation3 + $0x5b0] sm:$0xff]
        %v4815 = vld [vmem:[#allocation3 + $0x5b8] sm:$0xff]
        %v4816 = vld [vmem:[#allocation3 + $0x5c0] sm:$0xff]
        %v4817 = vld [vmem:[#allocation3 + $0x5c8] sm:$0xff]
        %v4818 = vld [vmem:[#allocation3 + $0x5d0] sm:$0xff]
        %v4819 = vld [vmem:[#allocation3 + $0x5d8] sm:$0xff]
        %v4820 = vld [vmem:[#allocation3 + $0x5e0] sm:$0xff]
        %v4821 = vld [vmem:[#allocation3 + $0x5e8] sm:$0xff]
        %v4822 = vld [vmem:[#allocation3 + $0x5f0] sm:$0xff]
        %v4823 = vld [vmem:[#allocation3 + $0x5f8] sm:$0xff]
        %v4824 = vld [vmem:[#allocation3 + $0x600] sm:$0xff]
        %v4825 = vld [vmem:[#allocation3 + $0x608] sm:$0xff]
        %v4826 = vld [vmem:[#allocation3 + $0x610] sm:$0xff]
        %v4827 = vld [vmem:[#allocation3 + $0x618] sm:$0xff]
        %v4828 = vld [vmem:[#allocation3 + $0x620] sm:$0xff]
        %v4829 = vld [vmem:[#allocation3 + $0x628] sm:$0xff]
        %v4830 = vld [vmem:[#allocation3 + $0x630] sm:$0xff]
        %v4831 = vld [vmem:[#allocation3 + $0x638] sm:$0xff]
        %v4832 = vld [vmem:[#allocation3 + $0x640] sm:$0xff]
        %v4833 = vld [vmem:[#allocation3 + $0x648] sm:$0xff]
        %v4834 = vld [vmem:[#allocation3 + $0x650] sm:$0xff]
        %v4835 = vld [vmem:[#allocation3 + $0x658] sm:$0xff]
        %v4836 = vld [vmem:[#allocation3 + $0x660] sm:$0xff]
        %v4837 = vld [vmem:[#allocation3 + $0x668] sm:$0xff]
        %v4838 = vld [vmem:[#allocation3 + $0x670] sm:$0xff]
        %v4839 = vld [vmem:[#allocation3 + $0x678] sm:$0xff]
        %v4840 = vld [vmem:[#allocation3 + $0x680] sm:$0xff]
        %v4841 = vld [vmem:[#allocation3 + $0x688] sm:$0xff]
        %v4842 = vld [vmem:[#allocation3 + $0x690] sm:$0xff]
        %v4843 = vld [vmem:[#allocation3 + $0x698] sm:$0xff]
        %v4844 = vld [vmem:[#allocation3 + $0x6a0] sm:$0xff]
        %v4845 = vld [vmem:[#allocation3 + $0x6a8] sm:$0xff]
        %v4846 = vld [vmem:[#allocation3 + $0x6b0] sm:$0xff]
        %v4847 = vld [vmem:[#allocation3 + $0x6b8] sm:$0xff]
        %v4848 = vld [vmem:[#allocation3 + $0x6c0] sm:$0xff]
        %v4849 = vld [vmem:[#allocation3 + $0x6c8] sm:$0xff]
        %v4850 = vld [vmem:[#allocation3 + $0x6d0] sm:$0xff]
        %v4851 = vld [vmem:[#allocation3 + $0x6d8] sm:$0xff]
        %v4852 = vld [vmem:[#allocation3 + $0x6e0] sm:$0xff]
        %v4853 = vld [vmem:[#allocation3 + $0x6e8] sm:$0xff]
        %v4854 = vld [vmem:[#allocation3 + $0x6f0] sm:$0xff]
        %v4855 = vld [vmem:[#allocation3 + $0x6f8] sm:$0xff]
        %v4856 = vld [vmem:[#allocation3 + $0x700] sm:$0xff]
        %v4857 = vld [vmem:[#allocation3 + $0x708] sm:$0xff]
        %v4858 = vld [vmem:[#allocation3 + $0x710] sm:$0xff]
        %v4859 = vld [vmem:[#allocation3 + $0x718] sm:$0xff]
        %v4860 = vld [vmem:[#allocation3 + $0x720] sm:$0xff]
        %v4861 = vld [vmem:[#allocation3 + $0x728] sm:$0xff]
        %v4862 = vld [vmem:[#allocation3 + $0x730] sm:$0xff]
        %v4863 = vld [vmem:[#allocation3 + $0x738] sm:$0xff]
        %v4864 = vld [vmem:[#allocation3 + $0x740] sm:$0xff]
        %v4865 = vld [vmem:[#allocation3 + $0x748] sm:$0xff]
        %v4866 = vld [vmem:[#allocation3 + $0x750] sm:$0xff]
        %v4867 = vld [vmem:[#allocation3 + $0x758] sm:$0xff]
        %v4868 = vld [vmem:[#allocation3 + $0x760] sm:$0xff]
        %v4869 = vld [vmem:[#allocation3 + $0x768] sm:$0xff]
        %v4870 = vld [vmem:[#allocation3 + $0x770] sm:$0xff]
        %v4871 = vld [vmem:[#allocation3 + $0x778] sm:$0xff]
        %v4872 = vld [vmem:[#allocation3 + $0x780] sm:$0xff]
        %v4873 = vld [vmem:[#allocation3 + $0x788] sm:$0xff]
        %v4874 = vld [vmem:[#allocation3 + $0x790] sm:$0xff]
        %v4875 = vld [vmem:[#allocation3 + $0x798] sm:$0xff]
        %v4876 = vld [vmem:[#allocation3 + $0x7a0] sm:$0xff]
        %v4877 = vld [vmem:[#allocation3 + $0x7a8] sm:$0xff]
        %v4878 = vld [vmem:[#allocation3 + $0x7b0] sm:$0xff]
        %v4879 = vld [vmem:[#allocation3 + $0x7b8] sm:$0xff]
        %v4880 = vld [vmem:[#allocation3 + $0x7c0] sm:$0xff]
        %v4881 = vld [vmem:[#allocation3 + $0x7c8] sm:$0xff]
        %v4882 = vld [vmem:[#allocation3 + $0x7d0] sm:$0xff]
        %v4883 = vld [vmem:[#allocation3 + $0x7d8] sm:$0xff]
        %v4884 = vld [vmem:[#allocation3 + $0x7e0] sm:$0xff]
        %v4885 = vld [vmem:[#allocation3 + $0x7e8] sm:$0xff]
        %v4886 = vld [vmem:[#allocation3 + $0x7f0] sm:$0xff]
        %v4887 = vld [vmem:[#allocation3 + $0x7f8] sm:$0xff]
        %v4888 = vld [vmem:[#allocation3 + $0x800] sm:$0xff]
        %v4889 = vld [vmem:[#allocation3 + $0x808] sm:$0xff]
        %v4890 = vld [vmem:[#allocation3 + $0x810] sm:$0xff]
        %v4891 = vld [vmem:[#allocation3 + $0x818] sm:$0xff]
        %v4892 = vld [vmem:[#allocation3 + $0x820] sm:$0xff]
        %v4893 = vld [vmem:[#allocation3 + $0x828] sm:$0xff]
        %v4894 = vld [vmem:[#allocation3 + $0x830] sm:$0xff]
        %v4895 = vld [vmem:[#allocation3 + $0x838] sm:$0xff]
        %v4896 = vld [vmem:[#allocation3 + $0x840] sm:$0xff]
        %v4897 = vld [vmem:[#allocation3 + $0x848] sm:$0xff]
        %v4898 = vld [vmem:[#allocation3 + $0x850] sm:$0xff]
        %v4899 = vld [vmem:[#allocation3 + $0x858] sm:$0xff]
        %v4900 = vld [vmem:[#allocation3 + $0x860] sm:$0xff]
        %v4901 = vld [vmem:[#allocation3 + $0x868] sm:$0xff]
        %v4902 = vld [vmem:[#allocation3 + $0x870] sm:$0xff]
        %v4903 = vld [vmem:[#allocation3 + $0x878] sm:$0xff]
        %v4904 = vld [vmem:[#allocation3 + $0x880] sm:$0xff]
        %v4905 = vld [vmem:[#allocation3 + $0x888] sm:$0xff]
        %v4906 = vld [vmem:[#allocation3 + $0x890] sm:$0xff]
        %v4907 = vld [vmem:[#allocation3 + $0x898] sm:$0xff]
        %v4908 = vld [vmem:[#allocation3 + $0x8a0] sm:$0xff]
        %v4909 = vld [vmem:[#allocation3 + $0x8a8] sm:$0xff]
        %v4910 = vld [vmem:[#allocation3 + $0x8b0] sm:$0xff]
        %v4911 = vld [vmem:[#allocation3 + $0x8b8] sm:$0xff]
        %v4912 = vld [vmem:[#allocation3 + $0x8c0] sm:$0xff]
        %v4913 = vld [vmem:[#allocation3 + $0x8c8] sm:$0xff]
        %v4914 = vld [vmem:[#allocation3 + $0x8d0] sm:$0xff]
        %v4915 = vld [vmem:[#allocation3 + $0x8d8] sm:$0xff]
        %v4916 = vld [vmem:[#allocation3 + $0x8e0] sm:$0xff]
        %v4917 = vld [vmem:[#allocation3 + $0x8e8] sm:$0xff]
        %v4918 = vld [vmem:[#allocation3 + $0x8f0] sm:$0xff]
        %v4919 = vld [vmem:[#allocation3 + $0x8f8] sm:$0xff]
        %v4920 = vld [vmem:[#allocation3 + $0x900] sm:$0xff]
        %v4921 = vld [vmem:[#allocation3 + $0x908] sm:$0xff]
        %v4922 = vld [vmem:[#allocation3 + $0x910] sm:$0xff]
        %v4923 = vld [vmem:[#allocation3 + $0x918] sm:$0xff]
        %v4924 = vld [vmem:[#allocation3 + $0x920] sm:$0xff]
        %v4925 = vld [vmem:[#allocation3 + $0x928] sm:$0xff]
        %v4926 = vld [vmem:[#allocation3 + $0x930] sm:$0xff]
        %v4927 = vld [vmem:[#allocation3 + $0x938] sm:$0xff]
        %v4928 = vld [vmem:[#allocation3 + $0x940] sm:$0xff]
        %v4929 = vld [vmem:[#allocation3 + $0x948] sm:$0xff]
        %v4930 = vld [vmem:[#allocation3 + $0x950] sm:$0xff]
        %v4931 = vld [vmem:[#allocation3 + $0x958] sm:$0xff]
        %v4932 = vld [vmem:[#allocation3 + $0x960] sm:$0xff]
        %v4933 = vld [vmem:[#allocation3 + $0x968] sm:$0xff]
        %v4934 = vld [vmem:[#allocation3 + $0x970] sm:$0xff]
        %v4935 = vld [vmem:[#allocation3 + $0x978] sm:$0xff]
        %v4936 = vld [vmem:[#allocation3 + $0x980] sm:$0xff]
        %v4937 = vld [vmem:[#allocation3 + $0x988] sm:$0xff]
        %v4938 = vld [vmem:[#allocation3 + $0x990] sm:$0xff]
        %v4939 = vld [vmem:[#allocation3 + $0x998] sm:$0xff]
        %v4940 = vld [vmem:[#allocation3 + $0x9a0] sm:$0xff]
        %v4941 = vld [vmem:[#allocation3 + $0x9a8] sm:$0xff]
        %v4942 = vld [vmem:[#allocation3 + $0x9b0] sm:$0xff]
        %v4943 = vld [vmem:[#allocation3 + $0x9b8] sm:$0xff]
        %v4944 = vld [vmem:[#allocation3 + $0x9c0] sm:$0xff]
        %v4945 = vld [vmem:[#allocation3 + $0x9c8] sm:$0xff]
        %v4946 = vld [vmem:[#allocation3 + $0x9d0] sm:$0xff]
        %v4947 = vld [vmem:[#allocation3 + $0x9d8] sm:$0xff]
        %v4948 = vld [vmem:[#allocation3 + $0x9e0] sm:$0xff]
        %v4949 = vld [vmem:[#allocation3 + $0x9e8] sm:$0xff]
        %v4950 = vld [vmem:[#allocation3 + $0x9f0] sm:$0xff]
        %v4951 = vld [vmem:[#allocation3 + $0x9f8] sm:$0xff]
        %v4952 = vld [vmem:[#allocation3 + $0xa00] sm:$0xff]
        %v4953 = vld [vmem:[#allocation3 + $0xa08] sm:$0xff]
        %v4954 = vld [vmem:[#allocation3 + $0xa10] sm:$0xff]
        %v4955 = vld [vmem:[#allocation3 + $0xa18] sm:$0xff]
        %v4956 = vld [vmem:[#allocation3 + $0xa20] sm:$0xff]
        %v4957 = vld [vmem:[#allocation3 + $0xa28] sm:$0xff]
        %v4958 = vld [vmem:[#allocation3 + $0xa30] sm:$0xff]
        %v4959 = vld [vmem:[#allocation3 + $0xa38] sm:$0xff]
        %v4960 = vld [vmem:[#allocation3 + $0xa40] sm:$0xff]
        %v4961 = vld [vmem:[#allocation3 + $0xa48] sm:$0xff]
        %v4962 = vld [vmem:[#allocation3 + $0xa50] sm:$0xff]
        %v4963 = vld [vmem:[#allocation3 + $0xa58] sm:$0xff]
        %v4964 = vld [vmem:[#allocation3 + $0xa60] sm:$0xff]
        %v4965 = vld [vmem:[#allocation3 + $0xa68] sm:$0xff]
        %v4966 = vld [vmem:[#allocation3 + $0xa70] sm:$0xff]
        %v4967 = vld [vmem:[#allocation3 + $0xa78] sm:$0xff]
        %v4968 = vld [vmem:[#allocation3 + $0xa80] sm:$0xff]
        %v4969 = vld [vmem:[#allocation3 + $0xa88] sm:$0xff]
        %v4970 = vld [vmem:[#allocation3 + $0xa90] sm:$0xff]
        %v4971 = vld [vmem:[#allocation3 + $0xa98] sm:$0xff]
        %v4972 = vld [vmem:[#allocation3 + $0xaa0] sm:$0xff]
        %v4973 = vld [vmem:[#allocation3 + $0xaa8] sm:$0xff]
        %v4974 = vld [vmem:[#allocation3 + $0xab0] sm:$0xff]
        %v4975 = vld [vmem:[#allocation3 + $0xab8] sm:$0xff]
        %v4976 = vld [vmem:[#allocation3 + $0xac0] sm:$0xff]
        %v4977 = vld [vmem:[#allocation3 + $0xac8] sm:$0xff]
        %v4978 = vld [vmem:[#allocation3 + $0xad0] sm:$0xff]
        %v4979 = vld [vmem:[#allocation3 + $0xad8] sm:$0xff]
        %v4980 = vld [vmem:[#allocation3 + $0xae0] sm:$0xff]
        %v4981 = vld [vmem:[#allocation3 + $0xae8] sm:$0xff]
        %v4982 = vld [vmem:[#allocation3 + $0xaf0] sm:$0xff]
        %v4983 = vld [vmem:[#allocation3 + $0xaf8] sm:$0xff]
        %v4984 = vld [vmem:[#allocation3 + $0xb00] sm:$0xff]
        %v4985 = vld [vmem:[#allocation3 + $0xb08] sm:$0xff]
        %v4986 = vld [vmem:[#allocation3 + $0xb10] sm:$0xff]
        %v4987 = vld [vmem:[#allocation3 + $0xb18] sm:$0xff]
        %v4988 = vld [vmem:[#allocation3 + $0xb20] sm:$0xff]
        %v4989 = vld [vmem:[#allocation3 + $0xb28] sm:$0xff]
        %v4990 = vld [vmem:[#allocation3 + $0xb30] sm:$0xff]
        %v4991 = vld [vmem:[#allocation3 + $0xb38] sm:$0xff]
        %v4992 = vld [vmem:[#allocation3 + $0xb40] sm:$0xff]
        %v4993 = vld [vmem:[#allocation3 + $0xb48] sm:$0xff]
        %v4994 = vld [vmem:[#allocation3 + $0xb50] sm:$0xff]
        %v4995 = vld [vmem:[#allocation3 + $0xb58] sm:$0xff]
        %v4996 = vld [vmem:[#allocation3 + $0xb60] sm:$0xff]
        %v4997 = vld [vmem:[#allocation3 + $0xb68] sm:$0xff]
        %v4998 = vld [vmem:[#allocation3 + $0xb70] sm:$0xff]
        %v4999 = vld [vmem:[#allocation3 + $0xb78] sm:$0xff]
        %v5000 = vld [vmem:[#allocation3 + $0xb80] sm:$0xff]
        %v5001 = vld [vmem:[#allocation3 + $0xb88] sm:$0xff]
        %v5002 = vld [vmem:[#allocation3 + $0xb90] sm:$0xff]
        %v5003 = vld [vmem:[#allocation3 + $0xb98] sm:$0xff]
        %v5004 = vld [vmem:[#allocation3 + $0xba0] sm:$0xff]
        %v5005 = vld [vmem:[#allocation3 + $0xba8] sm:$0xff]
        %v5006 = vld [vmem:[#allocation3 + $0xbb0] sm:$0xff]
        %v5007 = vld [vmem:[#allocation3 + $0xbb8] sm:$0xff]
        %v5008 = vld [vmem:[#allocation3 + $0xbc0] sm:$0xff]
        %v5009 = vld [vmem:[#allocation3 + $0xbc8] sm:$0xff]
        %v5010 = vld [vmem:[#allocation3 + $0xbd0] sm:$0xff]
        %v5011 = vld [vmem:[#allocation3 + $0xbd8] sm:$0xff]
        %v5012 = vld [vmem:[#allocation3 + $0xbe0] sm:$0xff]
        %v5013 = vld [vmem:[#allocation3 + $0xbe8] sm:$0xff]
        %v5014 = vld [vmem:[#allocation3 + $0xbf0] sm:$0xff]
        %v5015 = vld [vmem:[#allocation3 + $0xbf8] sm:$0xff]
        %v5016 = vld [vmem:[#allocation3 + $0xc00] sm:$0xff]
        %v5017 = vld [vmem:[#allocation3 + $0xc08] sm:$0xff]
        %v5018 = vld [vmem:[#allocation3 + $0xc10] sm:$0xff]
        %v5019 = vld [vmem:[#allocation3 + $0xc18] sm:$0xff]
        %v5020 = vld [vmem:[#allocation3 + $0xc20] sm:$0xff]
        %v5021 = vld [vmem:[#allocation3 + $0xc28] sm:$0xff]
        %v5022 = vld [vmem:[#allocation3 + $0xc30] sm:$0xff]
        %v5023 = vld [vmem:[#allocation3 + $0xc38] sm:$0xff]
        %v5024 = vld [vmem:[#allocation3 + $0xc40] sm:$0xff]
        %v5025 = vld [vmem:[#allocation3 + $0xc48] sm:$0xff]
        %v5026 = vld [vmem:[#allocation3 + $0xc50] sm:$0xff]
        %v5027 = vld [vmem:[#allocation3 + $0xc58] sm:$0xff]
        %v5028 = vld [vmem:[#allocation3 + $0xc60] sm:$0xff]
        %v5029 = vld [vmem:[#allocation3 + $0xc68] sm:$0xff]
        %v5030 = vld [vmem:[#allocation3 + $0xc70] sm:$0xff]
        %v5031 = vld [vmem:[#allocation3 + $0xc78] sm:$0xff]
        %v5032 = vld [vmem:[#allocation3 + $0xc80] sm:$0xff]
        %v5033 = vld [vmem:[#allocation3 + $0xc88] sm:$0xff]
        %v5034 = vld [vmem:[#allocation3 + $0xc90] sm:$0xff]
        %v5035 = vld [vmem:[#allocation3 + $0xc98] sm:$0xff]
        %v5036 = vld [vmem:[#allocation3 + $0xca0] sm:$0xff]
        %v5037 = vld [vmem:[#allocation3 + $0xca8] sm:$0xff]
        %v5038 = vld [vmem:[#allocation3 + $0xcb0] sm:$0xff]
        %v5039 = vld [vmem:[#allocation3 + $0xcb8] sm:$0xff]
        %v5040 = vld [vmem:[#allocation3 + $0xcc0] sm:$0xff]
        %v5041 = vld [vmem:[#allocation3 + $0xcc8] sm:$0xff]
        %v5042 = vld [vmem:[#allocation3 + $0xcd0] sm:$0xff]
        %v5043 = vld [vmem:[#allocation3 + $0xcd8] sm:$0xff]
        %v5044 = vld [vmem:[#allocation3 + $0xce0] sm:$0xff]
        %v5045 = vld [vmem:[#allocation3 + $0xce8] sm:$0xff]
        %v5046 = vld [vmem:[#allocation3 + $0xcf0] sm:$0xff]
        %v5047 = vld [vmem:[#allocation3 + $0xcf8] sm:$0xff]
        %v5048 = vld [vmem:[#allocation3 + $0xd00] sm:$0xff]
        %v5049 = vld [vmem:[#allocation3 + $0xd08] sm:$0xff]
        %v5050 = vld [vmem:[#allocation3 + $0xd10] sm:$0xff]
        %v5051 = vld [vmem:[#allocation3 + $0xd18] sm:$0xff]
        %v5052 = vld [vmem:[#allocation3 + $0xd20] sm:$0xff]
        %v5053 = vld [vmem:[#allocation3 + $0xd28] sm:$0xff]
        %v5054 = vld [vmem:[#allocation3 + $0xd30] sm:$0xff]
        %v5055 = vld [vmem:[#allocation3 + $0xd38] sm:$0xff]
        %v5056 = vld [vmem:[#allocation3 + $0xd40] sm:$0xff]
        %v5057 = vld [vmem:[#allocation3 + $0xd48] sm:$0xff]
        %v5058 = vld [vmem:[#allocation3 + $0xd50] sm:$0xff]
        %v5059 = vld [vmem:[#allocation3 + $0xd58] sm:$0xff]
        %v5060 = vld [vmem:[#allocation3 + $0xd60] sm:$0xff]
        %v5061 = vld [vmem:[#allocation3 + $0xd68] sm:$0xff]
        %v5062 = vld [vmem:[#allocation3 + $0xd70] sm:$0xff]
        %v5063 = vld [vmem:[#allocation3 + $0xd78] sm:$0xff]
        %v5064 = vld [vmem:[#allocation3 + $0xd80] sm:$0xff]
        %v5065 = vld [vmem:[#allocation3 + $0xd88] sm:$0xff]
        %v5066 = vld [vmem:[#allocation3 + $0xd90] sm:$0xff]
        %v5067 = vld [vmem:[#allocation3 + $0xd98] sm:$0xff]
        %v5068 = vld [vmem:[#allocation3 + $0xda0] sm:$0xff]
        %v5069 = vld [vmem:[#allocation3 + $0xda8] sm:$0xff]
        %v5070 = vld [vmem:[#allocation3 + $0xdb0] sm:$0xff]
        %v5071 = vld [vmem:[#allocation3 + $0xdb8] sm:$0xff]
        %v5072 = vld [vmem:[#allocation3 + $0xdc0] sm:$0xff]
        %v5073 = vld [vmem:[#allocation3 + $0xdc8] sm:$0xff]
        %v5074 = vld [vmem:[#allocation3 + $0xdd0] sm:$0xff]
        %v5075 = vld [vmem:[#allocation3 + $0xdd8] sm:$0xff]
        %v5076 = vld [vmem:[#allocation3 + $0xde0] sm:$0xff]
        %v5077 = vld [vmem:[#allocation3 + $0xde8] sm:$0xff]
        %v5078 = vld [vmem:[#allocation3 + $0xdf0] sm:$0xff]
        %v5079 = vld [vmem:[#allocation3 + $0xdf8] sm:$0xff]
        %v5080 = vld [vmem:[#allocation3 + $0xe00] sm:$0xff]
        %v5081 = vld [vmem:[#allocation3 + $0xe08] sm:$0xff]
        %v5082 = vld [vmem:[#allocation3 + $0xe10] sm:$0xff]
        %v5083 = vld [vmem:[#allocation3 + $0xe18] sm:$0xff]
        %v5084 = vld [vmem:[#allocation3 + $0xe20] sm:$0xff]
        %v5085 = vld [vmem:[#allocation3 + $0xe28] sm:$0xff]
        %v5086 = vld [vmem:[#allocation3 + $0xe30] sm:$0xff]
        %v5087 = vld [vmem:[#allocation3 + $0xe38] sm:$0xff]
        %v5088 = vld [vmem:[#allocation3 + $0xe40] sm:$0xff]
        %v5089 = vld [vmem:[#allocation3 + $0xe48] sm:$0xff]
        %v5090 = vld [vmem:[#allocation3 + $0xe50] sm:$0xff]
        %v5091 = vld [vmem:[#allocation3 + $0xe58] sm:$0xff]
        %v5092 = vld [vmem:[#allocation3 + $0xe60] sm:$0xff]
        %v5093 = vld [vmem:[#allocation3 + $0xe68] sm:$0xff]
        %v5094 = vld [vmem:[#allocation3 + $0xe70] sm:$0xff]
        %v5095 = vld [vmem:[#allocation3 + $0xe78] sm:$0xff]
        %v5096 = vld [vmem:[#allocation3 + $0xe80] sm:$0xff]
        %v5097 = vld [vmem:[#allocation3 + $0xe88] sm:$0xff]
        %v5098 = vld [vmem:[#allocation3 + $0xe90] sm:$0xff]
        %v5099 = vld [vmem:[#allocation3 + $0xe98] sm:$0xff]
        %v5100 = vld [vmem:[#allocation3 + $0xea0] sm:$0xff]
        %v5101 = vld [vmem:[#allocation3 + $0xea8] sm:$0xff]
        %v5102 = vld [vmem:[#allocation3 + $0xeb0] sm:$0xff]
        %v5103 = vld [vmem:[#allocation3 + $0xeb8] sm:$0xff]
        %v5104 = vld [vmem:[#allocation3 + $0xec0] sm:$0xff]
        %v5105 = vld [vmem:[#allocation3 + $0xec8] sm:$0xff]
        %v5106 = vld [vmem:[#allocation3 + $0xed0] sm:$0xff]
        %v5107 = vld [vmem:[#allocation3 + $0xed8] sm:$0xff]
        %v5108 = vld [vmem:[#allocation3 + $0xee0] sm:$0xff]
        %v5109 = vld [vmem:[#allocation3 + $0xee8] sm:$0xff]
        %v5110 = vld [vmem:[#allocation3 + $0xef0] sm:$0xff]
        %v5111 = vld [vmem:[#allocation3 + $0xef8] sm:$0xff]
        %v5592 = vunpack.c.l.b16 %v4632
        %v5593 = vunpack.c.h.b16 %v4632
        %v5594 = vunpack.c.l.b16 %v4633
        %v5595 = vunpack.c.h.b16 %v4633
        %v5596 = vunpack.c.l.b16 %v4634
        %v5597 = vunpack.c.h.b16 %v4634
        %v5598 = vunpack.c.l.b16 %v4635
        %v5599 = vunpack.c.h.b16 %v4635
        %v5600 = vunpack.c.l.b16 %v4636
        %v5601 = vunpack.c.h.b16 %v4636
        %v5602 = vunpack.c.l.b16 %v4637
        %v5603 = vunpack.c.h.b16 %v4637
        %v5604 = vunpack.c.l.b16 %v4638
        %v5605 = vunpack.c.h.b16 %v4638
        %v5606 = vunpack.c.l.b16 %v4639
        %v5607 = vunpack.c.h.b16 %v4639
        %v5608 = vunpack.c.l.b16 %v4640
        %v5609 = vunpack.c.h.b16 %v4640
        %v5610 = vunpack.c.l.b16 %v4641
        %v5611 = vunpack.c.h.b16 %v4641
        %v5612 = vunpack.c.l.b16 %v4642
        %v5613 = vunpack.c.h.b16 %v4642
        %v5614 = vunpack.c.l.b16 %v4643
        %v5615 = vunpack.c.h.b16 %v4643
        %v5616 = vunpack.c.l.b16 %v4644
        %v5617 = vunpack.c.h.b16 %v4644
        %v5618 = vunpack.c.l.b16 %v4645
        %v5619 = vunpack.c.h.b16 %v4645
        %v5620 = vunpack.c.l.b16 %v4646
        %v5621 = vunpack.c.h.b16 %v4646
        %v5622 = vunpack.c.l.b16 %v4647
        %v5623 = vunpack.c.h.b16 %v4647
        %v5624 = vunpack.c.l.b16 %v4648
        %v5625 = vunpack.c.h.b16 %v4648
        %v5626 = vunpack.c.l.b16 %v4649
        %v5627 = vunpack.c.h.b16 %v4649
        %v5628 = vunpack.c.l.b16 %v4650
        %v5629 = vunpack.c.h.b16 %v4650
        %v5630 = vunpack.c.l.b16 %v4651
        %v5631 = vunpack.c.h.b16 %v4651
        %v5632 = vunpack.c.l.b16 %v4652
        %v5633 = vunpack.c.h.b16 %v4652
        %v5634 = vunpack.c.l.b16 %v4653
        %v5635 = vunpack.c.h.b16 %v4653
        %v5636 = vunpack.c.l.b16 %v4654
        %v5637 = vunpack.c.h.b16 %v4654
        %v5638 = vunpack.c.l.b16 %v4655
        %v5639 = vunpack.c.h.b16 %v4655
        %v5640 = vunpack.c.l.b16 %v4656
        %v5641 = vunpack.c.h.b16 %v4656
        %v5642 = vunpack.c.l.b16 %v4657
        %v5643 = vunpack.c.h.b16 %v4657
        %v5644 = vunpack.c.l.b16 %v4658
        %v5645 = vunpack.c.h.b16 %v4658
        %v5646 = vunpack.c.l.b16 %v4659
        %v5647 = vunpack.c.h.b16 %v4659
        %v5648 = vunpack.c.l.b16 %v4660
        %v5649 = vunpack.c.h.b16 %v4660
        %v5650 = vunpack.c.l.b16 %v4661
        %v5651 = vunpack.c.h.b16 %v4661
        %v5652 = vunpack.c.l.b16 %v4662
        %v5653 = vunpack.c.h.b16 %v4662
        %v5654 = vunpack.c.l.b16 %v4663
        %v5655 = vunpack.c.h.b16 %v4663
        %v5656 = vunpack.c.l.b16 %v4664
        %v5657 = vunpack.c.h.b16 %v4664
        %v5658 = vunpack.c.l.b16 %v4665
        %v5659 = vunpack.c.h.b16 %v4665
        %v5660 = vunpack.c.l.b16 %v4666
        %v5661 = vunpack.c.h.b16 %v4666
        %v5662 = vunpack.c.l.b16 %v4667
        %v5663 = vunpack.c.h.b16 %v4667
        %v5664 = vunpack.c.l.b16 %v4668
        %v5665 = vunpack.c.h.b16 %v4668
        %v5666 = vunpack.c.l.b16 %v4669
        %v5667 = vunpack.c.h.b16 %v4669
        %v5668 = vunpack.c.l.b16 %v4670
        %v5669 = vunpack.c.h.b16 %v4670
        %v5670 = vunpack.c.l.b16 %v4671
        %v5671 = vunpack.c.h.b16 %v4671
        %v5672 = vunpack.c.l.b16 %v4672
        %v5673 = vunpack.c.h.b16 %v4672
        %v5674 = vunpack.c.l.b16 %v4673
        %v5675 = vunpack.c.h.b16 %v4673
        %v5676 = vunpack.c.l.b16 %v4674
        %v5677 = vunpack.c.h.b16 %v4674
        %v5678 = vunpack.c.l.b16 %v4675
        %v5679 = vunpack.c.h.b16 %v4675
        %v5680 = vunpack.c.l.b16 %v4676
        %v5681 = vunpack.c.h.b16 %v4676
        %v5682 = vunpack.c.l.b16 %v4677
        %v5683 = vunpack.c.h.b16 %v4677
        %v5684 = vunpack.c.l.b16 %v4678
        %v5685 = vunpack.c.h.b16 %v4678
        %v5686 = vunpack.c.l.b16 %v4679
        %v5687 = vunpack.c.h.b16 %v4679
        %v5688 = vunpack.c.l.b16 %v4680
        %v5689 = vunpack.c.h.b16 %v4680
        %v5690 = vunpack.c.l.b16 %v4681
        %v5691 = vunpack.c.h.b16 %v4681
        %v5692 = vunpack.c.l.b16 %v4682
        %v5693 = vunpack.c.h.b16 %v4682
        %v5694 = vunpack.c.l.b16 %v4683
        %v5695 = vunpack.c.h.b16 %v4683
        %v5696 = vunpack.c.l.b16 %v4684
        %v5697 = vunpack.c.h.b16 %v4684
        %v5698 = vunpack.c.l.b16 %v4685
        %v5699 = vunpack.c.h.b16 %v4685
        %v5700 = vunpack.c.l.b16 %v4686
        %v5701 = vunpack.c.h.b16 %v4686
        %v5702 = vunpack.c.l.b16 %v4687
        %v5703 = vunpack.c.h.b16 %v4687
        %v5704 = vunpack.c.l.b16 %v4688
        %v5705 = vunpack.c.h.b16 %v4688
        %v5706 = vunpack.c.l.b16 %v4689
        %v5707 = vunpack.c.h.b16 %v4689
        %v5708 = vunpack.c.l.b16 %v4690
        %v5709 = vunpack.c.h.b16 %v4690
        %v5710 = vunpack.c.l.b16 %v4691
        %v5711 = vunpack.c.h.b16 %v4691
        %v5712 = vunpack.c.l.b16 %v4692
        %v5713 = vunpack.c.h.b16 %v4692
        %v5714 = vunpack.c.l.b16 %v4693
        %v5715 = vunpack.c.h.b16 %v4693
        %v5716 = vunpack.c.l.b16 %v4694
        %v5717 = vunpack.c.h.b16 %v4694
        %v5718 = vunpack.c.l.b16 %v4695
        %v5719 = vunpack.c.h.b16 %v4695
        %v5720 = vunpack.c.l.b16 %v4696
        %v5721 = vunpack.c.h.b16 %v4696
        %v5722 = vunpack.c.l.b16 %v4697
        %v5723 = vunpack.c.h.b16 %v4697
        %v5724 = vunpack.c.l.b16 %v4698
        %v5725 = vunpack.c.h.b16 %v4698
        %v5726 = vunpack.c.l.b16 %v4699
        %v5727 = vunpack.c.h.b16 %v4699
        %v5728 = vunpack.c.l.b16 %v4700
        %v5729 = vunpack.c.h.b16 %v4700
        %v5730 = vunpack.c.l.b16 %v4701
        %v5731 = vunpack.c.h.b16 %v4701
        %v5732 = vunpack.c.l.b16 %v4702
        %v5733 = vunpack.c.h.b16 %v4702
        %v5734 = vunpack.c.l.b16 %v4703
        %v5735 = vunpack.c.h.b16 %v4703
        %v5736 = vunpack.c.l.b16 %v4704
        %v5737 = vunpack.c.h.b16 %v4704
        %v5738 = vunpack.c.l.b16 %v4705
        %v5739 = vunpack.c.h.b16 %v4705
        %v5740 = vunpack.c.l.b16 %v4706
        %v5741 = vunpack.c.h.b16 %v4706
        %v5742 = vunpack.c.l.b16 %v4707
        %v5743 = vunpack.c.h.b16 %v4707
        %v5744 = vunpack.c.l.b16 %v4708
        %v5745 = vunpack.c.h.b16 %v4708
        %v5746 = vunpack.c.l.b16 %v4709
        %v5747 = vunpack.c.h.b16 %v4709
        %v5748 = vunpack.c.l.b16 %v4710
        %v5749 = vunpack.c.h.b16 %v4710
        %v5750 = vunpack.c.l.b16 %v4711
        %v5751 = vunpack.c.h.b16 %v4711
        %v5752 = vunpack.c.l.b16 %v4712
        %v5753 = vunpack.c.h.b16 %v4712
        %v5754 = vunpack.c.l.b16 %v4713
        %v5755 = vunpack.c.h.b16 %v4713
        %v5756 = vunpack.c.l.b16 %v4714
        %v5757 = vunpack.c.h.b16 %v4714
        %v5758 = vunpack.c.l.b16 %v4715
        %v5759 = vunpack.c.h.b16 %v4715
        %v5760 = vunpack.c.l.b16 %v4716
        %v5761 = vunpack.c.h.b16 %v4716
        %v5762 = vunpack.c.l.b16 %v4717
        %v5763 = vunpack.c.h.b16 %v4717
        %v5764 = vunpack.c.l.b16 %v4718
        %v5765 = vunpack.c.h.b16 %v4718
        %v5766 = vunpack.c.l.b16 %v4719
        %v5767 = vunpack.c.h.b16 %v4719
        %v5768 = vunpack.c.l.b16 %v4720
        %v5769 = vunpack.c.h.b16 %v4720
        %v5770 = vunpack.c.l.b16 %v4721
        %v5771 = vunpack.c.h.b16 %v4721
        %v5772 = vunpack.c.l.b16 %v4722
        %v5773 = vunpack.c.h.b16 %v4722
        %v5774 = vunpack.c.l.b16 %v4723
        %v5775 = vunpack.c.h.b16 %v4723
        %v5776 = vunpack.c.l.b16 %v4724
        %v5777 = vunpack.c.h.b16 %v4724
        %v5778 = vunpack.c.l.b16 %v4725
        %v5779 = vunpack.c.h.b16 %v4725
        %v5780 = vunpack.c.l.b16 %v4726
        %v5781 = vunpack.c.h.b16 %v4726
        %v5782 = vunpack.c.l.b16 %v4727
        %v5783 = vunpack.c.h.b16 %v4727
        %v5784 = vunpack.c.l.b16 %v4728
        %v5785 = vunpack.c.h.b16 %v4728
        %v5786 = vunpack.c.l.b16 %v4729
        %v5787 = vunpack.c.h.b16 %v4729
        %v5788 = vunpack.c.l.b16 %v4730
        %v5789 = vunpack.c.h.b16 %v4730
        %v5790 = vunpack.c.l.b16 %v4731
        %v5791 = vunpack.c.h.b16 %v4731
        %v5792 = vunpack.c.l.b16 %v4732
        %v5793 = vunpack.c.h.b16 %v4732
        %v5794 = vunpack.c.l.b16 %v4733
        %v5795 = vunpack.c.h.b16 %v4733
        %v5796 = vunpack.c.l.b16 %v4734
        %v5797 = vunpack.c.h.b16 %v4734
        %v5798 = vunpack.c.l.b16 %v4735
        %v5799 = vunpack.c.h.b16 %v4735
        %v5800 = vunpack.c.l.b16 %v4736
        %v5801 = vunpack.c.h.b16 %v4736
        %v5802 = vunpack.c.l.b16 %v4737
        %v5803 = vunpack.c.h.b16 %v4737
        %v5804 = vunpack.c.l.b16 %v4738
        %v5805 = vunpack.c.h.b16 %v4738
        %v5806 = vunpack.c.l.b16 %v4739
        %v5807 = vunpack.c.h.b16 %v4739
        %v5808 = vunpack.c.l.b16 %v4740
        %v5809 = vunpack.c.h.b16 %v4740
        %v5810 = vunpack.c.l.b16 %v4741
        %v5811 = vunpack.c.h.b16 %v4741
        %v5812 = vunpack.c.l.b16 %v4742
        %v5813 = vunpack.c.h.b16 %v4742
        %v5814 = vunpack.c.l.b16 %v4743
        %v5815 = vunpack.c.h.b16 %v4743
        %v5816 = vunpack.c.l.b16 %v4744
        %v5817 = vunpack.c.h.b16 %v4744
        %v5818 = vunpack.c.l.b16 %v4745
        %v5819 = vunpack.c.h.b16 %v4745
        %v5820 = vunpack.c.l.b16 %v4746
        %v5821 = vunpack.c.h.b16 %v4746
        %v5822 = vunpack.c.l.b16 %v4747
        %v5823 = vunpack.c.h.b16 %v4747
        %v5824 = vunpack.c.l.b16 %v4748
        %v5825 = vunpack.c.h.b16 %v4748
        %v5826 = vunpack.c.l.b16 %v4749
        %v5827 = vunpack.c.h.b16 %v4749
        %v5828 = vunpack.c.l.b16 %v4750
        %v5829 = vunpack.c.h.b16 %v4750
        %v5830 = vunpack.c.l.b16 %v4751
        %v5831 = vunpack.c.h.b16 %v4751
        %v5832 = vunpack.c.l.b16 %v4752
        %v5833 = vunpack.c.h.b16 %v4752
        %v5834 = vunpack.c.l.b16 %v4753
        %v5835 = vunpack.c.h.b16 %v4753
        %v5836 = vunpack.c.l.b16 %v4754
        %v5837 = vunpack.c.h.b16 %v4754
        %v5838 = vunpack.c.l.b16 %v4755
        %v5839 = vunpack.c.h.b16 %v4755
        %v5840 = vunpack.c.l.b16 %v4756
        %v5841 = vunpack.c.h.b16 %v4756
        %v5842 = vunpack.c.l.b16 %v4757
        %v5843 = vunpack.c.h.b16 %v4757
        %v5844 = vunpack.c.l.b16 %v4758
        %v5845 = vunpack.c.h.b16 %v4758
        %v5846 = vunpack.c.l.b16 %v4759
        %v5847 = vunpack.c.h.b16 %v4759
        %v5848 = vunpack.c.l.b16 %v4760
        %v5849 = vunpack.c.h.b16 %v4760
        %v5850 = vunpack.c.l.b16 %v4761
        %v5851 = vunpack.c.h.b16 %v4761
        %v5852 = vunpack.c.l.b16 %v4762
        %v5853 = vunpack.c.h.b16 %v4762
        %v5854 = vunpack.c.l.b16 %v4763
        %v5855 = vunpack.c.h.b16 %v4763
        %v5856 = vunpack.c.l.b16 %v4764
        %v5857 = vunpack.c.h.b16 %v4764
        %v5858 = vunpack.c.l.b16 %v4765
        %v5859 = vunpack.c.h.b16 %v4765
        %v5860 = vunpack.c.l.b16 %v4766
        %v5861 = vunpack.c.h.b16 %v4766
        %v5862 = vunpack.c.l.b16 %v4767
        %v5863 = vunpack.c.h.b16 %v4767
        %v5864 = vunpack.c.l.b16 %v4768
        %v5865 = vunpack.c.h.b16 %v4768
        %v5866 = vunpack.c.l.b16 %v4769
        %v5867 = vunpack.c.h.b16 %v4769
        %v5868 = vunpack.c.l.b16 %v4770
        %v5869 = vunpack.c.h.b16 %v4770
        %v5870 = vunpack.c.l.b16 %v4771
        %v5871 = vunpack.c.h.b16 %v4771
        %v5872 = vunpack.c.l.b16 %v4772
        %v5873 = vunpack.c.h.b16 %v4772
        %v5874 = vunpack.c.l.b16 %v4773
        %v5875 = vunpack.c.h.b16 %v4773
        %v5876 = vunpack.c.l.b16 %v4774
        %v5877 = vunpack.c.h.b16 %v4774
        %v5878 = vunpack.c.l.b16 %v4775
        %v5879 = vunpack.c.h.b16 %v4775
        %v5880 = vunpack.c.l.b16 %v4776
        %v5881 = vunpack.c.h.b16 %v4776
        %v5882 = vunpack.c.l.b16 %v4777
        %v5883 = vunpack.c.h.b16 %v4777
        %v5884 = vunpack.c.l.b16 %v4778
        %v5885 = vunpack.c.h.b16 %v4778
        %v5886 = vunpack.c.l.b16 %v4779
        %v5887 = vunpack.c.h.b16 %v4779
        %v5888 = vunpack.c.l.b16 %v4780
        %v5889 = vunpack.c.h.b16 %v4780
        %v5890 = vunpack.c.l.b16 %v4781
        %v5891 = vunpack.c.h.b16 %v4781
        %v5892 = vunpack.c.l.b16 %v4782
        %v5893 = vunpack.c.h.b16 %v4782
        %v5894 = vunpack.c.l.b16 %v4783
        %v5895 = vunpack.c.h.b16 %v4783
        %v5896 = vunpack.c.l.b16 %v4784
        %v5897 = vunpack.c.h.b16 %v4784
        %v5898 = vunpack.c.l.b16 %v4785
        %v5899 = vunpack.c.h.b16 %v4785
        %v5900 = vunpack.c.l.b16 %v4786
        %v5901 = vunpack.c.h.b16 %v4786
        %v5902 = vunpack.c.l.b16 %v4787
        %v5903 = vunpack.c.h.b16 %v4787
        %v5904 = vunpack.c.l.b16 %v4788
        %v5905 = vunpack.c.h.b16 %v4788
        %v5906 = vunpack.c.l.b16 %v4789
        %v5907 = vunpack.c.h.b16 %v4789
        %v5908 = vunpack.c.l.b16 %v4790
        %v5909 = vunpack.c.h.b16 %v4790
        %v5910 = vunpack.c.l.b16 %v4791
        %v5911 = vunpack.c.h.b16 %v4791
        %v5912 = vunpack.c.l.b16 %v4792
        %v5913 = vunpack.c.h.b16 %v4792
        %v5914 = vunpack.c.l.b16 %v4793
        %v5915 = vunpack.c.h.b16 %v4793
        %v5916 = vunpack.c.l.b16 %v4794
        %v5917 = vunpack.c.h.b16 %v4794
        %v5918 = vunpack.c.l.b16 %v4795
        %v5919 = vunpack.c.h.b16 %v4795
        %v5920 = vunpack.c.l.b16 %v4796
        %v5921 = vunpack.c.h.b16 %v4796
        %v5922 = vunpack.c.l.b16 %v4797
        %v5923 = vunpack.c.h.b16 %v4797
        %v5924 = vunpack.c.l.b16 %v4798
        %v5925 = vunpack.c.h.b16 %v4798
        %v5926 = vunpack.c.l.b16 %v4799
        %v5927 = vunpack.c.h.b16 %v4799
        %v5928 = vunpack.c.l.b16 %v4800
        %v5929 = vunpack.c.h.b16 %v4800
        %v5930 = vunpack.c.l.b16 %v4801
        %v5931 = vunpack.c.h.b16 %v4801
        %v5932 = vunpack.c.l.b16 %v4802
        %v5933 = vunpack.c.h.b16 %v4802
        %v5934 = vunpack.c.l.b16 %v4803
        %v5935 = vunpack.c.h.b16 %v4803
        %v5936 = vunpack.c.l.b16 %v4804
        %v5937 = vunpack.c.h.b16 %v4804
        %v5938 = vunpack.c.l.b16 %v4805
        %v5939 = vunpack.c.h.b16 %v4805
        %v5940 = vunpack.c.l.b16 %v4806
        %v5941 = vunpack.c.h.b16 %v4806
        %v5942 = vunpack.c.l.b16 %v4807
        %v5943 = vunpack.c.h.b16 %v4807
        %v5944 = vunpack.c.l.b16 %v4808
        %v5945 = vunpack.c.h.b16 %v4808
        %v5946 = vunpack.c.l.b16 %v4809
        %v5947 = vunpack.c.h.b16 %v4809
        %v5948 = vunpack.c.l.b16 %v4810
        %v5949 = vunpack.c.h.b16 %v4810
        %v5950 = vunpack.c.l.b16 %v4811
        %v5951 = vunpack.c.h.b16 %v4811
        %v5952 = vunpack.c.l.b16 %v4812
        %v5953 = vunpack.c.h.b16 %v4812
        %v5954 = vunpack.c.l.b16 %v4813
        %v5955 = vunpack.c.h.b16 %v4813
        %v5956 = vunpack.c.l.b16 %v4814
        %v5957 = vunpack.c.h.b16 %v4814
        %v5958 = vunpack.c.l.b16 %v4815
        %v5959 = vunpack.c.h.b16 %v4815
        %v5960 = vunpack.c.l.b16 %v4816
        %v5961 = vunpack.c.h.b16 %v4816
        %v5962 = vunpack.c.l.b16 %v4817
        %v5963 = vunpack.c.h.b16 %v4817
        %v5964 = vunpack.c.l.b16 %v4818
        %v5965 = vunpack.c.h.b16 %v4818
        %v5966 = vunpack.c.l.b16 %v4819
        %v5967 = vunpack.c.h.b16 %v4819
        %v5968 = vunpack.c.l.b16 %v4820
        %v5969 = vunpack.c.h.b16 %v4820
        %v5970 = vunpack.c.l.b16 %v4821
        %v5971 = vunpack.c.h.b16 %v4821
        %v5972 = vunpack.c.l.b16 %v4822
        %v5973 = vunpack.c.h.b16 %v4822
        %v5974 = vunpack.c.l.b16 %v4823
        %v5975 = vunpack.c.h.b16 %v4823
        %v5976 = vunpack.c.l.b16 %v4824
        %v5977 = vunpack.c.h.b16 %v4824
        %v5978 = vunpack.c.l.b16 %v4825
        %v5979 = vunpack.c.h.b16 %v4825
        %v5980 = vunpack.c.l.b16 %v4826
        %v5981 = vunpack.c.h.b16 %v4826
        %v5982 = vunpack.c.l.b16 %v4827
        %v5983 = vunpack.c.h.b16 %v4827
        %v5984 = vunpack.c.l.b16 %v4828
        %v5985 = vunpack.c.h.b16 %v4828
        %v5986 = vunpack.c.l.b16 %v4829
        %v5987 = vunpack.c.h.b16 %v4829
        %v5988 = vunpack.c.l.b16 %v4830
        %v5989 = vunpack.c.h.b16 %v4830
        %v5990 = vunpack.c.l.b16 %v4831
        %v5991 = vunpack.c.h.b16 %v4831
        %v5992 = vunpack.c.l.b16 %v4832
        %v5993 = vunpack.c.h.b16 %v4832
        %v5994 = vunpack.c.l.b16 %v4833
        %v5995 = vunpack.c.h.b16 %v4833
        %v5996 = vunpack.c.l.b16 %v4834
        %v5997 = vunpack.c.h.b16 %v4834
        %v5998 = vunpack.c.l.b16 %v4835
        %v5999 = vunpack.c.h.b16 %v4835
        %v6000 = vunpack.c.l.b16 %v4836
        %v6001 = vunpack.c.h.b16 %v4836
        %v6002 = vunpack.c.l.b16 %v4837
        %v6003 = vunpack.c.h.b16 %v4837
        %v6004 = vunpack.c.l.b16 %v4838
        %v6005 = vunpack.c.h.b16 %v4838
        %v6006 = vunpack.c.l.b16 %v4839
        %v6007 = vunpack.c.h.b16 %v4839
        %v6008 = vunpack.c.l.b16 %v4840
        %v6009 = vunpack.c.h.b16 %v4840
        %v6010 = vunpack.c.l.b16 %v4841
        %v6011 = vunpack.c.h.b16 %v4841
        %v6012 = vunpack.c.l.b16 %v4842
        %v6013 = vunpack.c.h.b16 %v4842
        %v6014 = vunpack.c.l.b16 %v4843
        %v6015 = vunpack.c.h.b16 %v4843
        %v6016 = vunpack.c.l.b16 %v4844
        %v6017 = vunpack.c.h.b16 %v4844
        %v6018 = vunpack.c.l.b16 %v4845
        %v6019 = vunpack.c.h.b16 %v4845
        %v6020 = vunpack.c.l.b16 %v4846
        %v6021 = vunpack.c.h.b16 %v4846
        %v6022 = vunpack.c.l.b16 %v4847
        %v6023 = vunpack.c.h.b16 %v4847
        %v6024 = vunpack.c.l.b16 %v4848
        %v6025 = vunpack.c.h.b16 %v4848
        %v6026 = vunpack.c.l.b16 %v4849
        %v6027 = vunpack.c.h.b16 %v4849
        %v6028 = vunpack.c.l.b16 %v4850
        %v6029 = vunpack.c.h.b16 %v4850
        %v6030 = vunpack.c.l.b16 %v4851
        %v6031 = vunpack.c.h.b16 %v4851
        %v6032 = vunpack.c.l.b16 %v4852
        %v6033 = vunpack.c.h.b16 %v4852
        %v6034 = vunpack.c.l.b16 %v4853
        %v6035 = vunpack.c.h.b16 %v4853
        %v6036 = vunpack.c.l.b16 %v4854
        %v6037 = vunpack.c.h.b16 %v4854
        %v6038 = vunpack.c.l.b16 %v4855
        %v6039 = vunpack.c.h.b16 %v4855
        %v6040 = vunpack.c.l.b16 %v4856
        %v6041 = vunpack.c.h.b16 %v4856
        %v6042 = vunpack.c.l.b16 %v4857
        %v6043 = vunpack.c.h.b16 %v4857
        %v6044 = vunpack.c.l.b16 %v4858
        %v6045 = vunpack.c.h.b16 %v4858
        %v6046 = vunpack.c.l.b16 %v4859
        %v6047 = vunpack.c.h.b16 %v4859
        %v6048 = vunpack.c.l.b16 %v4860
        %v6049 = vunpack.c.h.b16 %v4860
        %v6050 = vunpack.c.l.b16 %v4861
        %v6051 = vunpack.c.h.b16 %v4861
        %v6052 = vunpack.c.l.b16 %v4862
        %v6053 = vunpack.c.h.b16 %v4862
        %v6054 = vunpack.c.l.b16 %v4863
        %v6055 = vunpack.c.h.b16 %v4863
        %v6056 = vunpack.c.l.b16 %v4864
        %v6057 = vunpack.c.h.b16 %v4864
        %v6058 = vunpack.c.l.b16 %v4865
        %v6059 = vunpack.c.h.b16 %v4865
        %v6060 = vunpack.c.l.b16 %v4866
        %v6061 = vunpack.c.h.b16 %v4866
        %v6062 = vunpack.c.l.b16 %v4867
        %v6063 = vunpack.c.h.b16 %v4867
        %v6064 = vunpack.c.l.b16 %v4868
        %v6065 = vunpack.c.h.b16 %v4868
        %v6066 = vunpack.c.l.b16 %v4869
        %v6067 = vunpack.c.h.b16 %v4869
        %v6068 = vunpack.c.l.b16 %v4870
        %v6069 = vunpack.c.h.b16 %v4870
        %v6070 = vunpack.c.l.b16 %v4871
        %v6071 = vunpack.c.h.b16 %v4871
        %v6072 = vunpack.c.l.b16 %v4872
        %v6073 = vunpack.c.h.b16 %v4872
        %v6074 = vunpack.c.l.b16 %v4873
        %v6075 = vunpack.c.h.b16 %v4873
        %v6076 = vunpack.c.l.b16 %v4874
        %v6077 = vunpack.c.h.b16 %v4874
        %v6078 = vunpack.c.l.b16 %v4875
        %v6079 = vunpack.c.h.b16 %v4875
        %v6080 = vunpack.c.l.b16 %v4876
        %v6081 = vunpack.c.h.b16 %v4876
        %v6082 = vunpack.c.l.b16 %v4877
        %v6083 = vunpack.c.h.b16 %v4877
        %v6084 = vunpack.c.l.b16 %v4878
        %v6085 = vunpack.c.h.b16 %v4878
        %v6086 = vunpack.c.l.b16 %v4879
        %v6087 = vunpack.c.h.b16 %v4879
        %v6088 = vunpack.c.l.b16 %v4880
        %v6089 = vunpack.c.h.b16 %v4880
        %v6090 = vunpack.c.l.b16 %v4881
        %v6091 = vunpack.c.h.b16 %v4881
        %v6092 = vunpack.c.l.b16 %v4882
        %v6093 = vunpack.c.h.b16 %v4882
        %v6094 = vunpack.c.l.b16 %v4883
        %v6095 = vunpack.c.h.b16 %v4883
        %v6096 = vunpack.c.l.b16 %v4884
        %v6097 = vunpack.c.h.b16 %v4884
        %v6098 = vunpack.c.l.b16 %v4885
        %v6099 = vunpack.c.h.b16 %v4885
        %v6100 = vunpack.c.l.b16 %v4886
        %v6101 = vunpack.c.h.b16 %v4886
        %v6102 = vunpack.c.l.b16 %v4887
        %v6103 = vunpack.c.h.b16 %v4887
        %v6104 = vunpack.c.l.b16 %v4888
        %v6105 = vunpack.c.h.b16 %v4888
        %v6106 = vunpack.c.l.b16 %v4889
        %v6107 = vunpack.c.h.b16 %v4889
        %v6108 = vunpack.c.l.b16 %v4890
        %v6109 = vunpack.c.h.b16 %v4890
        %v6110 = vunpack.c.l.b16 %v4891
        %v6111 = vunpack.c.h.b16 %v4891
        %v6112 = vunpack.c.l.b16 %v4892
        %v6113 = vunpack.c.h.b16 %v4892
        %v6114 = vunpack.c.l.b16 %v4893
        %v6115 = vunpack.c.h.b16 %v4893
        %v6116 = vunpack.c.l.b16 %v4894
        %v6117 = vunpack.c.h.b16 %v4894
        %v6118 = vunpack.c.l.b16 %v4895
        %v6119 = vunpack.c.h.b16 %v4895
        %v6120 = vunpack.c.l.b16 %v4896
        %v6121 = vunpack.c.h.b16 %v4896
        %v6122 = vunpack.c.l.b16 %v4897
        %v6123 = vunpack.c.h.b16 %v4897
        %v6124 = vunpack.c.l.b16 %v4898
        %v6125 = vunpack.c.h.b16 %v4898
        %v6126 = vunpack.c.l.b16 %v4899
        %v6127 = vunpack.c.h.b16 %v4899
        %v6128 = vunpack.c.l.b16 %v4900
        %v6129 = vunpack.c.h.b16 %v4900
        %v6130 = vunpack.c.l.b16 %v4901
        %v6131 = vunpack.c.h.b16 %v4901
        %v6132 = vunpack.c.l.b16 %v4902
        %v6133 = vunpack.c.h.b16 %v4902
        %v6134 = vunpack.c.l.b16 %v4903
        %v6135 = vunpack.c.h.b16 %v4903
        %v6136 = vunpack.c.l.b16 %v4904
        %v6137 = vunpack.c.h.b16 %v4904
        %v6138 = vunpack.c.l.b16 %v4905
        %v6139 = vunpack.c.h.b16 %v4905
        %v6140 = vunpack.c.l.b16 %v4906
        %v6141 = vunpack.c.h.b16 %v4906
        %v6142 = vunpack.c.l.b16 %v4907
        %v6143 = vunpack.c.h.b16 %v4907
        %v6144 = vunpack.c.l.b16 %v4908
        %v6145 = vunpack.c.h.b16 %v4908
        %v6146 = vunpack.c.l.b16 %v4909
        %v6147 = vunpack.c.h.b16 %v4909
        %v6148 = vunpack.c.l.b16 %v4910
        %v6149 = vunpack.c.h.b16 %v4910
        %v6150 = vunpack.c.l.b16 %v4911
        %v6151 = vunpack.c.h.b16 %v4911
        %v6152 = vunpack.c.l.b16 %v4912
        %v6153 = vunpack.c.h.b16 %v4912
        %v6154 = vunpack.c.l.b16 %v4913
        %v6155 = vunpack.c.h.b16 %v4913
        %v6156 = vunpack.c.l.b16 %v4914
        %v6157 = vunpack.c.h.b16 %v4914
        %v6158 = vunpack.c.l.b16 %v4915
        %v6159 = vunpack.c.h.b16 %v4915
        %v6160 = vunpack.c.l.b16 %v4916
        %v6161 = vunpack.c.h.b16 %v4916
        %v6162 = vunpack.c.l.b16 %v4917
        %v6163 = vunpack.c.h.b16 %v4917
        %v6164 = vunpack.c.l.b16 %v4918
        %v6165 = vunpack.c.h.b16 %v4918
        %v6166 = vunpack.c.l.b16 %v4919
        %v6167 = vunpack.c.h.b16 %v4919
        %v6168 = vunpack.c.l.b16 %v4920
        %v6169 = vunpack.c.h.b16 %v4920
        %v6170 = vunpack.c.l.b16 %v4921
        %v6171 = vunpack.c.h.b16 %v4921
        %v6172 = vunpack.c.l.b16 %v4922
        %v6173 = vunpack.c.h.b16 %v4922
        %v6174 = vunpack.c.l.b16 %v4923
        %v6175 = vunpack.c.h.b16 %v4923
        %v6176 = vunpack.c.l.b16 %v4924
        %v6177 = vunpack.c.h.b16 %v4924
        %v6178 = vunpack.c.l.b16 %v4925
        %v6179 = vunpack.c.h.b16 %v4925
        %v6180 = vunpack.c.l.b16 %v4926
        %v6181 = vunpack.c.h.b16 %v4926
        %v6182 = vunpack.c.l.b16 %v4927
        %v6183 = vunpack.c.h.b16 %v4927
        %v6184 = vunpack.c.l.b16 %v4928
        %v6185 = vunpack.c.h.b16 %v4928
        %v6186 = vunpack.c.l.b16 %v4929
        %v6187 = vunpack.c.h.b16 %v4929
        %v6188 = vunpack.c.l.b16 %v4930
        %v6189 = vunpack.c.h.b16 %v4930
        %v6190 = vunpack.c.l.b16 %v4931
        %v6191 = vunpack.c.h.b16 %v4931
        %v6192 = vunpack.c.l.b16 %v4932
        %v6193 = vunpack.c.h.b16 %v4932
        %v6194 = vunpack.c.l.b16 %v4933
        %v6195 = vunpack.c.h.b16 %v4933
        %v6196 = vunpack.c.l.b16 %v4934
        %v6197 = vunpack.c.h.b16 %v4934
        %v6198 = vunpack.c.l.b16 %v4935
        %v6199 = vunpack.c.h.b16 %v4935
        %v6200 = vunpack.c.l.b16 %v4936
        %v6201 = vunpack.c.h.b16 %v4936
        %v6202 = vunpack.c.l.b16 %v4937
        %v6203 = vunpack.c.h.b16 %v4937
        %v6204 = vunpack.c.l.b16 %v4938
        %v6205 = vunpack.c.h.b16 %v4938
        %v6206 = vunpack.c.l.b16 %v4939
        %v6207 = vunpack.c.h.b16 %v4939
        %v6208 = vunpack.c.l.b16 %v4940
        %v6209 = vunpack.c.h.b16 %v4940
        %v6210 = vunpack.c.l.b16 %v4941
        %v6211 = vunpack.c.h.b16 %v4941
        %v6212 = vunpack.c.l.b16 %v4942
        %v6213 = vunpack.c.h.b16 %v4942
        %v6214 = vunpack.c.l.b16 %v4943
        %v6215 = vunpack.c.h.b16 %v4943
        %v6216 = vunpack.c.l.b16 %v4944
        %v6217 = vunpack.c.h.b16 %v4944
        %v6218 = vunpack.c.l.b16 %v4945
        %v6219 = vunpack.c.h.b16 %v4945
        %v6220 = vunpack.c.l.b16 %v4946
        %v6221 = vunpack.c.h.b16 %v4946
        %v6222 = vunpack.c.l.b16 %v4947
        %v6223 = vunpack.c.h.b16 %v4947
        %v6224 = vunpack.c.l.b16 %v4948
        %v6225 = vunpack.c.h.b16 %v4948
        %v6226 = vunpack.c.l.b16 %v4949
        %v6227 = vunpack.c.h.b16 %v4949
        %v6228 = vunpack.c.l.b16 %v4950
        %v6229 = vunpack.c.h.b16 %v4950
        %v6230 = vunpack.c.l.b16 %v4951
        %v6231 = vunpack.c.h.b16 %v4951
        %v6232 = vunpack.c.l.b16 %v4952
        %v6233 = vunpack.c.h.b16 %v4952
        %v6234 = vunpack.c.l.b16 %v4953
        %v6235 = vunpack.c.h.b16 %v4953
        %v6236 = vunpack.c.l.b16 %v4954
        %v6237 = vunpack.c.h.b16 %v4954
        %v6238 = vunpack.c.l.b16 %v4955
        %v6239 = vunpack.c.h.b16 %v4955
        %v6240 = vunpack.c.l.b16 %v4956
        %v6241 = vunpack.c.h.b16 %v4956
        %v6242 = vunpack.c.l.b16 %v4957
        %v6243 = vunpack.c.h.b16 %v4957
        %v6244 = vunpack.c.l.b16 %v4958
        %v6245 = vunpack.c.h.b16 %v4958
        %v6246 = vunpack.c.l.b16 %v4959
        %v6247 = vunpack.c.h.b16 %v4959
        %v6248 = vunpack.c.l.b16 %v4960
        %v6249 = vunpack.c.h.b16 %v4960
        %v6250 = vunpack.c.l.b16 %v4961
        %v6251 = vunpack.c.h.b16 %v4961
        %v6252 = vunpack.c.l.b16 %v4962
        %v6253 = vunpack.c.h.b16 %v4962
        %v6254 = vunpack.c.l.b16 %v4963
        %v6255 = vunpack.c.h.b16 %v4963
        %v6256 = vunpack.c.l.b16 %v4964
        %v6257 = vunpack.c.h.b16 %v4964
        %v6258 = vunpack.c.l.b16 %v4965
        %v6259 = vunpack.c.h.b16 %v4965
        %v6260 = vunpack.c.l.b16 %v4966
        %v6261 = vunpack.c.h.b16 %v4966
        %v6262 = vunpack.c.l.b16 %v4967
        %v6263 = vunpack.c.h.b16 %v4967
        %v6264 = vunpack.c.l.b16 %v4968
        %v6265 = vunpack.c.h.b16 %v4968
        %v6266 = vunpack.c.l.b16 %v4969
        %v6267 = vunpack.c.h.b16 %v4969
        %v6268 = vunpack.c.l.b16 %v4970
        %v6269 = vunpack.c.h.b16 %v4970
        %v6270 = vunpack.c.l.b16 %v4971
        %v6271 = vunpack.c.h.b16 %v4971
        %v6272 = vunpack.c.l.b16 %v4972
        %v6273 = vunpack.c.h.b16 %v4972
        %v6274 = vunpack.c.l.b16 %v4973
        %v6275 = vunpack.c.h.b16 %v4973
        %v6276 = vunpack.c.l.b16 %v4974
        %v6277 = vunpack.c.h.b16 %v4974
        %v6278 = vunpack.c.l.b16 %v4975
        %v6279 = vunpack.c.h.b16 %v4975
        %v6280 = vunpack.c.l.b16 %v4976
        %v6281 = vunpack.c.h.b16 %v4976
        %v6282 = vunpack.c.l.b16 %v4977
        %v6283 = vunpack.c.h.b16 %v4977
        %v6284 = vunpack.c.l.b16 %v4978
        %v6285 = vunpack.c.h.b16 %v4978
        %v6286 = vunpack.c.l.b16 %v4979
        %v6287 = vunpack.c.h.b16 %v4979
        %v6288 = vunpack.c.l.b16 %v4980
        %v6289 = vunpack.c.h.b16 %v4980
        %v6290 = vunpack.c.l.b16 %v4981
        %v6291 = vunpack.c.h.b16 %v4981
        %v6292 = vunpack.c.l.b16 %v4982
        %v6293 = vunpack.c.h.b16 %v4982
        %v6294 = vunpack.c.l.b16 %v4983
        %v6295 = vunpack.c.h.b16 %v4983
        %v6296 = vunpack.c.l.b16 %v4984
        %v6297 = vunpack.c.h.b16 %v4984
        %v6298 = vunpack.c.l.b16 %v4985
        %v6299 = vunpack.c.h.b16 %v4985
        %v6300 = vunpack.c.l.b16 %v4986
        %v6301 = vunpack.c.h.b16 %v4986
        %v6302 = vunpack.c.l.b16 %v4987
        %v6303 = vunpack.c.h.b16 %v4987
        %v6304 = vunpack.c.l.b16 %v4988
        %v6305 = vunpack.c.h.b16 %v4988
        %v6306 = vunpack.c.l.b16 %v4989
        %v6307 = vunpack.c.h.b16 %v4989
        %v6308 = vunpack.c.l.b16 %v4990
        %v6309 = vunpack.c.h.b16 %v4990
        %v6310 = vunpack.c.l.b16 %v4991
        %v6311 = vunpack.c.h.b16 %v4991
        %v6312 = vunpack.c.l.b16 %v4992
        %v6313 = vunpack.c.h.b16 %v4992
        %v6314 = vunpack.c.l.b16 %v4993
        %v6315 = vunpack.c.h.b16 %v4993
        %v6316 = vunpack.c.l.b16 %v4994
        %v6317 = vunpack.c.h.b16 %v4994
        %v6318 = vunpack.c.l.b16 %v4995
        %v6319 = vunpack.c.h.b16 %v4995
        %v6320 = vunpack.c.l.b16 %v4996
        %v6321 = vunpack.c.h.b16 %v4996
        %v6322 = vunpack.c.l.b16 %v4997
        %v6323 = vunpack.c.h.b16 %v4997
        %v6324 = vunpack.c.l.b16 %v4998
        %v6325 = vunpack.c.h.b16 %v4998
        %v6326 = vunpack.c.l.b16 %v4999
        %v6327 = vunpack.c.h.b16 %v4999
        %v6328 = vunpack.c.l.b16 %v5000
        %v6329 = vunpack.c.h.b16 %v5000
        %v6330 = vunpack.c.l.b16 %v5001
        %v6331 = vunpack.c.h.b16 %v5001
        %v6332 = vunpack.c.l.b16 %v5002
        %v6333 = vunpack.c.h.b16 %v5002
        %v6334 = vunpack.c.l.b16 %v5003
        %v6335 = vunpack.c.h.b16 %v5003
        %v6336 = vunpack.c.l.b16 %v5004
        %v6337 = vunpack.c.h.b16 %v5004
        %v6338 = vunpack.c.l.b16 %v5005
        %v6339 = vunpack.c.h.b16 %v5005
        %v6340 = vunpack.c.l.b16 %v5006
        %v6341 = vunpack.c.h.b16 %v5006
        %v6342 = vunpack.c.l.b16 %v5007
        %v6343 = vunpack.c.h.b16 %v5007
        %v6344 = vunpack.c.l.b16 %v5008
        %v6345 = vunpack.c.h.b16 %v5008
        %v6346 = vunpack.c.l.b16 %v5009
        %v6347 = vunpack.c.h.b16 %v5009
        %v6348 = vunpack.c.l.b16 %v5010
        %v6349 = vunpack.c.h.b16 %v5010
        %v6350 = vunpack.c.l.b16 %v5011
        %v6351 = vunpack.c.h.b16 %v5011
        %v6352 = vunpack.c.l.b16 %v5012
        %v6353 = vunpack.c.h.b16 %v5012
        %v6354 = vunpack.c.l.b16 %v5013
        %v6355 = vunpack.c.h.b16 %v5013
        %v6356 = vunpack.c.l.b16 %v5014
        %v6357 = vunpack.c.h.b16 %v5014
        %v6358 = vunpack.c.l.b16 %v5015
        %v6359 = vunpack.c.h.b16 %v5015
        %v6360 = vunpack.c.l.b16 %v5016
        %v6361 = vunpack.c.h.b16 %v5016
        %v6362 = vunpack.c.l.b16 %v5017
        %v6363 = vunpack.c.h.b16 %v5017
        %v6364 = vunpack.c.l.b16 %v5018
        %v6365 = vunpack.c.h.b16 %v5018
        %v6366 = vunpack.c.l.b16 %v5019
        %v6367 = vunpack.c.h.b16 %v5019
        %v6368 = vunpack.c.l.b16 %v5020
        %v6369 = vunpack.c.h.b16 %v5020
        %v6370 = vunpack.c.l.b16 %v5021
        %v6371 = vunpack.c.h.b16 %v5021
        %v6372 = vunpack.c.l.b16 %v5022
        %v6373 = vunpack.c.h.b16 %v5022
        %v6374 = vunpack.c.l.b16 %v5023
        %v6375 = vunpack.c.h.b16 %v5023
        %v6376 = vunpack.c.l.b16 %v5024
        %v6377 = vunpack.c.h.b16 %v5024
        %v6378 = vunpack.c.l.b16 %v5025
        %v6379 = vunpack.c.h.b16 %v5025
        %v6380 = vunpack.c.l.b16 %v5026
        %v6381 = vunpack.c.h.b16 %v5026
        %v6382 = vunpack.c.l.b16 %v5027
        %v6383 = vunpack.c.h.b16 %v5027
        %v6384 = vunpack.c.l.b16 %v5028
        %v6385 = vunpack.c.h.b16 %v5028
        %v6386 = vunpack.c.l.b16 %v5029
        %v6387 = vunpack.c.h.b16 %v5029
        %v6388 = vunpack.c.l.b16 %v5030
        %v6389 = vunpack.c.h.b16 %v5030
        %v6390 = vunpack.c.l.b16 %v5031
        %v6391 = vunpack.c.h.b16 %v5031
        %v6392 = vunpack.c.l.b16 %v5032
        %v6393 = vunpack.c.h.b16 %v5032
        %v6394 = vunpack.c.l.b16 %v5033
        %v6395 = vunpack.c.h.b16 %v5033
        %v6396 = vunpack.c.l.b16 %v5034
        %v6397 = vunpack.c.h.b16 %v5034
        %v6398 = vunpack.c.l.b16 %v5035
        %v6399 = vunpack.c.h.b16 %v5035
        %v6400 = vunpack.c.l.b16 %v5036
        %v6401 = vunpack.c.h.b16 %v5036
        %v6402 = vunpack.c.l.b16 %v5037
        %v6403 = vunpack.c.h.b16 %v5037
        %v6404 = vunpack.c.l.b16 %v5038
        %v6405 = vunpack.c.h.b16 %v5038
        %v6406 = vunpack.c.l.b16 %v5039
        %v6407 = vunpack.c.h.b16 %v5039
        %v6408 = vunpack.c.l.b16 %v5040
        %v6409 = vunpack.c.h.b16 %v5040
        %v6410 = vunpack.c.l.b16 %v5041
        %v6411 = vunpack.c.h.b16 %v5041
        %v6412 = vunpack.c.l.b16 %v5042
        %v6413 = vunpack.c.h.b16 %v5042
        %v6414 = vunpack.c.l.b16 %v5043
        %v6415 = vunpack.c.h.b16 %v5043
        %v6416 = vunpack.c.l.b16 %v5044
        %v6417 = vunpack.c.h.b16 %v5044
        %v6418 = vunpack.c.l.b16 %v5045
        %v6419 = vunpack.c.h.b16 %v5045
        %v6420 = vunpack.c.l.b16 %v5046
        %v6421 = vunpack.c.h.b16 %v5046
        %v6422 = vunpack.c.l.b16 %v5047
        %v6423 = vunpack.c.h.b16 %v5047
        %v6424 = vunpack.c.l.b16 %v5048
        %v6425 = vunpack.c.h.b16 %v5048
        %v6426 = vunpack.c.l.b16 %v5049
        %v6427 = vunpack.c.h.b16 %v5049
        %v6428 = vunpack.c.l.b16 %v5050
        %v6429 = vunpack.c.h.b16 %v5050
        %v6430 = vunpack.c.l.b16 %v5051
        %v6431 = vunpack.c.h.b16 %v5051
        %v6432 = vunpack.c.l.b16 %v5052
        %v6433 = vunpack.c.h.b16 %v5052
        %v6434 = vunpack.c.l.b16 %v5053
        %v6435 = vunpack.c.h.b16 %v5053
        %v6436 = vunpack.c.l.b16 %v5054
        %v6437 = vunpack.c.h.b16 %v5054
        %v6438 = vunpack.c.l.b16 %v5055
        %v6439 = vunpack.c.h.b16 %v5055
        %v6440 = vunpack.c.l.b16 %v5056
        %v6441 = vunpack.c.h.b16 %v5056
        %v6442 = vunpack.c.l.b16 %v5057
        %v6443 = vunpack.c.h.b16 %v5057
        %v6444 = vunpack.c.l.b16 %v5058
        %v6445 = vunpack.c.h.b16 %v5058
        %v6446 = vunpack.c.l.b16 %v5059
        %v6447 = vunpack.c.h.b16 %v5059
        %v6448 = vunpack.c.l.b16 %v5060
        %v6449 = vunpack.c.h.b16 %v5060
        %v6450 = vunpack.c.l.b16 %v5061
        %v6451 = vunpack.c.h.b16 %v5061
        %v6452 = vunpack.c.l.b16 %v5062
        %v6453 = vunpack.c.h.b16 %v5062
        %v6454 = vunpack.c.l.b16 %v5063
        %v6455 = vunpack.c.h.b16 %v5063
        %v6456 = vunpack.c.l.b16 %v5064
        %v6457 = vunpack.c.h.b16 %v5064
        %v6458 = vunpack.c.l.b16 %v5065
        %v6459 = vunpack.c.h.b16 %v5065
        %v6460 = vunpack.c.l.b16 %v5066
        %v6461 = vunpack.c.h.b16 %v5066
        %v6462 = vunpack.c.l.b16 %v5067
        %v6463 = vunpack.c.h.b16 %v5067
        %v6464 = vunpack.c.l.b16 %v5068
        %v6465 = vunpack.c.h.b16 %v5068
        %v6466 = vunpack.c.l.b16 %v5069
        %v6467 = vunpack.c.h.b16 %v5069
        %v6468 = vunpack.c.l.b16 %v5070
        %v6469 = vunpack.c.h.b16 %v5070
        %v6470 = vunpack.c.l.b16 %v5071
        %v6471 = vunpack.c.h.b16 %v5071
        %v6472 = vunpack.c.l.b16 %v5072
        %v6473 = vunpack.c.h.b16 %v5072
        %v6474 = vunpack.c.l.b16 %v5073
        %v6475 = vunpack.c.h.b16 %v5073
        %v6476 = vunpack.c.l.b16 %v5074
        %v6477 = vunpack.c.h.b16 %v5074
        %v6478 = vunpack.c.l.b16 %v5075
        %v6479 = vunpack.c.h.b16 %v5075
        %v6480 = vunpack.c.l.b16 %v5076
        %v6481 = vunpack.c.h.b16 %v5076
        %v6482 = vunpack.c.l.b16 %v5077
        %v6483 = vunpack.c.h.b16 %v5077
        %v6484 = vunpack.c.l.b16 %v5078
        %v6485 = vunpack.c.h.b16 %v5078
        %v6486 = vunpack.c.l.b16 %v5079
        %v6487 = vunpack.c.h.b16 %v5079
        %v6488 = vunpack.c.l.b16 %v5080
        %v6489 = vunpack.c.h.b16 %v5080
        %v6490 = vunpack.c.l.b16 %v5081
        %v6491 = vunpack.c.h.b16 %v5081
        %v6492 = vunpack.c.l.b16 %v5082
        %v6493 = vunpack.c.h.b16 %v5082
        %v6494 = vunpack.c.l.b16 %v5083
        %v6495 = vunpack.c.h.b16 %v5083
        %v6496 = vunpack.c.l.b16 %v5084
        %v6497 = vunpack.c.h.b16 %v5084
        %v6498 = vunpack.c.l.b16 %v5085
        %v6499 = vunpack.c.h.b16 %v5085
        %v6500 = vunpack.c.l.b16 %v5086
        %v6501 = vunpack.c.h.b16 %v5086
        %v6502 = vunpack.c.l.b16 %v5087
        %v6503 = vunpack.c.h.b16 %v5087
        %v6504 = vunpack.c.l.b16 %v5088
        %v6505 = vunpack.c.h.b16 %v5088
        %v6506 = vunpack.c.l.b16 %v5089
        %v6507 = vunpack.c.h.b16 %v5089
        %v6508 = vunpack.c.l.b16 %v5090
        %v6509 = vunpack.c.h.b16 %v5090
        %v6510 = vunpack.c.l.b16 %v5091
        %v6511 = vunpack.c.h.b16 %v5091
        %v6512 = vunpack.c.l.b16 %v5092
        %v6513 = vunpack.c.h.b16 %v5092
        %v6514 = vunpack.c.l.b16 %v5093
        %v6515 = vunpack.c.h.b16 %v5093
        %v6516 = vunpack.c.l.b16 %v5094
        %v6517 = vunpack.c.h.b16 %v5094
        %v6518 = vunpack.c.l.b16 %v5095
        %v6519 = vunpack.c.h.b16 %v5095
        %v6520 = vunpack.c.l.b16 %v5096
        %v6521 = vunpack.c.h.b16 %v5096
        %v6522 = vunpack.c.l.b16 %v5097
        %v6523 = vunpack.c.h.b16 %v5097
        %v6524 = vunpack.c.l.b16 %v5098
        %v6525 = vunpack.c.h.b16 %v5098
        %v6526 = vunpack.c.l.b16 %v5099
        %v6527 = vunpack.c.h.b16 %v5099
        %v6528 = vunpack.c.l.b16 %v5100
        %v6529 = vunpack.c.h.b16 %v5100
        %v6530 = vunpack.c.l.b16 %v5101
        %v6531 = vunpack.c.h.b16 %v5101
        %v6532 = vunpack.c.l.b16 %v5102
        %v6533 = vunpack.c.h.b16 %v5102
        %v6534 = vunpack.c.l.b16 %v5103
        %v6535 = vunpack.c.h.b16 %v5103
        %v6536 = vunpack.c.l.b16 %v5104
        %v6537 = vunpack.c.h.b16 %v5104
        %v6538 = vunpack.c.l.b16 %v5105
        %v6539 = vunpack.c.h.b16 %v5105
        %v6540 = vunpack.c.l.b16 %v5106
        %v6541 = vunpack.c.h.b16 %v5106
        %v6542 = vunpack.c.l.b16 %v5107
        %v6543 = vunpack.c.h.b16 %v5107
        %v6544 = vunpack.c.l.b16 %v5108
        %v6545 = vunpack.c.h.b16 %v5108
        %v6546 = vunpack.c.l.b16 %v5109
        %v6547 = vunpack.c.h.b16 %v5109
        %v6548 = vunpack.c.l.b16 %v5110
        %v6549 = vunpack.c.h.b16 %v5110
        %v6550 = vunpack.c.l.b16 %v5111
        %v6551 = vunpack.c.h.b16 %v5111
        %v6552 = vpack.c.b16 %v5596, %v5592
        %v6553 = vpack.c.b16 %v5597, %v5593
        %v6554 = vpack.c.b16 %v5598, %v5594
        %v6555 = vpack.c.b16 %v5599, %v5595
        %v6556 = vpack.c.b16 %v5604, %v5600
        %v6557 = vpack.c.b16 %v5605, %v5601
        %v6558 = vpack.c.b16 %v5606, %v5602
        %v6559 = vpack.c.b16 %v5607, %v5603
        %v6560 = vpack.c.b16 %v5612, %v5608
        %v6561 = vpack.c.b16 %v5613, %v5609
        %v6562 = vpack.c.b16 %v5614, %v5610
        %v6563 = vpack.c.b16 %v5615, %v5611
        %v6564 = vpack.c.b16 %v5620, %v5616
        %v6565 = vpack.c.b16 %v5621, %v5617
        %v6566 = vpack.c.b16 %v5622, %v5618
        %v6567 = vpack.c.b16 %v5623, %v5619
        %v6568 = vpack.c.b16 %v5628, %v5624
        %v6569 = vpack.c.b16 %v5629, %v5625
        %v6570 = vpack.c.b16 %v5630, %v5626
        %v6571 = vpack.c.b16 %v5631, %v5627
        %v6572 = vpack.c.b16 %v5636, %v5632
        %v6573 = vpack.c.b16 %v5637, %v5633
        %v6574 = vpack.c.b16 %v5638, %v5634
        %v6575 = vpack.c.b16 %v5639, %v5635
        %v6576 = vpack.c.b16 %v5644, %v5640
        %v6577 = vpack.c.b16 %v5645, %v5641
        %v6578 = vpack.c.b16 %v5646, %v5642
        %v6579 = vpack.c.b16 %v5647, %v5643
        %v6580 = vpack.c.b16 %v5652, %v5648
        %v6581 = vpack.c.b16 %v5653, %v5649
        %v6582 = vpack.c.b16 %v5654, %v5650
        %v6583 = vpack.c.b16 %v5655, %v5651
        %v6584 = vpack.c.b16 %v5660, %v5656
        %v6585 = vpack.c.b16 %v5661, %v5657
        %v6586 = vpack.c.b16 %v5662, %v5658
        %v6587 = vpack.c.b16 %v5663, %v5659
        %v6588 = vpack.c.b16 %v5668, %v5664
        %v6589 = vpack.c.b16 %v5669, %v5665
        %v6590 = vpack.c.b16 %v5670, %v5666
        %v6591 = vpack.c.b16 %v5671, %v5667
        %v6592 = vpack.c.b16 %v5676, %v5672
        %v6593 = vpack.c.b16 %v5677, %v5673
        %v6594 = vpack.c.b16 %v5678, %v5674
        %v6595 = vpack.c.b16 %v5679, %v5675
        %v6596 = vpack.c.b16 %v5684, %v5680
        %v6597 = vpack.c.b16 %v5685, %v5681
        %v6598 = vpack.c.b16 %v5686, %v5682
        %v6599 = vpack.c.b16 %v5687, %v5683
        %v6600 = vpack.c.b16 %v5692, %v5688
        %v6601 = vpack.c.b16 %v5693, %v5689
        %v6602 = vpack.c.b16 %v5694, %v5690
        %v6603 = vpack.c.b16 %v5695, %v5691
        %v6604 = vpack.c.b16 %v5700, %v5696
        %v6605 = vpack.c.b16 %v5701, %v5697
        %v6606 = vpack.c.b16 %v5702, %v5698
        %v6607 = vpack.c.b16 %v5703, %v5699
        %v6608 = vpack.c.b16 %v5708, %v5704
        %v6609 = vpack.c.b16 %v5709, %v5705
        %v6610 = vpack.c.b16 %v5710, %v5706
        %v6611 = vpack.c.b16 %v5711, %v5707
        %v6612 = vpack.c.b16 %v5716, %v5712
        %v6613 = vpack.c.b16 %v5717, %v5713
        %v6614 = vpack.c.b16 %v5718, %v5714
        %v6615 = vpack.c.b16 %v5719, %v5715
        %v6616 = vpack.c.b16 %v5724, %v5720
        %v6617 = vpack.c.b16 %v5725, %v5721
        %v6618 = vpack.c.b16 %v5726, %v5722
        %v6619 = vpack.c.b16 %v5727, %v5723
        %v6620 = vpack.c.b16 %v5732, %v5728
        %v6621 = vpack.c.b16 %v5733, %v5729
        %v6622 = vpack.c.b16 %v5734, %v5730
        %v6623 = vpack.c.b16 %v5735, %v5731
        %v6624 = vpack.c.b16 %v5740, %v5736
        %v6625 = vpack.c.b16 %v5741, %v5737
        %v6626 = vpack.c.b16 %v5742, %v5738
        %v6627 = vpack.c.b16 %v5743, %v5739
        %v6628 = vpack.c.b16 %v5748, %v5744
        %v6629 = vpack.c.b16 %v5749, %v5745
        %v6630 = vpack.c.b16 %v5750, %v5746
        %v6631 = vpack.c.b16 %v5751, %v5747
        %v6632 = vpack.c.b16 %v5756, %v5752
        %v6633 = vpack.c.b16 %v5757, %v5753
        %v6634 = vpack.c.b16 %v5758, %v5754
        %v6635 = vpack.c.b16 %v5759, %v5755
        %v6636 = vpack.c.b16 %v5764, %v5760
        %v6637 = vpack.c.b16 %v5765, %v5761
        %v6638 = vpack.c.b16 %v5766, %v5762
        %v6639 = vpack.c.b16 %v5767, %v5763
        %v6640 = vpack.c.b16 %v5772, %v5768
        %v6641 = vpack.c.b16 %v5773, %v5769
        %v6642 = vpack.c.b16 %v5774, %v5770
        %v6643 = vpack.c.b16 %v5775, %v5771
        %v6644 = vpack.c.b16 %v5780, %v5776
        %v6645 = vpack.c.b16 %v5781, %v5777
        %v6646 = vpack.c.b16 %v5782, %v5778
        %v6647 = vpack.c.b16 %v5783, %v5779
        %v6648 = vpack.c.b16 %v5788, %v5784
        %v6649 = vpack.c.b16 %v5789, %v5785
        %v6650 = vpack.c.b16 %v5790, %v5786
        %v6651 = vpack.c.b16 %v5791, %v5787
        %v6652 = vpack.c.b16 %v5796, %v5792
        %v6653 = vpack.c.b16 %v5797, %v5793
        %v6654 = vpack.c.b16 %v5798, %v5794
        %v6655 = vpack.c.b16 %v5799, %v5795
        %v6656 = vpack.c.b16 %v5804, %v5800
        %v6657 = vpack.c.b16 %v5805, %v5801
        %v6658 = vpack.c.b16 %v5806, %v5802
        %v6659 = vpack.c.b16 %v5807, %v5803
        %v6660 = vpack.c.b16 %v5812, %v5808
        %v6661 = vpack.c.b16 %v5813, %v5809
        %v6662 = vpack.c.b16 %v5814, %v5810
        %v6663 = vpack.c.b16 %v5815, %v5811
        %v6664 = vpack.c.b16 %v5820, %v5816
        %v6665 = vpack.c.b16 %v5821, %v5817
        %v6666 = vpack.c.b16 %v5822, %v5818
        %v6667 = vpack.c.b16 %v5823, %v5819
        %v6668 = vpack.c.b16 %v5828, %v5824
        %v6669 = vpack.c.b16 %v5829, %v5825
        %v6670 = vpack.c.b16 %v5830, %v5826
        %v6671 = vpack.c.b16 %v5831, %v5827
        %v6672 = vpack.c.b16 %v5836, %v5832
        %v6673 = vpack.c.b16 %v5837, %v5833
        %v6674 = vpack.c.b16 %v5838, %v5834
        %v6675 = vpack.c.b16 %v5839, %v5835
        %v6676 = vpack.c.b16 %v5844, %v5840
        %v6677 = vpack.c.b16 %v5845, %v5841
        %v6678 = vpack.c.b16 %v5846, %v5842
        %v6679 = vpack.c.b16 %v5847, %v5843
        %v6680 = vpack.c.b16 %v5852, %v5848
        %v6681 = vpack.c.b16 %v5853, %v5849
        %v6682 = vpack.c.b16 %v5854, %v5850
        %v6683 = vpack.c.b16 %v5855, %v5851
        %v6684 = vpack.c.b16 %v5860, %v5856
        %v6685 = vpack.c.b16 %v5861, %v5857
        %v6686 = vpack.c.b16 %v5862, %v5858
        %v6687 = vpack.c.b16 %v5863, %v5859
        %v6688 = vpack.c.b16 %v5868, %v5864
        %v6689 = vpack.c.b16 %v5869, %v5865
        %v6690 = vpack.c.b16 %v5870, %v5866
        %v6691 = vpack.c.b16 %v5871, %v5867
        %v6692 = vpack.c.b16 %v5876, %v5872
        %v6693 = vpack.c.b16 %v5877, %v5873
        %v6694 = vpack.c.b16 %v5878, %v5874
        %v6695 = vpack.c.b16 %v5879, %v5875
        %v6696 = vpack.c.b16 %v5884, %v5880
        %v6697 = vpack.c.b16 %v5885, %v5881
        %v6698 = vpack.c.b16 %v5886, %v5882
        %v6699 = vpack.c.b16 %v5887, %v5883
        %v6700 = vpack.c.b16 %v5892, %v5888
        %v6701 = vpack.c.b16 %v5893, %v5889
        %v6702 = vpack.c.b16 %v5894, %v5890
        %v6703 = vpack.c.b16 %v5895, %v5891
        %v6704 = vpack.c.b16 %v5900, %v5896
        %v6705 = vpack.c.b16 %v5901, %v5897
        %v6706 = vpack.c.b16 %v5902, %v5898
        %v6707 = vpack.c.b16 %v5903, %v5899
        %v6708 = vpack.c.b16 %v5908, %v5904
        %v6709 = vpack.c.b16 %v5909, %v5905
        %v6710 = vpack.c.b16 %v5910, %v5906
        %v6711 = vpack.c.b16 %v5911, %v5907
        %v6712 = vpack.c.b16 %v5916, %v5912
        %v6713 = vpack.c.b16 %v5917, %v5913
        %v6714 = vpack.c.b16 %v5918, %v5914
        %v6715 = vpack.c.b16 %v5919, %v5915
        %v6716 = vpack.c.b16 %v5924, %v5920
        %v6717 = vpack.c.b16 %v5925, %v5921
        %v6718 = vpack.c.b16 %v5926, %v5922
        %v6719 = vpack.c.b16 %v5927, %v5923
        %v6720 = vpack.c.b16 %v5932, %v5928
        %v6721 = vpack.c.b16 %v5933, %v5929
        %v6722 = vpack.c.b16 %v5934, %v5930
        %v6723 = vpack.c.b16 %v5935, %v5931
        %v6724 = vpack.c.b16 %v5940, %v5936
        %v6725 = vpack.c.b16 %v5941, %v5937
        %v6726 = vpack.c.b16 %v5942, %v5938
        %v6727 = vpack.c.b16 %v5943, %v5939
        %v6728 = vpack.c.b16 %v5948, %v5944
        %v6729 = vpack.c.b16 %v5949, %v5945
        %v6730 = vpack.c.b16 %v5950, %v5946
        %v6731 = vpack.c.b16 %v5951, %v5947
        %v6732 = vpack.c.b16 %v5956, %v5952
        %v6733 = vpack.c.b16 %v5957, %v5953
        %v6734 = vpack.c.b16 %v5958, %v5954
        %v6735 = vpack.c.b16 %v5959, %v5955
        %v6736 = vpack.c.b16 %v5964, %v5960
        %v6737 = vpack.c.b16 %v5965, %v5961
        %v6738 = vpack.c.b16 %v5966, %v5962
        %v6739 = vpack.c.b16 %v5967, %v5963
        %v6740 = vpack.c.b16 %v5972, %v5968
        %v6741 = vpack.c.b16 %v5973, %v5969
        %v6742 = vpack.c.b16 %v5974, %v5970
        %v6743 = vpack.c.b16 %v5975, %v5971
        %v6744 = vpack.c.b16 %v5980, %v5976
        %v6745 = vpack.c.b16 %v5981, %v5977
        %v6746 = vpack.c.b16 %v5982, %v5978
        %v6747 = vpack.c.b16 %v5983, %v5979
        %v6748 = vpack.c.b16 %v5988, %v5984
        %v6749 = vpack.c.b16 %v5989, %v5985
        %v6750 = vpack.c.b16 %v5990, %v5986
        %v6751 = vpack.c.b16 %v5991, %v5987
        %v6752 = vpack.c.b16 %v5996, %v5992
        %v6753 = vpack.c.b16 %v5997, %v5993
        %v6754 = vpack.c.b16 %v5998, %v5994
        %v6755 = vpack.c.b16 %v5999, %v5995
        %v6756 = vpack.c.b16 %v6004, %v6000
        %v6757 = vpack.c.b16 %v6005, %v6001
        %v6758 = vpack.c.b16 %v6006, %v6002
        %v6759 = vpack.c.b16 %v6007, %v6003
        %v6760 = vpack.c.b16 %v6012, %v6008
        %v6761 = vpack.c.b16 %v6013, %v6009
        %v6762 = vpack.c.b16 %v6014, %v6010
        %v6763 = vpack.c.b16 %v6015, %v6011
        %v6764 = vpack.c.b16 %v6020, %v6016
        %v6765 = vpack.c.b16 %v6021, %v6017
        %v6766 = vpack.c.b16 %v6022, %v6018
        %v6767 = vpack.c.b16 %v6023, %v6019
        %v6768 = vpack.c.b16 %v6028, %v6024
        %v6769 = vpack.c.b16 %v6029, %v6025
        %v6770 = vpack.c.b16 %v6030, %v6026
        %v6771 = vpack.c.b16 %v6031, %v6027
        %v6772 = vpack.c.b16 %v6036, %v6032
        %v6773 = vpack.c.b16 %v6037, %v6033
        %v6774 = vpack.c.b16 %v6038, %v6034
        %v6775 = vpack.c.b16 %v6039, %v6035
        %v6776 = vpack.c.b16 %v6044, %v6040
        %v6777 = vpack.c.b16 %v6045, %v6041
        %v6778 = vpack.c.b16 %v6046, %v6042
        %v6779 = vpack.c.b16 %v6047, %v6043
        %v6780 = vpack.c.b16 %v6052, %v6048
        %v6781 = vpack.c.b16 %v6053, %v6049
        %v6782 = vpack.c.b16 %v6054, %v6050
        %v6783 = vpack.c.b16 %v6055, %v6051
        %v6784 = vpack.c.b16 %v6060, %v6056
        %v6785 = vpack.c.b16 %v6061, %v6057
        %v6786 = vpack.c.b16 %v6062, %v6058
        %v6787 = vpack.c.b16 %v6063, %v6059
        %v6788 = vpack.c.b16 %v6068, %v6064
        %v6789 = vpack.c.b16 %v6069, %v6065
        %v6790 = vpack.c.b16 %v6070, %v6066
        %v6791 = vpack.c.b16 %v6071, %v6067
        %v6792 = vpack.c.b16 %v6076, %v6072
        %v6793 = vpack.c.b16 %v6077, %v6073
        %v6794 = vpack.c.b16 %v6078, %v6074
        %v6795 = vpack.c.b16 %v6079, %v6075
        %v6796 = vpack.c.b16 %v6084, %v6080
        %v6797 = vpack.c.b16 %v6085, %v6081
        %v6798 = vpack.c.b16 %v6086, %v6082
        %v6799 = vpack.c.b16 %v6087, %v6083
        %v6800 = vpack.c.b16 %v6092, %v6088
        %v6801 = vpack.c.b16 %v6093, %v6089
        %v6802 = vpack.c.b16 %v6094, %v6090
        %v6803 = vpack.c.b16 %v6095, %v6091
        %v6804 = vpack.c.b16 %v6100, %v6096
        %v6805 = vpack.c.b16 %v6101, %v6097
        %v6806 = vpack.c.b16 %v6102, %v6098
        %v6807 = vpack.c.b16 %v6103, %v6099
        %v6808 = vpack.c.b16 %v6108, %v6104
        %v6809 = vpack.c.b16 %v6109, %v6105
        %v6810 = vpack.c.b16 %v6110, %v6106
        %v6811 = vpack.c.b16 %v6111, %v6107
        %v6812 = vpack.c.b16 %v6116, %v6112
        %v6813 = vpack.c.b16 %v6117, %v6113
        %v6814 = vpack.c.b16 %v6118, %v6114
        %v6815 = vpack.c.b16 %v6119, %v6115
        %v6816 = vpack.c.b16 %v6124, %v6120
        %v6817 = vpack.c.b16 %v6125, %v6121
        %v6818 = vpack.c.b16 %v6126, %v6122
        %v6819 = vpack.c.b16 %v6127, %v6123
        %v6820 = vpack.c.b16 %v6132, %v6128
        %v6821 = vpack.c.b16 %v6133, %v6129
        %v6822 = vpack.c.b16 %v6134, %v6130
        %v6823 = vpack.c.b16 %v6135, %v6131
        %v6824 = vpack.c.b16 %v6140, %v6136
        %v6825 = vpack.c.b16 %v6141, %v6137
        %v6826 = vpack.c.b16 %v6142, %v6138
        %v6827 = vpack.c.b16 %v6143, %v6139
        %v6828 = vpack.c.b16 %v6148, %v6144
        %v6829 = vpack.c.b16 %v6149, %v6145
        %v6830 = vpack.c.b16 %v6150, %v6146
        %v6831 = vpack.c.b16 %v6151, %v6147
        %v6832 = vpack.c.b16 %v6156, %v6152
        %v6833 = vpack.c.b16 %v6157, %v6153
        %v6834 = vpack.c.b16 %v6158, %v6154
        %v6835 = vpack.c.b16 %v6159, %v6155
        %v6836 = vpack.c.b16 %v6164, %v6160
        %v6837 = vpack.c.b16 %v6165, %v6161
        %v6838 = vpack.c.b16 %v6166, %v6162
        %v6839 = vpack.c.b16 %v6167, %v6163
        %v6840 = vpack.c.b16 %v6172, %v6168
        %v6841 = vpack.c.b16 %v6173, %v6169
        %v6842 = vpack.c.b16 %v6174, %v6170
        %v6843 = vpack.c.b16 %v6175, %v6171
        %v6844 = vpack.c.b16 %v6180, %v6176
        %v6845 = vpack.c.b16 %v6181, %v6177
        %v6846 = vpack.c.b16 %v6182, %v6178
        %v6847 = vpack.c.b16 %v6183, %v6179
        %v6848 = vpack.c.b16 %v6188, %v6184
        %v6849 = vpack.c.b16 %v6189, %v6185
        %v6850 = vpack.c.b16 %v6190, %v6186
        %v6851 = vpack.c.b16 %v6191, %v6187
        %v6852 = vpack.c.b16 %v6196, %v6192
        %v6853 = vpack.c.b16 %v6197, %v6193
        %v6854 = vpack.c.b16 %v6198, %v6194
        %v6855 = vpack.c.b16 %v6199, %v6195
        %v6856 = vpack.c.b16 %v6204, %v6200
        %v6857 = vpack.c.b16 %v6205, %v6201
        %v6858 = vpack.c.b16 %v6206, %v6202
        %v6859 = vpack.c.b16 %v6207, %v6203
        %v6860 = vpack.c.b16 %v6212, %v6208
        %v6861 = vpack.c.b16 %v6213, %v6209
        %v6862 = vpack.c.b16 %v6214, %v6210
        %v6863 = vpack.c.b16 %v6215, %v6211
        %v6864 = vpack.c.b16 %v6220, %v6216
        %v6865 = vpack.c.b16 %v6221, %v6217
        %v6866 = vpack.c.b16 %v6222, %v6218
        %v6867 = vpack.c.b16 %v6223, %v6219
        %v6868 = vpack.c.b16 %v6228, %v6224
        %v6869 = vpack.c.b16 %v6229, %v6225
        %v6870 = vpack.c.b16 %v6230, %v6226
        %v6871 = vpack.c.b16 %v6231, %v6227
        %v6872 = vpack.c.b16 %v6236, %v6232
        %v6873 = vpack.c.b16 %v6237, %v6233
        %v6874 = vpack.c.b16 %v6238, %v6234
        %v6875 = vpack.c.b16 %v6239, %v6235
        %v6876 = vpack.c.b16 %v6244, %v6240
        %v6877 = vpack.c.b16 %v6245, %v6241
        %v6878 = vpack.c.b16 %v6246, %v6242
        %v6879 = vpack.c.b16 %v6247, %v6243
        %v6880 = vpack.c.b16 %v6252, %v6248
        %v6881 = vpack.c.b16 %v6253, %v6249
        %v6882 = vpack.c.b16 %v6254, %v6250
        %v6883 = vpack.c.b16 %v6255, %v6251
        %v6884 = vpack.c.b16 %v6260, %v6256
        %v6885 = vpack.c.b16 %v6261, %v6257
        %v6886 = vpack.c.b16 %v6262, %v6258
        %v6887 = vpack.c.b16 %v6263, %v6259
        %v6888 = vpack.c.b16 %v6268, %v6264
        %v6889 = vpack.c.b16 %v6269, %v6265
        %v6890 = vpack.c.b16 %v6270, %v6266
        %v6891 = vpack.c.b16 %v6271, %v6267
        %v6892 = vpack.c.b16 %v6276, %v6272
        %v6893 = vpack.c.b16 %v6277, %v6273
        %v6894 = vpack.c.b16 %v6278, %v6274
        %v6895 = vpack.c.b16 %v6279, %v6275
        %v6896 = vpack.c.b16 %v6284, %v6280
        %v6897 = vpack.c.b16 %v6285, %v6281
        %v6898 = vpack.c.b16 %v6286, %v6282
        %v6899 = vpack.c.b16 %v6287, %v6283
        %v6900 = vpack.c.b16 %v6292, %v6288
        %v6901 = vpack.c.b16 %v6293, %v6289
        %v6902 = vpack.c.b16 %v6294, %v6290
        %v6903 = vpack.c.b16 %v6295, %v6291
        %v6904 = vpack.c.b16 %v6300, %v6296
        %v6905 = vpack.c.b16 %v6301, %v6297
        %v6906 = vpack.c.b16 %v6302, %v6298
        %v6907 = vpack.c.b16 %v6303, %v6299
        %v6908 = vpack.c.b16 %v6308, %v6304
        %v6909 = vpack.c.b16 %v6309, %v6305
        %v6910 = vpack.c.b16 %v6310, %v6306
        %v6911 = vpack.c.b16 %v6311, %v6307
        %v6912 = vpack.c.b16 %v6316, %v6312
        %v6913 = vpack.c.b16 %v6317, %v6313
        %v6914 = vpack.c.b16 %v6318, %v6314
        %v6915 = vpack.c.b16 %v6319, %v6315
        %v6916 = vpack.c.b16 %v6324, %v6320
        %v6917 = vpack.c.b16 %v6325, %v6321
        %v6918 = vpack.c.b16 %v6326, %v6322
        %v6919 = vpack.c.b16 %v6327, %v6323
        %v6920 = vpack.c.b16 %v6332, %v6328
        %v6921 = vpack.c.b16 %v6333, %v6329
        %v6922 = vpack.c.b16 %v6334, %v6330
        %v6923 = vpack.c.b16 %v6335, %v6331
        %v6924 = vpack.c.b16 %v6340, %v6336
        %v6925 = vpack.c.b16 %v6341, %v6337
        %v6926 = vpack.c.b16 %v6342, %v6338
        %v6927 = vpack.c.b16 %v6343, %v6339
        %v6928 = vpack.c.b16 %v6348, %v6344
        %v6929 = vpack.c.b16 %v6349, %v6345
        %v6930 = vpack.c.b16 %v6350, %v6346
        %v6931 = vpack.c.b16 %v6351, %v6347
        %v6932 = vpack.c.b16 %v6356, %v6352
        %v6933 = vpack.c.b16 %v6357, %v6353
        %v6934 = vpack.c.b16 %v6358, %v6354
        %v6935 = vpack.c.b16 %v6359, %v6355
        %v6936 = vpack.c.b16 %v6364, %v6360
        %v6937 = vpack.c.b16 %v6365, %v6361
        %v6938 = vpack.c.b16 %v6366, %v6362
        %v6939 = vpack.c.b16 %v6367, %v6363
        %v6940 = vpack.c.b16 %v6372, %v6368
        %v6941 = vpack.c.b16 %v6373, %v6369
        %v6942 = vpack.c.b16 %v6374, %v6370
        %v6943 = vpack.c.b16 %v6375, %v6371
        %v6944 = vpack.c.b16 %v6380, %v6376
        %v6945 = vpack.c.b16 %v6381, %v6377
        %v6946 = vpack.c.b16 %v6382, %v6378
        %v6947 = vpack.c.b16 %v6383, %v6379
        %v6948 = vpack.c.b16 %v6388, %v6384
        %v6949 = vpack.c.b16 %v6389, %v6385
        %v6950 = vpack.c.b16 %v6390, %v6386
        %v6951 = vpack.c.b16 %v6391, %v6387
        %v6952 = vpack.c.b16 %v6396, %v6392
        %v6953 = vpack.c.b16 %v6397, %v6393
        %v6954 = vpack.c.b16 %v6398, %v6394
        %v6955 = vpack.c.b16 %v6399, %v6395
        %v6956 = vpack.c.b16 %v6404, %v6400
        %v6957 = vpack.c.b16 %v6405, %v6401
        %v6958 = vpack.c.b16 %v6406, %v6402
        %v6959 = vpack.c.b16 %v6407, %v6403
        %v6960 = vpack.c.b16 %v6412, %v6408
        %v6961 = vpack.c.b16 %v6413, %v6409
        %v6962 = vpack.c.b16 %v6414, %v6410
        %v6963 = vpack.c.b16 %v6415, %v6411
        %v6964 = vpack.c.b16 %v6420, %v6416
        %v6965 = vpack.c.b16 %v6421, %v6417
        %v6966 = vpack.c.b16 %v6422, %v6418
        %v6967 = vpack.c.b16 %v6423, %v6419
        %v6968 = vpack.c.b16 %v6428, %v6424
        %v6969 = vpack.c.b16 %v6429, %v6425
        %v6970 = vpack.c.b16 %v6430, %v6426
        %v6971 = vpack.c.b16 %v6431, %v6427
        %v6972 = vpack.c.b16 %v6436, %v6432
        %v6973 = vpack.c.b16 %v6437, %v6433
        %v6974 = vpack.c.b16 %v6438, %v6434
        %v6975 = vpack.c.b16 %v6439, %v6435
        %v6976 = vpack.c.b16 %v6444, %v6440
        %v6977 = vpack.c.b16 %v6445, %v6441
        %v6978 = vpack.c.b16 %v6446, %v6442
        %v6979 = vpack.c.b16 %v6447, %v6443
        %v6980 = vpack.c.b16 %v6452, %v6448
        %v6981 = vpack.c.b16 %v6453, %v6449
        %v6982 = vpack.c.b16 %v6454, %v6450
        %v6983 = vpack.c.b16 %v6455, %v6451
        %v6984 = vpack.c.b16 %v6460, %v6456
        %v6985 = vpack.c.b16 %v6461, %v6457
        %v6986 = vpack.c.b16 %v6462, %v6458
        %v6987 = vpack.c.b16 %v6463, %v6459
        %v6988 = vpack.c.b16 %v6468, %v6464
        %v6989 = vpack.c.b16 %v6469, %v6465
        %v6990 = vpack.c.b16 %v6470, %v6466
        %v6991 = vpack.c.b16 %v6471, %v6467
        %v6992 = vpack.c.b16 %v6476, %v6472
        %v6993 = vpack.c.b16 %v6477, %v6473
        %v6994 = vpack.c.b16 %v6478, %v6474
        %v6995 = vpack.c.b16 %v6479, %v6475
        %v6996 = vpack.c.b16 %v6484, %v6480
        %v6997 = vpack.c.b16 %v6485, %v6481
        %v6998 = vpack.c.b16 %v6486, %v6482
        %v6999 = vpack.c.b16 %v6487, %v6483
        %v7000 = vpack.c.b16 %v6492, %v6488
        %v7001 = vpack.c.b16 %v6493, %v6489
        %v7002 = vpack.c.b16 %v6494, %v6490
        %v7003 = vpack.c.b16 %v6495, %v6491
        %v7004 = vpack.c.b16 %v6500, %v6496
        %v7005 = vpack.c.b16 %v6501, %v6497
        %v7006 = vpack.c.b16 %v6502, %v6498
        %v7007 = vpack.c.b16 %v6503, %v6499
        %v7008 = vpack.c.b16 %v6508, %v6504
        %v7009 = vpack.c.b16 %v6509, %v6505
        %v7010 = vpack.c.b16 %v6510, %v6506
        %v7011 = vpack.c.b16 %v6511, %v6507
        %v7012 = vpack.c.b16 %v6516, %v6512
        %v7013 = vpack.c.b16 %v6517, %v6513
        %v7014 = vpack.c.b16 %v6518, %v6514
        %v7015 = vpack.c.b16 %v6519, %v6515
        %v7016 = vpack.c.b16 %v6524, %v6520
        %v7017 = vpack.c.b16 %v6525, %v6521
        %v7018 = vpack.c.b16 %v6526, %v6522
        %v7019 = vpack.c.b16 %v6527, %v6523
        %v7020 = vpack.c.b16 %v6532, %v6528
        %v7021 = vpack.c.b16 %v6533, %v6529
        %v7022 = vpack.c.b16 %v6534, %v6530
        %v7023 = vpack.c.b16 %v6535, %v6531
        %v7024 = vpack.c.b16 %v6540, %v6536
        %v7025 = vpack.c.b16 %v6541, %v6537
        %v7026 = vpack.c.b16 %v6542, %v6538
        %v7027 = vpack.c.b16 %v6543, %v6539
        %v7028 = vpack.c.b16 %v6548, %v6544
        %v7029 = vpack.c.b16 %v6549, %v6545
        %v7030 = vpack.c.b16 %v6550, %v6546
        %v7031 = vpack.c.b16 %v6551, %v6547
        %7512 = vmatprep.subr.bf16.mxu0 %v6553
        %7513 = vmatpush1.bf16.msra.mxu0 %v6552
        %7514 = vmatprep.subr.bf16.mxu0 %v6557
        %7515 = vmatpush1.bf16.msra.mxu0 %v6556
        %7516 = vmatprep.subr.bf16.mxu0 %v6561
        %7517 = vmatpush1.bf16.msra.mxu0 %v6560
        %7518 = vmatprep.subr.bf16.mxu0 %v6565
        %7519 = vmatpush1.bf16.msra.mxu0 %v6564
        %7520 = vmatprep.subr.bf16.mxu0 %v6569
        %7521 = vmatpush1.bf16.msra.mxu0 %v6568
        %7522 = vmatprep.subr.bf16.mxu0 %v6573
        %7523 = vmatpush1.bf16.msra.mxu0 %v6572
        %7524 = vmatprep.subr.bf16.mxu0 %v6577
        %7525 = vmatpush1.bf16.msra.mxu0 %v6576
        %7526 = vmatprep.subr.bf16.mxu0 %v6581
        %7527 = vmatpush1.bf16.msra.mxu0 %v6580
        %7528 = vmatprep.subr.bf16.mxu0 %v6585
        %7529 = vmatpush1.bf16.msra.mxu0 %v6584
        %7530 = vmatprep.subr.bf16.mxu0 %v6589
        %7531 = vmatpush1.bf16.msra.mxu0 %v6588
        %7532 = vmatprep.subr.bf16.mxu0 %v6593
        %7533 = vmatpush1.bf16.msra.mxu0 %v6592
        %7534 = vmatprep.subr.bf16.mxu0 %v6597
        %7535 = vmatpush1.bf16.msra.mxu0 %v6596
        %7536 = vmatprep.subr.bf16.mxu0 %v6601
        %7537 = vmatpush1.bf16.msra.mxu0 %v6600
        %7538 = vmatprep.subr.bf16.mxu0 %v6605
        %7539 = vmatpush1.bf16.msra.mxu0 %v6604
        %7540 = vmatprep.subr.bf16.mxu0 %v6609
        %7541 = vmatpush1.bf16.msra.mxu0 %v6608
        %7542 = vmatprep.subr.bf16.mxu0 %v6613
        %7543 = vmatpush1.bf16.msra.mxu0 %v6612
        %7544 = vmatprep.mubr.bf16.mxu0 %v4588
        %7545 = vmatmul.mubr.bf16.gmra.mrb[0].mxu0 %v4587
        %v7546 = vpop.f32.mrb[0].mxu0
        %v7547 = vadd.f32 0.0, %v7546
        %v7548 = vpop.f32.mrb[0].mxu0
        %v7549 = vadd.f32 0.0, %v7548
        %v7550 = vpop.f32.mrb[0].mxu0
        %v7551 = vadd.f32 0.0, %v7550
        %v7552 = vpop.f32.mrb[0].mxu0
        %v7553 = vadd.f32 0.0, %v7552
        %7554 = vmatprep.mubr.bf16.mxu0 %v4603
        %7555 = vmatmul.mubr.bf16.gmra.mrb[0].mxu0 %v4602
        %v7556 = vpop.f32.mrb[0].mxu0
        %v7557 = vadd.f32 0.0, %v7556
        %v7558 = vpop.f32.mrb[0].mxu0
        %v7559 = vadd.f32 0.0, %v7558
        %v7560 = vpop.f32.mrb[0].mxu0
        %v7561 = vadd.f32 0.0, %v7560
        %v7562 = vpop.f32.mrb[0].mxu0
        %v7563 = vadd.f32 0.0, %v7562
        %7564 = vmatprep.mubr.bf16.mxu0 %v4618
        %7565 = vmatmul.mubr.bf16.gmra.mrb[0].mxu0 %v4617
        %v7566 = vpop.f32.mrb[0].mxu0
        %v7567 = vadd.f32 0.0, %v7566
        %v7568 = vpop.f32.mrb[0].mxu0
        %v7569 = vadd.f32 0.0, %v7568
        %v7570 = vpop.f32.mrb[0].mxu0
        %v7571 = vadd.f32 0.0, %v7570
        %v7572 = vpop.f32.mrb[0].mxu0
        %v7573 = vadd.f32 0.0, %v7572
        %7574 = vdwg.mxu0
        %7575 = vmatprep.subr.bf16.mxu0 %v6617
        %7576 = vmatpush1.bf16.msra.mxu0 %v6616
        %7577 = vmatprep.subr.bf16.mxu0 %v6621
        %7578 = vmatpush1.bf16.msra.mxu0 %v6620
        %7579 = vmatprep.subr.bf16.mxu0 %v6625
        %7580 = vmatpush1.bf16.msra.mxu0 %v6624
        %7581 = vmatprep.subr.bf16.mxu0 %v6629
        %7582 = vmatpush1.bf16.msra.mxu0 %v6628
        %7583 = vmatprep.subr.bf16.mxu0 %v6633
        %7584 = vmatpush1.bf16.msra.mxu0 %v6632
        %7585 = vmatprep.subr.bf16.mxu0 %v6637
        %7586 = vmatpush1.bf16.msra.mxu0 %v6636
        %7587 = vmatprep.subr.bf16.mxu0 %v6641
        %7588 = vmatpush1.bf16.msra.mxu0 %v6640
        %7589 = vmatprep.subr.bf16.mxu0 %v6645
        %7590 = vmatpush1.bf16.msra.mxu0 %v6644
        %7591 = vmatprep.subr.bf16.mxu0 %v6649
        %7592 = vmatpush1.bf16.msra.mxu0 %v6648
        %7593 = vmatprep.subr.bf16.mxu0 %v6653
        %7594 = vmatpush1.bf16.msra.mxu0 %v6652
        %7595 = vmatprep.subr.bf16.mxu0 %v6657
        %7596 = vmatpush1.bf16.msra.mxu0 %v6656
        %7597 = vmatprep.subr.bf16.mxu0 %v6661
        %7598 = vmatpush1.bf16.msra.mxu0 %v6660
        %7599 = vmatprep.subr.bf16.mxu0 %v6665
        %7600 = vmatpush1.bf16.msra.mxu0 %v6664
        %7601 = vmatprep.subr.bf16.mxu0 %v6669
        %7602 = vmatpush1.bf16.msra.mxu0 %v6668
        %7603 = vmatprep.subr.bf16.mxu0 %v6673
        %7604 = vmatpush1.bf16.msra.mxu0 %v6672
        %7605 = vmatprep.subr.bf16.mxu0 %v6677
        %7606 = vmatpush1.bf16.msra.mxu0 %v6676
        %7607 = vmatprep.mubr.bf16.mxu0 %v4590
        %7608 = vmatmul.mubr.bf16.gmra.mrb[0].mxu0 %v4589
        %v7609 = vpop.f32.mrb[0].mxu0
        %v7610 = vadd.f32 %v7547, %v7609
        %v7611 = vpop.f32.mrb[0].mxu0
        %v7612 = vadd.f32 %v7549, %v7611
        %v7613 = vpop.f32.mrb[0].mxu0
        %v7614 = vadd.f32 %v7551, %v7613
        %v7615 = vpop.f32.mrb[0].mxu0
        %v7616 = vadd.f32 %v7553, %v7615
        %7617 = vmatprep.mubr.bf16.mxu0 %v4605
        %7618 = vmatmul.mubr.bf16.gmra.mrb[0].mxu0 %v4604
        %v7619 = vpop.f32.mrb[0].mxu0
        %v7620 = vadd.f32 %v7557, %v7619
        %v7621 = vpop.f32.mrb[0].mxu0
        %v7622 = vadd.f32 %v7559, %v7621
        %v7623 = vpop.f32.mrb[0].mxu0
        %v7624 = vadd.f32 %v7561, %v7623
        %v7625 = vpop.f32.mrb[0].mxu0
        %v7626 = vadd.f32 %v7563, %v7625
        %7627 = vmatprep.mubr.bf16.mxu0 %v4620
        %7628 = vmatmul.mubr.bf16.gmra.mrb[0].mxu0 %v4619
        %v7629 = vpop.f32.mrb[0].mxu0
        %v7630 = vadd.f32 %v7567, %v7629
        %v7631 = vpop.f32.mrb[0].mxu0
        %v7632 = vadd.f32 %v7569, %v7631
        %v7633 = vpop.f32.mrb[0].mxu0
        %v7634 = vadd.f32 %v7571, %v7633
        %v7635 = vpop.f32.mrb[0].mxu0
        %v7636 = vadd.f32 %v7573, %v7635
        %7637 = vdwg.mxu0
        %7638 = vmatprep.subr.bf16.mxu0 %v6681
        %7639 = vmatpush1.bf16.msra.mxu0 %v6680
        %7640 = vmatprep.subr.bf16.mxu0 %v6685
        %7641 = vmatpush1.bf16.msra.mxu0 %v6684
        %7642 = vmatprep.subr.bf16.mxu0 %v6689
        %7643 = vmatpush1.bf16.msra.mxu0 %v6688
        %7644 = vmatprep.subr.bf16.mxu0 %v6693
        %7645 = vmatpush1.bf16.msra.mxu0 %v6692
        %7646 = vmatprep.subr.bf16.mxu0 %v6697
        %7647 = vmatpush1.bf16.msra.mxu0 %v6696
        %7648 = vmatprep.subr.bf16.mxu0 %v6701
        %7649 = vmatpush1.bf16.msra.mxu0 %v6700
        %7650 = vmatprep.subr.bf16.mxu0 %v6705
        %7651 = vmatpush1.bf16.msra.mxu0 %v6704
        %7652 = vmatprep.subr.bf16.mxu0 %v6709
        %7653 = vmatpush1.bf16.msra.mxu0 %v6708
        %7654 = vmatprep.subr.bf16.mxu0 %v6713
        %7655 = vmatpush1.bf16.msra.mxu0 %v6712
        %7656 = vmatprep.subr.bf16.mxu0 %v6717
        %7657 = vmatpush1.bf16.msra.mxu0 %v6716
        %7658 = vmatprep.subr.bf16.mxu0 %v6721
        %7659 = vmatpush1.bf16.msra.mxu0 %v6720
        %7660 = vmatprep.subr.bf16.mxu0 %v6725
        %7661 = vmatpush1.bf16.msra.mxu0 %v6724
        %7662 = vmatprep.subr.bf16.mxu0 %v6729
        %7663 = vmatpush1.bf16.msra.mxu0 %v6728
        %7664 = vmatprep.subr.bf16.mxu0 %v6733
        %7665 = vmatpush1.bf16.msra.mxu0 %v6732
        %7666 = vmatprep.subr.bf16.mxu0 %v6737
        %7667 = vmatpush1.bf16.msra.mxu0 %v6736
        %7668 = vmatprep.subr.bf16.mxu0 %v6741
        %7669 = vmatpush1.bf16.msra.mxu0 %v6740
        %7670 = vmatprep.mubr.bf16.mxu0 %v4592
        %7671 = vmatmul.mubr.bf16.gmra.mrb[0].mxu0 %v4591
        %v7672 = vpop.f32.mrb[0].mxu0
        %v7673 = vadd.f32 %v7610, %v7672
        %v7674 = vpop.f32.mrb[0].mxu0
        %v7675 = vadd.f32 %v7612, %v7674
        %v7676 = vpop.f32.mrb[0].mxu0
        %v7677 = vadd.f32 %v7614, %v7676
        %v7678 = vpop.f32.mrb[0].mxu0
        %v7679 = vadd.f32 %v7616, %v7678
        %7680 = vmatprep.mubr.bf16.mxu0 %v4607
        %7681 = vmatmul.mubr.bf16.gmra.mrb[0].mxu0 %v4606
        %v7682 = vpop.f32.mrb[0].mxu0
        %v7683 = vadd.f32 %v7620, %v7682
        %v7684 = vpop.f32.mrb[0].mxu0
        %v7685 = vadd.f32 %v7622, %v7684
        %v7686 = vpop.f32.mrb[0].mxu0
        %v7687 = vadd.f32 %v7624, %v7686
        %v7688 = vpop.f32.mrb[0].mxu0
        %v7689 = vadd.f32 %v7626, %v7688
        %7690 = vmatprep.mubr.bf16.mxu0 %v4622
        %7691 = vmatmul.mubr.bf16.gmra.mrb[0].mxu0 %v4621
        %v7692 = vpop.f32.mrb[0].mxu0
        %v7693 = vadd.f32 %v7630, %v7692
        %v7694 = vpop.f32.mrb[0].mxu0
        %v7695 = vadd.f32 %v7632, %v7694
        %v7696 = vpop.f32.mrb[0].mxu0
        %v7697 = vadd.f32 %v7634, %v7696
        %v7698 = vpop.f32.mrb[0].mxu0
        %v7699 = vadd.f32 %v7636, %v7698
        %7700 = vdwg.mxu0
        %7701 = vmatprep.subr.bf16.mxu0 %v6745
        %7702 = vmatpush1.bf16.msra.mxu0 %v6744
        %7703 = vmatprep.subr.bf16.mxu0 %v6749
        %7704 = vmatpush1.bf16.msra.mxu0 %v6748
        %7705 = vmatprep.subr.bf16.mxu0 %v6753
        %7706 = vmatpush1.bf16.msra.mxu0 %v6752
        %7707 = vmatprep.subr.bf16.mxu0 %v6757
        %7708 = vmatpush1.bf16.msra.mxu0 %v6756
        %7709 = vmatprep.subr.bf16.mxu0 %v6761
        %7710 = vmatpush1.bf16.msra.mxu0 %v6760
        %7711 = vmatprep.subr.bf16.mxu0 %v6765
        %7712 = vmatpush1.bf16.msra.mxu0 %v6764
        %7713 = vmatprep.subr.bf16.mxu0 %v6769
        %7714 = vmatpush1.bf16.msra.mxu0 %v6768
        %7715 = vmatprep.subr.bf16.mxu0 %v6773
        %7716 = vmatpush1.bf16.msra.mxu0 %v6772
        %7717 = vmatprep.subr.bf16.mxu0 %v6777
        %7718 = vmatpush1.bf16.msra.mxu0 %v6776
        %7719 = vmatprep.subr.bf16.mxu0 %v6781
        %7720 = vmatpush1.bf16.msra.mxu0 %v6780
        %7721 = vmatprep.subr.bf16.mxu0 %v6785
        %7722 = vmatpush1.bf16.msra.mxu0 %v6784
        %7723 = vmatprep.subr.bf16.mxu0 %v6789
        %7724 = vmatpush1.bf16.msra.mxu0 %v6788
        %7725 = vmatprep.subr.bf16.mxu0 %v6793
        %7726 = vmatpush1.bf16.msra.mxu0 %v6792
        %7727 = vmatprep.subr.bf16.mxu0 %v6797
        %7728 = vmatpush1.bf16.msra.mxu0 %v6796
        %7729 = vmatprep.subr.bf16.mxu0 %v6801
        %7730 = vmatpush1.bf16.msra.mxu0 %v6800
        %7731 = vmatprep.subr.bf16.mxu0 %v6805
        %7732 = vmatpush1.bf16.msra.mxu0 %v6804
        %7733 = vmatprep.mubr.bf16.mxu0 %v4594
        %7734 = vmatmul.mubr.bf16.gmra.mrb[0].mxu0 %v4593
        %v7735 = vpop.f32.mrb[0].mxu0
        %v7736 = vadd.f32 %v7673, %v7735
        %v7737 = vpop.f32.mrb[0].mxu0
        %v7738 = vadd.f32 %v7675, %v7737
        %v7739 = vpop.f32.mrb[0].mxu0
        %v7740 = vadd.f32 %v7677, %v7739
        %v7741 = vpop.f32.mrb[0].mxu0
        %v7742 = vadd.f32 %v7679, %v7741
        %7743 = vmatprep.mubr.bf16.mxu0 %v4609
        %7744 = vmatmul.mubr.bf16.gmra.mrb[0].mxu0 %v4608
        %v7745 = vpop.f32.mrb[0].mxu0
        %v7746 = vadd.f32 %v7683, %v7745
        %v7747 = vpop.f32.mrb[0].mxu0
        %v7748 = vadd.f32 %v7685, %v7747
        %v7749 = vpop.f32.mrb[0].mxu0
        %v7750 = vadd.f32 %v7687, %v7749
        %v7751 = vpop.f32.mrb[0].mxu0
        %v7752 = vadd.f32 %v7689, %v7751
        %7753 = vmatprep.mubr.bf16.mxu0 %v4624
        %7754 = vmatmul.mubr.bf16.gmra.mrb[0].mxu0 %v4623
        %v7755 = vpop.f32.mrb[0].mxu0
        %v7756 = vadd.f32 %v7693, %v7755
        %v7757 = vpop.f32.mrb[0].mxu0
        %v7758 = vadd.f32 %v7695, %v7757
        %v7759 = vpop.f32.mrb[0].mxu0
        %v7760 = vadd.f32 %v7697, %v7759
        %v7761 = vpop.f32.mrb[0].mxu0
        %v7762 = vadd.f32 %v7699, %v7761
        %7763 = vdwg.mxu0
        %7764 = vmatprep.subr.bf16.mxu0 %v6809
        %7765 = vmatpush1.bf16.msra.mxu0 %v6808
        %7766 = vmatprep.subr.bf16.mxu0 %v6813
        %7767 = vmatpush1.bf16.msra.mxu0 %v6812
        %7768 = vmatprep.subr.bf16.mxu0 %v6817
        %7769 = vmatpush1.bf16.msra.mxu0 %v6816
        %7770 = vmatprep.subr.bf16.mxu0 %v6821
        %7771 = vmatpush1.bf16.msra.mxu0 %v6820
        %7772 = vmatprep.subr.bf16.mxu0 %v6825
        %7773 = vmatpush1.bf16.msra.mxu0 %v6824
        %7774 = vmatprep.subr.bf16.mxu0 %v6829
        %7775 = vmatpush1.bf16.msra.mxu0 %v6828
        %7776 = vmatprep.subr.bf16.mxu0 %v6833
        %7777 = vmatpush1.bf16.msra.mxu0 %v6832
        %7778 = vmatprep.subr.bf16.mxu0 %v6837
        %7779 = vmatpush1.bf16.msra.mxu0 %v6836
        %7780 = vmatprep.subr.bf16.mxu0 %v6841
        %7781 = vmatpush1.bf16.msra.mxu0 %v6840
        %7782 = vmatprep.subr.bf16.mxu0 %v6845
        %7783 = vmatpush1.bf16.msra.mxu0 %v6844
        %7784 = vmatprep.subr.bf16.mxu0 %v6849
        %7785 = vmatpush1.bf16.msra.mxu0 %v6848
        %7786 = vmatprep.subr.bf16.mxu0 %v6853
        %7787 = vmatpush1.bf16.msra.mxu0 %v6852
        %7788 = vmatprep.subr.bf16.mxu0 %v6857
        %7789 = vmatpush1.bf16.msra.mxu0 %v6856
        %7790 = vmatprep.subr.bf16.mxu0 %v6861
        %7791 = vmatpush1.bf16.msra.mxu0 %v6860
        %7792 = vmatprep.subr.bf16.mxu0 %v6865
        %7793 = vmatpush1.bf16.msra.mxu0 %v6864
        %7794 = vmatprep.subr.bf16.mxu0 %v6869
        %7795 = vmatpush1.bf16.msra.mxu0 %v6868
        %7796 = vmatprep.mubr.bf16.mxu0 %v4596
        %7797 = vmatmul.mubr.bf16.gmra.mrb[0].mxu0 %v4595
        %v7798 = vpop.f32.mrb[0].mxu0
        %v7799 = vadd.f32 %v7736, %v7798
        %v7800 = vpop.f32.mrb[0].mxu0
        %v7801 = vadd.f32 %v7738, %v7800
        %v7802 = vpop.f32.mrb[0].mxu0
        %v7803 = vadd.f32 %v7740, %v7802
        %v7804 = vpop.f32.mrb[0].mxu0
        %v7805 = vadd.f32 %v7742, %v7804
        %7806 = vmatprep.mubr.bf16.mxu0 %v4611
        %7807 = vmatmul.mubr.bf16.gmra.mrb[0].mxu0 %v4610
        %v7808 = vpop.f32.mrb[0].mxu0
        %v7809 = vadd.f32 %v7746, %v7808
        %v7810 = vpop.f32.mrb[0].mxu0
        %v7811 = vadd.f32 %v7748, %v7810
        %v7812 = vpop.f32.mrb[0].mxu0
        %v7813 = vadd.f32 %v7750, %v7812
        %v7814 = vpop.f32.mrb[0].mxu0
        %v7815 = vadd.f32 %v7752, %v7814
        %7816 = vmatprep.mubr.bf16.mxu0 %v4626
        %7817 = vmatmul.mubr.bf16.gmra.mrb[0].mxu0 %v4625
        %v7818 = vpop.f32.mrb[0].mxu0
        %v7819 = vadd.f32 %v7756, %v7818
        %v7820 = vpop.f32.mrb[0].mxu0
        %v7821 = vadd.f32 %v7758, %v7820
        %v7822 = vpop.f32.mrb[0].mxu0
        %v7823 = vadd.f32 %v7760, %v7822
        %v7824 = vpop.f32.mrb[0].mxu0
        %v7825 = vadd.f32 %v7762, %v7824
        %7826 = vdwg.mxu0
        %7827 = vmatprep.subr.bf16.mxu0 %v6873
        %7828 = vmatpush1.bf16.msra.mxu0 %v6872
        %7829 = vmatprep.subr.bf16.mxu0 %v6877
        %7830 = vmatpush1.bf16.msra.mxu0 %v6876
        %7831 = vmatprep.subr.bf16.mxu0 %v6881
        %7832 = vmatpush1.bf16.msra.mxu0 %v6880
        %7833 = vmatprep.subr.bf16.mxu0 %v6885
        %7834 = vmatpush1.bf16.msra.mxu0 %v6884
        %7835 = vmatprep.subr.bf16.mxu0 %v6889
        %7836 = vmatpush1.bf16.msra.mxu0 %v6888
        %7837 = vmatprep.subr.bf16.mxu0 %v6893
        %7838 = vmatpush1.bf16.msra.mxu0 %v6892
        %7839 = vmatprep.subr.bf16.mxu0 %v6897
        %7840 = vmatpush1.bf16.msra.mxu0 %v6896
        %7841 = vmatprep.subr.bf16.mxu0 %v6901
        %7842 = vmatpush1.bf16.msra.mxu0 %v6900
        %7843 = vmatprep.subr.bf16.mxu0 %v6905
        %7844 = vmatpush1.bf16.msra.mxu0 %v6904
        %7845 = vmatprep.subr.bf16.mxu0 %v6909
        %7846 = vmatpush1.bf16.msra.mxu0 %v6908
        %7847 = vmatprep.subr.bf16.mxu0 %v6913
        %7848 = vmatpush1.bf16.msra.mxu0 %v6912
        %7849 = vmatprep.subr.bf16.mxu0 %v6917
        %7850 = vmatpush1.bf16.msra.mxu0 %v6916
        %7851 = vmatprep.subr.bf16.mxu0 %v6921
        %7852 = vmatpush1.bf16.msra.mxu0 %v6920
        %7853 = vmatprep.subr.bf16.mxu0 %v6925
        %7854 = vmatpush1.bf16.msra.mxu0 %v6924
        %7855 = vmatprep.subr.bf16.mxu0 %v6929
        %7856 = vmatpush1.bf16.msra.mxu0 %v6928
        %7857 = vmatprep.subr.bf16.mxu0 %v6933
        %7858 = vmatpush1.bf16.msra.mxu0 %v6932
        %7859 = vmatprep.mubr.bf16.mxu0 %v4598
        %7860 = vmatmul.mubr.bf16.gmra.mrb[0].mxu0 %v4597
        %v7861 = vpop.f32.mrb[0].mxu0
        %v7862 = vadd.f32 %v7799, %v7861
        %v7863 = vpop.f32.mrb[0].mxu0
        %v7864 = vadd.f32 %v7801, %v7863
        %v7865 = vpop.f32.mrb[0].mxu0
        %v7866 = vadd.f32 %v7803, %v7865
        %v7867 = vpop.f32.mrb[0].mxu0
        %v7868 = vadd.f32 %v7805, %v7867
        %7869 = vmatprep.mubr.bf16.mxu0 %v4613
        %7870 = vmatmul.mubr.bf16.gmra.mrb[0].mxu0 %v4612
        %v7871 = vpop.f32.mrb[0].mxu0
        %v7872 = vadd.f32 %v7809, %v7871
        %v7873 = vpop.f32.mrb[0].mxu0
        %v7874 = vadd.f32 %v7811, %v7873
        %v7875 = vpop.f32.mrb[0].mxu0
        %v7876 = vadd.f32 %v7813, %v7875
        %v7877 = vpop.f32.mrb[0].mxu0
        %v7878 = vadd.f32 %v7815, %v7877
        %7879 = vmatprep.mubr.bf16.mxu0 %v4628
        %7880 = vmatmul.mubr.bf16.gmra.mrb[0].mxu0 %v4627
        %v7881 = vpop.f32.mrb[0].mxu0
        %v7882 = vadd.f32 %v7819, %v7881
        %v7883 = vpop.f32.mrb[0].mxu0
        %v7884 = vadd.f32 %v7821, %v7883
        %v7885 = vpop.f32.mrb[0].mxu0
        %v7886 = vadd.f32 %v7823, %v7885
        %v7887 = vpop.f32.mrb[0].mxu0
        %v7888 = vadd.f32 %v7825, %v7887
        %7889 = vdwg.mxu0
        %7890 = vmatprep.subr.bf16.mxu0 %v6937
        %7891 = vmatpush1.bf16.msra.mxu0 %v6936
        %7892 = vmatprep.subr.bf16.mxu0 %v6941
        %7893 = vmatpush1.bf16.msra.mxu0 %v6940
        %7894 = vmatprep.subr.bf16.mxu0 %v6945
        %7895 = vmatpush1.bf16.msra.mxu0 %v6944
        %7896 = vmatprep.subr.bf16.mxu0 %v6949
        %7897 = vmatpush1.bf16.msra.mxu0 %v6948
        %7898 = vmatprep.subr.bf16.mxu0 %v6953
        %7899 = vmatpush1.bf16.msra.mxu0 %v6952
        %7900 = vmatprep.subr.bf16.mxu0 %v6957
        %7901 = vmatpush1.bf16.msra.mxu0 %v6956
        %7902 = vmatprep.subr.bf16.mxu0 %v6961
        %7903 = vmatpush1.bf16.msra.mxu0 %v6960
        %7904 = vmatprep.subr.bf16.mxu0 %v6965
        %7905 = vmatpush1.bf16.msra.mxu0 %v6964
        %7906 = vmatprep.subr.bf16.mxu0 %v6969
        %7907 = vmatpush1.bf16.msra.mxu0 %v6968
        %7908 = vmatprep.subr.bf16.mxu0 %v6973
        %7909 = vmatpush1.bf16.msra.mxu0 %v6972
        %7910 = vmatprep.subr.bf16.mxu0 %v6977
        %7911 = vmatpush1.bf16.msra.mxu0 %v6976
        %7912 = vmatprep.subr.bf16.mxu0 %v6981
        %7913 = vmatpush1.bf16.msra.mxu0 %v6980
        %7914 = vmatprep.subr.bf16.mxu0 %v6985
        %7915 = vmatpush1.bf16.msra.mxu0 %v6984
        %7916 = vmatprep.subr.bf16.mxu0 %v6989
        %7917 = vmatpush1.bf16.msra.mxu0 %v6988
        %7918 = vmatprep.subr.bf16.mxu0 %v6993
        %7919 = vmatpush1.bf16.msra.mxu0 %v6992
        %7920 = vmatprep.subr.bf16.mxu0 %v6997
        %7921 = vmatpush1.bf16.msra.mxu0 %v6996
        %7922 = vmatprep.mubr.bf16.mxu0 %v4600
        %7923 = vmatmul.mubr.bf16.gmra.mrb[0].mxu0 %v4599
        %v7924 = vpop.f32.mrb[0].mxu0
        %v7925 = vadd.f32 %v7862, %v7924
        %v7926 = vpop.f32.mrb[0].mxu0
        %v7927 = vadd.f32 %v7864, %v7926
        %v7928 = vpop.f32.mrb[0].mxu0
        %v7929 = vadd.f32 %v7866, %v7928
        %v7930 = vpop.f32.mrb[0].mxu0
        %v7931 = vadd.f32 %v7868, %v7930
        %7932 = vmatprep.mubr.bf16.mxu0 %v4615
        %7933 = vmatmul.mubr.bf16.gmra.mrb[0].mxu0 %v4614
        %v7934 = vpop.f32.mrb[0].mxu0
        %v7935 = vadd.f32 %v7872, %v7934
        %v7936 = vpop.f32.mrb[0].mxu0
        %v7937 = vadd.f32 %v7874, %v7936
        %v7938 = vpop.f32.mrb[0].mxu0
        %v7939 = vadd.f32 %v7876, %v7938
        %v7940 = vpop.f32.mrb[0].mxu0
        %v7941 = vadd.f32 %v7878, %v7940
        %7942 = vmatprep.mubr.bf16.mxu0 %v4630
        %7943 = vmatmul.mubr.bf16.gmra.mrb[0].mxu0 %v4629
        %v7944 = vpop.f32.mrb[0].mxu0
        %v7945 = vadd.f32 %v7882, %v7944
        %v7946 = vpop.f32.mrb[0].mxu0
        %v7947 = vadd.f32 %v7884, %v7946
        %v7948 = vpop.f32.mrb[0].mxu0
        %v7949 = vadd.f32 %v7886, %v7948
        %v7950 = vpop.f32.mrb[0].mxu0
        %v7951 = vadd.f32 %v7888, %v7950
        %7952 = vdwg.mxu0
        %7953 = vmatprep.subr.bf16.mxu0 %v7001
        %7954 = vmatpush1.bf16.msra.mxu0 %v7000
        %7955 = vmatprep.subr.bf16.mxu0 %v7005
        %7956 = vmatpush1.bf16.msra.mxu0 %v7004
        %7957 = vmatprep.subr.bf16.mxu0 %v7009
        %7958 = vmatpush1.bf16.msra.mxu0 %v7008
        %7959 = vmatprep.subr.bf16.mxu0 %v7013
        %7960 = vmatpush1.bf16.msra.mxu0 %v7012
        %7961 = vmatprep.subr.bf16.mxu0 %v7017
        %7962 = vmatpush1.bf16.msra.mxu0 %v7016
        %7963 = vmatprep.subr.bf16.mxu0 %v7021
        %7964 = vmatpush1.bf16.msra.mxu0 %v7020
        %7965 = vmatprep.subr.bf16.mxu0 %v7025
        %7966 = vmatpush1.bf16.msra.mxu0 %v7024
        %7967 = vmatprep.subr.bf16.mxu0 %v7029
        %7968 = vmatpush1.bf16.msra.mxu0 %v7028
        %7969 = vmatprep.subr.bf16.mxu0 0
        %7970 = vmatpush1.bf16.msra.mxu0 0
        %7971 = vmatprep.subr.bf16.mxu0 0
        %7972 = vmatpush1.bf16.msra.mxu0 0
        %7973 = vmatprep.subr.bf16.mxu0 0
        %7974 = vmatpush1.bf16.msra.mxu0 0
        %7975 = vmatprep.subr.bf16.mxu0 0
        %7976 = vmatpush1.bf16.msra.mxu0 0
        %7977 = vmatprep.subr.bf16.mxu0 0
        %7978 = vmatpush1.bf16.msra.mxu0 0
        %7979 = vmatprep.subr.bf16.mxu0 0
        %7980 = vmatpush1.bf16.msra.mxu0 0
        %7981 = vmatprep.subr.bf16.mxu0 0
        %7982 = vmatpush1.bf16.msra.mxu0 0
        %7983 = vmatprep.subr.bf16.mxu0 0
        %7984 = vmatpush1.bf16.msra.mxu0 0
        %7985 = vmatprep.mubr.bf16.mxu0 0
        %7986 = vmatmul.mubr.bf16.gmra.mrb[0].mxu0 %v4601
        %v7987 = vpop.f32.mrb[0].mxu0
        %v7988 = vadd.f32 %v7925, %v7987
        %v7989 = vpop.f32.mrb[0].mxu0
        %v7990 = vadd.f32 %v7927, %v7989
        %v7991 = vpop.f32.mrb[0].mxu0
        %v7992 = vadd.f32 %v7929, %v7991
        %v7993 = vpop.f32.mrb[0].mxu0
        %v7994 = vadd.f32 %v7931, %v7993
        %7995 = vmatprep.mubr.bf16.mxu0 0
        %7996 = vmatmul.mubr.bf16.gmra.mrb[0].mxu0 %v4616
        %v7997 = vpop.f32.mrb[0].mxu0
        %v7998 = vadd.f32 %v7935, %v7997
        %v7999 = vpop.f32.mrb[0].mxu0
        %v8000 = vadd.f32 %v7937, %v7999
        %v8001 = vpop.f32.mrb[0].mxu0
        %v8002 = vadd.f32 %v7939, %v8001
        %v8003 = vpop.f32.mrb[0].mxu0
        %v8004 = vadd.f32 %v7941, %v8003
        %8005 = vmatprep.mubr.bf16.mxu0 0
        %8006 = vmatmul.mubr.bf16.gmra.mrb[0].mxu0 %v4631
        %v8007 = vpop.f32.mrb[0].mxu0
        %v8008 = vadd.f32 %v7945, %v8007
        %v8009 = vpop.f32.mrb[0].mxu0
        %v8010 = vadd.f32 %v7947, %v8009
        %v8011 = vpop.f32.mrb[0].mxu0
        %v8012 = vadd.f32 %v7949, %v8011
        %v8013 = vpop.f32.mrb[0].mxu0
        %v8014 = vadd.f32 %v7951, %v8013
        %8015 = vdwg.mxu0
        %8016 = vmatprep.subr.bf16.mxu0 %v6555
        %8017 = vmatpush1.bf16.msra.mxu0 %v6554
        %8018 = vmatprep.subr.bf16.mxu0 %v6559
        %8019 = vmatpush1.bf16.msra.mxu0 %v6558
        %8020 = vmatprep.subr.bf16.mxu0 %v6563
        %8021 = vmatpush1.bf16.msra.mxu0 %v6562
        %8022 = vmatprep.subr.bf16.mxu0 %v6567
        %8023 = vmatpush1.bf16.msra.mxu0 %v6566
        %8024 = vmatprep.subr.bf16.mxu0 %v6571
        %8025 = vmatpush1.bf16.msra.mxu0 %v6570
        %8026 = vmatprep.subr.bf16.mxu0 %v6575
        %8027 = vmatpush1.bf16.msra.mxu0 %v6574
        %8028 = vmatprep.subr.bf16.mxu0 %v6579
        %8029 = vmatpush1.bf16.msra.mxu0 %v6578
        %8030 = vmatprep.subr.bf16.mxu0 %v6583
        %8031 = vmatpush1.bf16.msra.mxu0 %v6582
        %8032 = vmatprep.subr.bf16.mxu0 %v6587
        %8033 = vmatpush1.bf16.msra.mxu0 %v6586
        %8034 = vmatprep.subr.bf16.mxu0 %v6591
        %8035 = vmatpush1.bf16.msra.mxu0 %v6590
        %8036 = vmatprep.subr.bf16.mxu0 %v6595
        %8037 = vmatpush1.bf16.msra.mxu0 %v6594
        %8038 = vmatprep.subr.bf16.mxu0 %v6599
        %8039 = vmatpush1.bf16.msra.mxu0 %v6598
        %8040 = vmatprep.subr.bf16.mxu0 %v6603
        %8041 = vmatpush1.bf16.msra.mxu0 %v6602
        %8042 = vmatprep.subr.bf16.mxu0 %v6607
        %8043 = vmatpush1.bf16.msra.mxu0 %v6606
        %8044 = vmatprep.subr.bf16.mxu0 %v6611
        %8045 = vmatpush1.bf16.msra.mxu0 %v6610
        %8046 = vmatprep.subr.bf16.mxu0 %v6615
        %8047 = vmatpush1.bf16.msra.mxu0 %v6614
        %8048 = vmatprep.mubr.bf16.mxu0 %v4588
        %8049 = vmatmul.mubr.bf16.gmra.mrb[0].mxu0 %v4587
        %v8050 = vpop.f32.mrb[0].mxu0
        %v8051 = vadd.f32 0.0, %v8050
        %v8052 = vpop.f32.mrb[0].mxu0
        %v8053 = vadd.f32 0.0, %v8052
        %v8054 = vpop.f32.mrb[0].mxu0
        %v8055 = vadd.f32 0.0, %v8054
        %v8056 = vpop.f32.mrb[0].mxu0
        %v8057 = vadd.f32 0.0, %v8056
        %8058 = vmatprep.mubr.bf16.mxu0 %v4603
        %8059 = vmatmul.mubr.bf16.gmra.mrb[0].mxu0 %v4602
        %v8060 = vpop.f32.mrb[0].mxu0
        %v8061 = vadd.f32 0.0, %v8060
        %v8062 = vpop.f32.mrb[0].mxu0
        %v8063 = vadd.f32 0.0, %v8062
        %v8064 = vpop.f32.mrb[0].mxu0
        %v8065 = vadd.f32 0.0, %v8064
        %v8066 = vpop.f32.mrb[0].mxu0
        %v8067 = vadd.f32 0.0, %v8066
        %8068 = vmatprep.mubr.bf16.mxu0 %v4618
        %8069 = vmatmul.mubr.bf16.gmra.mrb[0].mxu0 %v4617
        %v8070 = vpop.f32.mrb[0].mxu0
        %v8071 = vadd.f32 0.0, %v8070
        %v8072 = vpop.f32.mrb[0].mxu0
        %v8073 = vadd.f32 0.0, %v8072
        %v8074 = vpop.f32.mrb[0].mxu0
        %v8075 = vadd.f32 0.0, %v8074
        %v8076 = vpop.f32.mrb[0].mxu0
        %v8077 = vadd.f32 0.0, %v8076
        %8078 = vdwg.mxu0
        %8079 = vmatprep.subr.bf16.mxu0 %v6619
        %8080 = vmatpush1.bf16.msra.mxu0 %v6618
        %8081 = vmatprep.subr.bf16.mxu0 %v6623
        %8082 = vmatpush1.bf16.msra.mxu0 %v6622
        %8083 = vmatprep.subr.bf16.mxu0 %v6627
        %8084 = vmatpush1.bf16.msra.mxu0 %v6626
        %8085 = vmatprep.subr.bf16.mxu0 %v6631
        %8086 = vmatpush1.bf16.msra.mxu0 %v6630
        %8087 = vmatprep.subr.bf16.mxu0 %v6635
        %8088 = vmatpush1.bf16.msra.mxu0 %v6634
        %8089 = vmatprep.subr.bf16.mxu0 %v6639
        %8090 = vmatpush1.bf16.msra.mxu0 %v6638
        %8091 = vmatprep.subr.bf16.mxu0 %v6643
        %8092 = vmatpush1.bf16.msra.mxu0 %v6642
        %8093 = vmatprep.subr.bf16.mxu0 %v6647
        %8094 = vmatpush1.bf16.msra.mxu0 %v6646
        %8095 = vmatprep.subr.bf16.mxu0 %v6651
        %8096 = vmatpush1.bf16.msra.mxu0 %v6650
        %8097 = vmatprep.subr.bf16.mxu0 %v6655
        %8098 = vmatpush1.bf16.msra.mxu0 %v6654
        %8099 = vmatprep.subr.bf16.mxu0 %v6659
        %8100 = vmatpush1.bf16.msra.mxu0 %v6658
        %8101 = vmatprep.subr.bf16.mxu0 %v6663
        %8102 = vmatpush1.bf16.msra.mxu0 %v6662
        %8103 = vmatprep.subr.bf16.mxu0 %v6667
        %8104 = vmatpush1.bf16.msra.mxu0 %v6666
        %8105 = vmatprep.subr.bf16.mxu0 %v6671
        %8106 = vmatpush1.bf16.msra.mxu0 %v6670
        %8107 = vmatprep.subr.bf16.mxu0 %v6675
        %8108 = vmatpush1.bf16.msra.mxu0 %v6674
        %8109 = vmatprep.subr.bf16.mxu0 %v6679
        %8110 = vmatpush1.bf16.msra.mxu0 %v6678
        %8111 = vmatprep.mubr.bf16.mxu0 %v4590
        %8112 = vmatmul.mubr.bf16.gmra.mrb[0].mxu0 %v4589
        %v8113 = vpop.f32.mrb[0].mxu0
        %v8114 = vadd.f32 %v8051, %v8113
        %v8115 = vpop.f32.mrb[0].mxu0
        %v8116 = vadd.f32 %v8053, %v8115
        %v8117 = vpop.f32.mrb[0].mxu0
        %v8118 = vadd.f32 %v8055, %v8117
        %v8119 = vpop.f32.mrb[0].mxu0
        %v8120 = vadd.f32 %v8057, %v8119
        %8121 = vmatprep.mubr.bf16.mxu0 %v4605
        %8122 = vmatmul.mubr.bf16.gmra.mrb[0].mxu0 %v4604
        %v8123 = vpop.f32.mrb[0].mxu0
        %v8124 = vadd.f32 %v8061, %v8123
        %v8125 = vpop.f32.mrb[0].mxu0
        %v8126 = vadd.f32 %v8063, %v8125
        %v8127 = vpop.f32.mrb[0].mxu0
        %v8128 = vadd.f32 %v8065, %v8127
        %v8129 = vpop.f32.mrb[0].mxu0
        %v8130 = vadd.f32 %v8067, %v8129
        %8131 = vmatprep.mubr.bf16.mxu0 %v4620
        %8132 = vmatmul.mubr.bf16.gmra.mrb[0].mxu0 %v4619
        %v8133 = vpop.f32.mrb[0].mxu0
        %v8134 = vadd.f32 %v8071, %v8133
        %v8135 = vpop.f32.mrb[0].mxu0
        %v8136 = vadd.f32 %v8073, %v8135
        %v8137 = vpop.f32.mrb[0].mxu0
        %v8138 = vadd.f32 %v8075, %v8137
        %v8139 = vpop.f32.mrb[0].mxu0
        %v8140 = vadd.f32 %v8077, %v8139
        %8141 = vdwg.mxu0
        %8142 = vmatprep.subr.bf16.mxu0 %v6683
        %8143 = vmatpush1.bf16.msra.mxu0 %v6682
        %8144 = vmatprep.subr.bf16.mxu0 %v6687
        %8145 = vmatpush1.bf16.msra.mxu0 %v6686
        %8146 = vmatprep.subr.bf16.mxu0 %v6691
        %8147 = vmatpush1.bf16.msra.mxu0 %v6690
        %8148 = vmatprep.subr.bf16.mxu0 %v6695
        %8149 = vmatpush1.bf16.msra.mxu0 %v6694
        %8150 = vmatprep.subr.bf16.mxu0 %v6699
        %8151 = vmatpush1.bf16.msra.mxu0 %v6698
        %8152 = vmatprep.subr.bf16.mxu0 %v6703
        %8153 = vmatpush1.bf16.msra.mxu0 %v6702
        %8154 = vmatprep.subr.bf16.mxu0 %v6707
        %8155 = vmatpush1.bf16.msra.mxu0 %v6706
        %8156 = vmatprep.subr.bf16.mxu0 %v6711
        %8157 = vmatpush1.bf16.msra.mxu0 %v6710
        %8158 = vmatprep.subr.bf16.mxu0 %v6715
        %8159 = vmatpush1.bf16.msra.mxu0 %v6714
        %8160 = vmatprep.subr.bf16.mxu0 %v6719
        %8161 = vmatpush1.bf16.msra.mxu0 %v6718
        %8162 = vmatprep.subr.bf16.mxu0 %v6723
        %8163 = vmatpush1.bf16.msra.mxu0 %v6722
        %8164 = vmatprep.subr.bf16.mxu0 %v6727
        %8165 = vmatpush1.bf16.msra.mxu0 %v6726
        %8166 = vmatprep.subr.bf16.mxu0 %v6731
        %8167 = vmatpush1.bf16.msra.mxu0 %v6730
        %8168 = vmatprep.subr.bf16.mxu0 %v6735
        %8169 = vmatpush1.bf16.msra.mxu0 %v6734
        %8170 = vmatprep.subr.bf16.mxu0 %v6739
        %8171 = vmatpush1.bf16.msra.mxu0 %v6738
        %8172 = vmatprep.subr.bf16.mxu0 %v6743
        %8173 = vmatpush1.bf16.msra.mxu0 %v6742
        %8174 = vmatprep.mubr.bf16.mxu0 %v4592
        %8175 = vmatmul.mubr.bf16.gmra.mrb[0].mxu0 %v4591
        %v8176 = vpop.f32.mrb[0].mxu0
        %v8177 = vadd.f32 %v8114, %v8176
        %v8178 = vpop.f32.mrb[0].mxu0
        %v8179 = vadd.f32 %v8116, %v8178
        %v8180 = vpop.f32.mrb[0].mxu0
        %v8181 = vadd.f32 %v8118, %v8180
        %v8182 = vpop.f32.mrb[0].mxu0
        %v8183 = vadd.f32 %v8120, %v8182
        %8184 = vmatprep.mubr.bf16.mxu0 %v4607
        %8185 = vmatmul.mubr.bf16.gmra.mrb[0].mxu0 %v4606
        %v8186 = vpop.f32.mrb[0].mxu0
        %v8187 = vadd.f32 %v8124, %v8186
        %v8188 = vpop.f32.mrb[0].mxu0
        %v8189 = vadd.f32 %v8126, %v8188
        %v8190 = vpop.f32.mrb[0].mxu0
        %v8191 = vadd.f32 %v8128, %v8190
        %v8192 = vpop.f32.mrb[0].mxu0
        %v8193 = vadd.f32 %v8130, %v8192
        %8194 = vmatprep.mubr.bf16.mxu0 %v4622
        %8195 = vmatmul.mubr.bf16.gmra.mrb[0].mxu0 %v4621
        %v8196 = vpop.f32.mrb[0].mxu0
        %v8197 = vadd.f32 %v8134, %v8196
        %v8198 = vpop.f32.mrb[0].mxu0
        %v8199 = vadd.f32 %v8136, %v8198
        %v8200 = vpop.f32.mrb[0].mxu0
        %v8201 = vadd.f32 %v8138, %v8200
        %v8202 = vpop.f32.mrb[0].mxu0
        %v8203 = vadd.f32 %v8140, %v8202
        %8204 = vdwg.mxu0
        %8205 = vmatprep.subr.bf16.mxu0 %v6747
        %8206 = vmatpush1.bf16.msra.mxu0 %v6746
        %8207 = vmatprep.subr.bf16.mxu0 %v6751
        %8208 = vmatpush1.bf16.msra.mxu0 %v6750
        %8209 = vmatprep.subr.bf16.mxu0 %v6755
        %8210 = vmatpush1.bf16.msra.mxu0 %v6754
        %8211 = vmatprep.subr.bf16.mxu0 %v6759
        %8212 = vmatpush1.bf16.msra.mxu0 %v6758
        %8213 = vmatprep.subr.bf16.mxu0 %v6763
        %8214 = vmatpush1.bf16.msra.mxu0 %v6762
        %8215 = vmatprep.subr.bf16.mxu0 %v6767
        %8216 = vmatpush1.bf16.msra.mxu0 %v6766
        %8217 = vmatprep.subr.bf16.mxu0 %v6771
        %8218 = vmatpush1.bf16.msra.mxu0 %v6770
        %8219 = vmatprep.subr.bf16.mxu0 %v6775
        %8220 = vmatpush1.bf16.msra.mxu0 %v6774
        %8221 = vmatprep.subr.bf16.mxu0 %v6779
        %8222 = vmatpush1.bf16.msra.mxu0 %v6778
        %8223 = vmatprep.subr.bf16.mxu0 %v6783
        %8224 = vmatpush1.bf16.msra.mxu0 %v6782
        %8225 = vmatprep.subr.bf16.mxu0 %v6787
        %8226 = vmatpush1.bf16.msra.mxu0 %v6786
        %8227 = vmatprep.subr.bf16.mxu0 %v6791
        %8228 = vmatpush1.bf16.msra.mxu0 %v6790
        %8229 = vmatprep.subr.bf16.mxu0 %v6795
        %8230 = vmatpush1.bf16.msra.mxu0 %v6794
        %8231 = vmatprep.subr.bf16.mxu0 %v6799
        %8232 = vmatpush1.bf16.msra.mxu0 %v6798
        %8233 = vmatprep.subr.bf16.mxu0 %v6803
        %8234 = vmatpush1.bf16.msra.mxu0 %v6802
        %8235 = vmatprep.subr.bf16.mxu0 %v6807
        %8236 = vmatpush1.bf16.msra.mxu0 %v6806
        %8237 = vmatprep.mubr.bf16.mxu0 %v4594
        %8238 = vmatmul.mubr.bf16.gmra.mrb[0].mxu0 %v4593
        %v8239 = vpop.f32.mrb[0].mxu0
        %v8240 = vadd.f32 %v8177, %v8239
        %v8241 = vpop.f32.mrb[0].mxu0
        %v8242 = vadd.f32 %v8179, %v8241
        %v8243 = vpop.f32.mrb[0].mxu0
        %v8244 = vadd.f32 %v8181, %v8243
        %v8245 = vpop.f32.mrb[0].mxu0
        %v8246 = vadd.f32 %v8183, %v8245
        %8247 = vmatprep.mubr.bf16.mxu0 %v4609
        %8248 = vmatmul.mubr.bf16.gmra.mrb[0].mxu0 %v4608
        %v8249 = vpop.f32.mrb[0].mxu0
        %v8250 = vadd.f32 %v8187, %v8249
        %v8251 = vpop.f32.mrb[0].mxu0
        %v8252 = vadd.f32 %v8189, %v8251
        %v8253 = vpop.f32.mrb[0].mxu0
        %v8254 = vadd.f32 %v8191, %v8253
        %v8255 = vpop.f32.mrb[0].mxu0
        %v8256 = vadd.f32 %v8193, %v8255
        %8257 = vmatprep.mubr.bf16.mxu0 %v4624
        %8258 = vmatmul.mubr.bf16.gmra.mrb[0].mxu0 %v4623
        %v8259 = vpop.f32.mrb[0].mxu0
        %v8260 = vadd.f32 %v8197, %v8259
        %v8261 = vpop.f32.mrb[0].mxu0
        %v8262 = vadd.f32 %v8199, %v8261
        %v8263 = vpop.f32.mrb[0].mxu0
        %v8264 = vadd.f32 %v8201, %v8263
        %v8265 = vpop.f32.mrb[0].mxu0
        %v8266 = vadd.f32 %v8203, %v8265
        %8267 = vdwg.mxu0
        %8268 = vmatprep.subr.bf16.mxu0 %v6811
        %8269 = vmatpush1.bf16.msra.mxu0 %v6810
        %8270 = vmatprep.subr.bf16.mxu0 %v6815
        %8271 = vmatpush1.bf16.msra.mxu0 %v6814
        %8272 = vmatprep.subr.bf16.mxu0 %v6819
        %8273 = vmatpush1.bf16.msra.mxu0 %v6818
        %8274 = vmatprep.subr.bf16.mxu0 %v6823
        %8275 = vmatpush1.bf16.msra.mxu0 %v6822
        %8276 = vmatprep.subr.bf16.mxu0 %v6827
        %8277 = vmatpush1.bf16.msra.mxu0 %v6826
        %8278 = vmatprep.subr.bf16.mxu0 %v6831
        %8279 = vmatpush1.bf16.msra.mxu0 %v6830
        %8280 = vmatprep.subr.bf16.mxu0 %v6835
        %8281 = vmatpush1.bf16.msra.mxu0 %v6834
        %8282 = vmatprep.subr.bf16.mxu0 %v6839
        %8283 = vmatpush1.bf16.msra.mxu0 %v6838
        %8284 = vmatprep.subr.bf16.mxu0 %v6843
        %8285 = vmatpush1.bf16.msra.mxu0 %v6842
        %8286 = vmatprep.subr.bf16.mxu0 %v6847
        %8287 = vmatpush1.bf16.msra.mxu0 %v6846
        %8288 = vmatprep.subr.bf16.mxu0 %v6851
        %8289 = vmatpush1.bf16.msra.mxu0 %v6850
        %8290 = vmatprep.subr.bf16.mxu0 %v6855
        %8291 = vmatpush1.bf16.msra.mxu0 %v6854
        %8292 = vmatprep.subr.bf16.mxu0 %v6859
        %8293 = vmatpush1.bf16.msra.mxu0 %v6858
        %8294 = vmatprep.subr.bf16.mxu0 %v6863
        %8295 = vmatpush1.bf16.msra.mxu0 %v6862
        %8296 = vmatprep.subr.bf16.mxu0 %v6867
        %8297 = vmatpush1.bf16.msra.mxu0 %v6866
        %8298 = vmatprep.subr.bf16.mxu0 %v6871
        %8299 = vmatpush1.bf16.msra.mxu0 %v6870
        %8300 = vmatprep.mubr.bf16.mxu0 %v4596
        %8301 = vmatmul.mubr.bf16.gmra.mrb[0].mxu0 %v4595
        %v8302 = vpop.f32.mrb[0].mxu0
        %v8303 = vadd.f32 %v8240, %v8302
        %v8304 = vpop.f32.mrb[0].mxu0
        %v8305 = vadd.f32 %v8242, %v8304
        %v8306 = vpop.f32.mrb[0].mxu0
        %v8307 = vadd.f32 %v8244, %v8306
        %v8308 = vpop.f32.mrb[0].mxu0
        %v8309 = vadd.f32 %v8246, %v8308
        %8310 = vmatprep.mubr.bf16.mxu0 %v4611
        %8311 = vmatmul.mubr.bf16.gmra.mrb[0].mxu0 %v4610
        %v8312 = vpop.f32.mrb[0].mxu0
        %v8313 = vadd.f32 %v8250, %v8312
        %v8314 = vpop.f32.mrb[0].mxu0
        %v8315 = vadd.f32 %v8252, %v8314
        %v8316 = vpop.f32.mrb[0].mxu0
        %v8317 = vadd.f32 %v8254, %v8316
        %v8318 = vpop.f32.mrb[0].mxu0
        %v8319 = vadd.f32 %v8256, %v8318
        %8320 = vmatprep.mubr.bf16.mxu0 %v4626
        %8321 = vmatmul.mubr.bf16.gmra.mrb[0].mxu0 %v4625
        %v8322 = vpop.f32.mrb[0].mxu0
        %v8323 = vadd.f32 %v8260, %v8322
        %v8324 = vpop.f32.mrb[0].mxu0
        %v8325 = vadd.f32 %v8262, %v8324
        %v8326 = vpop.f32.mrb[0].mxu0
        %v8327 = vadd.f32 %v8264, %v8326
        %v8328 = vpop.f32.mrb[0].mxu0
        %v8329 = vadd.f32 %v8266, %v8328
        %8330 = vdwg.mxu0
        %8331 = vmatprep.subr.bf16.mxu0 %v6875
        %8332 = vmatpush1.bf16.msra.mxu0 %v6874
        %8333 = vmatprep.subr.bf16.mxu0 %v6879
        %8334 = vmatpush1.bf16.msra.mxu0 %v6878
        %8335 = vmatprep.subr.bf16.mxu0 %v6883
        %8336 = vmatpush1.bf16.msra.mxu0 %v6882
        %8337 = vmatprep.subr.bf16.mxu0 %v6887
        %8338 = vmatpush1.bf16.msra.mxu0 %v6886
        %8339 = vmatprep.subr.bf16.mxu0 %v6891
        %8340 = vmatpush1.bf16.msra.mxu0 %v6890
        %8341 = vmatprep.subr.bf16.mxu0 %v6895
        %8342 = vmatpush1.bf16.msra.mxu0 %v6894
        %8343 = vmatprep.subr.bf16.mxu0 %v6899
        %8344 = vmatpush1.bf16.msra.mxu0 %v6898
        %8345 = vmatprep.subr.bf16.mxu0 %v6903
        %8346 = vmatpush1.bf16.msra.mxu0 %v6902
        %8347 = vmatprep.subr.bf16.mxu0 %v6907
        %8348 = vmatpush1.bf16.msra.mxu0 %v6906
        %8349 = vmatprep.subr.bf16.mxu0 %v6911
        %8350 = vmatpush1.bf16.msra.mxu0 %v6910
        %8351 = vmatprep.subr.bf16.mxu0 %v6915
        %8352 = vmatpush1.bf16.msra.mxu0 %v6914
        %8353 = vmatprep.subr.bf16.mxu0 %v6919
        %8354 = vmatpush1.bf16.msra.mxu0 %v6918
        %8355 = vmatprep.subr.bf16.mxu0 %v6923
        %8356 = vmatpush1.bf16.msra.mxu0 %v6922
        %8357 = vmatprep.subr.bf16.mxu0 %v6927
        %8358 = vmatpush1.bf16.msra.mxu0 %v6926
        %8359 = vmatprep.subr.bf16.mxu0 %v6931
        %8360 = vmatpush1.bf16.msra.mxu0 %v6930
        %8361 = vmatprep.subr.bf16.mxu0 %v6935
        %8362 = vmatpush1.bf16.msra.mxu0 %v6934
        %8363 = vmatprep.mubr.bf16.mxu0 %v4598
        %8364 = vmatmul.mubr.bf16.gmra.mrb[0].mxu0 %v4597
        %v8365 = vpop.f32.mrb[0].mxu0
        %v8366 = vadd.f32 %v8303, %v8365
        %v8367 = vpop.f32.mrb[0].mxu0
        %v8368 = vadd.f32 %v8305, %v8367
        %v8369 = vpop.f32.mrb[0].mxu0
        %v8370 = vadd.f32 %v8307, %v8369
        %v8371 = vpop.f32.mrb[0].mxu0
        %v8372 = vadd.f32 %v8309, %v8371
        %8373 = vmatprep.mubr.bf16.mxu0 %v4613
        %8374 = vmatmul.mubr.bf16.gmra.mrb[0].mxu0 %v4612
        %v8375 = vpop.f32.mrb[0].mxu0
        %v8376 = vadd.f32 %v8313, %v8375
        %v8377 = vpop.f32.mrb[0].mxu0
        %v8378 = vadd.f32 %v8315, %v8377
        %v8379 = vpop.f32.mrb[0].mxu0
        %v8380 = vadd.f32 %v8317, %v8379
        %v8381 = vpop.f32.mrb[0].mxu0
        %v8382 = vadd.f32 %v8319, %v8381
        %8383 = vmatprep.mubr.bf16.mxu0 %v4628
        %8384 = vmatmul.mubr.bf16.gmra.mrb[0].mxu0 %v4627
        %v8385 = vpop.f32.mrb[0].mxu0
        %v8386 = vadd.f32 %v8323, %v8385
        %v8387 = vpop.f32.mrb[0].mxu0
        %v8388 = vadd.f32 %v8325, %v8387
        %v8389 = vpop.f32.mrb[0].mxu0
        %v8390 = vadd.f32 %v8327, %v8389
        %v8391 = vpop.f32.mrb[0].mxu0
        %v8392 = vadd.f32 %v8329, %v8391
        %8393 = vdwg.mxu0
        %8394 = vmatprep.subr.bf16.mxu0 %v6939
        %8395 = vmatpush1.bf16.msra.mxu0 %v6938
        %8396 = vmatprep.subr.bf16.mxu0 %v6943
        %8397 = vmatpush1.bf16.msra.mxu0 %v6942
        %8398 = vmatprep.subr.bf16.mxu0 %v6947
        %8399 = vmatpush1.bf16.msra.mxu0 %v6946
        %8400 = vmatprep.subr.bf16.mxu0 %v6951
        %8401 = vmatpush1.bf16.msra.mxu0 %v6950
        %8402 = vmatprep.subr.bf16.mxu0 %v6955
        %8403 = vmatpush1.bf16.msra.mxu0 %v6954
        %8404 = vmatprep.subr.bf16.mxu0 %v6959
        %8405 = vmatpush1.bf16.msra.mxu0 %v6958
        %8406 = vmatprep.subr.bf16.mxu0 %v6963
        %8407 = vmatpush1.bf16.msra.mxu0 %v6962
        %8408 = vmatprep.subr.bf16.mxu0 %v6967
        %8409 = vmatpush1.bf16.msra.mxu0 %v6966
        %8410 = vmatprep.subr.bf16.mxu0 %v6971
        %8411 = vmatpush1.bf16.msra.mxu0 %v6970
        %8412 = vmatprep.subr.bf16.mxu0 %v6975
        %8413 = vmatpush1.bf16.msra.mxu0 %v6974
        %8414 = vmatprep.subr.bf16.mxu0 %v6979
        %8415 = vmatpush1.bf16.msra.mxu0 %v6978
        %8416 = vmatprep.subr.bf16.mxu0 %v6983
        %8417 = vmatpush1.bf16.msra.mxu0 %v6982
        %8418 = vmatprep.subr.bf16.mxu0 %v6987
        %8419 = vmatpush1.bf16.msra.mxu0 %v6986
        %8420 = vmatprep.subr.bf16.mxu0 %v6991
        %8421 = vmatpush1.bf16.msra.mxu0 %v6990
        %8422 = vmatprep.subr.bf16.mxu0 %v6995
        %8423 = vmatpush1.bf16.msra.mxu0 %v6994
        %8424 = vmatprep.subr.bf16.mxu0 %v6999
        %8425 = vmatpush1.bf16.msra.mxu0 %v6998
        %8426 = vmatprep.mubr.bf16.mxu0 %v4600
        %8427 = vmatmul.mubr.bf16.gmra.mrb[0].mxu0 %v4599
        %v8428 = vpop.f32.mrb[0].mxu0
        %v8429 = vadd.f32 %v8366, %v8428
        %v8430 = vpop.f32.mrb[0].mxu0
        %v8431 = vadd.f32 %v8368, %v8430
        %v8432 = vpop.f32.mrb[0].mxu0
        %v8433 = vadd.f32 %v8370, %v8432
        %v8434 = vpop.f32.mrb[0].mxu0
        %v8435 = vadd.f32 %v8372, %v8434
        %8436 = vmatprep.mubr.bf16.mxu0 %v4615
        %8437 = vmatmul.mubr.bf16.gmra.mrb[0].mxu0 %v4614
        %v8438 = vpop.f32.mrb[0].mxu0
        %v8439 = vadd.f32 %v8376, %v8438
        %v8440 = vpop.f32.mrb[0].mxu0
        %v8441 = vadd.f32 %v8378, %v8440
        %v8442 = vpop.f32.mrb[0].mxu0
        %v8443 = vadd.f32 %v8380, %v8442
        %v8444 = vpop.f32.mrb[0].mxu0
        %v8445 = vadd.f32 %v8382, %v8444
        %8446 = vmatprep.mubr.bf16.mxu0 %v4630
        %8447 = vmatmul.mubr.bf16.gmra.mrb[0].mxu0 %v4629
        %v8448 = vpop.f32.mrb[0].mxu0
        %v8449 = vadd.f32 %v8386, %v8448
        %v8450 = vpop.f32.mrb[0].mxu0
        %v8451 = vadd.f32 %v8388, %v8450
        %v8452 = vpop.f32.mrb[0].mxu0
        %v8453 = vadd.f32 %v8390, %v8452
        %v8454 = vpop.f32.mrb[0].mxu0
        %v8455 = vadd.f32 %v8392, %v8454
        %8456 = vdwg.mxu0
        %8457 = vmatprep.subr.bf16.mxu0 %v7003
        %8458 = vmatpush1.bf16.msra.mxu0 %v7002
        %8459 = vmatprep.subr.bf16.mxu0 %v7007
        %8460 = vmatpush1.bf16.msra.mxu0 %v7006
        %8461 = vmatprep.subr.bf16.mxu0 %v7011
        %8462 = vmatpush1.bf16.msra.mxu0 %v7010
        %8463 = vmatprep.subr.bf16.mxu0 %v7015
        %8464 = vmatpush1.bf16.msra.mxu0 %v7014
        %8465 = vmatprep.subr.bf16.mxu0 %v7019
        %8466 = vmatpush1.bf16.msra.mxu0 %v7018
        %8467 = vmatprep.subr.bf16.mxu0 %v7023
        %8468 = vmatpush1.bf16.msra.mxu0 %v7022
        %8469 = vmatprep.subr.bf16.mxu0 %v7027
        %8470 = vmatpush1.bf16.msra.mxu0 %v7026
        %8471 = vmatprep.subr.bf16.mxu0 %v7031
        %8472 = vmatpush1.bf16.msra.mxu0 %v7030
        %8473 = vmatprep.subr.bf16.mxu0 0
        %8474 = vmatpush1.bf16.msra.mxu0 0
        %8475 = vmatprep.subr.bf16.mxu0 0
        %8476 = vmatpush1.bf16.msra.mxu0 0
        %8477 = vmatprep.subr.bf16.mxu0 0
        %8478 = vmatpush1.bf16.msra.mxu0 0
        %8479 = vmatprep.subr.bf16.mxu0 0
        %8480 = vmatpush1.bf16.msra.mxu0 0
        %8481 = vmatprep.subr.bf16.mxu0 0
        %8482 = vmatpush1.bf16.msra.mxu0 0
        %8483 = vmatprep.subr.bf16.mxu0 0
        %8484 = vmatpush1.bf16.msra.mxu0 0
        %8485 = vmatprep.subr.bf16.mxu0 0
        %8486 = vmatpush1.bf16.msra.mxu0 0
        %8487 = vmatprep.subr.bf16.mxu0 0
        %8488 = vmatpush1.bf16.msra.mxu0 0
        %8489 = vmatprep.mubr.bf16.mxu0 0
        %8490 = vmatmul.mubr.bf16.gmra.mrb[0].mxu0 %v4601
        %v8491 = vpop.f32.mrb[0].mxu0
        %v8492 = vadd.f32 %v8429, %v8491
        %v8493 = vpop.f32.mrb[0].mxu0
        %v8494 = vadd.f32 %v8431, %v8493
        %v8495 = vpop.f32.mrb[0].mxu0
        %v8496 = vadd.f32 %v8433, %v8495
        %v8497 = vpop.f32.mrb[0].mxu0
        %v8498 = vadd.f32 %v8435, %v8497
        %8499 = vmatprep.mubr.bf16.mxu0 0
        %8500 = vmatmul.mubr.bf16.gmra.mrb[0].mxu0 %v4616
        %v8501 = vpop.f32.mrb[0].mxu0
        %v8502 = vadd.f32 %v8439, %v8501
        %v8503 = vpop.f32.mrb[0].mxu0
        %v8504 = vadd.f32 %v8441, %v8503
        %v8505 = vpop.f32.mrb[0].mxu0
        %v8506 = vadd.f32 %v8443, %v8505
        %v8507 = vpop.f32.mrb[0].mxu0
        %v8508 = vadd.f32 %v8445, %v8507
        %8509 = vmatprep.mubr.bf16.mxu0 0
        %8510 = vmatmul.mubr.bf16.gmra.mrb[0].mxu0 %v4631
        %v8511 = vpop.f32.mrb[0].mxu0
        %v8512 = vadd.f32 %v8449, %v8511
        %v8513 = vpop.f32.mrb[0].mxu0
        %v8514 = vadd.f32 %v8451, %v8513
        %v8515 = vpop.f32.mrb[0].mxu0
        %v8516 = vadd.f32 %v8453, %v8515
        %v8517 = vpop.f32.mrb[0].mxu0
        %v8518 = vadd.f32 %v8455, %v8517
        %8519 = vdwg.mxu0
        %8520 = vst [vmem:[%s227] sm:$0xff] %v7988
        %8521 = vst [vmem:[%s227 + $0x8] sm:$0xff] %v7990
        %8522 = vst [vmem:[%s227 + $0x10] sm:$0xff] %v8492
        %8523 = vst [vmem:[%s227 + $0x18] sm:$0xff] %v8494
        %8524 = vst [vmem:[%s227 + $0x20] sm:$0xff] %v7992
        %8525 = vst [vmem:[%s227 + $0x28] sm:$0xff] %v7994
        %8526 = vst [vmem:[%s227 + $0x30] sm:$0xff] %v8496
        %8527 = vst [vmem:[%s227 + $0x38] sm:$0xff] %v8498
        %8528 = vst [vmem:[%s227 + $0x40] sm:$0xff] %v7998
        %8529 = vst [vmem:[%s227 + $0x48] sm:$0xff] %v8000
        %8530 = vst [vmem:[%s227 + $0x50] sm:$0xff] %v8502
        %8531 = vst [vmem:[%s227 + $0x58] sm:$0xff] %v8504
        %8532 = vst [vmem:[%s227 + $0x60] sm:$0xff] %v8002
        %8533 = vst [vmem:[%s227 + $0x68] sm:$0xff] %v8004
        %8534 = vst [vmem:[%s227 + $0x70] sm:$0xff] %v8506
        %8535 = vst [vmem:[%s227 + $0x78] sm:$0xff] %v8508
        %8536 = vst [vmem:[%s227 + $0x80] sm:$0xff] %v8008
        %8537 = vst [vmem:[%s227 + $0x88] sm:$0xff] %v8010
        %8538 = vst [vmem:[%s227 + $0x90] sm:$0xff] %v8512
        %8539 = vst [vmem:[%s227 + $0x98] sm:$0xff] %v8514
        %8540 = vst [vmem:[%s227 + $0xa0] sm:$0xff] %v8012
        %8541 = vst [vmem:[%s227 + $0xa8] sm:$0xff] %v8014
        %8542 = vst [vmem:[%s227 + $0xb0] sm:$0xff] %v8516
        %8543 = vst [vmem:[%s227 + $0xb8] sm:$0xff] %v8518
        %s8544 = sand.u32 %s135, 1
        %s8545 = scalar_lea.sflag [#allocation5], %s8544
        %s8546 = sand.u32 %s135, 1
        %s8547 = smul.addr %s8546, 192
        %s8548 = scalar_lea.vmem [#allocation6], %s8547
        // Predicated region
        $region45: #{tpu_custom_call.1} parent=35 // pred_check
          %p8549 = pneg %p145
        $region46: #{tpu_custom_call.1} parent=35 // pred_check_branch
          %8551 = sbr.rel (%p8549) target = $region48
        $region47: #{tpu_custom_call.1} parent=35 // pred_region
          %s8552 = smul.u32 4, %s24
          %s8554 = ssub.s32 3072, 3072
          %8555 = vsyncadd %s8545, %s8554
          %s8556 = smul.addr %s23, 24
          %s8557 = sadd.s32 %s8552, %s8556
          %s8558 = smul.addr %s8557, 128
          %s8559 = scalar_lea.hbm %s4, %s8558
          %s8560 = sshll.u32 %s8548, 4
          %s8561 = int_to_ptr.vmem [resolvable:$true] %s8560
          %8566 = dma.vmem_to_hbm [thread:$0]  %s8561, 3072, %s8559, %s8545, 512, 512, 32
        $region48: #{tpu_custom_call.1} parent=35 // pred_fallthru
          _
      $region36: #{tpu_custom_call.1} parent=5 // pred_fallthru
        _
      %p8567 = scmp.le.s32.totalorder 2, %s14
      // Predicated region
      $region49: #{tpu_custom_call.1} parent=5 // pred_check
        %p8568 = pneg %p8567
      $region50: #{tpu_custom_call.1} parent=5 // pred_check_branch
        %8570 = sbr.rel (%p8568) target = $region52
      $region51: #{tpu_custom_call.1} parent=5 // pred_region
        %s8571 = ssub.s32 %s14, 2
        // Predicated region
        $region53: #{tpu_custom_call.1} parent=51 // pred_check
          %p8572 = pneg %p151
        $region54: #{tpu_custom_call.1} parent=51 // pred_check_branch
          %8574 = sbr.rel (%p8572) target = $region56
        $region55: #{tpu_custom_call.1} parent=51 // pred_region
          %s8575 = sand.u32 %s136, 1
          %s8576 = scalar_lea.sflag [#allocation5], %s8575
          %s8577 = sand.u32 %s136, 1
          %s8578 = smul.addr %s8577, 192
          %s8579 = scalar_lea.vmem [#allocation6], %s8578
          %8580 = dma.done %s8576, 3072
        $region56: #{tpu_custom_call.1} parent=51 // pred_fallthru
          _
      $region52: #{tpu_custom_call.1} parent=5 // pred_fallthru
        _
    $region6: #{tpu_custom_call.1} parent=1 // loop_footer
      %s18 = sadd.s32 1, %s14
    $region7: #{tpu_custom_call.1} parent=1 // loop_footer_branch
      %13 = sbr.rel target = $region3
    $region8: #{tpu_custom_call.1} parent=1 // loop_exit
      _
    %8581 = vsyncpa [#allocation4], 1
    %s8582 = scalar_lea.sflag [#allocation4], 1
    %8583 = vsyncpa %s8582, 1
    %8584 = vsyncpa [#allocation5], 1
    %s8585 = scalar_lea.sflag [#allocation5], 1
    %8586 = vsyncpa %s8585, 1

</llo_original>
